<compile_context>
chip_gen: v7x
topology: tpu7x:2x2x1
jax: 0.10.0
libtpu: 0.0.40
codegen_flags: <defaults>
</compile_context>

<pallas_src>
import functools

import jax
import jax.numpy as jnp
from jax.experimental import pallas as pl
from jax.experimental.pallas import tpu as pltpu

LANE = 128  # pad conv out-channels to a full lane width for dense stores


def _full_spec(shape):
    """Full-array BlockSpec (single grid step, whole operand resident in VMEM)."""
    return pl.BlockSpec(shape, lambda *_: (0,) * len(shape))


# ---------------------------------------------------------------------------
# Kernel 1: fused matmul + bias + ReLU (conv1 / conv2 after im2col)
# ---------------------------------------------------------------------------
def _matmul_bias_relu_kernel(x_ref, w_ref, b_ref, o_ref):
    y = jnp.dot(x_ref[...], w_ref[...], preferred_element_type=jnp.float32)
    o_ref[...] = jnp.maximum(y + b_ref[...], 0.0)


def conv_matmul(patches, w, b):
    """relu(patches @ w + b).  patches: [M, K], w: [K, 128], b: [1, 128]."""
    M, K = patches.shape
    Kw, N = w.shape
    assert K == Kw and b.shape == (1, N)
    cost = pl.CostEstimate(
        flops=2 * M * K * N,
        transcendentals=0,
        bytes_accessed=4 * (M * K + K * N + N + M * N),
    )
    return pl.pallas_call(
        _matmul_bias_relu_kernel,
        out_shape=jax.ShapeDtypeStruct((M, N), jnp.float32),
        grid=(1,),
        in_specs=[_full_spec((M, K)), _full_spec((K, N)), _full_spec((1, N))],
        out_specs=_full_spec((M, N)),
        cost_estimate=cost,
        compiler_params=pltpu.CompilerParams(dimension_semantics=("arbitrary",)),
    )(patches, w, b)


# ---------------------------------------------------------------------------
# Kernel 2: fused conv3 (matmul) + ReLU + fc1 + ReLU + fc2
# ---------------------------------------------------------------------------
def _conv3_fc_kernel(p_ref, w3_ref, b3_ref, w1_ref, b1_ref, w2_ref, b2_ref,
                     o_ref, *, batch, n_pos):
    # conv3 for all (spatial position, batch) rows in one MXU matmul.
    v = jnp.dot(p_ref[...], w3_ref[...], preferred_element_type=jnp.float32)
    v = jnp.maximum(v + b3_ref[...], 0.0)                    # [n_pos*batch, C3]

    # fc1: joint contraction over (spatial position, conv3 channel).  Patch rows
    # are ordered (position-major, batch-minor) so each position contributes a
    # contiguous [batch, C3] slab.  The PyTorch NCHW flatten is folded into the
    # pre-permuted w1 rows at init time.
    hidden = jnp.zeros((batch, b1_ref.shape[1]), jnp.float32)
    for p in range(n_pos):
        hidden = hidden + jnp.dot(v[p * batch:(p + 1) * batch, :], w1_ref[p],
                                  preferred_element_type=jnp.float32)
    hidden = jnp.maximum(hidden + b1_ref[...], 0.0)          # [batch, 512]

    # fc2 (512 -> 1): VPU multiply + lane reduction (avoids N=1 MXU matmul and a
    # separate kernel launch).
    o_ref[...] = jnp.sum(hidden * w2_ref[...], axis=1, keepdims=True) + b2_ref[...]


def conv3_fc(patches_pb, w3, b3, w1, b1, w2, b2, *, batch):
    n_rows, K3 = patches_pb.shape
    n_pos = n_rows // batch
    C3 = w3.shape[1]
    H1 = w1.shape[2]
    cost = pl.CostEstimate(
        flops=2 * (n_rows * K3 * C3 + n_rows * C3 * H1 + batch * H1),
        transcendentals=0,
        bytes_accessed=4 * (patches_pb.size + w3.size + b3.size + w1.size
                            + b1.size + w2.size + b2.size + batch),
    )
    kernel = functools.partial(_conv3_fc_kernel, batch=batch, n_pos=n_pos)
    return pl.pallas_call(
        kernel,
        out_shape=jax.ShapeDtypeStruct((batch, 1), jnp.float32),
        grid=(1,),
        in_specs=[_full_spec(patches_pb.shape), _full_spec(w3.shape),
                  _full_spec(b3.shape), _full_spec(w1.shape),
                  _full_spec(b1.shape), _full_spec(w2.shape),
                  _full_spec(b2.shape)],
        out_specs=_full_spec((batch, 1)),
        cost_estimate=cost,
        compiler_params=pltpu.CompilerParams(
            dimension_semantics=("arbitrary",),
            vmem_limit_bytes=32 * 1024 * 1024,
        ),
    )(patches_pb, w3, b3, w1, b1, w2, b2)


# ---------------------------------------------------------------------------
# Thin XLA glue: NHWC im2col (feature order = (kh, kw, c))
# ---------------------------------------------------------------------------
def _im2col_nhwc(x, k, s):
    B, H, W, C = x.shape
    OH = (H - k) // s + 1
    OW = (W - k) // s + 1
    cols = [x[:, i:i + s * OH:s, j:j + s * OW:s, :]
            for i in range(k) for j in range(k)]
    return jnp.concatenate(cols, axis=-1), OH, OW            # [B, OH, OW, k*k*C]


# ---------------------------------------------------------------------------
# Parameters: PyTorch-layout init + one-time kernel-ready preparation
# ---------------------------------------------------------------------------
def init_params(key, in_channels):
    def uniform(key, shape, fan_in):
        bound = 1.0 / jnp.sqrt(float(fan_in))
        return jax.random.uniform(key, shape, jnp.float32, -bound, bound)

    keys = jax.random.split(key, 10)
    p = {}
    p["conv1_w"] = uniform(keys[0], (32, in_channels, 8, 8), in_channels * 8 * 8)
    p["conv1_b"] = uniform(keys[1], (32,), in_channels * 8 * 8)
    p["conv2_w"] = uniform(keys[2], (64, 32, 4, 4), 32 * 4 * 4)
    p["conv2_b"] = uniform(keys[3], (64,), 32 * 4 * 4)
    p["conv3_w"] = uniform(keys[4], (64, 64, 3, 3), 64 * 3 * 3)
    p["conv3_b"] = uniform(keys[5], (64,), 64 * 3 * 3)
    p["fc1_w"] = uniform(keys[6], (512, 64 * 7 * 7), 64 * 7 * 7)
    p["fc1_b"] = uniform(keys[7], (512,), 64 * 7 * 7)
    p["fc2_w"] = uniform(keys[8], (1, 512), 512)
    p["fc2_b"] = uniform(keys[9], (1,), 512)
    return p


def _conv_w_to_matmul(w, n_pad):
    out_ch, in_ch, k, _ = w.shape
    wm = w.transpose(2, 3, 1, 0).reshape(k * k * in_ch, out_ch)  # rows = (kh, kw, c)
    return jnp.pad(wm, ((0, 0), (0, n_pad - out_ch)))


def _bias_row(b, n_pad):
    return jnp.pad(b, (0, n_pad - b.shape[0])).reshape(1, n_pad)


def prepare_params(p):
    """One-time transform of PyTorch-layout params into kernel-ready layouts."""
    kp = {}
    kp["w1c"] = _conv_w_to_matmul(p["conv1_w"], LANE)        # [256, 128]
    kp["b1c"] = _bias_row(p["conv1_b"], LANE)
    kp["w2c"] = _conv_w_to_matmul(p["conv2_w"], LANE)        # [512, 128]
    kp["b2c"] = _bias_row(p["conv2_b"], LANE)
    kp["w3c"] = _conv_w_to_matmul(p["conv3_w"], 64)          # [576, 64] (stays in-kernel)
    kp["b3c"] = _bias_row(p["conv3_b"], 64)
    # fc1 consumes the NCHW flatten (feature = c*49 + oh*7 + ow); we feed the
    # conv3 result as (position, channel) slabs, so re-group the rows once here.
    kp["w_fc1"] = (p["fc1_w"].reshape(512, 64, 7, 7)
                   .transpose(2, 3, 1, 0).reshape(49, 64, 512))
    kp["b_fc1"] = p["fc1_b"].reshape(1, 512)
    kp["w_fc2"] = p["fc2_w"].reshape(1, 512)
    kp["b_fc2"] = p["fc2_b"].reshape(1, 1)
    return kp


# ---------------------------------------------------------------------------
# Forward pass (matches ValueNetwork.forward)
# ---------------------------------------------------------------------------
def value_network_forward(kp, x):
    B = x.shape[0]
    x = jnp.transpose(x, (0, 2, 3, 1))                       # NCHW -> NHWC (tiny, once)

    # conv1: 8x8, stride 4
    p1, oh1, ow1 = _im2col_nhwc(x, 8, 4)
    y1 = conv_matmul(p1.reshape(B * oh1 * ow1, -1), kp["w1c"], kp["b1c"])
    a1 = y1[:, :32].reshape(B, oh1, ow1, 32)

    # conv2: 4x4, stride 2
    p2, oh2, ow2 = _im2col_nhwc(a1, 4, 2)
    y2 = conv_matmul(p2.reshape(B * oh2 * ow2, -1), kp["w2c"], kp["b2c"])
    a2 = y2[:, :64].reshape(B, oh2, ow2, 64)

    # conv3 + fc1 + fc2, fused.  Patch rows ordered (position-major, batch-minor).
    p3, oh3, ow3 = _im2col_nhwc(a2, 3, 1)
    p3 = jnp.transpose(p3, (1, 2, 0, 3)).reshape(oh3 * ow3 * B, -1)
    value = conv3_fc(p3, kp["w3c"], kp["b3c"], kp["w_fc1"], kp["b_fc1"],
                     kp["w_fc2"], kp["b_fc2"], batch=B)
    return value                                             # [B, 1]


if __name__ == "__main__":
    # fc1 expects 64*7*7 features => spatial input must be 84x84 (Atari-style).
    key = jax.random.PRNGKey(0)
    k_x, k_p = jax.random.split(key)
    x = jax.random.normal(k_x, (2, 4, 84, 84), jnp.float32)

    params = init_params(k_p, in_channels=4)
    kparams = prepare_params(params)   # one-time weight re-layout (outside the jit)

    fwd = jax.jit(value_network_forward)
    value = fwd(kparams, x)
    jax.block_until_ready(value)

    assert value.shape == (2, 1) and value.dtype == jnp.float32
    print("KERNEL_OK")
</pallas_src>

<mosaic_0001>
module attributes {stable_mosaic.version = 11 : i64} {
  func.func @_matmul_bias_relu_kernel(%arg0: i32, %arg1: memref<800x256xf32, #tpu.memory_space<vmem>>, %arg2: memref<256x128xf32, #tpu.memory_space<vmem>>, %arg3: memref<1x128xf32, #tpu.memory_space<vmem>>, %arg4: memref<800x128xf32, #tpu.memory_space<vmem>>) attributes {dimension_semantics = [#tpu.dimension_semantics<arbitrary>], iteration_bounds = array<i64: 1>, scalar_prefetch = 0 : i64, scratch_operands = 0 : i64, tpu.core_type = #tpu.core_type<tc>, window_params = [{pipeline_mode = #tpu.pipeline_mode<synchronous>, transform_indices = @transform_0, window_bounds = array<i64: 800, 256>}, {pipeline_mode = #tpu.pipeline_mode<synchronous>, transform_indices = @transform_1, window_bounds = array<i64: 256, 128>}, {pipeline_mode = #tpu.pipeline_mode<synchronous>, transform_indices = @transform_2, window_bounds = array<i64: 1, 128>}, {pipeline_mode = #tpu.pipeline_mode<synchronous>, transform_indices = @transform_3, window_bounds = array<i64: 800, 128>}]} {
    %c0 = arith.constant 0 : index
    %c0_0 = arith.constant 0 : index
    %0 = vector.load %arg1[%c0, %c0_0] : memref<800x256xf32, #tpu.memory_space<vmem>>, vector<800x256xf32>
    %c0_1 = arith.constant 0 : index
    %c0_2 = arith.constant 0 : index
    %1 = vector.load %arg2[%c0_1, %c0_2] : memref<256x128xf32, #tpu.memory_space<vmem>>, vector<256x128xf32>
    %cst = arith.constant dense<0.000000e+00> : vector<800x128xf32>
    %2 = tpu.matmul %0, %1, %cst {dimension_numbers = #tpu.dot_dimension_numbers<[1], [0], [0], [1], [0, 0, 1, 1], [], []>} : vector<800x256xf32>, vector<256x128xf32>, vector<800x128xf32> -> vector<800x128xf32>
    %c0_3 = arith.constant 0 : index
    %c0_4 = arith.constant 0 : index
    %3 = vector.load %arg3[%c0_3, %c0_4] : memref<1x128xf32, #tpu.memory_space<vmem>>, vector<1x128xf32>
    %4 = vector.broadcast %3 : vector<1x128xf32> to vector<800x128xf32>
    %5 = arith.addf %2, %4 : vector<800x128xf32>
    %cst_5 = arith.constant 0.000000e+00 : f32
    %6 = vector.broadcast %cst_5 : f32 to vector<800x128xf32>
    %7 = arith.maximumf %5, %6 : vector<800x128xf32>
    %c0_6 = arith.constant 0 : index
    %c0_7 = arith.constant 0 : index
    %8 = vector.load %arg4[%c0_6, %c0_7] : memref<800x128xf32, #tpu.memory_space<vmem>>, vector<800x128xf32>
    tpu.vector_store %arg4[%c0_6, %c0_7], %7 {strides = array<i32>} : memref<800x128xf32, #tpu.memory_space<vmem>>, vector<800x128xf32>,
    return
  }
  func.func @transform_0(%arg0: i32) -> (i32, i32) {
    %c0_i32 = arith.constant 0 : i32
    %c0_i32_0 = arith.constant 0 : i32
    %c0_i32_1 = arith.constant 0 : i32
    return %c0_i32, %c0_i32_0 : i32, i32
  }
  func.func @transform_1(%arg0: i32) -> (i32, i32) {
    %c0_i32 = arith.constant 0 : i32
    %c0_i32_0 = arith.constant 0 : i32
    %c0_i32_1 = arith.constant 0 : i32
    return %c0_i32, %c0_i32_0 : i32, i32
  }
  func.func @transform_2(%arg0: i32) -> (i32, i32) {
    %c0_i32 = arith.constant 0 : i32
    %c0_i32_0 = arith.constant 0 : i32
    %c0_i32_1 = arith.constant 0 : i32
    return %c0_i32, %c0_i32_0 : i32, i32
  }
  func.func @transform_3(%arg0: i32) -> (i32, i32) {
    %c0_i32 = arith.constant 0 : i32
    %c0_i32_0 = arith.constant 0 : i32
    %c0_i32_1 = arith.constant 0 : i32
    return %c0_i32, %c0_i32_0 : i32, i32
  }
}

module attributes {stable_mosaic.version = 11 : i64} {
  func.func @_matmul_bias_relu_kernel(%arg0: i32, %arg1: memref<162x512xf32, #tpu.memory_space<vmem>>, %arg2: memref<512x128xf32, #tpu.memory_space<vmem>>, %arg3: memref<1x128xf32, #tpu.memory_space<vmem>>, %arg4: memref<162x128xf32, #tpu.memory_space<vmem>>) attributes {dimension_semantics = [#tpu.dimension_semantics<arbitrary>], iteration_bounds = array<i64: 1>, scalar_prefetch = 0 : i64, scratch_operands = 0 : i64, tpu.core_type = #tpu.core_type<tc>, window_params = [{pipeline_mode = #tpu.pipeline_mode<synchronous>, transform_indices = @transform_0, window_bounds = array<i64: 162, 512>}, {pipeline_mode = #tpu.pipeline_mode<synchronous>, transform_indices = @transform_1, window_bounds = array<i64: 512, 128>}, {pipeline_mode = #tpu.pipeline_mode<synchronous>, transform_indices = @transform_2, window_bounds = array<i64: 1, 128>}, {pipeline_mode = #tpu.pipeline_mode<synchronous>, transform_indices = @transform_3, window_bounds = array<i64: 162, 128>}]} {
    %c0 = arith.constant 0 : index
    %c0_0 = arith.constant 0 : index
    %0 = vector.load %arg1[%c0, %c0_0] : memref<162x512xf32, #tpu.memory_space<vmem>>, vector<162x512xf32>
    %c0_1 = arith.constant 0 : index
    %c0_2 = arith.constant 0 : index
    %1 = vector.load %arg2[%c0_1, %c0_2] : memref<512x128xf32, #tpu.memory_space<vmem>>, vector<512x128xf32>
    %cst = arith.constant dense<0.000000e+00> : vector<162x128xf32>
    %2 = tpu.matmul %0, %1, %cst {dimension_numbers = #tpu.dot_dimension_numbers<[1], [0], [0], [1], [0, 0, 1, 1], [], []>} : vector<162x512xf32>, vector<512x128xf32>, vector<162x128xf32> -> vector<162x128xf32>
    %c0_3 = arith.constant 0 : index
    %c0_4 = arith.constant 0 : index
    %3 = vector.load %arg3[%c0_3, %c0_4] : memref<1x128xf32, #tpu.memory_space<vmem>>, vector<1x128xf32>
    %4 = vector.broadcast %3 : vector<1x128xf32> to vector<162x128xf32>
    %5 = arith.addf %2, %4 : vector<162x128xf32>
    %cst_5 = arith.constant 0.000000e+00 : f32
    %6 = vector.broadcast %cst_5 : f32 to vector<162x128xf32>
    %7 = arith.maximumf %5, %6 : vector<162x128xf32>
    %c0_6 = arith.constant 0 : index
    %c0_7 = arith.constant 0 : index
    %8 = vector.load %arg4[%c0_6, %c0_7] : memref<162x128xf32, #tpu.memory_space<vmem>>, vector<162x128xf32>
    tpu.vector_store %arg4[%c0_6, %c0_7], %7 {strides = array<i32>} : memref<162x128xf32, #tpu.memory_space<vmem>>, vector<162x128xf32>,
    return
  }
  func.func @transform_0(%arg0: i32) -> (i32, i32) {
    %c0_i32 = arith.constant 0 : i32
    %c0_i32_0 = arith.constant 0 : i32
    %c0_i32_1 = arith.constant 0 : i32
    return %c0_i32, %c0_i32_0 : i32, i32
  }
  func.func @transform_1(%arg0: i32) -> (i32, i32) {
    %c0_i32 = arith.constant 0 : i32
    %c0_i32_0 = arith.constant 0 : i32
    %c0_i32_1 = arith.constant 0 : i32
    return %c0_i32, %c0_i32_0 : i32, i32
  }
  func.func @transform_2(%arg0: i32) -> (i32, i32) {
    %c0_i32 = arith.constant 0 : i32
    %c0_i32_0 = arith.constant 0 : i32
    %c0_i32_1 = arith.constant 0 : i32
    return %c0_i32, %c0_i32_0 : i32, i32
  }
  func.func @transform_3(%arg0: i32) -> (i32, i32) {
    %c0_i32 = arith.constant 0 : i32
    %c0_i32_0 = arith.constant 0 : i32
    %c0_i32_1 = arith.constant 0 : i32
    return %c0_i32, %c0_i32_0 : i32, i32
  }
}

module attributes {stable_mosaic.version = 11 : i64} {
  func.func @_conv3_fc_kernel(%arg0: i32, %arg1: memref<98x576xf32, #tpu.memory_space<vmem>>, %arg2: memref<576x64xf32, #tpu.memory_space<vmem>>, %arg3: memref<1x64xf32, #tpu.memory_space<vmem>>, %arg4: memref<49x64x512xf32, #tpu.memory_space<vmem>>, %arg5: memref<1x512xf32, #tpu.memory_space<vmem>>, %arg6: memref<1x512xf32, #tpu.memory_space<vmem>>, %arg7: memref<1x1xf32, #tpu.memory_space<vmem>>, %arg8: memref<2x1xf32, #tpu.memory_space<vmem>>) attributes {dimension_semantics = [#tpu.dimension_semantics<arbitrary>], iteration_bounds = array<i64: 1>, scalar_prefetch = 0 : i64, scratch_operands = 0 : i64, tpu.core_type = #tpu.core_type<tc>, window_params = [{pipeline_mode = #tpu.pipeline_mode<synchronous>, transform_indices = @transform_0, window_bounds = array<i64: 98, 576>}, {pipeline_mode = #tpu.pipeline_mode<synchronous>, transform_indices = @transform_1, window_bounds = array<i64: 576, 64>}, {pipeline_mode = #tpu.pipeline_mode<synchronous>, transform_indices = @transform_2, window_bounds = array<i64: 1, 64>}, {pipeline_mode = #tpu.pipeline_mode<synchronous>, transform_indices = @transform_3, window_bounds = array<i64: 49, 64, 512>}, {pipeline_mode = #tpu.pipeline_mode<synchronous>, transform_indices = @transform_4, window_bounds = array<i64: 1, 512>}, {pipeline_mode = #tpu.pipeline_mode<synchronous>, transform_indices = @transform_5, window_bounds = array<i64: 1, 512>}, {pipeline_mode = #tpu.pipeline_mode<synchronous>, transform_indices = @transform_6, window_bounds = array<i64: 1, 1>}, {pipeline_mode = #tpu.pipeline_mode<synchronous>, transform_indices = @transform_7, window_bounds = array<i64: 2, 1>}]} {
    %c0 = arith.constant 0 : index
    %c0_0 = arith.constant 0 : index
    %0 = vector.load %arg1[%c0, %c0_0] : memref<98x576xf32, #tpu.memory_space<vmem>>, vector<98x576xf32>
    %c0_1 = arith.constant 0 : index
    %c0_2 = arith.constant 0 : index
    %1 = vector.load %arg2[%c0_1, %c0_2] : memref<576x64xf32, #tpu.memory_space<vmem>>, vector<576x64xf32>
    %cst = arith.constant dense<0.000000e+00> : vector<98x64xf32>
    %2 = tpu.matmul %0, %1, %cst {dimension_numbers = #tpu.dot_dimension_numbers<[1], [0], [0], [1], [0, 0, 1, 1], [], []>} : vector<98x576xf32>, vector<576x64xf32>, vector<98x64xf32> -> vector<98x64xf32>
    %c0_3 = arith.constant 0 : index
    %c0_4 = arith.constant 0 : index
    %3 = vector.load %arg3[%c0_3, %c0_4] : memref<1x64xf32, #tpu.memory_space<vmem>>, vector<1x64xf32>
    %4 = vector.broadcast %3 : vector<1x64xf32> to vector<98x64xf32>
    %5 = arith.addf %2, %4 : vector<98x64xf32>
    %cst_5 = arith.constant 0.000000e+00 : f32
    %6 = vector.broadcast %cst_5 : f32 to vector<98x64xf32>
    %7 = arith.maximumf %5, %6 : vector<98x64xf32>
    %cst_6 = arith.constant 0.000000e+00 : f32
    %8 = vector.broadcast %cst_6 : f32 to vector<2x512xf32>
    %9 = vector.extract_strided_slice %7 {offsets = [0, 0], sizes = [2, 64], strides = [1, 1]} : vector<98x64xf32> to vector<2x64xf32>
    %c0_7 = arith.constant 0 : index
    %c0_8 = arith.constant 0 : index
    %c0_9 = arith.constant 0 : index
    %10 = vector.load %arg4[%c0_7, %c0_8, %c0_9] : memref<49x64x512xf32, #tpu.memory_space<vmem>>, vector<1x64x512xf32>
    %11 = vector.shape_cast %10 : vector<1x64x512xf32> to vector<64x512xf32>
    %cst_10 = arith.constant dense<0.000000e+00> : vector<2x512xf32>
    %12 = tpu.matmul %9, %11, %cst_10 {dimension_numbers = #tpu.dot_dimension_numbers<[1], [0], [0], [1], [0, 0, 1, 1], [], []>} : vector<2x64xf32>, vector<64x512xf32>, vector<2x512xf32> -> vector<2x512xf32>
    %13 = arith.addf %8, %12 : vector<2x512xf32>
    %14 = vector.extract_strided_slice %7 {offsets = [2, 0], sizes = [2, 64], strides = [1, 1]} : vector<98x64xf32> to vector<2x64xf32>
    %c1 = arith.constant 1 : index
    %c0_11 = arith.constant 0 : index
    %c0_12 = arith.constant 0 : index
    %15 = vector.load %arg4[%c1, %c0_11, %c0_12] : memref<49x64x512xf32, #tpu.memory_space<vmem>>, vector<1x64x512xf32>
    %16 = vector.shape_cast %15 : vector<1x64x512xf32> to vector<64x512xf32>
    %cst_13 = arith.constant dense<0.000000e+00> : vector<2x512xf32>
    %17 = tpu.matmul %14, %16, %cst_13 {dimension_numbers = #tpu.dot_dimension_numbers<[1], [0], [0], [1], [0, 0, 1, 1], [], []>} : vector<2x64xf32>, vector<64x512xf32>, vector<2x512xf32> -> vector<2x512xf32>
    %18 = arith.addf %13, %17 : vector<2x512xf32>
    %19 = vector.extract_strided_slice %7 {offsets = [4, 0], sizes = [2, 64], strides = [1, 1]} : vector<98x64xf32> to vector<2x64xf32>
    %c2 = arith.constant 2 : index
    %c0_14 = arith.constant 0 : index
    %c0_15 = arith.constant 0 : index
    %20 = vector.load %arg4[%c2, %c0_14, %c0_15] : memref<49x64x512xf32, #tpu.memory_space<vmem>>, vector<1x64x512xf32>
    %21 = vector.shape_cast %20 : vector<1x64x512xf32> to vector<64x512xf32>
    %cst_16 = arith.constant dense<0.000000e+00> : vector<2x512xf32>
    %22 = tpu.matmul %19, %21, %cst_16 {dimension_numbers = #tpu.dot_dimension_numbers<[1], [0], [0], [1], [0, 0, 1, 1], [], []>} : vector<2x64xf32>, vector<64x512xf32>, vector<2x512xf32> -> vector<2x512xf32>
    %23 = arith.addf %18, %22 : vector<2x512xf32>
    %24 = vector.extract_strided_slice %7 {offsets = [6, 0], sizes = [2, 64], strides = [1, 1]} : vector<98x64xf32> to vector<2x64xf32>
    %c3 = arith.constant 3 : index
    %c0_17 = arith.constant 0 : index
    %c0_18 = arith.constant 0 : index
    %25 = vector.load %arg4[%c3, %c0_17, %c0_18] : memref<49x64x512xf32, #tpu.memory_space<vmem>>, vector<1x64x512xf32>
    %26 = vector.shape_cast %25 : vector<1x64x512xf32> to vector<64x512xf32>
    %cst_19 = arith.constant dense<0.000000e+00> : vector<2x512xf32>
    %27 = tpu.matmul %24, %26, %cst_19 {dimension_numbers = #tpu.dot_dimension_numbers<[1], [0], [0], [1], [0, 0, 1, 1], [], []>} : vector<2x64xf32>, vector<64x512xf32>, vector<2x512xf32> -> vector<2x512xf32>
    %28 = arith.addf %23, %27 : vector<2x512xf32>
    %29 = vector.extract_strided_slice %7 {offsets = [8, 0], sizes = [2, 64], strides = [1, 1]} : vector<98x64xf32> to vector<2x64xf32>
    %c4 = arith.constant 4 : index
    %c0_20 = arith.constant 0 : index
    %c0_21 = arith.constant 0 : index
    %30 = vector.load %arg4[%c4, %c0_20, %c0_21] : memref<49x64x512xf32, #tpu.memory_space<vmem>>, vector<1x64x512xf32>
    %31 = vector.shape_cast %30 : vector<1x64x512xf32> to vector<64x512xf32>
    %cst_22 = arith.constant dense<0.000000e+00> : vector<2x512xf32>
    %32 = tpu.matmul %29, %31, %cst_22 {dimension_numbers = #tpu.dot_dimension_numbers<[1], [0], [0], [1], [0, 0, 1, 1], [], []>} : vector<2x64xf32>, vector<64x512xf32>, vector<2x512xf32> -> vector<2x512xf32>
    %33 = arith.addf %28, %32 : vector<2x512xf32>
    %34 = vector.extract_strided_slice %7 {offsets = [10, 0], sizes = [2, 64], strides = [1, 1]} : vector<98x64xf32> to vector<2x64xf32>
    %c5 = arith.constant 5 : index
    %c0_23 = arith.constant 0 : index
    %c0_24 = arith.constant 0 : index
    %35 = vector.load %arg4[%c5, %c0_23, %c0_24] : memref<49x64x512xf32, #tpu.memory_space<vmem>>, vector<1x64x512xf32>
    %36 = vector.shape_cast %35 : vector<1x64x512xf32> to vector<64x512xf32>
    %cst_25 = arith.constant dense<0.000000e+00> : vector<2x512xf32>
    %37 = tpu.matmul %34, %36, %cst_25 {dimension_numbers = #tpu.dot_dimension_numbers<[1], [0], [0], [1], [0, 0, 1, 1], [], []>} : vector<2x64xf32>, vector<64x512xf32>, vector<2x512xf32> -> vector<2x512xf32>
    %38 = arith.addf %33, %37 : vector<2x512xf32>
    %39 = vector.extract_strided_slice %7 {offsets = [12, 0], sizes = [2, 64], strides = [1, 1]} : vector<98x64xf32> to vector<2x64xf32>
    %c6 = arith.constant 6 : index
    %c0_26 = arith.constant 0 : index
    %c0_27 = arith.constant 0 : index
    %40 = vector.load %arg4[%c6, %c0_26, %c0_27] : memref<49x64x512xf32, #tpu.memory_space<vmem>>, vector<1x64x512xf32>
    %41 = vector.shape_cast %40 : vector<1x64x512xf32> to vector<64x512xf32>
    %cst_28 = arith.constant dense<0.000000e+00> : vector<2x512xf32>
    %42 = tpu.matmul %39, %41, %cst_28 {dimension_numbers = #tpu.dot_dimension_numbers<[1], [0], [0], [1], [0, 0, 1, 1], [], []>} : vector<2x64xf32>, vector<64x512xf32>, vector<2x512xf32> -> vector<2x512xf32>
    %43 = arith.addf %38, %42 : vector<2x512xf32>
    %44 = vector.extract_strided_slice %7 {offsets = [14, 0], sizes = [2, 64], strides = [1, 1]} : vector<98x64xf32> to vector<2x64xf32>
    %c7 = arith.constant 7 : index
    %c0_29 = arith.constant 0 : index
    %c0_30 = arith.constant 0 : index
    %45 = vector.load %arg4[%c7, %c0_29, %c0_30] : memref<49x64x512xf32, #tpu.memory_space<vmem>>, vector<1x64x512xf32>
    %46 = vector.shape_cast %45 : vector<1x64x512xf32> to vector<64x512xf32>
    %cst_31 = arith.constant dense<0.000000e+00> : vector<2x512xf32>
    %47 = tpu.matmul %44, %46, %cst_31 {dimension_numbers = #tpu.dot_dimension_numbers<[1], [0], [0], [1], [0, 0, 1, 1], [], []>} : vector<2x64xf32>, vector<64x512xf32>, vector<2x512xf32> -> vector<2x512xf32>
    %48 = arith.addf %43, %47 : vector<2x512xf32>
    %49 = vector.extract_strided_slice %7 {offsets = [16, 0], sizes = [2, 64], strides = [1, 1]} : vector<98x64xf32> to vector<2x64xf32>
    %c8 = arith.constant 8 : index
    %c0_32 = arith.constant 0 : index
    %c0_33 = arith.constant 0 : index
    %50 = vector.load %arg4[%c8, %c0_32, %c0_33] : memref<49x64x512xf32, #tpu.memory_space<vmem>>, vector<1x64x512xf32>
    %51 = vector.shape_cast %50 : vector<1x64x512xf32> to vector<64x512xf32>
    %cst_34 = arith.constant dense<0.000000e+00> : vector<2x512xf32>
    %52 = tpu.matmul %49, %51, %cst_34 {dimension_numbers = #tpu.dot_dimension_numbers<[1], [0], [0], [1], [0, 0, 1, 1], [], []>} : vector<2x64xf32>, vector<64x512xf32>, vector<2x512xf32> -> vector<2x512xf32>
    %53 = arith.addf %48, %52 : vector<2x512xf32>
    %54 = vector.extract_strided_slice %7 {offsets = [18, 0], sizes = [2, 64], strides = [1, 1]} : vector<98x64xf32> to vector<2x64xf32>
    %c9 = arith.constant 9 : index
    %c0_35 = arith.constant 0 : index
    %c0_36 = arith.constant 0 : index
    %55 = vector.load %arg4[%c9, %c0_35, %c0_36] : memref<49x64x512xf32, #tpu.memory_space<vmem>>, vector<1x64x512xf32>
    %56 = vector.shape_cast %55 : vector<1x64x512xf32> to vector<64x512xf32>
    %cst_37 = arith.constant dense<0.000000e+00> : vector<2x512xf32>
    %57 = tpu.matmul %54, %56, %cst_37 {dimension_numbers = #tpu.dot_dimension_numbers<[1], [0], [0], [1], [0, 0, 1, 1], [], []>} : vector<2x64xf32>, vector<64x512xf32>, vector<2x512xf32> -> vector<2x512xf32>
    %58 = arith.addf %53, %57 : vector<2x512xf32>
    %59 = vector.extract_strided_slice %7 {offsets = [20, 0], sizes = [2, 64], strides = [1, 1]} : vector<98x64xf32> to vector<2x64xf32>
    %c10 = arith.constant 10 : index
    %c0_38 = arith.constant 0 : index
    %c0_39 = arith.constant 0 : index
    %60 = vector.load %arg4[%c10, %c0_38, %c0_39] : memref<49x64x512xf32, #tpu.memory_space<vmem>>, vector<1x64x512xf32>
    %61 = vector.shape_cast %60 : vector<1x64x512xf32> to vector<64x512xf32>
    %cst_40 = arith.constant dense<0.000000e+00> : vector<2x512xf32>
    %62 = tpu.matmul %59, %61, %cst_40 {dimension_numbers = #tpu.dot_dimension_numbers<[1], [0], [0], [1], [0, 0, 1, 1], [], []>} : vector<2x64xf32>, vector<64x512xf32>, vector<2x512xf32> -> vector<2x512xf32>
    %63 = arith.addf %58, %62 : vector<2x512xf32>
    %64 = vector.extract_strided_slice %7 {offsets = [22, 0], sizes = [2, 64], strides = [1, 1]} : vector<98x64xf32> to vector<2x64xf32>
    %c11 = arith.constant 11 : index
    %c0_41 = arith.constant 0 : index
    %c0_42 = arith.constant 0 : index
    %65 = vector.load %arg4[%c11, %c0_41, %c0_42] : memref<49x64x512xf32, #tpu.memory_space<vmem>>, vector<1x64x512xf32>
    %66 = vector.shape_cast %65 : vector<1x64x512xf32> to vector<64x512xf32>
    %cst_43 = arith.constant dense<0.000000e+00> : vector<2x512xf32>
    %67 = tpu.matmul %64, %66, %cst_43 {dimension_numbers = #tpu.dot_dimension_numbers<[1], [0], [0], [1], [0, 0, 1, 1], [], []>} : vector<2x64xf32>, vector<64x512xf32>, vector<2x512xf32> -> vector<2x512xf32>
    %68 = arith.addf %63, %67 : vector<2x512xf32>
    %69 = vector.extract_strided_slice %7 {offsets = [24, 0], sizes = [2, 64], strides = [1, 1]} : vector<98x64xf32> to vector<2x64xf32>
    %c12 = arith.constant 12 : index
    %c0_44 = arith.constant 0 : index
    %c0_45 = arith.constant 0 : index
    %70 = vector.load %arg4[%c12, %c0_44, %c0_45] : memref<49x64x512xf32, #tpu.memory_space<vmem>>, vector<1x64x512xf32>
    %71 = vector.shape_cast %70 : vector<1x64x512xf32> to vector<64x512xf32>
    %cst_46 = arith.constant dense<0.000000e+00> : vector<2x512xf32>
    %72 = tpu.matmul %69, %71, %cst_46 {dimension_numbers = #tpu.dot_dimension_numbers<[1], [0], [0], [1], [0, 0, 1, 1], [], []>} : vector<2x64xf32>, vector<64x512xf32>, vector<2x512xf32> -> vector<2x512xf32>
    %73 = arith.addf %68, %72 : vector<2x512xf32>
    %74 = vector.extract_strided_slice %7 {offsets = [26, 0], sizes = [2, 64], strides = [1, 1]} : vector<98x64xf32> to vector<2x64xf32>
    %c13 = arith.constant 13 : index
    %c0_47 = arith.constant 0 : index
    %c0_48 = arith.constant 0 : index
    %75 = vector.load %arg4[%c13, %c0_47, %c0_48] : memref<49x64x512xf32, #tpu.memory_space<vmem>>, vector<1x64x512xf32>
    %76 = vector.shape_cast %75 : vector<1x64x512xf32> to vector<64x512xf32>
    %cst_49 = arith.constant dense<0.000000e+00> : vector<2x512xf32>
    %77 = tpu.matmul %74, %76, %cst_49 {dimension_numbers = #tpu.dot_dimension_numbers<[1], [0], [0], [1], [0, 0, 1, 1], [], []>} : vector<2x64xf32>, vector<64x512xf32>, vector<2x512xf32> -> vector<2x512xf32>
    %78 = arith.addf %73, %77 : vector<2x512xf32>
    %79 = vector.extract_strided_slice %7 {offsets = [28, 0], sizes = [2, 64], strides = [1, 1]} : vector<98x64xf32> to vector<2x64xf32>
    %c14 = arith.constant 14 : index
    %c0_50 = arith.constant 0 : index
    %c0_51 = arith.constant 0 : index
    %80 = vector.load %arg4[%c14, %c0_50, %c0_51] : memref<49x64x512xf32, #tpu.memory_space<vmem>>, vector<1x64x512xf32>
    %81 = vector.shape_cast %80 : vector<1x64x512xf32> to vector<64x512xf32>
    %cst_52 = arith.constant dense<0.000000e+00> : vector<2x512xf32>
    %82 = tpu.matmul %79, %81, %cst_52 {dimension_numbers = #tpu.dot_dimension_numbers<[1], [0], [0], [1], [0, 0, 1, 1], [], []>} : vector<2x64xf32>, vector<64x512xf32>, vector<2x512xf32> -> vector<2x512xf32>
    %83 = arith.addf %78, %82 : vector<2x512xf32>
    %84 = vector.extract_strided_slice %7 {offsets = [30, 0], sizes = [2, 64], strides = [1, 1]} : vector<98x64xf32> to vector<2x64xf32>
    %c15 = arith.constant 15 : index
    %c0_53 = arith.constant 0 : index
    %c0_54 = arith.constant 0 : index
    %85 = vector.load %arg4[%c15, %c0_53, %c0_54] : memref<49x64x512xf32, #tpu.memory_space<vmem>>, vector<1x64x512xf32>
    %86 = vector.shape_cast %85 : vector<1x64x512xf32> to vector<64x512xf32>
    %cst_55 = arith.constant dense<0.000000e+00> : vector<2x512xf32>
    %87 = tpu.matmul %84, %86, %cst_55 {dimension_numbers = #tpu.dot_dimension_numbers<[1], [0], [0], [1], [0, 0, 1, 1], [], []>} : vector<2x64xf32>, vector<64x512xf32>, vector<2x512xf32> -> vector<2x512xf32>
    %88 = arith.addf %83, %87 : vector<2x512xf32>
    %89 = vector.extract_strided_slice %7 {offsets = [32, 0], sizes = [2, 64], strides = [1, 1]} : vector<98x64xf32> to vector<2x64xf32>
    %c16 = arith.constant 16 : index
    %c0_56 = arith.constant 0 : index
    %c0_57 = arith.constant 0 : index
    %90 = vector.load %arg4[%c16, %c0_56, %c0_57] : memref<49x64x512xf32, #tpu.memory_space<vmem>>, vector<1x64x512xf32>
    %91 = vector.shape_cast %90 : vector<1x64x512xf32> to vector<64x512xf32>
    %cst_58 = arith.constant dense<0.000000e+00> : vector<2x512xf32>
    %92 = tpu.matmul %89, %91, %cst_58 {dimension_numbers = #tpu.dot_dimension_numbers<[1], [0], [0], [1], [0, 0, 1, 1], [], []>} : vector<2x64xf32>, vector<64x512xf32>, vector<2x512xf32> -> vector<2x512xf32>
    %93 = arith.addf %88, %92 : vector<2x512xf32>
    %94 = vector.extract_strided_slice %7 {offsets = [34, 0], sizes = [2, 64], strides = [1, 1]} : vector<98x64xf32> to vector<2x64xf32>
    %c17 = arith.constant 17 : index
    %c0_59 = arith.constant 0 : index
    %c0_60 = arith.constant 0 : index
    %95 = vector.load %arg4[%c17, %c0_59, %c0_60] : memref<49x64x512xf32, #tpu.memory_space<vmem>>, vector<1x64x512xf32>
    %96 = vector.shape_cast %95 : vector<1x64x512xf32> to vector<64x512xf32>
    %cst_61 = arith.constant dense<0.000000e+00> : vector<2x512xf32>
    %97 = tpu.matmul %94, %96, %cst_61 {dimension_numbers = #tpu.dot_dimension_numbers<[1], [0], [0], [1], [0, 0, 1, 1], [], []>} : vector<2x64xf32>, vector<64x512xf32>, vector<2x512xf32> -> vector<2x512xf32>
    %98 = arith.addf %93, %97 : vector<2x512xf32>
    %99 = vector.extract_strided_slice %7 {offsets = [36, 0], sizes = [2, 64], strides = [1, 1]} : vector<98x64xf32> to vector<2x64xf32>
    %c18 = arith.constant 18 : index
    %c0_62 = arith.constant 0 : index
    %c0_63 = arith.constant 0 : index
    %100 = vector.load %arg4[%c18, %c0_62, %c0_63] : memref<49x64x512xf32, #tpu.memory_space<vmem>>, vector<1x64x512xf32>
    %101 = vector.shape_cast %100 : vector<1x64x512xf32> to vector<64x512xf32>
    %cst_64 = arith.constant dense<0.000000e+00> : vector<2x512xf32>
    %102 = tpu.matmul %99, %101, %cst_64 {dimension_numbers = #tpu.dot_dimension_numbers<[1], [0], [0], [1], [0, 0, 1, 1], [], []>} : vector<2x64xf32>, vector<64x512xf32>, vector<2x512xf32> -> vector<2x512xf32>
    %103 = arith.addf %98, %102 : vector<2x512xf32>
    %104 = vector.extract_strided_slice %7 {offsets = [38, 0], sizes = [2, 64], strides = [1, 1]} : vector<98x64xf32> to vector<2x64xf32>
    %c19 = arith.constant 19 : index
    %c0_65 = arith.constant 0 : index
    %c0_66 = arith.constant 0 : index
    %105 = vector.load %arg4[%c19, %c0_65, %c0_66] : memref<49x64x512xf32, #tpu.memory_space<vmem>>, vector<1x64x512xf32>
    %106 = vector.shape_cast %105 : vector<1x64x512xf32> to vector<64x512xf32>
    %cst_67 = arith.constant dense<0.000000e+00> : vector<2x512xf32>
    %107 = tpu.matmul %104, %106, %cst_67 {dimension_numbers = #tpu.dot_dimension_numbers<[1], [0], [0], [1], [0, 0, 1, 1], [], []>} : vector<2x64xf32>, vector<64x512xf32>, vector<2x512xf32> -> vector<2x512xf32>
    %108 = arith.addf %103, %107 : vector<2x512xf32>
    %109 = vector.extract_strided_slice %7 {offsets = [40, 0], sizes = [2, 64], strides = [1, 1]} : vector<98x64xf32> to vector<2x64xf32>
    %c20 = arith.constant 20 : index
    %c0_68 = arith.constant 0 : index
    %c0_69 = arith.constant 0 : index
    %110 = vector.load %arg4[%c20, %c0_68, %c0_69] : memref<49x64x512xf32, #tpu.memory_space<vmem>>, vector<1x64x512xf32>
    %111 = vector.shape_cast %110 : vector<1x64x512xf32> to vector<64x512xf32>
    %cst_70 = arith.constant dense<0.000000e+00> : vector<2x512xf32>
    %112 = tpu.matmul %109, %111, %cst_70 {dimension_numbers = #tpu.dot_dimension_numbers<[1], [0], [0], [1], [0, 0, 1, 1], [], []>} : vector<2x64xf32>, vector<64x512xf32>, vector<2x512xf32> -> vector<2x512xf32>
    %113 = arith.addf %108, %112 : vector<2x512xf32>
    %114 = vector.extract_strided_slice %7 {offsets = [42, 0], sizes = [2, 64], strides = [1, 1]} : vector<98x64xf32> to vector<2x64xf32>
    %c21 = arith.constant 21 : index
    %c0_71 = arith.constant 0 : index
    %c0_72 = arith.constant 0 : index
    %115 = vector.load %arg4[%c21, %c0_71, %c0_72] : memref<49x64x512xf32, #tpu.memory_space<vmem>>, vector<1x64x512xf32>
    %116 = vector.shape_cast %115 : vector<1x64x512xf32> to vector<64x512xf32>
    %cst_73 = arith.constant dense<0.000000e+00> : vector<2x512xf32>
    %117 = tpu.matmul %114, %116, %cst_73 {dimension_numbers = #tpu.dot_dimension_numbers<[1], [0], [0], [1], [0, 0, 1, 1], [], []>} : vector<2x64xf32>, vector<64x512xf32>, vector<2x512xf32> -> vector<2x512xf32>
    %118 = arith.addf %113, %117 : vector<2x512xf32>
    %119 = vector.extract_strided_slice %7 {offsets = [44, 0], sizes = [2, 64], strides = [1, 1]} : vector<98x64xf32> to vector<2x64xf32>
    %c22 = arith.constant 22 : index
    %c0_74 = arith.constant 0 : index
    %c0_75 = arith.constant 0 : index
    %120 = vector.load %arg4[%c22, %c0_74, %c0_75] : memref<49x64x512xf32, #tpu.memory_space<vmem>>, vector<1x64x512xf32>
    %121 = vector.shape_cast %120 : vector<1x64x512xf32> to vector<64x512xf32>
    %cst_76 = arith.constant dense<0.000000e+00> : vector<2x512xf32>
    %122 = tpu.matmul %119, %121, %cst_76 {dimension_numbers = #tpu.dot_dimension_numbers<[1], [0], [0], [1], [0, 0, 1, 1], [], []>} : vector<2x64xf32>, vector<64x512xf32>, vector<2x512xf32> -> vector<2x512xf32>
    %123 = arith.addf %118, %122 : vector<2x512xf32>
    %124 = vector.extract_strided_slice %7 {offsets = [46, 0], sizes = [2, 64], strides = [1, 1]} : vector<98x64xf32> to vector<2x64xf32>
    %c23 = arith.constant 23 : index
    %c0_77 = arith.constant 0 : index
    %c0_78 = arith.constant 0 : index
    %125 = vector.load %arg4[%c23, %c0_77, %c0_78] : memref<49x64x512xf32, #tpu.memory_space<vmem>>, vector<1x64x512xf32>
    %126 = vector.shape_cast %125 : vector<1x64x512xf32> to vector<64x512xf32>
    %cst_79 = arith.constant dense<0.000000e+00> : vector<2x512xf32>
    %127 = tpu.matmul %124, %126, %cst_79 {dimension_numbers = #tpu.dot_dimension_numbers<[1], [0], [0], [1], [0, 0, 1, 1], [], []>} : vector<2x64xf32>, vector<64x512xf32>, vector<2x512xf32> -> vector<2x512xf32>
    %128 = arith.addf %123, %127 : vector<2x512xf32>
    %129 = vector.extract_strided_slice %7 {offsets = [48, 0], sizes = [2, 64], strides = [1, 1]} : vector<98x64xf32> to vector<2x64xf32>
    %c24 = arith.constant 24 : index
    %c0_80 = arith.constant 0 : index
    %c0_81 = arith.constant 0 : index
    %130 = vector.load %arg4[%c24, %c0_80, %c0_81] : memref<49x64x512xf32, #tpu.memory_space<vmem>>, vector<1x64x512xf32>
    %131 = vector.shape_cast %130 : vector<1x64x512xf32> to vector<64x512xf32>
    %cst_82 = arith.constant dense<0.000000e+00> : vector<2x512xf32>
    %132 = tpu.matmul %129, %131, %cst_82 {dimension_numbers = #tpu.dot_dimension_numbers<[1], [0], [0], [1], [0, 0, 1, 1], [], []>} : vector<2x64xf32>, vector<64x512xf32>, vector<2x512xf32> -> vector<2x512xf32>
    %133 = arith.addf %128, %132 : vector<2x512xf32>
    %134 = vector.extract_strided_slice %7 {offsets = [50, 0], sizes = [2, 64], strides = [1, 1]} : vector<98x64xf32> to vector<2x64xf32>
    %c25 = arith.constant 25 : index
    %c0_83 = arith.constant 0 : index
    %c0_84 = arith.constant 0 : index
    %135 = vector.load %arg4[%c25, %c0_83, %c0_84] : memref<49x64x512xf32, #tpu.memory_space<vmem>>, vector<1x64x512xf32>
    %136 = vector.shape_cast %135 : vector<1x64x512xf32> to vector<64x512xf32>
    %cst_85 = arith.constant dense<0.000000e+00> : vector<2x512xf32>
    %137 = tpu.matmul %134, %136, %cst_85 {dimension_numbers = #tpu.dot_dimension_numbers<[1], [0], [0], [1], [0, 0, 1, 1], [], []>} : vector<2x64xf32>, vector<64x512xf32>, vector<2x512xf32> -> vector<2x512xf32>
    %138 = arith.addf %133, %137 : vector<2x512xf32>
    %139 = vector.extract_strided_slice %7 {offsets = [52, 0], sizes = [2, 64], strides = [1, 1]} : vector<98x64xf32> to vector<2x64xf32>
    %c26 = arith.constant 26 : index
    %c0_86 = arith.constant 0 : index
    %c0_87 = arith.constant 0 : index
    %140 = vector.load %arg4[%c26, %c0_86, %c0_87] : memref<49x64x512xf32, #tpu.memory_space<vmem>>, vector<1x64x512xf32>
    %141 = vector.shape_cast %140 : vector<1x64x512xf32> to vector<64x512xf32>
    %cst_88 = arith.constant dense<0.000000e+00> : vector<2x512xf32>
    %142 = tpu.matmul %139, %141, %cst_88 {dimension_numbers = #tpu.dot_dimension_numbers<[1], [0], [0], [1], [0, 0, 1, 1], [], []>} : vector<2x64xf32>, vector<64x512xf32>, vector<2x512xf32> -> vector<2x512xf32>
    %143 = arith.addf %138, %142 : vector<2x512xf32>
    %144 = vector.extract_strided_slice %7 {offsets = [54, 0], sizes = [2, 64], strides = [1, 1]} : vector<98x64xf32> to vector<2x64xf32>
    %c27 = arith.constant 27 : index
    %c0_89 = arith.constant 0 : index
    %c0_90 = arith.constant 0 : index
    %145 = vector.load %arg4[%c27, %c0_89, %c0_90] : memref<49x64x512xf32, #tpu.memory_space<vmem>>, vector<1x64x512xf32>
    %146 = vector.shape_cast %145 : vector<1x64x512xf32> to vector<64x512xf32>
    %cst_91 = arith.constant dense<0.000000e+00> : vector<2x512xf32>
    %147 = tpu.matmul %144, %146, %cst_91 {dimension_numbers = #tpu.dot_dimension_numbers<[1], [0], [0], [1], [0, 0, 1, 1], [], []>} : vector<2x64xf32>, vector<64x512xf32>, vector<2x512xf32> -> vector<2x512xf32>
    %148 = arith.addf %143, %147 : vector<2x512xf32>
    %149 = vector.extract_strided_slice %7 {offsets = [56, 0], sizes = [2, 64], strides = [1, 1]} : vector<98x64xf32> to vector<2x64xf32>
    %c28 = arith.constant 28 : index
    %c0_92 = arith.constant 0 : index
    %c0_93 = arith.constant 0 : index
    %150 = vector.load %arg4[%c28, %c0_92, %c0_93] : memref<49x64x512xf32, #tpu.memory_space<vmem>>, vector<1x64x512xf32>
    %151 = vector.shape_cast %150 : vector<1x64x512xf32> to vector<64x512xf32>
    %cst_94 = arith.constant dense<0.000000e+00> : vector<2x512xf32>
    %152 = tpu.matmul %149, %151, %cst_94 {dimension_numbers = #tpu.dot_dimension_numbers<[1], [0], [0], [1], [0, 0, 1, 1], [], []>} : vector<2x64xf32>, vector<64x512xf32>, vector<2x512xf32> -> vector<2x512xf32>
    %153 = arith.addf %148, %152 : vector<2x512xf32>
    %154 = vector.extract_strided_slice %7 {offsets = [58, 0], sizes = [2, 64], strides = [1, 1]} : vector<98x64xf32> to vector<2x64xf32>
    %c29 = arith.constant 29 : index
    %c0_95 = arith.constant 0 : index
    %c0_96 = arith.constant 0 : index
    %155 = vector.load %arg4[%c29, %c0_95, %c0_96] : memref<49x64x512xf32, #tpu.memory_space<vmem>>, vector<1x64x512xf32>
    %156 = vector.shape_cast %155 : vector<1x64x512xf32> to vector<64x512xf32>
    %cst_97 = arith.constant dense<0.000000e+00> : vector<2x512xf32>
    %157 = tpu.matmul %154, %156, %cst_97 {dimension_numbers = #tpu.dot_dimension_numbers<[1], [0], [0], [1], [0, 0, 1, 1], [], []>} : vector<2x64xf32>, vector<64x512xf32>, vector<2x512xf32> -> vector<2x512xf32>
    %158 = arith.addf %153, %157 : vector<2x512xf32>
    %159 = vector.extract_strided_slice %7 {offsets = [60, 0], sizes = [2, 64], strides = [1, 1]} : vector<98x64xf32> to vector<2x64xf32>
    %c30 = arith.constant 30 : index
    %c0_98 = arith.constant 0 : index
    %c0_99 = arith.constant 0 : index
    %160 = vector.load %arg4[%c30, %c0_98, %c0_99] : memref<49x64x512xf32, #tpu.memory_space<vmem>>, vector<1x64x512xf32>
    %161 = vector.shape_cast %160 : vector<1x64x512xf32> to vector<64x512xf32>
    %cst_100 = arith.constant dense<0.000000e+00> : vector<2x512xf32>
    %162 = tpu.matmul %159, %161, %cst_100 {dimension_numbers = #tpu.dot_dimension_numbers<[1], [0], [0], [1], [0, 0, 1, 1], [], []>} : vector<2x64xf32>, vector<64x512xf32>, vector<2x512xf32> -> vector<2x512xf32>
    %163 = arith.addf %158, %162 : vector<2x512xf32>
    %164 = vector.extract_strided_slice %7 {offsets = [62, 0], sizes = [2, 64], strides = [1, 1]} : vector<98x64xf32> to vector<2x64xf32>
    %c31 = arith.constant 31 : index
    %c0_101 = arith.constant 0 : index
    %c0_102 = arith.constant 0 : index
    %165 = vector.load %arg4[%c31, %c0_101, %c0_102] : memref<49x64x512xf32, #tpu.memory_space<vmem>>, vector<1x64x512xf32>
    %166 = vector.shape_cast %165 : vector<1x64x512xf32> to vector<64x512xf32>
    %cst_103 = arith.constant dense<0.000000e+00> : vector<2x512xf32>
    %167 = tpu.matmul %164, %166, %cst_103 {dimension_numbers = #tpu.dot_dimension_numbers<[1], [0], [0], [1], [0, 0, 1, 1], [], []>} : vector<2x64xf32>, vector<64x512xf32>, vector<2x512xf32> -> vector<2x512xf32>
    %168 = arith.addf %163, %167 : vector<2x512xf32>
    %169 = vector.extract_strided_slice %7 {offsets = [64, 0], sizes = [2, 64], strides = [1, 1]} : vector<98x64xf32> to vector<2x64xf32>
    %c32 = arith.constant 32 : index
    %c0_104 = arith.constant 0 : index
    %c0_105 = arith.constant 0 : index
    %170 = vector.load %arg4[%c32, %c0_104, %c0_105] : memref<49x64x512xf32, #tpu.memory_space<vmem>>, vector<1x64x512xf32>
    %171 = vector.shape_cast %170 : vector<1x64x512xf32> to vector<64x512xf32>
    %cst_106 = arith.constant dense<0.000000e+00> : vector<2x512xf32>
    %172 = tpu.matmul %169, %171, %cst_106 {dimension_numbers = #tpu.dot_dimension_numbers<[1], [0], [0], [1], [0, 0, 1, 1], [], []>} : vector<2x64xf32>, vector<64x512xf32>, vector<2x512xf32> -> vector<2x512xf32>
    %173 = arith.addf %168, %172 : vector<2x512xf32>
    %174 = vector.extract_strided_slice %7 {offsets = [66, 0], sizes = [2, 64], strides = [1, 1]} : vector<98x64xf32> to vector<2x64xf32>
    %c33 = arith.constant 33 : index
    %c0_107 = arith.constant 0 : index
    %c0_108 = arith.constant 0 : index
    %175 = vector.load %arg4[%c33, %c0_107, %c0_108] : memref<49x64x512xf32, #tpu.memory_space<vmem>>, vector<1x64x512xf32>
    %176 = vector.shape_cast %175 : vector<1x64x512xf32> to vector<64x512xf32>
    %cst_109 = arith.constant dense<0.000000e+00> : vector<2x512xf32>
    %177 = tpu.matmul %174, %176, %cst_109 {dimension_numbers = #tpu.dot_dimension_numbers<[1], [0], [0], [1], [0, 0, 1, 1], [], []>} : vector<2x64xf32>, vector<64x512xf32>, vector<2x512xf32> -> vector<2x512xf32>
    %178 = arith.addf %173, %177 : vector<2x512xf32>
    %179 = vector.extract_strided_slice %7 {offsets = [68, 0], sizes = [2, 64], strides = [1, 1]} : vector<98x64xf32> to vector<2x64xf32>
    %c34 = arith.constant 34 : index
    %c0_110 = arith.constant 0 : index
    %c0_111 = arith.constant 0 : index
    %180 = vector.load %arg4[%c34, %c0_110, %c0_111] : memref<49x64x512xf32, #tpu.memory_space<vmem>>, vector<1x64x512xf32>
    %181 = vector.shape_cast %180 : vector<1x64x512xf32> to vector<64x512xf32>
    %cst_112 = arith.constant dense<0.000000e+00> : vector<2x512xf32>
    %182 = tpu.matmul %179, %181, %cst_112 {dimension_numbers = #tpu.dot_dimension_numbers<[1], [0], [0], [1], [0, 0, 1, 1], [], []>} : vector<2x64xf32>, vector<64x512xf32>, vector<2x512xf32> -> vector<2x512xf32>
    %183 = arith.addf %178, %182 : vector<2x512xf32>
    %184 = vector.extract_strided_slice %7 {offsets = [70, 0], sizes = [2, 64], strides = [1, 1]} : vector<98x64xf32> to vector<2x64xf32>
    %c35 = arith.constant 35 : index
    %c0_113 = arith.constant 0 : index
    %c0_114 = arith.constant 0 : index
    %185 = vector.load %arg4[%c35, %c0_113, %c0_114] : memref<49x64x512xf32, #tpu.memory_space<vmem>>, vector<1x64x512xf32>
    %186 = vector.shape_cast %185 : vector<1x64x512xf32> to vector<64x512xf32>
    %cst_115 = arith.constant dense<0.000000e+00> : vector<2x512xf32>
    %187 = tpu.matmul %184, %186, %cst_115 {dimension_numbers = #tpu.dot_dimension_numbers<[1], [0], [0], [1], [0, 0, 1, 1], [], []>} : vector<2x64xf32>, vector<64x512xf32>, vector<2x512xf32> -> vector<2x512xf32>
    %188 = arith.addf %183, %187 : vector<2x512xf32>
    %189 = vector.extract_strided_slice %7 {offsets = [72, 0], sizes = [2, 64], strides = [1, 1]} : vector<98x64xf32> to vector<2x64xf32>
    %c36 = arith.constant 36 : index
    %c0_116 = arith.constant 0 : index
    %c0_117 = arith.constant 0 : index
    %190 = vector.load %arg4[%c36, %c0_116, %c0_117] : memref<49x64x512xf32, #tpu.memory_space<vmem>>, vector<1x64x512xf32>
    %191 = vector.shape_cast %190 : vector<1x64x512xf32> to vector<64x512xf32>
    %cst_118 = arith.constant dense<0.000000e+00> : vector<2x512xf32>
    %192 = tpu.matmul %189, %191, %cst_118 {dimension_numbers = #tpu.dot_dimension_numbers<[1], [0], [0], [1], [0, 0, 1, 1], [], []>} : vector<2x64xf32>, vector<64x512xf32>, vector<2x512xf32> -> vector<2x512xf32>
    %193 = arith.addf %188, %192 : vector<2x512xf32>
    %194 = vector.extract_strided_slice %7 {offsets = [74, 0], sizes = [2, 64], strides = [1, 1]} : vector<98x64xf32> to vector<2x64xf32>
    %c37 = arith.constant 37 : index
    %c0_119 = arith.constant 0 : index
    %c0_120 = arith.constant 0 : index
    %195 = vector.load %arg4[%c37, %c0_119, %c0_120] : memref<49x64x512xf32, #tpu.memory_space<vmem>>, vector<1x64x512xf32>
    %196 = vector.shape_cast %195 : vector<1x64x512xf32> to vector<64x512xf32>
    %cst_121 = arith.constant dense<0.000000e+00> : vector<2x512xf32>
    %197 = tpu.matmul %194, %196, %cst_121 {dimension_numbers = #tpu.dot_dimension_numbers<[1], [0], [0], [1], [0, 0, 1, 1], [], []>} : vector<2x64xf32>, vector<64x512xf32>, vector<2x512xf32> -> vector<2x512xf32>
    %198 = arith.addf %193, %197 : vector<2x512xf32>
    %199 = vector.extract_strided_slice %7 {offsets = [76, 0], sizes = [2, 64], strides = [1, 1]} : vector<98x64xf32> to vector<2x64xf32>
    %c38 = arith.constant 38 : index
    %c0_122 = arith.constant 0 : index
    %c0_123 = arith.constant 0 : index
    %200 = vector.load %arg4[%c38, %c0_122, %c0_123] : memref<49x64x512xf32, #tpu.memory_space<vmem>>, vector<1x64x512xf32>
    %201 = vector.shape_cast %200 : vector<1x64x512xf32> to vector<64x512xf32>
    %cst_124 = arith.constant dense<0.000000e+00> : vector<2x512xf32>
    %202 = tpu.matmul %199, %201, %cst_124 {dimension_numbers = #tpu.dot_dimension_numbers<[1], [0], [0], [1], [0, 0, 1, 1], [], []>} : vector<2x64xf32>, vector<64x512xf32>, vector<2x512xf32> -> vector<2x512xf32>
    %203 = arith.addf %198, %202 : vector<2x512xf32>
    %204 = vector.extract_strided_slice %7 {offsets = [78, 0], sizes = [2, 64], strides = [1, 1]} : vector<98x64xf32> to vector<2x64xf32>
    %c39 = arith.constant 39 : index
    %c0_125 = arith.constant 0 : index
    %c0_126 = arith.constant 0 : index
    %205 = vector.load %arg4[%c39, %c0_125, %c0_126] : memref<49x64x512xf32, #tpu.memory_space<vmem>>, vector<1x64x512xf32>
    %206 = vector.shape_cast %205 : vector<1x64x512xf32> to vector<64x512xf32>
    %cst_127 = arith.constant dense<0.000000e+00> : vector<2x512xf32>
    %207 = tpu.matmul %204, %206, %cst_127 {dimension_numbers = #tpu.dot_dimension_numbers<[1], [0], [0], [1], [0, 0, 1, 1], [], []>} : vector<2x64xf32>, vector<64x512xf32>, vector<2x512xf32> -> vector<2x512xf32>
    %208 = arith.addf %203, %207 : vector<2x512xf32>
    %209 = vector.extract_strided_slice %7 {offsets = [80, 0], sizes = [2, 64], strides = [1, 1]} : vector<98x64xf32> to vector<2x64xf32>
    %c40 = arith.constant 40 : index
    %c0_128 = arith.constant 0 : index
    %c0_129 = arith.constant 0 : index
    %210 = vector.load %arg4[%c40, %c0_128, %c0_129] : memref<49x64x512xf32, #tpu.memory_space<vmem>>, vector<1x64x512xf32>
    %211 = vector.shape_cast %210 : vector<1x64x512xf32> to vector<64x512xf32>
    %cst_130 = arith.constant dense<0.000000e+00> : vector<2x512xf32>
    %212 = tpu.matmul %209, %211, %cst_130 {dimension_numbers = #tpu.dot_dimension_numbers<[1], [0], [0], [1], [0, 0, 1, 1], [], []>} : vector<2x64xf32>, vector<64x512xf32>, vector<2x512xf32> -> vector<2x512xf32>
    %213 = arith.addf %208, %212 : vector<2x512xf32>
    %214 = vector.extract_strided_slice %7 {offsets = [82, 0], sizes = [2, 64], strides = [1, 1]} : vector<98x64xf32> to vector<2x64xf32>
    %c41 = arith.constant 41 : index
    %c0_131 = arith.constant 0 : index
    %c0_132 = arith.constant 0 : index
    %215 = vector.load %arg4[%c41, %c0_131, %c0_132] : memref<49x64x512xf32, #tpu.memory_space<vmem>>, vector<1x64x512xf32>
    %216 = vector.shape_cast %215 : vector<1x64x512xf32> to vector<64x512xf32>
    %cst_133 = arith.constant dense<0.000000e+00> : vector<2x512xf32>
    %217 = tpu.matmul %214, %216, %cst_133 {dimension_numbers = #tpu.dot_dimension_numbers<[1], [0], [0], [1], [0, 0, 1, 1], [], []>} : vector<2x64xf32>, vector<64x512xf32>, vector<2x512xf32> -> vector<2x512xf32>
    %218 = arith.addf %213, %217 : vector<2x512xf32>
    %219 = vector.extract_strided_slice %7 {offsets = [84, 0], sizes = [2, 64], strides = [1, 1]} : vector<98x64xf32> to vector<2x64xf32>
    %c42 = arith.constant 42 : index
    %c0_134 = arith.constant 0 : index
    %c0_135 = arith.constant 0 : index
    %220 = vector.load %arg4[%c42, %c0_134, %c0_135] : memref<49x64x512xf32, #tpu.memory_space<vmem>>, vector<1x64x512xf32>
    %221 = vector.shape_cast %220 : vector<1x64x512xf32> to vector<64x512xf32>
    %cst_136 = arith.constant dense<0.000000e+00> : vector<2x512xf32>
    %222 = tpu.matmul %219, %221, %cst_136 {dimension_numbers = #tpu.dot_dimension_numbers<[1], [0], [0], [1], [0, 0, 1, 1], [], []>} : vector<2x64xf32>, vector<64x512xf32>, vector<2x512xf32> -> vector<2x512xf32>
    %223 = arith.addf %218, %222 : vector<2x512xf32>
    %224 = vector.extract_strided_slice %7 {offsets = [86, 0], sizes = [2, 64], strides = [1, 1]} : vector<98x64xf32> to vector<2x64xf32>
    %c43 = arith.constant 43 : index
    %c0_137 = arith.constant 0 : index
    %c0_138 = arith.constant 0 : index
    %225 = vector.load %arg4[%c43, %c0_137, %c0_138] : memref<49x64x512xf32, #tpu.memory_space<vmem>>, vector<1x64x512xf32>
    %226 = vector.shape_cast %225 : vector<1x64x512xf32> to vector<64x512xf32>
    %cst_139 = arith.constant dense<0.000000e+00> : vector<2x512xf32>
    %227 = tpu.matmul %224, %226, %cst_139 {dimension_numbers = #tpu.dot_dimension_numbers<[1], [0], [0], [1], [0, 0, 1, 1], [], []>} : vector<2x64xf32>, vector<64x512xf32>, vector<2x512xf32> -> vector<2x512xf32>
    %228 = arith.addf %223, %227 : vector<2x512xf32>
    %229 = vector.extract_strided_slice %7 {offsets = [88, 0], sizes = [2, 64], strides = [1, 1]} : vector<98x64xf32> to vector<2x64xf32>
    %c44 = arith.constant 44 : index
    %c0_140 = arith.constant 0 : index
    %c0_141 = arith.constant 0 : index
    %230 = vector.load %arg4[%c44, %c0_140, %c0_141] : memref<49x64x512xf32, #tpu.memory_space<vmem>>, vector<1x64x512xf32>
    %231 = vector.shape_cast %230 : vector<1x64x512xf32> to vector<64x512xf32>
    %cst_142 = arith.constant dense<0.000000e+00> : vector<2x512xf32>
    %232 = tpu.matmul %229, %231, %cst_142 {dimension_numbers = #tpu.dot_dimension_numbers<[1], [0], [0], [1], [0, 0, 1, 1], [], []>} : vector<2x64xf32>, vector<64x512xf32>, vector<2x512xf32> -> vector<2x512xf32>
    %233 = arith.addf %228, %232 : vector<2x512xf32>
    %234 = vector.extract_strided_slice %7 {offsets = [90, 0], sizes = [2, 64], strides = [1, 1]} : vector<98x64xf32> to vector<2x64xf32>
    %c45 = arith.constant 45 : index
    %c0_143 = arith.constant 0 : index
    %c0_144 = arith.constant 0 : index
    %235 = vector.load %arg4[%c45, %c0_143, %c0_144] : memref<49x64x512xf32, #tpu.memory_space<vmem>>, vector<1x64x512xf32>
    %236 = vector.shape_cast %235 : vector<1x64x512xf32> to vector<64x512xf32>
    %cst_145 = arith.constant dense<0.000000e+00> : vector<2x512xf32>
    %237 = tpu.matmul %234, %236, %cst_145 {dimension_numbers = #tpu.dot_dimension_numbers<[1], [0], [0], [1], [0, 0, 1, 1], [], []>} : vector<2x64xf32>, vector<64x512xf32>, vector<2x512xf32> -> vector<2x512xf32>
    %238 = arith.addf %233, %237 : vector<2x512xf32>
    %239 = vector.extract_strided_slice %7 {offsets = [92, 0], sizes = [2, 64], strides = [1, 1]} : vector<98x64xf32> to vector<2x64xf32>
    %c46 = arith.constant 46 : index
    %c0_146 = arith.constant 0 : index
    %c0_147 = arith.constant 0 : index
    %240 = vector.load %arg4[%c46, %c0_146, %c0_147] : memref<49x64x512xf32, #tpu.memory_space<vmem>>, vector<1x64x512xf32>
    %241 = vector.shape_cast %240 : vector<1x64x512xf32> to vector<64x512xf32>
    %cst_148 = arith.constant dense<0.000000e+00> : vector<2x512xf32>
    %242 = tpu.matmul %239, %241, %cst_148 {dimension_numbers = #tpu.dot_dimension_numbers<[1], [0], [0], [1], [0, 0, 1, 1], [], []>} : vector<2x64xf32>, vector<64x512xf32>, vector<2x512xf32> -> vector<2x512xf32>
    %243 = arith.addf %238, %242 : vector<2x512xf32>
    %244 = vector.extract_strided_slice %7 {offsets = [94, 0], sizes = [2, 64], strides = [1, 1]} : vector<98x64xf32> to vector<2x64xf32>
    %c47 = arith.constant 47 : index
    %c0_149 = arith.constant 0 : index
    %c0_150 = arith.constant 0 : index
    %245 = vector.load %arg4[%c47, %c0_149, %c0_150] : memref<49x64x512xf32, #tpu.memory_space<vmem>>, vector<1x64x512xf32>
    %246 = vector.shape_cast %245 : vector<1x64x512xf32> to vector<64x512xf32>
    %cst_151 = arith.constant dense<0.000000e+00> : vector<2x512xf32>
    %247 = tpu.matmul %244, %246, %cst_151 {dimension_numbers = #tpu.dot_dimension_numbers<[1], [0], [0], [1], [0, 0, 1, 1], [], []>} : vector<2x64xf32>, vector<64x512xf32>, vector<2x512xf32> -> vector<2x512xf32>
    %248 = arith.addf %243, %247 : vector<2x512xf32>
    %249 = vector.extract_strided_slice %7 {offsets = [96, 0], sizes = [2, 64], strides = [1, 1]} : vector<98x64xf32> to vector<2x64xf32>
    %c48 = arith.constant 48 : index
    %c0_152 = arith.constant 0 : index
    %c0_153 = arith.constant 0 : index
    %250 = vector.load %arg4[%c48, %c0_152, %c0_153] : memref<49x64x512xf32, #tpu.memory_space<vmem>>, vector<1x64x512xf32>
    %251 = vector.shape_cast %250 : vector<1x64x512xf32> to vector<64x512xf32>
    %cst_154 = arith.constant dense<0.000000e+00> : vector<2x512xf32>
    %252 = tpu.matmul %249, %251, %cst_154 {dimension_numbers = #tpu.dot_dimension_numbers<[1], [0], [0], [1], [0, 0, 1, 1], [], []>} : vector<2x64xf32>, vector<64x512xf32>, vector<2x512xf32> -> vector<2x512xf32>
    %253 = arith.addf %248, %252 : vector<2x512xf32>
    %c0_155 = arith.constant 0 : index
    %c0_156 = arith.constant 0 : index
    %254 = vector.load %arg5[%c0_155, %c0_156] : memref<1x512xf32, #tpu.memory_space<vmem>>, vector<1x512xf32>
    %255 = vector.broadcast %254 : vector<1x512xf32> to vector<2x512xf32>
    %256 = arith.addf %253, %255 : vector<2x512xf32>
    %cst_157 = arith.constant 0.000000e+00 : f32
    %257 = vector.broadcast %cst_157 : f32 to vector<2x512xf32>
    %258 = arith.maximumf %256, %257 : vector<2x512xf32>
    %c0_158 = arith.constant 0 : index
    %c0_159 = arith.constant 0 : index
    %259 = vector.load %arg6[%c0_158, %c0_159] : memref<1x512xf32, #tpu.memory_space<vmem>>, vector<1x512xf32>
    %260 = vector.broadcast %259 : vector<1x512xf32> to vector<2x512xf32>
    %261 = arith.mulf %258, %260 : vector<2x512xf32>
    %cst_160 = arith.constant dense<0.000000e+00> : vector<2xf32>
    %262 = vector.multi_reduction <add>, %261, %cst_160 [1] : vector<2x512xf32> to vector<2xf32>
    %263 = vector.shape_cast %262 : vector<2xf32> to vector<2x1xf32>
    %c0_161 = arith.constant 0 : index
    %c0_162 = arith.constant 0 : index
    %264 = vector.load %arg7[%c0_161, %c0_162] : memref<1x1xf32, #tpu.memory_space<vmem>>, vector<1x1xf32>
    %265 = vector.broadcast %264 : vector<1x1xf32> to vector<2x1xf32>
    %266 = arith.addf %263, %265 : vector<2x1xf32>
    %c0_163 = arith.constant 0 : index
    %c0_164 = arith.constant 0 : index
    %267 = vector.load %arg8[%c0_163, %c0_164] : memref<2x1xf32, #tpu.memory_space<vmem>>, vector<2x1xf32>
    tpu.vector_store %arg8[%c0_163, %c0_164], %266 {strides = array<i32>} : memref<2x1xf32, #tpu.memory_space<vmem>>, vector<2x1xf32>,
    return
  }
  func.func @transform_0(%arg0: i32) -> (i32, i32) {
    %c0_i32 = arith.constant 0 : i32
    %c0_i32_0 = arith.constant 0 : i32
    %c0_i32_1 = arith.constant 0 : i32
    return %c0_i32, %c0_i32_0 : i32, i32
  }
  func.func @transform_1(%arg0: i32) -> (i32, i32) {
    %c0_i32 = arith.constant 0 : i32
    %c0_i32_0 = arith.constant 0 : i32
    %c0_i32_1 = arith.constant 0 : i32
    return %c0_i32, %c0_i32_0 : i32, i32
  }
  func.func @transform_2(%arg0: i32) -> (i32, i32) {
    %c0_i32 = arith.constant 0 : i32
    %c0_i32_0 = arith.constant 0 : i32
    %c0_i32_1 = arith.constant 0 : i32
    return %c0_i32, %c0_i32_0 : i32, i32
  }
  func.func @transform_3(%arg0: i32) -> (i32, i32, i32) {
    %c0_i32 = arith.constant 0 : i32
    %c0_i32_0 = arith.constant 0 : i32
    %c0_i32_1 = arith.constant 0 : i32
    %c0_i32_2 = arith.constant 0 : i32
    return %c0_i32, %c0_i32_0, %c0_i32_1 : i32, i32, i32
  }
  func.func @transform_4(%arg0: i32) -> (i32, i32) {
    %c0_i32 = arith.constant 0 : i32
    %c0_i32_0 = arith.constant 0 : i32
    %c0_i32_1 = arith.constant 0 : i32
    return %c0_i32, %c0_i32_0 : i32, i32
  }
  func.func @transform_5(%arg0: i32) -> (i32, i32) {
    %c0_i32 = arith.constant 0 : i32
    %c0_i32_0 = arith.constant 0 : i32
    %c0_i32_1 = arith.constant 0 : i32
    return %c0_i32, %c0_i32_0 : i32, i32
  }
  func.func @transform_6(%arg0: i32) -> (i32, i32) {
    %c0_i32 = arith.constant 0 : i32
    %c0_i32_0 = arith.constant 0 : i32
    %c0_i32_1 = arith.constant 0 : i32
    return %c0_i32, %c0_i32_0 : i32, i32
  }
  func.func @transform_7(%arg0: i32) -> (i32, i32) {
    %c0_i32 = arith.constant 0 : i32
    %c0_i32_0 = arith.constant 0 : i32
    %c0_i32_1 = arith.constant 0 : i32
    return %c0_i32, %c0_i32_0 : i32, i32
  }
}

</mosaic_0001>

<llo_original>
// kernel: value_network_forward.3
$region0: #{value_network_forward.3}
  #allocation0 [shape = 'u32[]', space=smem, size = 0x4, offset = 0x4, fixed_abs, tag = 'smem constant byte address 0x4 - core index']
  #allocation1 [shape = 'u32[144,128]{1,0:T(1,128)}', space=vmem, size = 0x12000, scoped, tag = 'internal scratch']
  %s0 = inlined_call_operand.vmem [shape: f32[800,256], index: 0, kind: input, shape index: {}]
  %s1 = inlined_call_operand.vmem [shape: f32[256,128], index: 1, kind: input, shape index: {}]
  %s2 = inlined_call_operand.vmem [shape: f32[1,128], index: 2, kind: input, shape index: {}]
  %s3 = inlined_call_operand.vmem [shape: f32[800,128], index: 3, kind: output, shape index: {}]
  %s4 = sld [smem:[#allocation0]]
  $region22: #{value_network_forward.3} parent=0
    _
  %s6 = ssub.s32 1, %s4
  %s7 = scalar_select 0, %s6, %s4
  // Predicated region
  $region2: #{value_network_forward.3} parent=0 // pred_check
    _
  $region3: #{value_network_forward.3} parent=0 // pred_check_branch
    %9 = sbr.rel (0) target = $region5
  $region4: #{value_network_forward.3} parent=0 // pred_region
    _
  $region5: #{value_network_forward.3} parent=0 // pred_fallthru
    _
  // Predicated region
  $region6: #{value_network_forward.3} parent=0 // pred_check
    _
  $region7: #{value_network_forward.3} parent=0 // pred_check_branch
    %11 = sbr.rel (0) target = $region9
  $region8: #{value_network_forward.3} parent=0 // pred_region
    _
  $region9: #{value_network_forward.3} parent=0 // pred_fallthru
    _
  // Predicated region
  $region10: #{value_network_forward.3} parent=0 // pred_check
    _
  $region11: #{value_network_forward.3} parent=0 // pred_check_branch
    %13 = sbr.rel (0) target = $region13
  $region12: #{value_network_forward.3} parent=0 // pred_region
    _
  $region13: #{value_network_forward.3} parent=0 // pred_fallthru
    _
  %v14 = vld [vmem:[%s0] sm:$0xff]
  %v15 = vld [vmem:[%s0 + $0x8] sm:$0xff]
  %v16 = vld [vmem:[%s0 + $0x10] sm:$0xff]
  %v17 = vld [vmem:[%s0 + $0x18] sm:$0xff]
  %v18 = vld [vmem:[%s0 + $0x20] sm:$0xff]
  %v19 = vld [vmem:[%s0 + $0x28] sm:$0xff]
  %v20 = vld [vmem:[%s0 + $0x30] sm:$0xff]
  %v21 = vld [vmem:[%s0 + $0x38] sm:$0xff]
  %v22 = vld [vmem:[%s0 + $0x40] sm:$0xff]
  %v23 = vld [vmem:[%s0 + $0x48] sm:$0xff]
  %v24 = vld [vmem:[%s0 + $0x50] sm:$0xff]
  %v25 = vld [vmem:[%s0 + $0x58] sm:$0xff]
  %v26 = vld [vmem:[%s0 + $0x60] sm:$0xff]
  %v27 = vld [vmem:[%s0 + $0x68] sm:$0xff]
  %v28 = vld [vmem:[%s0 + $0x70] sm:$0xff]
  %v29 = vld [vmem:[%s0 + $0x78] sm:$0xff]
  %v30 = vld [vmem:[%s0 + $0x80] sm:$0xff]
  %v31 = vld [vmem:[%s0 + $0x88] sm:$0xff]
  %v32 = vld [vmem:[%s0 + $0x90] sm:$0xff]
  %v33 = vld [vmem:[%s0 + $0x98] sm:$0xff]
  %v34 = vld [vmem:[%s0 + $0xa0] sm:$0xff]
  %v35 = vld [vmem:[%s0 + $0xa8] sm:$0xff]
  %v36 = vld [vmem:[%s0 + $0xb0] sm:$0xff]
  %v37 = vld [vmem:[%s0 + $0xb8] sm:$0xff]
  %v38 = vld [vmem:[%s0 + $0xc0] sm:$0xff]
  %v39 = vld [vmem:[%s0 + $0xc8] sm:$0xff]
  %v40 = vld [vmem:[%s0 + $0xd0] sm:$0xff]
  %v41 = vld [vmem:[%s0 + $0xd8] sm:$0xff]
  %v42 = vld [vmem:[%s0 + $0xe0] sm:$0xff]
  %v43 = vld [vmem:[%s0 + $0xe8] sm:$0xff]
  %v44 = vld [vmem:[%s0 + $0xf0] sm:$0xff]
  %v45 = vld [vmem:[%s0 + $0xf8] sm:$0xff]
  %v46 = vld [vmem:[%s0 + $0x100] sm:$0xff]
  %v47 = vld [vmem:[%s0 + $0x108] sm:$0xff]
  %v48 = vld [vmem:[%s0 + $0x110] sm:$0xff]
  %v49 = vld [vmem:[%s0 + $0x118] sm:$0xff]
  %v50 = vld [vmem:[%s0 + $0x120] sm:$0xff]
  %v51 = vld [vmem:[%s0 + $0x128] sm:$0xff]
  %v52 = vld [vmem:[%s0 + $0x130] sm:$0xff]
  %v53 = vld [vmem:[%s0 + $0x138] sm:$0xff]
  %v54 = vld [vmem:[%s0 + $0x140] sm:$0xff]
  %v55 = vld [vmem:[%s0 + $0x148] sm:$0xff]
  %v56 = vld [vmem:[%s0 + $0x150] sm:$0xff]
  %v57 = vld [vmem:[%s0 + $0x158] sm:$0xff]
  %v58 = vld [vmem:[%s0 + $0x160] sm:$0xff]
  %v59 = vld [vmem:[%s0 + $0x168] sm:$0xff]
  %v60 = vld [vmem:[%s0 + $0x170] sm:$0xff]
  %v61 = vld [vmem:[%s0 + $0x178] sm:$0xff]
  %v62 = vld [vmem:[%s0 + $0x180] sm:$0xff]
  %v63 = vld [vmem:[%s0 + $0x188] sm:$0xff]
  %v64 = vld [vmem:[%s0 + $0x190] sm:$0xff]
  %v65 = vld [vmem:[%s0 + $0x198] sm:$0xff]
  %v66 = vld [vmem:[%s0 + $0x1a0] sm:$0xff]
  %v67 = vld [vmem:[%s0 + $0x1a8] sm:$0xff]
  %v68 = vld [vmem:[%s0 + $0x1b0] sm:$0xff]
  %v69 = vld [vmem:[%s0 + $0x1b8] sm:$0xff]
  %v70 = vld [vmem:[%s0 + $0x1c0] sm:$0xff]
  %v71 = vld [vmem:[%s0 + $0x1c8] sm:$0xff]
  %v72 = vld [vmem:[%s0 + $0x1d0] sm:$0xff]
  %v73 = vld [vmem:[%s0 + $0x1d8] sm:$0xff]
  %v74 = vld [vmem:[%s0 + $0x1e0] sm:$0xff]
  %v75 = vld [vmem:[%s0 + $0x1e8] sm:$0xff]
  %v76 = vld [vmem:[%s0 + $0x1f0] sm:$0xff]
  %v77 = vld [vmem:[%s0 + $0x1f8] sm:$0xff]
  %v78 = vld [vmem:[%s0 + $0x200] sm:$0xff]
  %v79 = vld [vmem:[%s0 + $0x208] sm:$0xff]
  %v80 = vld [vmem:[%s0 + $0x210] sm:$0xff]
  %v81 = vld [vmem:[%s0 + $0x218] sm:$0xff]
  %v82 = vld [vmem:[%s0 + $0x220] sm:$0xff]
  %v83 = vld [vmem:[%s0 + $0x228] sm:$0xff]
  %v84 = vld [vmem:[%s0 + $0x230] sm:$0xff]
  %v85 = vld [vmem:[%s0 + $0x238] sm:$0xff]
  %v86 = vld [vmem:[%s0 + $0x240] sm:$0xff]
  %v87 = vld [vmem:[%s0 + $0x248] sm:$0xff]
  %v88 = vld [vmem:[%s0 + $0x250] sm:$0xff]
  %v89 = vld [vmem:[%s0 + $0x258] sm:$0xff]
  %v90 = vld [vmem:[%s0 + $0x260] sm:$0xff]
  %v91 = vld [vmem:[%s0 + $0x268] sm:$0xff]
  %v92 = vld [vmem:[%s0 + $0x270] sm:$0xff]
  %v93 = vld [vmem:[%s0 + $0x278] sm:$0xff]
  %v94 = vld [vmem:[%s0 + $0x280] sm:$0xff]
  %v95 = vld [vmem:[%s0 + $0x288] sm:$0xff]
  %v96 = vld [vmem:[%s0 + $0x290] sm:$0xff]
  %v97 = vld [vmem:[%s0 + $0x298] sm:$0xff]
  %v98 = vld [vmem:[%s0 + $0x2a0] sm:$0xff]
  %v99 = vld [vmem:[%s0 + $0x2a8] sm:$0xff]
  %v100 = vld [vmem:[%s0 + $0x2b0] sm:$0xff]
  %v101 = vld [vmem:[%s0 + $0x2b8] sm:$0xff]
  %v102 = vld [vmem:[%s0 + $0x2c0] sm:$0xff]
  %v103 = vld [vmem:[%s0 + $0x2c8] sm:$0xff]
  %v104 = vld [vmem:[%s0 + $0x2d0] sm:$0xff]
  %v105 = vld [vmem:[%s0 + $0x2d8] sm:$0xff]
  %v106 = vld [vmem:[%s0 + $0x2e0] sm:$0xff]
  %v107 = vld [vmem:[%s0 + $0x2e8] sm:$0xff]
  %v108 = vld [vmem:[%s0 + $0x2f0] sm:$0xff]
  %v109 = vld [vmem:[%s0 + $0x2f8] sm:$0xff]
  %v110 = vld [vmem:[%s0 + $0x300] sm:$0xff]
  %v111 = vld [vmem:[%s0 + $0x308] sm:$0xff]
  %v112 = vld [vmem:[%s0 + $0x310] sm:$0xff]
  %v113 = vld [vmem:[%s0 + $0x318] sm:$0xff]
  %v114 = vld [vmem:[%s0 + $0x320] sm:$0xff]
  %v115 = vld [vmem:[%s0 + $0x328] sm:$0xff]
  %v116 = vld [vmem:[%s0 + $0x330] sm:$0xff]
  %v117 = vld [vmem:[%s0 + $0x338] sm:$0xff]
  %v118 = vld [vmem:[%s0 + $0x340] sm:$0xff]
  %v119 = vld [vmem:[%s0 + $0x348] sm:$0xff]
  %v120 = vld [vmem:[%s0 + $0x350] sm:$0xff]
  %v121 = vld [vmem:[%s0 + $0x358] sm:$0xff]
  %v122 = vld [vmem:[%s0 + $0x360] sm:$0xff]
  %v123 = vld [vmem:[%s0 + $0x368] sm:$0xff]
  %v124 = vld [vmem:[%s0 + $0x370] sm:$0xff]
  %v125 = vld [vmem:[%s0 + $0x378] sm:$0xff]
  %v126 = vld [vmem:[%s0 + $0x380] sm:$0xff]
  %v127 = vld [vmem:[%s0 + $0x388] sm:$0xff]
  %v128 = vld [vmem:[%s0 + $0x390] sm:$0xff]
  %v129 = vld [vmem:[%s0 + $0x398] sm:$0xff]
  %v130 = vld [vmem:[%s0 + $0x3a0] sm:$0xff]
  %v131 = vld [vmem:[%s0 + $0x3a8] sm:$0xff]
  %v132 = vld [vmem:[%s0 + $0x3b0] sm:$0xff]
  %v133 = vld [vmem:[%s0 + $0x3b8] sm:$0xff]
  %v134 = vld [vmem:[%s0 + $0x3c0] sm:$0xff]
  %v135 = vld [vmem:[%s0 + $0x3c8] sm:$0xff]
  %v136 = vld [vmem:[%s0 + $0x3d0] sm:$0xff]
  %v137 = vld [vmem:[%s0 + $0x3d8] sm:$0xff]
  %v138 = vld [vmem:[%s0 + $0x3e0] sm:$0xff]
  %v139 = vld [vmem:[%s0 + $0x3e8] sm:$0xff]
  %v140 = vld [vmem:[%s0 + $0x3f0] sm:$0xff]
  %v141 = vld [vmem:[%s0 + $0x3f8] sm:$0xff]
  %v142 = vld [vmem:[%s0 + $0x400] sm:$0xff]
  %v143 = vld [vmem:[%s0 + $0x408] sm:$0xff]
  %v144 = vld [vmem:[%s0 + $0x410] sm:$0xff]
  %v145 = vld [vmem:[%s0 + $0x418] sm:$0xff]
  %v146 = vld [vmem:[%s0 + $0x420] sm:$0xff]
  %v147 = vld [vmem:[%s0 + $0x428] sm:$0xff]
  %v148 = vld [vmem:[%s0 + $0x430] sm:$0xff]
  %v149 = vld [vmem:[%s0 + $0x438] sm:$0xff]
  %v150 = vld [vmem:[%s0 + $0x440] sm:$0xff]
  %v151 = vld [vmem:[%s0 + $0x448] sm:$0xff]
  %v152 = vld [vmem:[%s0 + $0x450] sm:$0xff]
  %v153 = vld [vmem:[%s0 + $0x458] sm:$0xff]
  %v154 = vld [vmem:[%s0 + $0x460] sm:$0xff]
  %v155 = vld [vmem:[%s0 + $0x468] sm:$0xff]
  %v156 = vld [vmem:[%s0 + $0x470] sm:$0xff]
  %v157 = vld [vmem:[%s0 + $0x478] sm:$0xff]
  %v158 = vld [vmem:[%s0 + $0x480] sm:$0xff]
  %v159 = vld [vmem:[%s0 + $0x488] sm:$0xff]
  %v160 = vld [vmem:[%s0 + $0x490] sm:$0xff]
  %v161 = vld [vmem:[%s0 + $0x498] sm:$0xff]
  %v162 = vld [vmem:[%s0 + $0x4a0] sm:$0xff]
  %v163 = vld [vmem:[%s0 + $0x4a8] sm:$0xff]
  %v164 = vld [vmem:[%s0 + $0x4b0] sm:$0xff]
  %v165 = vld [vmem:[%s0 + $0x4b8] sm:$0xff]
  %v166 = vld [vmem:[%s0 + $0x4c0] sm:$0xff]
  %v167 = vld [vmem:[%s0 + $0x4c8] sm:$0xff]
  %v168 = vld [vmem:[%s0 + $0x4d0] sm:$0xff]
  %v169 = vld [vmem:[%s0 + $0x4d8] sm:$0xff]
  %v170 = vld [vmem:[%s0 + $0x4e0] sm:$0xff]
  %v171 = vld [vmem:[%s0 + $0x4e8] sm:$0xff]
  %v172 = vld [vmem:[%s0 + $0x4f0] sm:$0xff]
  %v173 = vld [vmem:[%s0 + $0x4f8] sm:$0xff]
  %v174 = vld [vmem:[%s0 + $0x500] sm:$0xff]
  %v175 = vld [vmem:[%s0 + $0x508] sm:$0xff]
  %v176 = vld [vmem:[%s0 + $0x510] sm:$0xff]
  %v177 = vld [vmem:[%s0 + $0x518] sm:$0xff]
  %v178 = vld [vmem:[%s0 + $0x520] sm:$0xff]
  %v179 = vld [vmem:[%s0 + $0x528] sm:$0xff]
  %v180 = vld [vmem:[%s0 + $0x530] sm:$0xff]
  %v181 = vld [vmem:[%s0 + $0x538] sm:$0xff]
  %v182 = vld [vmem:[%s0 + $0x540] sm:$0xff]
  %v183 = vld [vmem:[%s0 + $0x548] sm:$0xff]
  %v184 = vld [vmem:[%s0 + $0x550] sm:$0xff]
  %v185 = vld [vmem:[%s0 + $0x558] sm:$0xff]
  %v186 = vld [vmem:[%s0 + $0x560] sm:$0xff]
  %v187 = vld [vmem:[%s0 + $0x568] sm:$0xff]
  %v188 = vld [vmem:[%s0 + $0x570] sm:$0xff]
  %v189 = vld [vmem:[%s0 + $0x578] sm:$0xff]
  %v190 = vld [vmem:[%s0 + $0x580] sm:$0xff]
  %v191 = vld [vmem:[%s0 + $0x588] sm:$0xff]
  %v192 = vld [vmem:[%s0 + $0x590] sm:$0xff]
  %v193 = vld [vmem:[%s0 + $0x598] sm:$0xff]
  %v194 = vld [vmem:[%s0 + $0x5a0] sm:$0xff]
  %v195 = vld [vmem:[%s0 + $0x5a8] sm:$0xff]
  %v196 = vld [vmem:[%s0 + $0x5b0] sm:$0xff]
  %v197 = vld [vmem:[%s0 + $0x5b8] sm:$0xff]
  %v198 = vld [vmem:[%s0 + $0x5c0] sm:$0xff]
  %v199 = vld [vmem:[%s0 + $0x5c8] sm:$0xff]
  %v200 = vld [vmem:[%s0 + $0x5d0] sm:$0xff]
  %v201 = vld [vmem:[%s0 + $0x5d8] sm:$0xff]
  %v202 = vld [vmem:[%s0 + $0x5e0] sm:$0xff]
  %v203 = vld [vmem:[%s0 + $0x5e8] sm:$0xff]
  %v204 = vld [vmem:[%s0 + $0x5f0] sm:$0xff]
  %v205 = vld [vmem:[%s0 + $0x5f8] sm:$0xff]
  %v206 = vld [vmem:[%s0 + $0x600] sm:$0xff]
  %v207 = vld [vmem:[%s0 + $0x608] sm:$0xff]
  %v208 = vld [vmem:[%s0 + $0x610] sm:$0xff]
  %v209 = vld [vmem:[%s0 + $0x618] sm:$0xff]
  %v210 = vld [vmem:[%s0 + $0x620] sm:$0xff]
  %v211 = vld [vmem:[%s0 + $0x628] sm:$0xff]
  %v212 = vld [vmem:[%s0 + $0x630] sm:$0xff]
  %v213 = vld [vmem:[%s0 + $0x638] sm:$0xff]
  %v214 = vld [vmem:[%s1] sm:$0xff]
  %v215 = vld [vmem:[%s1 + $0x8] sm:$0xff]
  %v216 = vld [vmem:[%s1 + $0x10] sm:$0xff]
  %v217 = vld [vmem:[%s1 + $0x18] sm:$0xff]
  %v218 = vld [vmem:[%s1 + $0x20] sm:$0xff]
  %v219 = vld [vmem:[%s1 + $0x28] sm:$0xff]
  %v220 = vld [vmem:[%s1 + $0x30] sm:$0xff]
  %v221 = vld [vmem:[%s1 + $0x38] sm:$0xff]
  %v222 = vld [vmem:[%s1 + $0x40] sm:$0xff]
  %v223 = vld [vmem:[%s1 + $0x48] sm:$0xff]
  %v224 = vld [vmem:[%s1 + $0x50] sm:$0xff]
  %v225 = vld [vmem:[%s1 + $0x58] sm:$0xff]
  %v226 = vld [vmem:[%s1 + $0x60] sm:$0xff]
  %v227 = vld [vmem:[%s1 + $0x68] sm:$0xff]
  %v228 = vld [vmem:[%s1 + $0x70] sm:$0xff]
  %v229 = vld [vmem:[%s1 + $0x78] sm:$0xff]
  %v230 = vld [vmem:[%s1 + $0x80] sm:$0xff]
  %v231 = vld [vmem:[%s1 + $0x88] sm:$0xff]
  %v232 = vld [vmem:[%s1 + $0x90] sm:$0xff]
  %v233 = vld [vmem:[%s1 + $0x98] sm:$0xff]
  %v234 = vld [vmem:[%s1 + $0xa0] sm:$0xff]
  %v235 = vld [vmem:[%s1 + $0xa8] sm:$0xff]
  %v236 = vld [vmem:[%s1 + $0xb0] sm:$0xff]
  %v237 = vld [vmem:[%s1 + $0xb8] sm:$0xff]
  %v238 = vld [vmem:[%s1 + $0xc0] sm:$0xff]
  %v239 = vld [vmem:[%s1 + $0xc8] sm:$0xff]
  %v240 = vld [vmem:[%s1 + $0xd0] sm:$0xff]
  %v241 = vld [vmem:[%s1 + $0xd8] sm:$0xff]
  %v242 = vld [vmem:[%s1 + $0xe0] sm:$0xff]
  %v243 = vld [vmem:[%s1 + $0xe8] sm:$0xff]
  %v244 = vld [vmem:[%s1 + $0xf0] sm:$0xff]
  %v245 = vld [vmem:[%s1 + $0xf8] sm:$0xff]
  %v246 = vld [vmem:[%s2] sm:$0x1]
  %v248 = vlaneseq
  %v249 = vshrl.u32 %v248, 7
  %v250 = vsub.s32 0, %v249
  %v251 = vrot.slane %v246, %v250
  %253 = vmatprep.subr.mxu0 0.0
  %254 = vmatpush1.msra.mxu0 %v214
  %255 = vmatprep.subr.mxu0 0.0
  %256 = vmatpush1.msra.mxu0 %v215
  %257 = vmatprep.subr.mxu0 0.0
  %258 = vmatpush1.msra.mxu0 %v216
  %259 = vmatprep.subr.mxu0 0.0
  %260 = vmatpush1.msra.mxu0 %v217
  %261 = vmatprep.subr.mxu0 0.0
  %262 = vmatpush1.msra.mxu0 %v218
  %263 = vmatprep.subr.mxu0 0.0
  %264 = vmatpush1.msra.mxu0 %v219
  %265 = vmatprep.subr.mxu0 0.0
  %266 = vmatpush1.msra.mxu0 %v220
  %267 = vmatprep.subr.mxu0 0.0
  %268 = vmatpush1.msra.mxu0 %v221
  %269 = vmatprep.subr.mxu0 0.0
  %270 = vmatpush1.msra.mxu0 %v222
  %271 = vmatprep.subr.mxu0 0.0
  %272 = vmatpush1.msra.mxu0 %v223
  %273 = vmatprep.subr.mxu0 0.0
  %274 = vmatpush1.msra.mxu0 %v224
  %275 = vmatprep.subr.mxu0 0.0
  %276 = vmatpush1.msra.mxu0 %v225
  %277 = vmatprep.subr.mxu0 0.0
  %278 = vmatpush1.msra.mxu0 %v226
  %279 = vmatprep.subr.mxu0 0.0
  %280 = vmatpush1.msra.mxu0 %v227
  %281 = vmatprep.subr.mxu0 0.0
  %282 = vmatpush1.msra.mxu0 %v228
  %283 = vmatprep.subr.mxu0 0.0
  %284 = vmatpush1.msra.mxu0 %v229
  %285 = vmatprep.subr.mxu0 0.0
  %286 = vmatpush1.msra.mxu0 %v230
  %287 = vmatprep.subr.mxu0 0.0
  %288 = vmatpush1.msra.mxu0 %v231
  %289 = vmatprep.subr.mxu0 0.0
  %290 = vmatpush1.msra.mxu0 %v232
  %291 = vmatprep.subr.mxu0 0.0
  %292 = vmatpush1.msra.mxu0 %v233
  %293 = vmatprep.subr.mxu0 0.0
  %294 = vmatpush1.msra.mxu0 %v234
  %295 = vmatprep.subr.mxu0 0.0
  %296 = vmatpush1.msra.mxu0 %v235
  %297 = vmatprep.subr.mxu0 0.0
  %298 = vmatpush1.msra.mxu0 %v236
  %299 = vmatprep.subr.mxu0 0.0
  %300 = vmatpush1.msra.mxu0 %v237
  %301 = vmatprep.subr.mxu0 0.0
  %302 = vmatpush1.msra.mxu0 %v238
  %303 = vmatprep.subr.mxu0 0.0
  %304 = vmatpush1.msra.mxu0 %v239
  %305 = vmatprep.subr.mxu0 0.0
  %306 = vmatpush1.msra.mxu0 %v240
  %307 = vmatprep.subr.mxu0 0.0
  %308 = vmatpush1.msra.mxu0 %v241
  %309 = vmatprep.subr.mxu0 0.0
  %310 = vmatpush1.msra.mxu0 %v242
  %311 = vmatprep.subr.mxu0 0.0
  %312 = vmatpush1.msra.mxu0 %v243
  %313 = vmatprep.subr.mxu0 0.0
  %314 = vmatpush1.msra.mxu0 %v244
  %315 = vmatprep.subr.mxu0 0.0
  %316 = vmatpush1.msra.mxu0 %v245
  %317 = vmatprep.mubr.f32.mxu0 %v15
  %318 = vmatmul.mubr.f32.gmra.mrb[0].mxu0 %v14
  %v319 = vpop.f32.mrb[0].mxu0
  %v320 = vadd.f32 %v251, %v319
  %v321 = vpop.f32.mrb[0].mxu0
  %322 = vmatprep.mubr.f32.mxu0 %v17
  %323 = vmatmul.mubr.f32.gmra.mrb[0].mxu0 %v16
  %v324 = vpop.f32.mrb[0].mxu0
  %v325 = vadd.f32 %v251, %v324
  %v326 = vpop.f32.mrb[0].mxu0
  %327 = vmatprep.mubr.f32.mxu0 %v19
  %328 = vmatmul.mubr.f32.gmra.mrb[0].mxu0 %v18
  %v329 = vpop.f32.mrb[0].mxu0
  %v330 = vadd.f32 %v251, %v329
  %v331 = vpop.f32.mrb[0].mxu0
  %332 = vmatprep.mubr.f32.mxu0 %v21
  %333 = vmatmul.mubr.f32.gmra.mrb[0].mxu0 %v20
  %v334 = vpop.f32.mrb[0].mxu0
  %v335 = vadd.f32 %v251, %v334
  %v336 = vpop.f32.mrb[0].mxu0
  %337 = vmatprep.mubr.f32.mxu0 %v23
  %338 = vmatmul.mubr.f32.gmra.mrb[0].mxu0 %v22
  %v339 = vpop.f32.mrb[0].mxu0
  %v340 = vadd.f32 %v251, %v339
  %v341 = vpop.f32.mrb[0].mxu0
  %342 = vmatprep.mubr.f32.mxu0 %v25
  %343 = vmatmul.mubr.f32.gmra.mrb[0].mxu0 %v24
  %v344 = vpop.f32.mrb[0].mxu0
  %v345 = vadd.f32 %v251, %v344
  %v346 = vpop.f32.mrb[0].mxu0
  %347 = vmatprep.mubr.f32.mxu0 %v27
  %348 = vmatmul.mubr.f32.gmra.mrb[0].mxu0 %v26
  %v349 = vpop.f32.mrb[0].mxu0
  %v350 = vadd.f32 %v251, %v349
  %v351 = vpop.f32.mrb[0].mxu0
  %352 = vmatprep.mubr.f32.mxu0 %v29
  %353 = vmatmul.mubr.f32.gmra.mrb[0].mxu0 %v28
  %v354 = vpop.f32.mrb[0].mxu0
  %v355 = vadd.f32 %v251, %v354
  %v356 = vpop.f32.mrb[0].mxu0
  %357 = vmatprep.mubr.f32.mxu0 %v31
  %358 = vmatmul.mubr.f32.gmra.mrb[0].mxu0 %v30
  %v359 = vpop.f32.mrb[0].mxu0
  %v360 = vadd.f32 %v251, %v359
  %v361 = vpop.f32.mrb[0].mxu0
  %362 = vmatprep.mubr.f32.mxu0 %v33
  %363 = vmatmul.mubr.f32.gmra.mrb[0].mxu0 %v32
  %v364 = vpop.f32.mrb[0].mxu0
  %v365 = vadd.f32 %v251, %v364
  %v366 = vpop.f32.mrb[0].mxu0
  %367 = vmatprep.mubr.f32.mxu0 %v35
  %368 = vmatmul.mubr.f32.gmra.mrb[0].mxu0 %v34
  %v369 = vpop.f32.mrb[0].mxu0
  %v370 = vadd.f32 %v251, %v369
  %v371 = vpop.f32.mrb[0].mxu0
  %372 = vmatprep.mubr.f32.mxu0 %v37
  %373 = vmatmul.mubr.f32.gmra.mrb[0].mxu0 %v36
  %v374 = vpop.f32.mrb[0].mxu0
  %v375 = vadd.f32 %v251, %v374
  %v376 = vpop.f32.mrb[0].mxu0
  %377 = vmatprep.mubr.f32.mxu0 %v39
  %378 = vmatmul.mubr.f32.gmra.mrb[0].mxu0 %v38
  %v379 = vpop.f32.mrb[0].mxu0
  %v380 = vadd.f32 %v251, %v379
  %v381 = vpop.f32.mrb[0].mxu0
  %382 = vmatprep.mubr.f32.mxu0 %v41
  %383 = vmatmul.mubr.f32.gmra.mrb[0].mxu0 %v40
  %v384 = vpop.f32.mrb[0].mxu0
  %v385 = vadd.f32 %v251, %v384
  %v386 = vpop.f32.mrb[0].mxu0
  %387 = vmatprep.mubr.f32.mxu0 %v43
  %388 = vmatmul.mubr.f32.gmra.mrb[0].mxu0 %v42
  %v389 = vpop.f32.mrb[0].mxu0
  %v390 = vadd.f32 %v251, %v389
  %v391 = vpop.f32.mrb[0].mxu0
  %392 = vmatprep.mubr.f32.mxu0 %v45
  %393 = vmatmul.mubr.f32.gmra.mrb[0].mxu0 %v44
  %v394 = vpop.f32.mrb[0].mxu0
  %v395 = vadd.f32 %v251, %v394
  %v396 = vpop.f32.mrb[0].mxu0
  %397 = vmatprep.mubr.f32.mxu0 %v47
  %398 = vmatmul.mubr.f32.gmra.mrb[0].mxu0 %v46
  %v399 = vpop.f32.mrb[0].mxu0
  %v400 = vadd.f32 %v251, %v399
  %v401 = vpop.f32.mrb[0].mxu0
  %402 = vmatprep.mubr.f32.mxu0 %v49
  %403 = vmatmul.mubr.f32.gmra.mrb[0].mxu0 %v48
  %v404 = vpop.f32.mrb[0].mxu0
  %v405 = vadd.f32 %v251, %v404
  %v406 = vpop.f32.mrb[0].mxu0
  %407 = vmatprep.mubr.f32.mxu0 %v51
  %408 = vmatmul.mubr.f32.gmra.mrb[0].mxu0 %v50
  %v409 = vpop.f32.mrb[0].mxu0
  %v410 = vadd.f32 %v251, %v409
  %v411 = vpop.f32.mrb[0].mxu0
  %412 = vmatprep.mubr.f32.mxu0 %v53
  %413 = vmatmul.mubr.f32.gmra.mrb[0].mxu0 %v52
  %v414 = vpop.f32.mrb[0].mxu0
  %v415 = vadd.f32 %v251, %v414
  %v416 = vpop.f32.mrb[0].mxu0
  %417 = vmatprep.mubr.f32.mxu0 %v55
  %418 = vmatmul.mubr.f32.gmra.mrb[0].mxu0 %v54
  %v419 = vpop.f32.mrb[0].mxu0
  %v420 = vadd.f32 %v251, %v419
  %v421 = vpop.f32.mrb[0].mxu0
  %422 = vmatprep.mubr.f32.mxu0 %v57
  %423 = vmatmul.mubr.f32.gmra.mrb[0].mxu0 %v56
  %v424 = vpop.f32.mrb[0].mxu0
  %v425 = vadd.f32 %v251, %v424
  %v426 = vpop.f32.mrb[0].mxu0
  %427 = vmatprep.mubr.f32.mxu0 %v59
  %428 = vmatmul.mubr.f32.gmra.mrb[0].mxu0 %v58
  %v429 = vpop.f32.mrb[0].mxu0
  %v430 = vadd.f32 %v251, %v429
  %v431 = vpop.f32.mrb[0].mxu0
  %432 = vmatprep.mubr.f32.mxu0 %v61
  %433 = vmatmul.mubr.f32.gmra.mrb[0].mxu0 %v60
  %v434 = vpop.f32.mrb[0].mxu0
  %v435 = vadd.f32 %v251, %v434
  %v436 = vpop.f32.mrb[0].mxu0
  %437 = vmatprep.mubr.f32.mxu0 %v63
  %438 = vmatmul.mubr.f32.gmra.mrb[0].mxu0 %v62
  %v439 = vpop.f32.mrb[0].mxu0
  %v440 = vadd.f32 %v251, %v439
  %v441 = vpop.f32.mrb[0].mxu0
  %442 = vmatprep.mubr.f32.mxu0 %v65
  %443 = vmatmul.mubr.f32.gmra.mrb[0].mxu0 %v64
  %v444 = vpop.f32.mrb[0].mxu0
  %v445 = vadd.f32 %v251, %v444
  %v446 = vpop.f32.mrb[0].mxu0
  %447 = vmatprep.mubr.f32.mxu0 %v67
  %448 = vmatmul.mubr.f32.gmra.mrb[0].mxu0 %v66
  %v449 = vpop.f32.mrb[0].mxu0
  %v450 = vadd.f32 %v251, %v449
  %v451 = vpop.f32.mrb[0].mxu0
  %452 = vmatprep.mubr.f32.mxu0 %v69
  %453 = vmatmul.mubr.f32.gmra.mrb[0].mxu0 %v68
  %v454 = vpop.f32.mrb[0].mxu0
  %v455 = vadd.f32 %v251, %v454
  %v456 = vpop.f32.mrb[0].mxu0
  %457 = vmatprep.mubr.f32.mxu0 %v71
  %458 = vmatmul.mubr.f32.gmra.mrb[0].mxu0 %v70
  %v459 = vpop.f32.mrb[0].mxu0
  %v460 = vadd.f32 %v251, %v459
  %v461 = vpop.f32.mrb[0].mxu0
  %462 = vmatprep.mubr.f32.mxu0 %v73
  %463 = vmatmul.mubr.f32.gmra.mrb[0].mxu0 %v72
  %v464 = vpop.f32.mrb[0].mxu0
  %v465 = vadd.f32 %v251, %v464
  %v466 = vpop.f32.mrb[0].mxu0
  %467 = vmatprep.mubr.f32.mxu0 %v75
  %468 = vmatmul.mubr.f32.gmra.mrb[0].mxu0 %v74
  %v469 = vpop.f32.mrb[0].mxu0
  %v470 = vadd.f32 %v251, %v469
  %v471 = vpop.f32.mrb[0].mxu0
  %472 = vmatprep.mubr.f32.mxu0 %v77
  %473 = vmatmul.mubr.f32.gmra.mrb[0].mxu0 %v76
  %v474 = vpop.f32.mrb[0].mxu0
  %v475 = vadd.f32 %v251, %v474
  %v476 = vpop.f32.mrb[0].mxu0
  %477 = vmatprep.mubr.f32.mxu0 %v79
  %478 = vmatmul.mubr.f32.gmra.mrb[0].mxu0 %v78
  %v479 = vpop.f32.mrb[0].mxu0
  %v480 = vadd.f32 %v251, %v479
  %v481 = vpop.f32.mrb[0].mxu0
  %482 = vmatprep.mubr.f32.mxu0 %v81
  %483 = vmatmul.mubr.f32.gmra.mrb[0].mxu0 %v80
  %v484 = vpop.f32.mrb[0].mxu0
  %v485 = vadd.f32 %v251, %v484
  %v486 = vpop.f32.mrb[0].mxu0
  %487 = vmatprep.mubr.f32.mxu0 %v83
  %488 = vmatmul.mubr.f32.gmra.mrb[0].mxu0 %v82
  %v489 = vpop.f32.mrb[0].mxu0
  %v490 = vadd.f32 %v251, %v489
  %v491 = vpop.f32.mrb[0].mxu0
  %492 = vmatprep.mubr.f32.mxu0 %v85
  %493 = vmatmul.mubr.f32.gmra.mrb[0].mxu0 %v84
  %v494 = vpop.f32.mrb[0].mxu0
  %v495 = vadd.f32 %v251, %v494
  %v496 = vpop.f32.mrb[0].mxu0
  %497 = vmatprep.mubr.f32.mxu0 %v87
  %498 = vmatmul.mubr.f32.gmra.mrb[0].mxu0 %v86
  %v499 = vpop.f32.mrb[0].mxu0
  %v500 = vadd.f32 %v251, %v499
  %v501 = vpop.f32.mrb[0].mxu0
  %502 = vmatprep.mubr.f32.mxu0 %v89
  %503 = vmatmul.mubr.f32.gmra.mrb[0].mxu0 %v88
  %v504 = vpop.f32.mrb[0].mxu0
  %v505 = vadd.f32 %v251, %v504
  %v506 = vpop.f32.mrb[0].mxu0
  %507 = vmatprep.mubr.f32.mxu0 %v91
  %508 = vmatmul.mubr.f32.gmra.mrb[0].mxu0 %v90
  %v509 = vpop.f32.mrb[0].mxu0
  %v510 = vadd.f32 %v251, %v509
  %v511 = vpop.f32.mrb[0].mxu0
  %512 = vmatprep.mubr.f32.mxu0 %v93
  %513 = vmatmul.mubr.f32.gmra.mrb[0].mxu0 %v92
  %v514 = vpop.f32.mrb[0].mxu0
  %v515 = vadd.f32 %v251, %v514
  %v516 = vpop.f32.mrb[0].mxu0
  %517 = vmatprep.mubr.f32.mxu0 %v95
  %518 = vmatmul.mubr.f32.gmra.mrb[0].mxu0 %v94
  %v519 = vpop.f32.mrb[0].mxu0
  %v520 = vadd.f32 %v251, %v519
  %v521 = vpop.f32.mrb[0].mxu0
  %522 = vmatprep.mubr.f32.mxu0 %v97
  %523 = vmatmul.mubr.f32.gmra.mrb[0].mxu0 %v96
  %v524 = vpop.f32.mrb[0].mxu0
  %v525 = vadd.f32 %v251, %v524
  %v526 = vpop.f32.mrb[0].mxu0
  %527 = vmatprep.mubr.f32.mxu0 %v99
  %528 = vmatmul.mubr.f32.gmra.mrb[0].mxu0 %v98
  %v529 = vpop.f32.mrb[0].mxu0
  %v530 = vadd.f32 %v251, %v529
  %v531 = vpop.f32.mrb[0].mxu0
  %532 = vmatprep.mubr.f32.mxu0 %v101
  %533 = vmatmul.mubr.f32.gmra.mrb[0].mxu0 %v100
  %v534 = vpop.f32.mrb[0].mxu0
  %v535 = vadd.f32 %v251, %v534
  %v536 = vpop.f32.mrb[0].mxu0
  %537 = vmatprep.mubr.f32.mxu0 %v103
  %538 = vmatmul.mubr.f32.gmra.mrb[0].mxu0 %v102
  %v539 = vpop.f32.mrb[0].mxu0
  %v540 = vadd.f32 %v251, %v539
  %v541 = vpop.f32.mrb[0].mxu0
  %542 = vmatprep.mubr.f32.mxu0 %v105
  %543 = vmatmul.mubr.f32.gmra.mrb[0].mxu0 %v104
  %v544 = vpop.f32.mrb[0].mxu0
  %v545 = vadd.f32 %v251, %v544
  %v546 = vpop.f32.mrb[0].mxu0
  %547 = vmatprep.mubr.f32.mxu0 %v107
  %548 = vmatmul.mubr.f32.gmra.mrb[0].mxu0 %v106
  %v549 = vpop.f32.mrb[0].mxu0
  %v550 = vadd.f32 %v251, %v549
  %v551 = vpop.f32.mrb[0].mxu0
  %552 = vmatprep.mubr.f32.mxu0 %v109
  %553 = vmatmul.mubr.f32.gmra.mrb[0].mxu0 %v108
  %v554 = vpop.f32.mrb[0].mxu0
  %v555 = vadd.f32 %v251, %v554
  %v556 = vpop.f32.mrb[0].mxu0
  %557 = vmatprep.mubr.f32.mxu0 %v111
  %558 = vmatmul.mubr.f32.gmra.mrb[0].mxu0 %v110
  %v559 = vpop.f32.mrb[0].mxu0
  %v560 = vadd.f32 %v251, %v559
  %v561 = vpop.f32.mrb[0].mxu0
  %562 = vmatprep.mubr.f32.mxu0 %v113
  %563 = vmatmul.mubr.f32.gmra.mrb[0].mxu0 %v112
  %v564 = vpop.f32.mrb[0].mxu0
  %v565 = vadd.f32 %v251, %v564
  %v566 = vpop.f32.mrb[0].mxu0
  %567 = vmatprep.mubr.f32.mxu0 %v115
  %568 = vmatmul.mubr.f32.gmra.mrb[0].mxu0 %v114
  %v569 = vpop.f32.mrb[0].mxu0
  %v570 = vadd.f32 %v251, %v569
  %v571 = vpop.f32.mrb[0].mxu0
  %572 = vmatprep.mubr.f32.mxu0 %v117
  %573 = vmatmul.mubr.f32.gmra.mrb[0].mxu0 %v116
  %v574 = vpop.f32.mrb[0].mxu0
  %v575 = vadd.f32 %v251, %v574
  %v576 = vpop.f32.mrb[0].mxu0
  %577 = vmatprep.mubr.f32.mxu0 %v119
  %578 = vmatmul.mubr.f32.gmra.mrb[0].mxu0 %v118
  %v579 = vpop.f32.mrb[0].mxu0
  %v580 = vadd.f32 %v251, %v579
  %v581 = vpop.f32.mrb[0].mxu0
  %582 = vmatprep.mubr.f32.mxu0 %v121
  %583 = vmatmul.mubr.f32.gmra.mrb[0].mxu0 %v120
  %v584 = vpop.f32.mrb[0].mxu0
  %v585 = vadd.f32 %v251, %v584
  %v586 = vpop.f32.mrb[0].mxu0
  %587 = vmatprep.mubr.f32.mxu0 %v123
  %588 = vmatmul.mubr.f32.gmra.mrb[0].mxu0 %v122
  %v589 = vpop.f32.mrb[0].mxu0
  %v590 = vadd.f32 %v251, %v589
  %v591 = vpop.f32.mrb[0].mxu0
  %592 = vmatprep.mubr.f32.mxu0 %v125
  %593 = vmatmul.mubr.f32.gmra.mrb[0].mxu0 %v124
  %v594 = vpop.f32.mrb[0].mxu0
  %v595 = vadd.f32 %v251, %v594
  %v596 = vpop.f32.mrb[0].mxu0
  %597 = vmatprep.mubr.f32.mxu0 %v127
  %598 = vmatmul.mubr.f32.gmra.mrb[0].mxu0 %v126
  %v599 = vpop.f32.mrb[0].mxu0
  %v600 = vadd.f32 %v251, %v599
  %v601 = vpop.f32.mrb[0].mxu0
  %602 = vmatprep.mubr.f32.mxu0 %v129
  %603 = vmatmul.mubr.f32.gmra.mrb[0].mxu0 %v128
  %v604 = vpop.f32.mrb[0].mxu0
  %v605 = vadd.f32 %v251, %v604
  %v606 = vpop.f32.mrb[0].mxu0
  %607 = vmatprep.mubr.f32.mxu0 %v131
  %608 = vmatmul.mubr.f32.gmra.mrb[0].mxu0 %v130
  %v609 = vpop.f32.mrb[0].mxu0
  %v610 = vadd.f32 %v251, %v609
  %v611 = vpop.f32.mrb[0].mxu0
  %612 = vmatprep.mubr.f32.mxu0 %v133
  %613 = vmatmul.mubr.f32.gmra.mrb[0].mxu0 %v132
  %v614 = vpop.f32.mrb[0].mxu0
  %v615 = vadd.f32 %v251, %v614
  %v616 = vpop.f32.mrb[0].mxu0
  %617 = vmatprep.mubr.f32.mxu0 %v135
  %618 = vmatmul.mubr.f32.gmra.mrb[0].mxu0 %v134
  %v619 = vpop.f32.mrb[0].mxu0
  %v620 = vadd.f32 %v251, %v619
  %v621 = vpop.f32.mrb[0].mxu0
  %622 = vmatprep.mubr.f32.mxu0 %v137
  %623 = vmatmul.mubr.f32.gmra.mrb[0].mxu0 %v136
  %v624 = vpop.f32.mrb[0].mxu0
  %v625 = vadd.f32 %v251, %v624
  %v626 = vpop.f32.mrb[0].mxu0
  %627 = vmatprep.mubr.f32.mxu0 %v139
  %628 = vmatmul.mubr.f32.gmra.mrb[0].mxu0 %v138
  %v629 = vpop.f32.mrb[0].mxu0
  %v630 = vadd.f32 %v251, %v629
  %v631 = vpop.f32.mrb[0].mxu0
  %632 = vmatprep.mubr.f32.mxu0 %v141
  %633 = vmatmul.mubr.f32.gmra.mrb[0].mxu0 %v140
  %v634 = vpop.f32.mrb[0].mxu0
  %v635 = vadd.f32 %v251, %v634
  %v636 = vpop.f32.mrb[0].mxu0
  %637 = vmatprep.mubr.f32.mxu0 %v143
  %638 = vmatmul.mubr.f32.gmra.mrb[0].mxu0 %v142
  %v639 = vpop.f32.mrb[0].mxu0
  %v640 = vadd.f32 %v251, %v639
  %v641 = vpop.f32.mrb[0].mxu0
  %642 = vmatprep.mubr.f32.mxu0 %v145
  %643 = vmatmul.mubr.f32.gmra.mrb[0].mxu0 %v144
  %v644 = vpop.f32.mrb[0].mxu0
  %v645 = vadd.f32 %v251, %v644
  %v646 = vpop.f32.mrb[0].mxu0
  %647 = vmatprep.mubr.f32.mxu0 %v147
  %648 = vmatmul.mubr.f32.gmra.mrb[0].mxu0 %v146
  %v649 = vpop.f32.mrb[0].mxu0
  %v650 = vadd.f32 %v251, %v649
  %v651 = vpop.f32.mrb[0].mxu0
  %652 = vmatprep.mubr.f32.mxu0 %v149
  %653 = vmatmul.mubr.f32.gmra.mrb[0].mxu0 %v148
  %v654 = vpop.f32.mrb[0].mxu0
  %v655 = vadd.f32 %v251, %v654
  %v656 = vpop.f32.mrb[0].mxu0
  %657 = vmatprep.mubr.f32.mxu0 %v151
  %658 = vmatmul.mubr.f32.gmra.mrb[0].mxu0 %v150
  %v659 = vpop.f32.mrb[0].mxu0
  %v660 = vadd.f32 %v251, %v659
  %v661 = vpop.f32.mrb[0].mxu0
  %662 = vmatprep.mubr.f32.mxu0 %v153
  %663 = vmatmul.mubr.f32.gmra.mrb[0].mxu0 %v152
  %v664 = vpop.f32.mrb[0].mxu0
  %v665 = vadd.f32 %v251, %v664
  %v666 = vpop.f32.mrb[0].mxu0
  %667 = vmatprep.mubr.f32.mxu0 %v155
  %668 = vmatmul.mubr.f32.gmra.mrb[0].mxu0 %v154
  %v669 = vpop.f32.mrb[0].mxu0
  %v670 = vadd.f32 %v251, %v669
  %v671 = vpop.f32.mrb[0].mxu0
  %672 = vmatprep.mubr.f32.mxu0 %v157
  %673 = vmatmul.mubr.f32.gmra.mrb[0].mxu0 %v156
  %v674 = vpop.f32.mrb[0].mxu0
  %v675 = vadd.f32 %v251, %v674
  %v676 = vpop.f32.mrb[0].mxu0
  %677 = vmatprep.mubr.f32.mxu0 %v159
  %678 = vmatmul.mubr.f32.gmra.mrb[0].mxu0 %v158
  %v679 = vpop.f32.mrb[0].mxu0
  %v680 = vadd.f32 %v251, %v679
  %v681 = vpop.f32.mrb[0].mxu0
  %682 = vmatprep.mubr.f32.mxu0 %v161
  %683 = vmatmul.mubr.f32.gmra.mrb[0].mxu0 %v160
  %v684 = vpop.f32.mrb[0].mxu0
  %v685 = vadd.f32 %v251, %v684
  %v686 = vpop.f32.mrb[0].mxu0
  %687 = vmatprep.mubr.f32.mxu0 %v163
  %688 = vmatmul.mubr.f32.gmra.mrb[0].mxu0 %v162
  %v689 = vpop.f32.mrb[0].mxu0
  %v690 = vadd.f32 %v251, %v689
  %v691 = vpop.f32.mrb[0].mxu0
  %692 = vmatprep.mubr.f32.mxu0 %v165
  %693 = vmatmul.mubr.f32.gmra.mrb[0].mxu0 %v164
  %v694 = vpop.f32.mrb[0].mxu0
  %v695 = vadd.f32 %v251, %v694
  %v696 = vpop.f32.mrb[0].mxu0
  %697 = vmatprep.mubr.f32.mxu0 %v167
  %698 = vmatmul.mubr.f32.gmra.mrb[0].mxu0 %v166
  %v699 = vpop.f32.mrb[0].mxu0
  %v700 = vadd.f32 %v251, %v699
  %v701 = vpop.f32.mrb[0].mxu0
  %702 = vmatprep.mubr.f32.mxu0 %v169
  %703 = vmatmul.mubr.f32.gmra.mrb[0].mxu0 %v168
  %v704 = vpop.f32.mrb[0].mxu0
  %v705 = vadd.f32 %v251, %v704
  %v706 = vpop.f32.mrb[0].mxu0
  %707 = vmatprep.mubr.f32.mxu0 %v171
  %708 = vmatmul.mubr.f32.gmra.mrb[0].mxu0 %v170
  %v709 = vpop.f32.mrb[0].mxu0
  %v710 = vadd.f32 %v251, %v709
  %v711 = vpop.f32.mrb[0].mxu0
  %712 = vmatprep.mubr.f32.mxu0 %v173
  %713 = vmatmul.mubr.f32.gmra.mrb[0].mxu0 %v172
  %v714 = vpop.f32.mrb[0].mxu0
  %v715 = vadd.f32 %v251, %v714
  %v716 = vpop.f32.mrb[0].mxu0
  %717 = vmatprep.mubr.f32.mxu0 %v175
  %718 = vmatmul.mubr.f32.gmra.mrb[0].mxu0 %v174
  %v719 = vpop.f32.mrb[0].mxu0
  %v720 = vadd.f32 %v251, %v719
  %v721 = vpop.f32.mrb[0].mxu0
  %722 = vmatprep.mubr.f32.mxu0 %v177
  %723 = vmatmul.mubr.f32.gmra.mrb[0].mxu0 %v176
  %v724 = vpop.f32.mrb[0].mxu0
  %v725 = vadd.f32 %v251, %v724
  %v726 = vpop.f32.mrb[0].mxu0
  %727 = vmatprep.mubr.f32.mxu0 %v179
  %728 = vmatmul.mubr.f32.gmra.mrb[0].mxu0 %v178
  %v729 = vpop.f32.mrb[0].mxu0
  %v730 = vadd.f32 %v251, %v729
  %v731 = vpop.f32.mrb[0].mxu0
  %732 = vmatprep.mubr.f32.mxu0 %v181
  %733 = vmatmul.mubr.f32.gmra.mrb[0].mxu0 %v180
  %v734 = vpop.f32.mrb[0].mxu0
  %v735 = vadd.f32 %v251, %v734
  %v736 = vpop.f32.mrb[0].mxu0
  %737 = vmatprep.mubr.f32.mxu0 %v183
  %738 = vmatmul.mubr.f32.gmra.mrb[0].mxu0 %v182
  %v739 = vpop.f32.mrb[0].mxu0
  %v740 = vadd.f32 %v251, %v739
  %v741 = vpop.f32.mrb[0].mxu0
  %742 = vmatprep.mubr.f32.mxu0 %v185
  %743 = vmatmul.mubr.f32.gmra.mrb[0].mxu0 %v184
  %v744 = vpop.f32.mrb[0].mxu0
  %v745 = vadd.f32 %v251, %v744
  %v746 = vpop.f32.mrb[0].mxu0
  %747 = vmatprep.mubr.f32.mxu0 %v187
  %748 = vmatmul.mubr.f32.gmra.mrb[0].mxu0 %v186
  %v749 = vpop.f32.mrb[0].mxu0
  %v750 = vadd.f32 %v251, %v749
  %v751 = vpop.f32.mrb[0].mxu0
  %752 = vmatprep.mubr.f32.mxu0 %v189
  %753 = vmatmul.mubr.f32.gmra.mrb[0].mxu0 %v188
  %v754 = vpop.f32.mrb[0].mxu0
  %v755 = vadd.f32 %v251, %v754
  %v756 = vpop.f32.mrb[0].mxu0
  %757 = vmatprep.mubr.f32.mxu0 %v191
  %758 = vmatmul.mubr.f32.gmra.mrb[0].mxu0 %v190
  %v759 = vpop.f32.mrb[0].mxu0
  %v760 = vadd.f32 %v251, %v759
  %v761 = vpop.f32.mrb[0].mxu0
  %762 = vmatprep.mubr.f32.mxu0 %v193
  %763 = vmatmul.mubr.f32.gmra.mrb[0].mxu0 %v192
  %v764 = vpop.f32.mrb[0].mxu0
  %v765 = vadd.f32 %v251, %v764
  %v766 = vpop.f32.mrb[0].mxu0
  %767 = vmatprep.mubr.f32.mxu0 %v195
  %768 = vmatmul.mubr.f32.gmra.mrb[0].mxu0 %v194
  %v769 = vpop.f32.mrb[0].mxu0
  %v770 = vadd.f32 %v251, %v769
  %v771 = vpop.f32.mrb[0].mxu0
  %772 = vmatprep.mubr.f32.mxu0 %v197
  %773 = vmatmul.mubr.f32.gmra.mrb[0].mxu0 %v196
  %v774 = vpop.f32.mrb[0].mxu0
  %v775 = vadd.f32 %v251, %v774
  %v776 = vpop.f32.mrb[0].mxu0
  %777 = vmatprep.mubr.f32.mxu0 %v199
  %778 = vmatmul.mubr.f32.gmra.mrb[0].mxu0 %v198
  %v779 = vpop.f32.mrb[0].mxu0
  %v780 = vadd.f32 %v251, %v779
  %v781 = vpop.f32.mrb[0].mxu0
  %782 = vmatprep.mubr.f32.mxu0 %v201
  %783 = vmatmul.mubr.f32.gmra.mrb[0].mxu0 %v200
  %v784 = vpop.f32.mrb[0].mxu0
  %v785 = vadd.f32 %v251, %v784
  %v786 = vpop.f32.mrb[0].mxu0
  %787 = vmatprep.mubr.f32.mxu0 %v203
  %788 = vmatmul.mubr.f32.gmra.mrb[0].mxu0 %v202
  %v789 = vpop.f32.mrb[0].mxu0
  %v790 = vadd.f32 %v251, %v789
  %v791 = vpop.f32.mrb[0].mxu0
  %792 = vmatprep.mubr.f32.mxu0 %v205
  %793 = vmatmul.mubr.f32.gmra.mrb[0].mxu0 %v204
  %v794 = vpop.f32.mrb[0].mxu0
  %v795 = vadd.f32 %v251, %v794
  %v796 = vpop.f32.mrb[0].mxu0
  %797 = vmatprep.mubr.f32.mxu0 %v207
  %798 = vmatmul.mubr.f32.gmra.mrb[0].mxu0 %v206
  %v799 = vpop.f32.mrb[0].mxu0
  %v800 = vadd.f32 %v251, %v799
  %v801 = vpop.f32.mrb[0].mxu0
  %802 = vmatprep.mubr.f32.mxu0 %v209
  %803 = vmatmul.mubr.f32.gmra.mrb[0].mxu0 %v208
  %v804 = vpop.f32.mrb[0].mxu0
  %v805 = vadd.f32 %v251, %v804
  %v806 = vpop.f32.mrb[0].mxu0
  %807 = vmatprep.mubr.f32.mxu0 %v211
  %808 = vmatmul.mubr.f32.gmra.mrb[0].mxu0 %v210
  %v809 = vpop.f32.mrb[0].mxu0
  %v810 = vadd.f32 %v251, %v809
  %v811 = vpop.f32.mrb[0].mxu0
  %812 = vmatprep.mubr.f32.mxu0 %v213
  %813 = vmatmul.mubr.f32.gmra.mrb[0].mxu0 %v212
  %v814 = vpop.f32.mrb[0].mxu0
  %v815 = vadd.f32 %v251, %v814
  %v816 = vpop.f32.mrb[0].mxu0
  %817 = vdwg.mxu0
  %v818 = vmax.f32 %v320, 0.0
  %v819 = vmax.f32 %v325, 0.0
  %v820 = vmax.f32 %v330, 0.0
  %v821 = vmax.f32 %v335, 0.0
  %v822 = vmax.f32 %v340, 0.0
  %v823 = vmax.f32 %v345, 0.0
  %v824 = vmax.f32 %v350, 0.0
  %v825 = vmax.f32 %v355, 0.0
  %v826 = vmax.f32 %v360, 0.0
  %v827 = vmax.f32 %v365, 0.0
  %v828 = vmax.f32 %v370, 0.0
  %v829 = vmax.f32 %v375, 0.0
  %v830 = vmax.f32 %v380, 0.0
  %v831 = vmax.f32 %v385, 0.0
  %v832 = vmax.f32 %v390, 0.0
  %v833 = vmax.f32 %v395, 0.0
  %v834 = vmax.f32 %v400, 0.0
  %v835 = vmax.f32 %v405, 0.0
  %v836 = vmax.f32 %v410, 0.0
  %v837 = vmax.f32 %v415, 0.0
  %v838 = vmax.f32 %v420, 0.0
  %v839 = vmax.f32 %v425, 0.0
  %v840 = vmax.f32 %v430, 0.0
  %v841 = vmax.f32 %v435, 0.0
  %v842 = vmax.f32 %v440, 0.0
  %v843 = vmax.f32 %v445, 0.0
  %v844 = vmax.f32 %v450, 0.0
  %v845 = vmax.f32 %v455, 0.0
  %v846 = vmax.f32 %v460, 0.0
  %v847 = vmax.f32 %v465, 0.0
  %v848 = vmax.f32 %v470, 0.0
  %v849 = vmax.f32 %v475, 0.0
  %v850 = vmax.f32 %v480, 0.0
  %v851 = vmax.f32 %v485, 0.0
  %v852 = vmax.f32 %v490, 0.0
  %v853 = vmax.f32 %v495, 0.0
  %v854 = vmax.f32 %v500, 0.0
  %v855 = vmax.f32 %v505, 0.0
  %v856 = vmax.f32 %v510, 0.0
  %v857 = vmax.f32 %v515, 0.0
  %v858 = vmax.f32 %v520, 0.0
  %v859 = vmax.f32 %v525, 0.0
  %v860 = vmax.f32 %v530, 0.0
  %v861 = vmax.f32 %v535, 0.0
  %v862 = vmax.f32 %v540, 0.0
  %v863 = vmax.f32 %v545, 0.0
  %v864 = vmax.f32 %v550, 0.0
  %v865 = vmax.f32 %v555, 0.0
  %v866 = vmax.f32 %v560, 0.0
  %v867 = vmax.f32 %v565, 0.0
  %v868 = vmax.f32 %v570, 0.0
  %v869 = vmax.f32 %v575, 0.0
  %v870 = vmax.f32 %v580, 0.0
  %v871 = vmax.f32 %v585, 0.0
  %v872 = vmax.f32 %v590, 0.0
  %v873 = vmax.f32 %v595, 0.0
  %v874 = vmax.f32 %v600, 0.0
  %v875 = vmax.f32 %v605, 0.0
  %v876 = vmax.f32 %v610, 0.0
  %v877 = vmax.f32 %v615, 0.0
  %v878 = vmax.f32 %v620, 0.0
  %v879 = vmax.f32 %v625, 0.0
  %v880 = vmax.f32 %v630, 0.0
  %v881 = vmax.f32 %v635, 0.0
  %v882 = vmax.f32 %v640, 0.0
  %v883 = vmax.f32 %v645, 0.0
  %v884 = vmax.f32 %v650, 0.0
  %v885 = vmax.f32 %v655, 0.0
  %v886 = vmax.f32 %v660, 0.0
  %v887 = vmax.f32 %v665, 0.0
  %v888 = vmax.f32 %v670, 0.0
  %v889 = vmax.f32 %v675, 0.0
  %v890 = vmax.f32 %v680, 0.0
  %v891 = vmax.f32 %v685, 0.0
  %v892 = vmax.f32 %v690, 0.0
  %v893 = vmax.f32 %v695, 0.0
  %v894 = vmax.f32 %v700, 0.0
  %v895 = vmax.f32 %v705, 0.0
  %v896 = vmax.f32 %v710, 0.0
  %v897 = vmax.f32 %v715, 0.0
  %v898 = vmax.f32 %v720, 0.0
  %v899 = vmax.f32 %v725, 0.0
  %v900 = vmax.f32 %v730, 0.0
  %v901 = vmax.f32 %v735, 0.0
  %v902 = vmax.f32 %v740, 0.0
  %v903 = vmax.f32 %v745, 0.0
  %v904 = vmax.f32 %v750, 0.0
  %v905 = vmax.f32 %v755, 0.0
  %v906 = vmax.f32 %v760, 0.0
  %v907 = vmax.f32 %v765, 0.0
  %v908 = vmax.f32 %v770, 0.0
  %v909 = vmax.f32 %v775, 0.0
  %v910 = vmax.f32 %v780, 0.0
  %v911 = vmax.f32 %v785, 0.0
  %v912 = vmax.f32 %v790, 0.0
  %v913 = vmax.f32 %v795, 0.0
  %v914 = vmax.f32 %v800, 0.0
  %v915 = vmax.f32 %v805, 0.0
  %v916 = vmax.f32 %v810, 0.0
  %v917 = vmax.f32 %v815, 0.0
  %918 = vst [vmem:[%s3] sm:$0xff] %v818
  %919 = vst [vmem:[%s3 + $0x8] sm:$0xff] %v819
  %920 = vst [vmem:[%s3 + $0x10] sm:$0xff] %v820
  %921 = vst [vmem:[%s3 + $0x18] sm:$0xff] %v821
  %922 = vst [vmem:[%s3 + $0x20] sm:$0xff] %v822
  %923 = vst [vmem:[%s3 + $0x28] sm:$0xff] %v823
  %924 = vst [vmem:[%s3 + $0x30] sm:$0xff] %v824
  %925 = vst [vmem:[%s3 + $0x38] sm:$0xff] %v825
  %926 = vst [vmem:[%s3 + $0x40] sm:$0xff] %v826
  %927 = vst [vmem:[%s3 + $0x48] sm:$0xff] %v827
  %928 = vst [vmem:[%s3 + $0x50] sm:$0xff] %v828
  %929 = vst [vmem:[%s3 + $0x58] sm:$0xff] %v829
  %930 = vst [vmem:[%s3 + $0x60] sm:$0xff] %v830
  %931 = vst [vmem:[%s3 + $0x68] sm:$0xff] %v831
  %932 = vst [vmem:[%s3 + $0x70] sm:$0xff] %v832
  %933 = vst [vmem:[%s3 + $0x78] sm:$0xff] %v833
  %934 = vst [vmem:[%s3 + $0x80] sm:$0xff] %v834
  %935 = vst [vmem:[%s3 + $0x88] sm:$0xff] %v835
  %936 = vst [vmem:[%s3 + $0x90] sm:$0xff] %v836
  %937 = vst [vmem:[%s3 + $0x98] sm:$0xff] %v837
  %938 = vst [vmem:[%s3 + $0xa0] sm:$0xff] %v838
  %939 = vst [vmem:[%s3 + $0xa8] sm:$0xff] %v839
  %940 = vst [vmem:[%s3 + $0xb0] sm:$0xff] %v840
  %941 = vst [vmem:[%s3 + $0xb8] sm:$0xff] %v841
  %942 = vst [vmem:[%s3 + $0xc0] sm:$0xff] %v842
  %943 = vst [vmem:[%s3 + $0xc8] sm:$0xff] %v843
  %944 = vst [vmem:[%s3 + $0xd0] sm:$0xff] %v844
  %945 = vst [vmem:[%s3 + $0xd8] sm:$0xff] %v845
  %946 = vst [vmem:[%s3 + $0xe0] sm:$0xff] %v846
  %947 = vst [vmem:[%s3 + $0xe8] sm:$0xff] %v847
  %948 = vst [vmem:[%s3 + $0xf0] sm:$0xff] %v848
  %949 = vst [vmem:[%s3 + $0xf8] sm:$0xff] %v849
  %950 = vst [vmem:[%s3 + $0x100] sm:$0xff] %v850
  %951 = vst [vmem:[%s3 + $0x108] sm:$0xff] %v851
  %952 = vst [vmem:[%s3 + $0x110] sm:$0xff] %v852
  %953 = vst [vmem:[%s3 + $0x118] sm:$0xff] %v853
  %954 = vst [vmem:[%s3 + $0x120] sm:$0xff] %v854
  %955 = vst [vmem:[%s3 + $0x128] sm:$0xff] %v855
  %956 = vst [vmem:[%s3 + $0x130] sm:$0xff] %v856
  %957 = vst [vmem:[%s3 + $0x138] sm:$0xff] %v857
  %958 = vst [vmem:[%s3 + $0x140] sm:$0xff] %v858
  %959 = vst [vmem:[%s3 + $0x148] sm:$0xff] %v859
  %960 = vst [vmem:[%s3 + $0x150] sm:$0xff] %v860
  %961 = vst [vmem:[%s3 + $0x158] sm:$0xff] %v861
  %962 = vst [vmem:[%s3 + $0x160] sm:$0xff] %v862
  %963 = vst [vmem:[%s3 + $0x168] sm:$0xff] %v863
  %964 = vst [vmem:[%s3 + $0x170] sm:$0xff] %v864
  %965 = vst [vmem:[%s3 + $0x178] sm:$0xff] %v865
  %966 = vst [vmem:[%s3 + $0x180] sm:$0xff] %v866
  %967 = vst [vmem:[%s3 + $0x188] sm:$0xff] %v867
  %968 = vst [vmem:[%s3 + $0x190] sm:$0xff] %v868
  %969 = vst [vmem:[%s3 + $0x198] sm:$0xff] %v869
  %970 = vst [vmem:[%s3 + $0x1a0] sm:$0xff] %v870
  %971 = vst [vmem:[%s3 + $0x1a8] sm:$0xff] %v871
  %972 = vst [vmem:[%s3 + $0x1b0] sm:$0xff] %v872
  %973 = vst [vmem:[%s3 + $0x1b8] sm:$0xff] %v873
  %974 = vst [vmem:[%s3 + $0x1c0] sm:$0xff] %v874
  %975 = vst [vmem:[%s3 + $0x1c8] sm:$0xff] %v875
  %976 = vst [vmem:[%s3 + $0x1d0] sm:$0xff] %v876
  %977 = vst [vmem:[%s3 + $0x1d8] sm:$0xff] %v877
  %978 = vst [vmem:[%s3 + $0x1e0] sm:$0xff] %v878
  %979 = vst [vmem:[%s3 + $0x1e8] sm:$0xff] %v879
  %980 = vst [vmem:[%s3 + $0x1f0] sm:$0xff] %v880
  %981 = vst [vmem:[%s3 + $0x1f8] sm:$0xff] %v881
  %982 = vst [vmem:[%s3 + $0x200] sm:$0xff] %v882
  %983 = vst [vmem:[%s3 + $0x208] sm:$0xff] %v883
  %984 = vst [vmem:[%s3 + $0x210] sm:$0xff] %v884
  %985 = vst [vmem:[%s3 + $0x218] sm:$0xff] %v885
  %986 = vst [vmem:[%s3 + $0x220] sm:$0xff] %v886
  %987 = vst [vmem:[%s3 + $0x228] sm:$0xff] %v887
  %988 = vst [vmem:[%s3 + $0x230] sm:$0xff] %v888
  %989 = vst [vmem:[%s3 + $0x238] sm:$0xff] %v889
  %990 = vst [vmem:[%s3 + $0x240] sm:$0xff] %v890
  %991 = vst [vmem:[%s3 + $0x248] sm:$0xff] %v891
  %992 = vst [vmem:[%s3 + $0x250] sm:$0xff] %v892
  %993 = vst [vmem:[%s3 + $0x258] sm:$0xff] %v893
  %994 = vst [vmem:[%s3 + $0x260] sm:$0xff] %v894
  %995 = vst [vmem:[%s3 + $0x268] sm:$0xff] %v895
  %996 = vst [vmem:[%s3 + $0x270] sm:$0xff] %v896
  %997 = vst [vmem:[%s3 + $0x278] sm:$0xff] %v897
  %998 = vst [vmem:[%s3 + $0x280] sm:$0xff] %v898
  %999 = vst [vmem:[%s3 + $0x288] sm:$0xff] %v899
  %1000 = vst [vmem:[%s3 + $0x290] sm:$0xff] %v900
  %1001 = vst [vmem:[%s3 + $0x298] sm:$0xff] %v901
  %1002 = vst [vmem:[%s3 + $0x2a0] sm:$0xff] %v902
  %1003 = vst [vmem:[%s3 + $0x2a8] sm:$0xff] %v903
  %1004 = vst [vmem:[%s3 + $0x2b0] sm:$0xff] %v904
  %1005 = vst [vmem:[%s3 + $0x2b8] sm:$0xff] %v905
  %1006 = vst [vmem:[%s3 + $0x2c0] sm:$0xff] %v906
  %1007 = vst [vmem:[%s3 + $0x2c8] sm:$0xff] %v907
  %1008 = vst [vmem:[%s3 + $0x2d0] sm:$0xff] %v908
  %1009 = vst [vmem:[%s3 + $0x2d8] sm:$0xff] %v909
  %1010 = vst [vmem:[%s3 + $0x2e0] sm:$0xff] %v910
  %1011 = vst [vmem:[%s3 + $0x2e8] sm:$0xff] %v911
  %1012 = vst [vmem:[%s3 + $0x2f0] sm:$0xff] %v912
  %1013 = vst [vmem:[%s3 + $0x2f8] sm:$0xff] %v913
  %1014 = vst [vmem:[%s3 + $0x300] sm:$0xff] %v914
  %1015 = vst [vmem:[%s3 + $0x308] sm:$0xff] %v915
  %1016 = vst [vmem:[%s3 + $0x310] sm:$0xff] %v916
  %1017 = vst [vmem:[%s3 + $0x318] sm:$0xff] %v917
  // Predicated region
  $region14: #{value_network_forward.3} parent=0 // pred_check
    _
  $region15: #{value_network_forward.3} parent=0 // pred_check_branch
    %1019 = sbr.rel (0) target = $region17
  $region16: #{value_network_forward.3} parent=0 // pred_region
    _
  $region17: #{value_network_forward.3} parent=0 // pred_fallthru
    _
  // Predicated region
  $region18: #{value_network_forward.3} parent=0 // pred_check
    _
  $region19: #{value_network_forward.3} parent=0 // pred_check_branch
    %1021 = sbr.rel (0) target = $region21
  $region20: #{value_network_forward.3} parent=0 // pred_region
    _
  $region21: #{value_network_forward.3} parent=0 // pred_fallthru
    _

// kernel: value_network_forward.4
$region0: #{value_network_forward.4}
  #allocation0 [shape = 'u32[]', space=smem, size = 0x4, offset = 0x4, fixed_abs, tag = 'smem constant byte address 0x4 - core index']
  #allocation1 [shape = 'u32[144,128]{1,0:T(1,128)}', space=vmem, size = 0x12000, scoped, tag = 'internal scratch']
  %s0 = inlined_call_operand.vmem [shape: f32[162,512], index: 0, kind: input, shape index: {}]
  %s1 = inlined_call_operand.vmem [shape: f32[512,128], index: 1, kind: input, shape index: {}]
  %s2 = inlined_call_operand.vmem [shape: f32[1,128], index: 2, kind: input, shape index: {}]
  %s3 = inlined_call_operand.vmem [shape: f32[162,128], index: 3, kind: output, shape index: {}]
  %s4 = sld [smem:[#allocation0]]
  $region22: #{value_network_forward.4} parent=0
    _
  %s6 = ssub.s32 1, %s4
  %s7 = scalar_select 0, %s6, %s4
  // Predicated region
  $region2: #{value_network_forward.4} parent=0 // pred_check
    _
  $region3: #{value_network_forward.4} parent=0 // pred_check_branch
    %9 = sbr.rel (0) target = $region5
  $region4: #{value_network_forward.4} parent=0 // pred_region
    _
  $region5: #{value_network_forward.4} parent=0 // pred_fallthru
    _
  // Predicated region
  $region6: #{value_network_forward.4} parent=0 // pred_check
    _
  $region7: #{value_network_forward.4} parent=0 // pred_check_branch
    %11 = sbr.rel (0) target = $region9
  $region8: #{value_network_forward.4} parent=0 // pred_region
    _
  $region9: #{value_network_forward.4} parent=0 // pred_fallthru
    _
  // Predicated region
  $region10: #{value_network_forward.4} parent=0 // pred_check
    _
  $region11: #{value_network_forward.4} parent=0 // pred_check_branch
    %13 = sbr.rel (0) target = $region13
  $region12: #{value_network_forward.4} parent=0 // pred_region
    _
  $region13: #{value_network_forward.4} parent=0 // pred_fallthru
    _
  %v14 = vld [vmem:[%s0] sm:$0xff]
  %v15 = vld [vmem:[%s0 + $0x8] sm:$0xff]
  %v16 = vld [vmem:[%s0 + $0x10] sm:$0xff]
  %v17 = vld [vmem:[%s0 + $0x18] sm:$0xff]
  %v18 = vld [vmem:[%s0 + $0x20] sm:$0xff]
  %v19 = vld [vmem:[%s0 + $0x28] sm:$0xff]
  %v20 = vld [vmem:[%s0 + $0x30] sm:$0xff]
  %v21 = vld [vmem:[%s0 + $0x38] sm:$0xff]
  %v22 = vld [vmem:[%s0 + $0x40] sm:$0xff]
  %v23 = vld [vmem:[%s0 + $0x48] sm:$0xff]
  %v24 = vld [vmem:[%s0 + $0x50] sm:$0xff]
  %v25 = vld [vmem:[%s0 + $0x58] sm:$0xff]
  %v26 = vld [vmem:[%s0 + $0x60] sm:$0xff]
  %v27 = vld [vmem:[%s0 + $0x68] sm:$0xff]
  %v28 = vld [vmem:[%s0 + $0x70] sm:$0xff]
  %v29 = vld [vmem:[%s0 + $0x78] sm:$0xff]
  %v30 = vld [vmem:[%s0 + $0x80] sm:$0xff]
  %v31 = vld [vmem:[%s0 + $0x88] sm:$0xff]
  %v32 = vld [vmem:[%s0 + $0x90] sm:$0xff]
  %v33 = vld [vmem:[%s0 + $0x98] sm:$0xff]
  %v34 = vld [vmem:[%s0 + $0xa0] sm:$0xff]
  %v35 = vld [vmem:[%s0 + $0xa8] sm:$0xff]
  %v36 = vld [vmem:[%s0 + $0xb0] sm:$0xff]
  %v37 = vld [vmem:[%s0 + $0xb8] sm:$0xff]
  %v38 = vld [vmem:[%s0 + $0xc0] sm:$0xff]
  %v39 = vld [vmem:[%s0 + $0xc8] sm:$0xff]
  %v40 = vld [vmem:[%s0 + $0xd0] sm:$0xff]
  %v41 = vld [vmem:[%s0 + $0xd8] sm:$0xff]
  %v42 = vld [vmem:[%s0 + $0xe0] sm:$0xff]
  %v43 = vld [vmem:[%s0 + $0xe8] sm:$0xff]
  %v44 = vld [vmem:[%s0 + $0xf0] sm:$0xff]
  %v45 = vld [vmem:[%s0 + $0xf8] sm:$0xff]
  %v46 = vld [vmem:[%s0 + $0x100] sm:$0xff]
  %v47 = vld [vmem:[%s0 + $0x108] sm:$0xff]
  %v48 = vld [vmem:[%s0 + $0x110] sm:$0xff]
  %v49 = vld [vmem:[%s0 + $0x118] sm:$0xff]
  %v50 = vld [vmem:[%s0 + $0x120] sm:$0xff]
  %v51 = vld [vmem:[%s0 + $0x128] sm:$0xff]
  %v52 = vld [vmem:[%s0 + $0x130] sm:$0xff]
  %v53 = vld [vmem:[%s0 + $0x138] sm:$0xff]
  %v54 = vld [vmem:[%s0 + $0x140] sm:$0xff]
  %v55 = vld [vmem:[%s0 + $0x148] sm:$0xff]
  %v56 = vld [vmem:[%s0 + $0x150] sm:$0xff]
  %v57 = vld [vmem:[%s0 + $0x158] sm:$0xff]
  %v58 = vld [vmem:[%s0 + $0x160] sm:$0xff]
  %v59 = vld [vmem:[%s0 + $0x168] sm:$0xff]
  %v60 = vld [vmem:[%s0 + $0x170] sm:$0xff]
  %v61 = vld [vmem:[%s0 + $0x178] sm:$0xff]
  %v62 = vld [vmem:[%s0 + $0x180] sm:$0xff]
  %v63 = vld [vmem:[%s0 + $0x188] sm:$0xff]
  %v64 = vld [vmem:[%s0 + $0x190] sm:$0xff]
  %v65 = vld [vmem:[%s0 + $0x198] sm:$0xff]
  %v66 = vld [vmem:[%s0 + $0x1a0] sm:$0xff]
  %v67 = vld [vmem:[%s0 + $0x1a8] sm:$0xff]
  %v68 = vld [vmem:[%s0 + $0x1b0] sm:$0xff]
  %v69 = vld [vmem:[%s0 + $0x1b8] sm:$0xff]
  %v70 = vld [vmem:[%s0 + $0x1c0] sm:$0xff]
  %v71 = vld [vmem:[%s0 + $0x1c8] sm:$0xff]
  %v72 = vld [vmem:[%s0 + $0x1d0] sm:$0xff]
  %v73 = vld [vmem:[%s0 + $0x1d8] sm:$0xff]
  %v74 = vld [vmem:[%s0 + $0x1e0] sm:$0xff]
  %v75 = vld [vmem:[%s0 + $0x1e8] sm:$0xff]
  %v76 = vld [vmem:[%s0 + $0x1f0] sm:$0xff]
  %v77 = vld [vmem:[%s0 + $0x1f8] sm:$0xff]
  %v78 = vld [vmem:[%s0 + $0x200] sm:$0xff]
  %v79 = vld [vmem:[%s0 + $0x208] sm:$0xff]
  %v80 = vld [vmem:[%s0 + $0x210] sm:$0xff]
  %v81 = vld [vmem:[%s0 + $0x218] sm:$0xff]
  %v82 = vld [vmem:[%s0 + $0x220] sm:$0xff]
  %v83 = vld [vmem:[%s0 + $0x228] sm:$0xff]
  %v84 = vld [vmem:[%s0 + $0x230] sm:$0xff]
  %v85 = vld [vmem:[%s0 + $0x238] sm:$0xff]
  %v86 = vld [vmem:[%s0 + $0x240] sm:$0xff]
  %v87 = vld [vmem:[%s0 + $0x248] sm:$0xff]
  %v88 = vld [vmem:[%s0 + $0x250] sm:$0xff]
  %v89 = vld [vmem:[%s0 + $0x258] sm:$0xff]
  %v90 = vld [vmem:[%s0 + $0x260] sm:$0xff]
  %v91 = vld [vmem:[%s0 + $0x268] sm:$0xff]
  %v92 = vld [vmem:[%s0 + $0x270] sm:$0xff]
  %v93 = vld [vmem:[%s0 + $0x278] sm:$0xff]
  %v94 = vld [vmem:[%s0 + $0x280] sm:$0x3]
  %v95 = vld [vmem:[%s0 + $0x288] sm:$0x3]
  %v96 = vld [vmem:[%s0 + $0x290] sm:$0x3]
  %v97 = vld [vmem:[%s0 + $0x298] sm:$0x3]
  %v98 = vld [vmem:[%s1] sm:$0xff]
  %v99 = vld [vmem:[%s1 + $0x8] sm:$0xff]
  %v100 = vld [vmem:[%s1 + $0x10] sm:$0xff]
  %v101 = vld [vmem:[%s1 + $0x18] sm:$0xff]
  %v102 = vld [vmem:[%s1 + $0x20] sm:$0xff]
  %v103 = vld [vmem:[%s1 + $0x28] sm:$0xff]
  %v104 = vld [vmem:[%s1 + $0x30] sm:$0xff]
  %v105 = vld [vmem:[%s1 + $0x38] sm:$0xff]
  %v106 = vld [vmem:[%s1 + $0x40] sm:$0xff]
  %v107 = vld [vmem:[%s1 + $0x48] sm:$0xff]
  %v108 = vld [vmem:[%s1 + $0x50] sm:$0xff]
  %v109 = vld [vmem:[%s1 + $0x58] sm:$0xff]
  %v110 = vld [vmem:[%s1 + $0x60] sm:$0xff]
  %v111 = vld [vmem:[%s1 + $0x68] sm:$0xff]
  %v112 = vld [vmem:[%s1 + $0x70] sm:$0xff]
  %v113 = vld [vmem:[%s1 + $0x78] sm:$0xff]
  %v114 = vld [vmem:[%s1 + $0x80] sm:$0xff]
  %v115 = vld [vmem:[%s1 + $0x88] sm:$0xff]
  %v116 = vld [vmem:[%s1 + $0x90] sm:$0xff]
  %v117 = vld [vmem:[%s1 + $0x98] sm:$0xff]
  %v118 = vld [vmem:[%s1 + $0xa0] sm:$0xff]
  %v119 = vld [vmem:[%s1 + $0xa8] sm:$0xff]
  %v120 = vld [vmem:[%s1 + $0xb0] sm:$0xff]
  %v121 = vld [vmem:[%s1 + $0xb8] sm:$0xff]
  %v122 = vld [vmem:[%s1 + $0xc0] sm:$0xff]
  %v123 = vld [vmem:[%s1 + $0xc8] sm:$0xff]
  %v124 = vld [vmem:[%s1 + $0xd0] sm:$0xff]
  %v125 = vld [vmem:[%s1 + $0xd8] sm:$0xff]
  %v126 = vld [vmem:[%s1 + $0xe0] sm:$0xff]
  %v127 = vld [vmem:[%s1 + $0xe8] sm:$0xff]
  %v128 = vld [vmem:[%s1 + $0xf0] sm:$0xff]
  %v129 = vld [vmem:[%s1 + $0xf8] sm:$0xff]
  %v130 = vld [vmem:[%s1 + $0x100] sm:$0xff]
  %v131 = vld [vmem:[%s1 + $0x108] sm:$0xff]
  %v132 = vld [vmem:[%s1 + $0x110] sm:$0xff]
  %v133 = vld [vmem:[%s1 + $0x118] sm:$0xff]
  %v134 = vld [vmem:[%s1 + $0x120] sm:$0xff]
  %v135 = vld [vmem:[%s1 + $0x128] sm:$0xff]
  %v136 = vld [vmem:[%s1 + $0x130] sm:$0xff]
  %v137 = vld [vmem:[%s1 + $0x138] sm:$0xff]
  %v138 = vld [vmem:[%s1 + $0x140] sm:$0xff]
  %v139 = vld [vmem:[%s1 + $0x148] sm:$0xff]
  %v140 = vld [vmem:[%s1 + $0x150] sm:$0xff]
  %v141 = vld [vmem:[%s1 + $0x158] sm:$0xff]
  %v142 = vld [vmem:[%s1 + $0x160] sm:$0xff]
  %v143 = vld [vmem:[%s1 + $0x168] sm:$0xff]
  %v144 = vld [vmem:[%s1 + $0x170] sm:$0xff]
  %v145 = vld [vmem:[%s1 + $0x178] sm:$0xff]
  %v146 = vld [vmem:[%s1 + $0x180] sm:$0xff]
  %v147 = vld [vmem:[%s1 + $0x188] sm:$0xff]
  %v148 = vld [vmem:[%s1 + $0x190] sm:$0xff]
  %v149 = vld [vmem:[%s1 + $0x198] sm:$0xff]
  %v150 = vld [vmem:[%s1 + $0x1a0] sm:$0xff]
  %v151 = vld [vmem:[%s1 + $0x1a8] sm:$0xff]
  %v152 = vld [vmem:[%s1 + $0x1b0] sm:$0xff]
  %v153 = vld [vmem:[%s1 + $0x1b8] sm:$0xff]
  %v154 = vld [vmem:[%s1 + $0x1c0] sm:$0xff]
  %v155 = vld [vmem:[%s1 + $0x1c8] sm:$0xff]
  %v156 = vld [vmem:[%s1 + $0x1d0] sm:$0xff]
  %v157 = vld [vmem:[%s1 + $0x1d8] sm:$0xff]
  %v158 = vld [vmem:[%s1 + $0x1e0] sm:$0xff]
  %v159 = vld [vmem:[%s1 + $0x1e8] sm:$0xff]
  %v160 = vld [vmem:[%s1 + $0x1f0] sm:$0xff]
  %v161 = vld [vmem:[%s1 + $0x1f8] sm:$0xff]
  %v162 = vld [vmem:[%s2] sm:$0x1]
  %v164 = vlaneseq
  %v165 = vshrl.u32 %v164, 7
  %v166 = vsub.s32 0, %v165
  %v167 = vrot.slane %v162, %v166
  %169 = vmatprep.subr.mxu0 0.0
  %170 = vmatpush1.msra.mxu0 %v98
  %171 = vmatprep.subr.mxu0 0.0
  %172 = vmatpush1.msra.mxu0 %v99
  %173 = vmatprep.subr.mxu0 0.0
  %174 = vmatpush1.msra.mxu0 %v100
  %175 = vmatprep.subr.mxu0 0.0
  %176 = vmatpush1.msra.mxu0 %v101
  %177 = vmatprep.subr.mxu0 0.0
  %178 = vmatpush1.msra.mxu0 %v102
  %179 = vmatprep.subr.mxu0 0.0
  %180 = vmatpush1.msra.mxu0 %v103
  %181 = vmatprep.subr.mxu0 0.0
  %182 = vmatpush1.msra.mxu0 %v104
  %183 = vmatprep.subr.mxu0 0.0
  %184 = vmatpush1.msra.mxu0 %v105
  %185 = vmatprep.subr.mxu0 0.0
  %186 = vmatpush1.msra.mxu0 %v106
  %187 = vmatprep.subr.mxu0 0.0
  %188 = vmatpush1.msra.mxu0 %v107
  %189 = vmatprep.subr.mxu0 0.0
  %190 = vmatpush1.msra.mxu0 %v108
  %191 = vmatprep.subr.mxu0 0.0
  %192 = vmatpush1.msra.mxu0 %v109
  %193 = vmatprep.subr.mxu0 0.0
  %194 = vmatpush1.msra.mxu0 %v110
  %195 = vmatprep.subr.mxu0 0.0
  %196 = vmatpush1.msra.mxu0 %v111
  %197 = vmatprep.subr.mxu0 0.0
  %198 = vmatpush1.msra.mxu0 %v112
  %199 = vmatprep.subr.mxu0 0.0
  %200 = vmatpush1.msra.mxu0 %v113
  %201 = vmatprep.subr.mxu0 0.0
  %202 = vmatpush1.msra.mxu0 %v114
  %203 = vmatprep.subr.mxu0 0.0
  %204 = vmatpush1.msra.mxu0 %v115
  %205 = vmatprep.subr.mxu0 0.0
  %206 = vmatpush1.msra.mxu0 %v116
  %207 = vmatprep.subr.mxu0 0.0
  %208 = vmatpush1.msra.mxu0 %v117
  %209 = vmatprep.subr.mxu0 0.0
  %210 = vmatpush1.msra.mxu0 %v118
  %211 = vmatprep.subr.mxu0 0.0
  %212 = vmatpush1.msra.mxu0 %v119
  %213 = vmatprep.subr.mxu0 0.0
  %214 = vmatpush1.msra.mxu0 %v120
  %215 = vmatprep.subr.mxu0 0.0
  %216 = vmatpush1.msra.mxu0 %v121
  %217 = vmatprep.subr.mxu0 0.0
  %218 = vmatpush1.msra.mxu0 %v122
  %219 = vmatprep.subr.mxu0 0.0
  %220 = vmatpush1.msra.mxu0 %v123
  %221 = vmatprep.subr.mxu0 0.0
  %222 = vmatpush1.msra.mxu0 %v124
  %223 = vmatprep.subr.mxu0 0.0
  %224 = vmatpush1.msra.mxu0 %v125
  %225 = vmatprep.subr.mxu0 0.0
  %226 = vmatpush1.msra.mxu0 %v126
  %227 = vmatprep.subr.mxu0 0.0
  %228 = vmatpush1.msra.mxu0 %v127
  %229 = vmatprep.subr.mxu0 0.0
  %230 = vmatpush1.msra.mxu0 %v128
  %231 = vmatprep.subr.mxu0 0.0
  %232 = vmatpush1.msra.mxu0 %v129
  %233 = vmatprep.mubr.f32.mxu0 %v15
  %234 = vmatmul.mubr.f32.gmra.mrb[0].mxu0 %v14
  %v235 = vpop.f32.mrb[0].mxu0
  %v236 = vadd.f32 %v167, %v235
  %v237 = vpop.f32.mrb[0].mxu0
  %238 = vmatprep.mubr.f32.mxu0 %v19
  %239 = vmatmul.mubr.f32.gmra.mrb[0].mxu0 %v18
  %v240 = vpop.f32.mrb[0].mxu0
  %v241 = vadd.f32 %v167, %v240
  %v242 = vpop.f32.mrb[0].mxu0
  %243 = vmatprep.mubr.f32.mxu0 %v23
  %244 = vmatmul.mubr.f32.gmra.mrb[0].mxu0 %v22
  %v245 = vpop.f32.mrb[0].mxu0
  %v246 = vadd.f32 %v167, %v245
  %v247 = vpop.f32.mrb[0].mxu0
  %248 = vmatprep.mubr.f32.mxu0 %v27
  %249 = vmatmul.mubr.f32.gmra.mrb[0].mxu0 %v26
  %v250 = vpop.f32.mrb[0].mxu0
  %v251 = vadd.f32 %v167, %v250
  %v252 = vpop.f32.mrb[0].mxu0
  %253 = vmatprep.mubr.f32.mxu0 %v31
  %254 = vmatmul.mubr.f32.gmra.mrb[0].mxu0 %v30
  %v255 = vpop.f32.mrb[0].mxu0
  %v256 = vadd.f32 %v167, %v255
  %v257 = vpop.f32.mrb[0].mxu0
  %258 = vmatprep.mubr.f32.mxu0 %v35
  %259 = vmatmul.mubr.f32.gmra.mrb[0].mxu0 %v34
  %v260 = vpop.f32.mrb[0].mxu0
  %v261 = vadd.f32 %v167, %v260
  %v262 = vpop.f32.mrb[0].mxu0
  %263 = vmatprep.mubr.f32.mxu0 %v39
  %264 = vmatmul.mubr.f32.gmra.mrb[0].mxu0 %v38
  %v265 = vpop.f32.mrb[0].mxu0
  %v266 = vadd.f32 %v167, %v265
  %v267 = vpop.f32.mrb[0].mxu0
  %268 = vmatprep.mubr.f32.mxu0 %v43
  %269 = vmatmul.mubr.f32.gmra.mrb[0].mxu0 %v42
  %v270 = vpop.f32.mrb[0].mxu0
  %v271 = vadd.f32 %v167, %v270
  %v272 = vpop.f32.mrb[0].mxu0
  %273 = vmatprep.mubr.f32.mxu0 %v47
  %274 = vmatmul.mubr.f32.gmra.mrb[0].mxu0 %v46
  %v275 = vpop.f32.mrb[0].mxu0
  %v276 = vadd.f32 %v167, %v275
  %v277 = vpop.f32.mrb[0].mxu0
  %278 = vmatprep.mubr.f32.mxu0 %v51
  %279 = vmatmul.mubr.f32.gmra.mrb[0].mxu0 %v50
  %v280 = vpop.f32.mrb[0].mxu0
  %v281 = vadd.f32 %v167, %v280
  %v282 = vpop.f32.mrb[0].mxu0
  %283 = vmatprep.mubr.f32.mxu0 %v55
  %284 = vmatmul.mubr.f32.gmra.mrb[0].mxu0 %v54
  %v285 = vpop.f32.mrb[0].mxu0
  %v286 = vadd.f32 %v167, %v285
  %v287 = vpop.f32.mrb[0].mxu0
  %288 = vmatprep.mubr.f32.mxu0 %v59
  %289 = vmatmul.mubr.f32.gmra.mrb[0].mxu0 %v58
  %v290 = vpop.f32.mrb[0].mxu0
  %v291 = vadd.f32 %v167, %v290
  %v292 = vpop.f32.mrb[0].mxu0
  %293 = vmatprep.mubr.f32.mxu0 %v63
  %294 = vmatmul.mubr.f32.gmra.mrb[0].mxu0 %v62
  %v295 = vpop.f32.mrb[0].mxu0
  %v296 = vadd.f32 %v167, %v295
  %v297 = vpop.f32.mrb[0].mxu0
  %298 = vmatprep.mubr.f32.mxu0 %v67
  %299 = vmatmul.mubr.f32.gmra.mrb[0].mxu0 %v66
  %v300 = vpop.f32.mrb[0].mxu0
  %v301 = vadd.f32 %v167, %v300
  %v302 = vpop.f32.mrb[0].mxu0
  %303 = vmatprep.mubr.f32.mxu0 %v71
  %304 = vmatmul.mubr.f32.gmra.mrb[0].mxu0 %v70
  %v305 = vpop.f32.mrb[0].mxu0
  %v306 = vadd.f32 %v167, %v305
  %v307 = vpop.f32.mrb[0].mxu0
  %308 = vmatprep.mubr.f32.mxu0 %v75
  %309 = vmatmul.mubr.f32.gmra.mrb[0].mxu0 %v74
  %v310 = vpop.f32.mrb[0].mxu0
  %v311 = vadd.f32 %v167, %v310
  %v312 = vpop.f32.mrb[0].mxu0
  %313 = vmatprep.mubr.f32.mxu0 %v79
  %314 = vmatmul.mubr.f32.gmra.mrb[0].mxu0 %v78
  %v315 = vpop.f32.mrb[0].mxu0
  %v316 = vadd.f32 %v167, %v315
  %v317 = vpop.f32.mrb[0].mxu0
  %318 = vmatprep.mubr.f32.mxu0 %v83
  %319 = vmatmul.mubr.f32.gmra.mrb[0].mxu0 %v82
  %v320 = vpop.f32.mrb[0].mxu0
  %v321 = vadd.f32 %v167, %v320
  %v322 = vpop.f32.mrb[0].mxu0
  %323 = vmatprep.mubr.f32.mxu0 %v87
  %324 = vmatmul.mubr.f32.gmra.mrb[0].mxu0 %v86
  %v325 = vpop.f32.mrb[0].mxu0
  %v326 = vadd.f32 %v167, %v325
  %v327 = vpop.f32.mrb[0].mxu0
  %328 = vmatprep.mubr.f32.mxu0 %v91
  %329 = vmatmul.mubr.f32.gmra.mrb[0].mxu0 %v90
  %v330 = vpop.f32.mrb[0].mxu0
  %v331 = vadd.f32 %v167, %v330
  %v332 = vpop.f32.mrb[0].mxu0
  %333 = vmatprep.mubr.f32.mxu0 %v95
  %334 = vmatmul.mubr.f32.gmra.mrb[0].mxu0 %v94
  %v335 = vpop.f32.mrb[0].mxu0
  %v336 = vadd.f32 %v167, %v335
  %v337 = vpop.f32.mrb[0].mxu0
  %338 = vdwg.mxu0
  %339 = vmatprep.subr.mxu0 0.0
  %340 = vmatpush1.msra.mxu0 %v130
  %341 = vmatprep.subr.mxu0 0.0
  %342 = vmatpush1.msra.mxu0 %v131
  %343 = vmatprep.subr.mxu0 0.0
  %344 = vmatpush1.msra.mxu0 %v132
  %345 = vmatprep.subr.mxu0 0.0
  %346 = vmatpush1.msra.mxu0 %v133
  %347 = vmatprep.subr.mxu0 0.0
  %348 = vmatpush1.msra.mxu0 %v134
  %349 = vmatprep.subr.mxu0 0.0
  %350 = vmatpush1.msra.mxu0 %v135
  %351 = vmatprep.subr.mxu0 0.0
  %352 = vmatpush1.msra.mxu0 %v136
  %353 = vmatprep.subr.mxu0 0.0
  %354 = vmatpush1.msra.mxu0 %v137
  %355 = vmatprep.subr.mxu0 0.0
  %356 = vmatpush1.msra.mxu0 %v138
  %357 = vmatprep.subr.mxu0 0.0
  %358 = vmatpush1.msra.mxu0 %v139
  %359 = vmatprep.subr.mxu0 0.0
  %360 = vmatpush1.msra.mxu0 %v140
  %361 = vmatprep.subr.mxu0 0.0
  %362 = vmatpush1.msra.mxu0 %v141
  %363 = vmatprep.subr.mxu0 0.0
  %364 = vmatpush1.msra.mxu0 %v142
  %365 = vmatprep.subr.mxu0 0.0
  %366 = vmatpush1.msra.mxu0 %v143
  %367 = vmatprep.subr.mxu0 0.0
  %368 = vmatpush1.msra.mxu0 %v144
  %369 = vmatprep.subr.mxu0 0.0
  %370 = vmatpush1.msra.mxu0 %v145
  %371 = vmatprep.subr.mxu0 0.0
  %372 = vmatpush1.msra.mxu0 %v146
  %373 = vmatprep.subr.mxu0 0.0
  %374 = vmatpush1.msra.mxu0 %v147
  %375 = vmatprep.subr.mxu0 0.0
  %376 = vmatpush1.msra.mxu0 %v148
  %377 = vmatprep.subr.mxu0 0.0
  %378 = vmatpush1.msra.mxu0 %v149
  %379 = vmatprep.subr.mxu0 0.0
  %380 = vmatpush1.msra.mxu0 %v150
  %381 = vmatprep.subr.mxu0 0.0
  %382 = vmatpush1.msra.mxu0 %v151
  %383 = vmatprep.subr.mxu0 0.0
  %384 = vmatpush1.msra.mxu0 %v152
  %385 = vmatprep.subr.mxu0 0.0
  %386 = vmatpush1.msra.mxu0 %v153
  %387 = vmatprep.subr.mxu0 0.0
  %388 = vmatpush1.msra.mxu0 %v154
  %389 = vmatprep.subr.mxu0 0.0
  %390 = vmatpush1.msra.mxu0 %v155
  %391 = vmatprep.subr.mxu0 0.0
  %392 = vmatpush1.msra.mxu0 %v156
  %393 = vmatprep.subr.mxu0 0.0
  %394 = vmatpush1.msra.mxu0 %v157
  %395 = vmatprep.subr.mxu0 0.0
  %396 = vmatpush1.msra.mxu0 %v158
  %397 = vmatprep.subr.mxu0 0.0
  %398 = vmatpush1.msra.mxu0 %v159
  %399 = vmatprep.subr.mxu0 0.0
  %400 = vmatpush1.msra.mxu0 %v160
  %401 = vmatprep.subr.mxu0 0.0
  %402 = vmatpush1.msra.mxu0 %v161
  %403 = vmatprep.mubr.f32.mxu0 %v17
  %404 = vmatmul.mubr.f32.gmra.mrb[0].mxu0 %v16
  %v405 = vpop.f32.mrb[0].mxu0
  %v406 = vadd.f32 %v236, %v405
  %v407 = vpop.f32.mrb[0].mxu0
  %408 = vmatprep.mubr.f32.mxu0 %v21
  %409 = vmatmul.mubr.f32.gmra.mrb[0].mxu0 %v20
  %v410 = vpop.f32.mrb[0].mxu0
  %v411 = vadd.f32 %v241, %v410
  %v412 = vpop.f32.mrb[0].mxu0
  %413 = vmatprep.mubr.f32.mxu0 %v25
  %414 = vmatmul.mubr.f32.gmra.mrb[0].mxu0 %v24
  %v415 = vpop.f32.mrb[0].mxu0
  %v416 = vadd.f32 %v246, %v415
  %v417 = vpop.f32.mrb[0].mxu0
  %418 = vmatprep.mubr.f32.mxu0 %v29
  %419 = vmatmul.mubr.f32.gmra.mrb[0].mxu0 %v28
  %v420 = vpop.f32.mrb[0].mxu0
  %v421 = vadd.f32 %v251, %v420
  %v422 = vpop.f32.mrb[0].mxu0
  %423 = vmatprep.mubr.f32.mxu0 %v33
  %424 = vmatmul.mubr.f32.gmra.mrb[0].mxu0 %v32
  %v425 = vpop.f32.mrb[0].mxu0
  %v426 = vadd.f32 %v256, %v425
  %v427 = vpop.f32.mrb[0].mxu0
  %428 = vmatprep.mubr.f32.mxu0 %v37
  %429 = vmatmul.mubr.f32.gmra.mrb[0].mxu0 %v36
  %v430 = vpop.f32.mrb[0].mxu0
  %v431 = vadd.f32 %v261, %v430
  %v432 = vpop.f32.mrb[0].mxu0
  %433 = vmatprep.mubr.f32.mxu0 %v41
  %434 = vmatmul.mubr.f32.gmra.mrb[0].mxu0 %v40
  %v435 = vpop.f32.mrb[0].mxu0
  %v436 = vadd.f32 %v266, %v435
  %v437 = vpop.f32.mrb[0].mxu0
  %438 = vmatprep.mubr.f32.mxu0 %v45
  %439 = vmatmul.mubr.f32.gmra.mrb[0].mxu0 %v44
  %v440 = vpop.f32.mrb[0].mxu0
  %v441 = vadd.f32 %v271, %v440
  %v442 = vpop.f32.mrb[0].mxu0
  %443 = vmatprep.mubr.f32.mxu0 %v49
  %444 = vmatmul.mubr.f32.gmra.mrb[0].mxu0 %v48
  %v445 = vpop.f32.mrb[0].mxu0
  %v446 = vadd.f32 %v276, %v445
  %v447 = vpop.f32.mrb[0].mxu0
  %448 = vmatprep.mubr.f32.mxu0 %v53
  %449 = vmatmul.mubr.f32.gmra.mrb[0].mxu0 %v52
  %v450 = vpop.f32.mrb[0].mxu0
  %v451 = vadd.f32 %v281, %v450
  %v452 = vpop.f32.mrb[0].mxu0
  %453 = vmatprep.mubr.f32.mxu0 %v57
  %454 = vmatmul.mubr.f32.gmra.mrb[0].mxu0 %v56
  %v455 = vpop.f32.mrb[0].mxu0
  %v456 = vadd.f32 %v286, %v455
  %v457 = vpop.f32.mrb[0].mxu0
  %458 = vmatprep.mubr.f32.mxu0 %v61
  %459 = vmatmul.mubr.f32.gmra.mrb[0].mxu0 %v60
  %v460 = vpop.f32.mrb[0].mxu0
  %v461 = vadd.f32 %v291, %v460
  %v462 = vpop.f32.mrb[0].mxu0
  %463 = vmatprep.mubr.f32.mxu0 %v65
  %464 = vmatmul.mubr.f32.gmra.mrb[0].mxu0 %v64
  %v465 = vpop.f32.mrb[0].mxu0
  %v466 = vadd.f32 %v296, %v465
  %v467 = vpop.f32.mrb[0].mxu0
  %468 = vmatprep.mubr.f32.mxu0 %v69
  %469 = vmatmul.mubr.f32.gmra.mrb[0].mxu0 %v68
  %v470 = vpop.f32.mrb[0].mxu0
  %v471 = vadd.f32 %v301, %v470
  %v472 = vpop.f32.mrb[0].mxu0
  %473 = vmatprep.mubr.f32.mxu0 %v73
  %474 = vmatmul.mubr.f32.gmra.mrb[0].mxu0 %v72
  %v475 = vpop.f32.mrb[0].mxu0
  %v476 = vadd.f32 %v306, %v475
  %v477 = vpop.f32.mrb[0].mxu0
  %478 = vmatprep.mubr.f32.mxu0 %v77
  %479 = vmatmul.mubr.f32.gmra.mrb[0].mxu0 %v76
  %v480 = vpop.f32.mrb[0].mxu0
  %v481 = vadd.f32 %v311, %v480
  %v482 = vpop.f32.mrb[0].mxu0
  %483 = vmatprep.mubr.f32.mxu0 %v81
  %484 = vmatmul.mubr.f32.gmra.mrb[0].mxu0 %v80
  %v485 = vpop.f32.mrb[0].mxu0
  %v486 = vadd.f32 %v316, %v485
  %v487 = vpop.f32.mrb[0].mxu0
  %488 = vmatprep.mubr.f32.mxu0 %v85
  %489 = vmatmul.mubr.f32.gmra.mrb[0].mxu0 %v84
  %v490 = vpop.f32.mrb[0].mxu0
  %v491 = vadd.f32 %v321, %v490
  %v492 = vpop.f32.mrb[0].mxu0
  %493 = vmatprep.mubr.f32.mxu0 %v89
  %494 = vmatmul.mubr.f32.gmra.mrb[0].mxu0 %v88
  %v495 = vpop.f32.mrb[0].mxu0
  %v496 = vadd.f32 %v326, %v495
  %v497 = vpop.f32.mrb[0].mxu0
  %498 = vmatprep.mubr.f32.mxu0 %v93
  %499 = vmatmul.mubr.f32.gmra.mrb[0].mxu0 %v92
  %v500 = vpop.f32.mrb[0].mxu0
  %v501 = vadd.f32 %v331, %v500
  %v502 = vpop.f32.mrb[0].mxu0
  %503 = vmatprep.mubr.f32.mxu0 %v97
  %504 = vmatmul.mubr.f32.gmra.mrb[0].mxu0 %v96
  %v505 = vpop.f32.mrb[0].mxu0
  %v506 = vadd.f32 %v336, %v505
  %v507 = vpop.f32.mrb[0].mxu0
  %508 = vdwg.mxu0
  %v509 = vmax.f32 %v406, 0.0
  %v510 = vmax.f32 %v411, 0.0
  %v511 = vmax.f32 %v416, 0.0
  %v512 = vmax.f32 %v421, 0.0
  %v513 = vmax.f32 %v426, 0.0
  %v514 = vmax.f32 %v431, 0.0
  %v515 = vmax.f32 %v436, 0.0
  %v516 = vmax.f32 %v441, 0.0
  %v517 = vmax.f32 %v446, 0.0
  %v518 = vmax.f32 %v451, 0.0
  %v519 = vmax.f32 %v456, 0.0
  %v520 = vmax.f32 %v461, 0.0
  %v521 = vmax.f32 %v466, 0.0
  %v522 = vmax.f32 %v471, 0.0
  %v523 = vmax.f32 %v476, 0.0
  %v524 = vmax.f32 %v481, 0.0
  %v525 = vmax.f32 %v486, 0.0
  %v526 = vmax.f32 %v491, 0.0
  %v527 = vmax.f32 %v496, 0.0
  %v528 = vmax.f32 %v501, 0.0
  %v529 = vmax.f32 %v506, 0.0
  %530 = vst [vmem:[%s3] sm:$0xff] %v509
  %531 = vst [vmem:[%s3 + $0x8] sm:$0xff] %v510
  %532 = vst [vmem:[%s3 + $0x10] sm:$0xff] %v511
  %533 = vst [vmem:[%s3 + $0x18] sm:$0xff] %v512
  %534 = vst [vmem:[%s3 + $0x20] sm:$0xff] %v513
  %535 = vst [vmem:[%s3 + $0x28] sm:$0xff] %v514
  %536 = vst [vmem:[%s3 + $0x30] sm:$0xff] %v515
  %537 = vst [vmem:[%s3 + $0x38] sm:$0xff] %v516
  %538 = vst [vmem:[%s3 + $0x40] sm:$0xff] %v517
  %539 = vst [vmem:[%s3 + $0x48] sm:$0xff] %v518
  %540 = vst [vmem:[%s3 + $0x50] sm:$0xff] %v519
  %541 = vst [vmem:[%s3 + $0x58] sm:$0xff] %v520
  %542 = vst [vmem:[%s3 + $0x60] sm:$0xff] %v521
  %543 = vst [vmem:[%s3 + $0x68] sm:$0xff] %v522
  %544 = vst [vmem:[%s3 + $0x70] sm:$0xff] %v523
  %545 = vst [vmem:[%s3 + $0x78] sm:$0xff] %v524
  %546 = vst [vmem:[%s3 + $0x80] sm:$0xff] %v525
  %547 = vst [vmem:[%s3 + $0x88] sm:$0xff] %v526
  %548 = vst [vmem:[%s3 + $0x90] sm:$0xff] %v527
  %549 = vst [vmem:[%s3 + $0x98] sm:$0xff] %v528
  %550 = vst [vmem:[%s3 + $0xa0] sm:$0x3] %v529
  // Predicated region
  $region14: #{value_network_forward.4} parent=0 // pred_check
    _
  $region15: #{value_network_forward.4} parent=0 // pred_check_branch
    %552 = sbr.rel (0) target = $region17
  $region16: #{value_network_forward.4} parent=0 // pred_region
    _
  $region17: #{value_network_forward.4} parent=0 // pred_fallthru
    _
  // Predicated region
  $region18: #{value_network_forward.4} parent=0 // pred_check
    _
  $region19: #{value_network_forward.4} parent=0 // pred_check_branch
    %554 = sbr.rel (0) target = $region21
  $region20: #{value_network_forward.4} parent=0 // pred_region
    _
  $region21: #{value_network_forward.4} parent=0 // pred_fallthru
    _

// kernel: value_network_forward.5
$region0: #{value_network_forward.5}
  #allocation0 [shape = 'u32[]', space=smem, size = 0x4, offset = 0x4, fixed_abs, tag = 'smem constant byte address 0x4 - core index']
  #allocation1 [shape = 'u32[144,128]{1,0:T(1,128)}', space=vmem, size = 0x12000, scoped, tag = 'internal scratch']
  #allocation2 [shape = 'f32[1,1]{1,0:T(1,128)S(1)}', space=vmem, size = 0x200, scoped, tag = 'scoped memory for value_network_forward.5']
  %s0 = inlined_call_operand.vmem [shape: f32[98,576], index: 0, kind: input, shape index: {}]
  %s1 = inlined_call_operand.vmem [shape: f32[576,64], index: 1, kind: input, shape index: {}]
  %s2 = inlined_call_operand.vmem [shape: f32[1,64], index: 2, kind: input, shape index: {}]
  %s3 = inlined_call_operand.vmem [shape: f32[49,64,512], index: 3, kind: input, shape index: {}]
  %s4 = inlined_call_operand.vmem [shape: f32[1,512], index: 4, kind: input, shape index: {}]
  %s5 = inlined_call_operand.vmem [shape: f32[1,512], index: 5, kind: input, shape index: {}]
  %s6 = inlined_call_operand.<no memory space> [shape: f32[1,1], index: 6, kind: input, shape index: {}]
  %s7 = inlined_call_operand.vmem [shape: f32[2,1], index: 7, kind: output, shape index: {}]
  %s8 = sld [smem:[#allocation0]]
  $region38: #{value_network_forward.5} parent=0
    _
  %s10 = ssub.s32 1, %s8
  %s11 = scalar_select 0, %s10, %s8
  %v12 = vstv %s6
  %13 = vst [vmem:[#allocation2] sm:$0x1] %v12
  // Predicated region
  $region2: #{value_network_forward.5} parent=0 // pred_check
    _
  $region3: #{value_network_forward.5} parent=0 // pred_check_branch
    %15 = sbr.rel (0) target = $region5
  $region4: #{value_network_forward.5} parent=0 // pred_region
    _
  $region5: #{value_network_forward.5} parent=0 // pred_fallthru
    _
  // Predicated region
  $region6: #{value_network_forward.5} parent=0 // pred_check
    _
  $region7: #{value_network_forward.5} parent=0 // pred_check_branch
    %17 = sbr.rel (0) target = $region9
  $region8: #{value_network_forward.5} parent=0 // pred_region
    _
  $region9: #{value_network_forward.5} parent=0 // pred_fallthru
    _
  // Predicated region
  $region10: #{value_network_forward.5} parent=0 // pred_check
    _
  $region11: #{value_network_forward.5} parent=0 // pred_check_branch
    %19 = sbr.rel (0) target = $region13
  $region12: #{value_network_forward.5} parent=0 // pred_region
    _
  $region13: #{value_network_forward.5} parent=0 // pred_fallthru
    _
  // Predicated region
  $region14: #{value_network_forward.5} parent=0 // pred_check
    _
  $region15: #{value_network_forward.5} parent=0 // pred_check_branch
    %21 = sbr.rel (0) target = $region17
  $region16: #{value_network_forward.5} parent=0 // pred_region
    _
  $region17: #{value_network_forward.5} parent=0 // pred_fallthru
    _
  // Predicated region
  $region18: #{value_network_forward.5} parent=0 // pred_check
    _
  $region19: #{value_network_forward.5} parent=0 // pred_check_branch
    %23 = sbr.rel (0) target = $region21
  $region20: #{value_network_forward.5} parent=0 // pred_region
    _
  $region21: #{value_network_forward.5} parent=0 // pred_fallthru
    _
  // Predicated region
  $region22: #{value_network_forward.5} parent=0 // pred_check
    _
  $region23: #{value_network_forward.5} parent=0 // pred_check_branch
    %25 = sbr.rel (0) target = $region25
  $region24: #{value_network_forward.5} parent=0 // pred_region
    _
  $region25: #{value_network_forward.5} parent=0 // pred_fallthru
    _
  // Predicated region
  $region26: #{value_network_forward.5} parent=0 // pred_check
    _
  $region27: #{value_network_forward.5} parent=0 // pred_check_branch
    %27 = sbr.rel (0) target = $region29
  $region28: #{value_network_forward.5} parent=0 // pred_region
    _
  $region29: #{value_network_forward.5} parent=0 // pred_fallthru
    _
  %v28 = vld [vmem:[%s0] sm:$0xff]
  %v29 = vld [vmem:[%s0 + $0x8] sm:$0xff]
  %v30 = vld [vmem:[%s0 + $0x10] sm:$0xff]
  %v31 = vld [vmem:[%s0 + $0x18] sm:$0xff]
  %v32 = vld [vmem:[%s0 + $0x20] sm:$0xff]
  %v33 = vld [vmem:[%s0 + $0x28] sm:$0xff]
  %v34 = vld [vmem:[%s0 + $0x30] sm:$0xff]
  %v35 = vld [vmem:[%s0 + $0x38] sm:$0xff]
  %v36 = vld [vmem:[%s0 + $0x40] sm:$0xff]
  %v37 = vld [vmem:[%s0 + $0x48] sm:$0xff]
  %v38 = vld [vmem:[%s0 + $0x50] sm:$0xff]
  %v39 = vld [vmem:[%s0 + $0x58] sm:$0xff]
  %v40 = vld [vmem:[%s0 + $0x60] sm:$0xff]
  %v41 = vld [vmem:[%s0 + $0x68] sm:$0xff]
  %v42 = vld [vmem:[%s0 + $0x70] sm:$0xff]
  %v43 = vld [vmem:[%s0 + $0x78] sm:$0xff]
  %v44 = vld [vmem:[%s0 + $0x80] sm:$0xff]
  %v45 = vld [vmem:[%s0 + $0x88] sm:$0xff]
  %v46 = vld [vmem:[%s0 + $0x90] sm:$0xff]
  %v47 = vld [vmem:[%s0 + $0x98] sm:$0xff]
  %v48 = vld [vmem:[%s0 + $0xa0] sm:$0xff]
  %v49 = vld [vmem:[%s0 + $0xa8] sm:$0xff]
  %v50 = vld [vmem:[%s0 + $0xb0] sm:$0xff]
  %v51 = vld [vmem:[%s0 + $0xb8] sm:$0xff]
  %v52 = vld [vmem:[%s0 + $0xc0] sm:$0xff]
  %v53 = vld [vmem:[%s0 + $0xc8] sm:$0xff]
  %v54 = vld [vmem:[%s0 + $0xd0] sm:$0xff]
  %v55 = vld [vmem:[%s0 + $0xd8] sm:$0xff]
  %v56 = vld [vmem:[%s0 + $0xe0] sm:$0xff]
  %v57 = vld [vmem:[%s0 + $0xe8] sm:$0xff]
  %v58 = vld [vmem:[%s0 + $0xf0] sm:$0xff]
  %v59 = vld [vmem:[%s0 + $0xf8] sm:$0xff]
  %v60 = vld [vmem:[%s0 + $0x100] sm:$0xff]
  %v61 = vld [vmem:[%s0 + $0x108] sm:$0xff]
  %v62 = vld [vmem:[%s0 + $0x110] sm:$0xff]
  %v63 = vld [vmem:[%s0 + $0x118] sm:$0xff]
  %v64 = vld [vmem:[%s0 + $0x120] sm:$0xff]
  %v65 = vld [vmem:[%s0 + $0x128] sm:$0xff]
  %v66 = vld [vmem:[%s0 + $0x130] sm:$0xff]
  %v67 = vld [vmem:[%s0 + $0x138] sm:$0xff]
  %v68 = vld [vmem:[%s0 + $0x140] sm:$0xff]
  %v69 = vld [vmem:[%s0 + $0x148] sm:$0xff]
  %v70 = vld [vmem:[%s0 + $0x150] sm:$0xff]
  %v71 = vld [vmem:[%s0 + $0x158] sm:$0xff]
  %v72 = vld [vmem:[%s0 + $0x160] sm:$0xff]
  %v73 = vld [vmem:[%s0 + $0x168] sm:$0xff]
  %v74 = vld [vmem:[%s0 + $0x170] sm:$0xff]
  %v75 = vld [vmem:[%s0 + $0x178] sm:$0xff]
  %v76 = vld [vmem:[%s0 + $0x180] sm:$0xff]
  %v77 = vld [vmem:[%s0 + $0x188] sm:$0xff]
  %v78 = vld [vmem:[%s0 + $0x190] sm:$0xff]
  %v79 = vld [vmem:[%s0 + $0x198] sm:$0xff]
  %v80 = vld [vmem:[%s0 + $0x1a0] sm:$0xff]
  %v81 = vld [vmem:[%s0 + $0x1a8] sm:$0xff]
  %v82 = vld [vmem:[%s0 + $0x1b0] sm:$0xff]
  %v83 = vld [vmem:[%s0 + $0x1b8] sm:$0xff]
  %v84 = vld [vmem:[%s0 + $0x1c0] sm:$0xff]
  %v85 = vld [vmem:[%s0 + $0x1c8] sm:$0xff]
  %v86 = vld [vmem:[%s0 + $0x1d0] sm:$0xff]
  %v87 = vld [vmem:[%s0 + $0x1d8] sm:$0xff]
  %v88 = vld [vmem:[%s0 + $0x1e0] sm:$0x3]
  %v89 = vld [vmem:[%s0 + $0x1e8] sm:$0x3]
  %v90 = vld [vmem:[%s0 + $0x1f0] sm:$0x3]
  %v91 = vld [vmem:[%s0 + $0x1f8] sm:$0x3]
  %v92 = vld [vmem:[%s0 + $0x200] sm:$0x3]
  %v93 = vld [vmem:[%s1] sm:$0xff]
  %v94 = vld [vmem:[%s1 + $0x8] sm:$0xff]
  %v95 = vld [vmem:[%s1 + $0x10] sm:$0xff]
  %v96 = vld [vmem:[%s1 + $0x18] sm:$0xff]
  %v97 = vld [vmem:[%s1 + $0x20] sm:$0xff]
  %v98 = vld [vmem:[%s1 + $0x28] sm:$0xff]
  %v99 = vld [vmem:[%s1 + $0x30] sm:$0xff]
  %v100 = vld [vmem:[%s1 + $0x38] sm:$0xff]
  %v101 = vld [vmem:[%s1 + $0x40] sm:$0xff]
  %v102 = vld [vmem:[%s1 + $0x48] sm:$0xff]
  %v103 = vld [vmem:[%s1 + $0x50] sm:$0xff]
  %v104 = vld [vmem:[%s1 + $0x58] sm:$0xff]
  %v105 = vld [vmem:[%s1 + $0x60] sm:$0xff]
  %v106 = vld [vmem:[%s1 + $0x68] sm:$0xff]
  %v107 = vld [vmem:[%s1 + $0x70] sm:$0xff]
  %v108 = vld [vmem:[%s1 + $0x78] sm:$0xff]
  %v109 = vld [vmem:[%s1 + $0x80] sm:$0xff]
  %v110 = vld [vmem:[%s1 + $0x88] sm:$0xff]
  %v111 = vld [vmem:[%s1 + $0x90] sm:$0xff]
  %v112 = vld [vmem:[%s1 + $0x98] sm:$0xff]
  %v113 = vld [vmem:[%s1 + $0xa0] sm:$0xff]
  %v114 = vld [vmem:[%s1 + $0xa8] sm:$0xff]
  %v115 = vld [vmem:[%s1 + $0xb0] sm:$0xff]
  %v116 = vld [vmem:[%s1 + $0xb8] sm:$0xff]
  %v117 = vld [vmem:[%s1 + $0xc0] sm:$0xff]
  %v118 = vld [vmem:[%s1 + $0xc8] sm:$0xff]
  %v119 = vld [vmem:[%s1 + $0xd0] sm:$0xff]
  %v120 = vld [vmem:[%s1 + $0xd8] sm:$0xff]
  %v121 = vld [vmem:[%s1 + $0xe0] sm:$0xff]
  %v122 = vld [vmem:[%s1 + $0xe8] sm:$0xff]
  %v123 = vld [vmem:[%s1 + $0xf0] sm:$0xff]
  %v124 = vld [vmem:[%s1 + $0xf8] sm:$0xff]
  %v125 = vld [vmem:[%s1 + $0x100] sm:$0xff]
  %v126 = vld [vmem:[%s1 + $0x108] sm:$0xff]
  %v127 = vld [vmem:[%s1 + $0x110] sm:$0xff]
  %v128 = vld [vmem:[%s1 + $0x118] sm:$0xff]
  %v129 = vld [vmem:[%s1 + $0x120] sm:$0xff]
  %v130 = vld [vmem:[%s1 + $0x128] sm:$0xff]
  %v131 = vld [vmem:[%s1 + $0x130] sm:$0xff]
  %v132 = vld [vmem:[%s1 + $0x138] sm:$0xff]
  %v133 = vld [vmem:[%s1 + $0x140] sm:$0xff]
  %v134 = vld [vmem:[%s1 + $0x148] sm:$0xff]
  %v135 = vld [vmem:[%s1 + $0x150] sm:$0xff]
  %v136 = vld [vmem:[%s1 + $0x158] sm:$0xff]
  %v137 = vld [vmem:[%s1 + $0x160] sm:$0xff]
  %v138 = vld [vmem:[%s1 + $0x168] sm:$0xff]
  %v139 = vld [vmem:[%s1 + $0x170] sm:$0xff]
  %v140 = vld [vmem:[%s1 + $0x178] sm:$0xff]
  %v141 = vld [vmem:[%s1 + $0x180] sm:$0xff]
  %v142 = vld [vmem:[%s1 + $0x188] sm:$0xff]
  %v143 = vld [vmem:[%s1 + $0x190] sm:$0xff]
  %v144 = vld [vmem:[%s1 + $0x198] sm:$0xff]
  %v145 = vld [vmem:[%s1 + $0x1a0] sm:$0xff]
  %v146 = vld [vmem:[%s1 + $0x1a8] sm:$0xff]
  %v147 = vld [vmem:[%s1 + $0x1b0] sm:$0xff]
  %v148 = vld [vmem:[%s1 + $0x1b8] sm:$0xff]
  %v149 = vld [vmem:[%s1 + $0x1c0] sm:$0xff]
  %v150 = vld [vmem:[%s1 + $0x1c8] sm:$0xff]
  %v151 = vld [vmem:[%s1 + $0x1d0] sm:$0xff]
  %v152 = vld [vmem:[%s1 + $0x1d8] sm:$0xff]
  %v153 = vld [vmem:[%s1 + $0x1e0] sm:$0xff]
  %v154 = vld [vmem:[%s1 + $0x1e8] sm:$0xff]
  %v155 = vld [vmem:[%s1 + $0x1f0] sm:$0xff]
  %v156 = vld [vmem:[%s1 + $0x1f8] sm:$0xff]
  %v157 = vld [vmem:[%s1 + $0x200] sm:$0xff]
  %v158 = vld [vmem:[%s1 + $0x208] sm:$0xff]
  %v159 = vld [vmem:[%s1 + $0x210] sm:$0xff]
  %v160 = vld [vmem:[%s1 + $0x218] sm:$0xff]
  %v161 = vld [vmem:[%s1 + $0x220] sm:$0xff]
  %v162 = vld [vmem:[%s1 + $0x228] sm:$0xff]
  %v163 = vld [vmem:[%s1 + $0x230] sm:$0xff]
  %v164 = vld [vmem:[%s1 + $0x238] sm:$0xff]
  %v165 = vld [vmem:[%s2] sm:$0x1]
  %v167 = vlaneseq
  %v168 = vshrl.u32 %v167, 7
  %v169 = vsub.s32 0, %v168
  %v170 = vrot.slane %v165, %v169
  %vm172 = vcmask 523264
  %v174 = vsel %vm172, %v32, 0
  %v177 = vsel %vm172, %v37, 0
  %v180 = vsel %vm172, %v42, 0
  %v183 = vsel %vm172, %v47, 0
  %v186 = vsel %vm172, %v52, 0
  %v189 = vsel %vm172, %v57, 0
  %v192 = vsel %vm172, %v62, 0
  %v195 = vsel %vm172, %v67, 0
  %v198 = vsel %vm172, %v72, 0
  %v201 = vsel %vm172, %v77, 0
  %v204 = vsel %vm172, %v82, 0
  %v207 = vsel %vm172, %v87, 0
  %v210 = vsel %vm172, %v92, 0
  %212 = vmatprep.subr.mxu0 0.0
  %213 = vmatpush1.msra.mxu0 %v93
  %214 = vmatprep.subr.mxu0 0.0
  %215 = vmatpush1.msra.mxu0 %v94
  %216 = vmatprep.subr.mxu0 0.0
  %217 = vmatpush1.msra.mxu0 %v95
  %218 = vmatprep.subr.mxu0 0.0
  %219 = vmatpush1.msra.mxu0 %v96
  %220 = vmatprep.subr.mxu0 0.0
  %221 = vmatpush1.msra.mxu0 %v97
  %222 = vmatprep.subr.mxu0 0.0
  %223 = vmatpush1.msra.mxu0 %v98
  %224 = vmatprep.subr.mxu0 0.0
  %225 = vmatpush1.msra.mxu0 %v99
  %226 = vmatprep.subr.mxu0 0.0
  %227 = vmatpush1.msra.mxu0 %v100
  %228 = vmatprep.subr.mxu0 0.0
  %229 = vmatpush1.msra.mxu0 %v101
  %230 = vmatprep.subr.mxu0 0.0
  %231 = vmatpush1.msra.mxu0 %v102
  %232 = vmatprep.subr.mxu0 0.0
  %233 = vmatpush1.msra.mxu0 %v103
  %234 = vmatprep.subr.mxu0 0.0
  %235 = vmatpush1.msra.mxu0 %v104
  %236 = vmatprep.subr.mxu0 0.0
  %237 = vmatpush1.msra.mxu0 %v105
  %238 = vmatprep.subr.mxu0 0.0
  %239 = vmatpush1.msra.mxu0 %v106
  %240 = vmatprep.subr.mxu0 0.0
  %241 = vmatpush1.msra.mxu0 %v107
  %242 = vmatprep.subr.mxu0 0.0
  %243 = vmatpush1.msra.mxu0 %v108
  %244 = vmatprep.subr.mxu0 0.0
  %245 = vmatpush1.msra.mxu0 %v109
  %246 = vmatprep.subr.mxu0 0.0
  %247 = vmatpush1.msra.mxu0 %v110
  %248 = vmatprep.subr.mxu0 0.0
  %249 = vmatpush1.msra.mxu0 %v111
  %250 = vmatprep.subr.mxu0 0.0
  %251 = vmatpush1.msra.mxu0 %v112
  %252 = vmatprep.subr.mxu0 0.0
  %253 = vmatpush1.msra.mxu0 %v113
  %254 = vmatprep.subr.mxu0 0.0
  %255 = vmatpush1.msra.mxu0 %v114
  %256 = vmatprep.subr.mxu0 0.0
  %257 = vmatpush1.msra.mxu0 %v115
  %258 = vmatprep.subr.mxu0 0.0
  %259 = vmatpush1.msra.mxu0 %v116
  %260 = vmatprep.subr.mxu0 0.0
  %261 = vmatpush1.msra.mxu0 %v117
  %262 = vmatprep.subr.mxu0 0.0
  %263 = vmatpush1.msra.mxu0 %v118
  %264 = vmatprep.subr.mxu0 0.0
  %265 = vmatpush1.msra.mxu0 %v119
  %266 = vmatprep.subr.mxu0 0.0
  %267 = vmatpush1.msra.mxu0 %v120
  %268 = vmatprep.subr.mxu0 0.0
  %269 = vmatpush1.msra.mxu0 %v121
  %270 = vmatprep.subr.mxu0 0.0
  %271 = vmatpush1.msra.mxu0 %v122
  %272 = vmatprep.subr.mxu0 0.0
  %273 = vmatpush1.msra.mxu0 %v123
  %274 = vmatprep.subr.mxu0 0.0
  %275 = vmatpush1.msra.mxu0 %v124
  %276 = vmatprep.mubr.f32.mxu0 %v29
  %277 = vmatmul.mubr.f32.gmra.mrb[0].mxu0 %v28
  %v278 = vpop.f32.mrb[0].mxu0
  %v279 = vadd.f32 %v170, %v278
  %v280 = vpop.f32.mrb[0].mxu0
  %281 = vmatprep.mubr.f32.mxu0 %v34
  %282 = vmatmul.mubr.f32.gmra.mrb[0].mxu0 %v33
  %v283 = vpop.f32.mrb[0].mxu0
  %v284 = vadd.f32 %v170, %v283
  %v285 = vpop.f32.mrb[0].mxu0
  %286 = vmatprep.mubr.f32.mxu0 %v39
  %287 = vmatmul.mubr.f32.gmra.mrb[0].mxu0 %v38
  %v288 = vpop.f32.mrb[0].mxu0
  %v289 = vadd.f32 %v170, %v288
  %v290 = vpop.f32.mrb[0].mxu0
  %291 = vmatprep.mubr.f32.mxu0 %v44
  %292 = vmatmul.mubr.f32.gmra.mrb[0].mxu0 %v43
  %v293 = vpop.f32.mrb[0].mxu0
  %v294 = vadd.f32 %v170, %v293
  %v295 = vpop.f32.mrb[0].mxu0
  %296 = vmatprep.mubr.f32.mxu0 %v49
  %297 = vmatmul.mubr.f32.gmra.mrb[0].mxu0 %v48
  %v298 = vpop.f32.mrb[0].mxu0
  %v299 = vadd.f32 %v170, %v298
  %v300 = vpop.f32.mrb[0].mxu0
  %301 = vmatprep.mubr.f32.mxu0 %v54
  %302 = vmatmul.mubr.f32.gmra.mrb[0].mxu0 %v53
  %v303 = vpop.f32.mrb[0].mxu0
  %v304 = vadd.f32 %v170, %v303
  %v305 = vpop.f32.mrb[0].mxu0
  %306 = vmatprep.mubr.f32.mxu0 %v59
  %307 = vmatmul.mubr.f32.gmra.mrb[0].mxu0 %v58
  %v308 = vpop.f32.mrb[0].mxu0
  %v309 = vadd.f32 %v170, %v308
  %v310 = vpop.f32.mrb[0].mxu0
  %311 = vmatprep.mubr.f32.mxu0 %v64
  %312 = vmatmul.mubr.f32.gmra.mrb[0].mxu0 %v63
  %v313 = vpop.f32.mrb[0].mxu0
  %v314 = vadd.f32 %v170, %v313
  %v315 = vpop.f32.mrb[0].mxu0
  %316 = vmatprep.mubr.f32.mxu0 %v69
  %317 = vmatmul.mubr.f32.gmra.mrb[0].mxu0 %v68
  %v318 = vpop.f32.mrb[0].mxu0
  %v319 = vadd.f32 %v170, %v318
  %v320 = vpop.f32.mrb[0].mxu0
  %321 = vmatprep.mubr.f32.mxu0 %v74
  %322 = vmatmul.mubr.f32.gmra.mrb[0].mxu0 %v73
  %v323 = vpop.f32.mrb[0].mxu0
  %v324 = vadd.f32 %v170, %v323
  %v325 = vpop.f32.mrb[0].mxu0
  %326 = vmatprep.mubr.f32.mxu0 %v79
  %327 = vmatmul.mubr.f32.gmra.mrb[0].mxu0 %v78
  %v328 = vpop.f32.mrb[0].mxu0
  %v329 = vadd.f32 %v170, %v328
  %v330 = vpop.f32.mrb[0].mxu0
  %331 = vmatprep.mubr.f32.mxu0 %v84
  %332 = vmatmul.mubr.f32.gmra.mrb[0].mxu0 %v83
  %v333 = vpop.f32.mrb[0].mxu0
  %v334 = vadd.f32 %v170, %v333
  %v335 = vpop.f32.mrb[0].mxu0
  %336 = vmatprep.mubr.f32.mxu0 %v89
  %337 = vmatmul.mubr.f32.gmra.mrb[0].mxu0 %v88
  %v338 = vpop.f32.mrb[0].mxu0
  %v339 = vadd.f32 %v170, %v338
  %v340 = vpop.f32.mrb[0].mxu0
  %341 = vdwg.mxu0
  %342 = vmatprep.subr.mxu0 0.0
  %343 = vmatpush1.msra.mxu0 %v125
  %344 = vmatprep.subr.mxu0 0.0
  %345 = vmatpush1.msra.mxu0 %v126
  %346 = vmatprep.subr.mxu0 0.0
  %347 = vmatpush1.msra.mxu0 %v127
  %348 = vmatprep.subr.mxu0 0.0
  %349 = vmatpush1.msra.mxu0 %v128
  %350 = vmatprep.subr.mxu0 0.0
  %351 = vmatpush1.msra.mxu0 %v129
  %352 = vmatprep.subr.mxu0 0.0
  %353 = vmatpush1.msra.mxu0 %v130
  %354 = vmatprep.subr.mxu0 0.0
  %355 = vmatpush1.msra.mxu0 %v131
  %356 = vmatprep.subr.mxu0 0.0
  %357 = vmatpush1.msra.mxu0 %v132
  %358 = vmatprep.subr.mxu0 0.0
  %359 = vmatpush1.msra.mxu0 %v133
  %360 = vmatprep.subr.mxu0 0.0
  %361 = vmatpush1.msra.mxu0 %v134
  %362 = vmatprep.subr.mxu0 0.0
  %363 = vmatpush1.msra.mxu0 %v135
  %364 = vmatprep.subr.mxu0 0.0
  %365 = vmatpush1.msra.mxu0 %v136
  %366 = vmatprep.subr.mxu0 0.0
  %367 = vmatpush1.msra.mxu0 %v137
  %368 = vmatprep.subr.mxu0 0.0
  %369 = vmatpush1.msra.mxu0 %v138
  %370 = vmatprep.subr.mxu0 0.0
  %371 = vmatpush1.msra.mxu0 %v139
  %372 = vmatprep.subr.mxu0 0.0
  %373 = vmatpush1.msra.mxu0 %v140
  %374 = vmatprep.subr.mxu0 0.0
  %375 = vmatpush1.msra.mxu0 %v141
  %376 = vmatprep.subr.mxu0 0.0
  %377 = vmatpush1.msra.mxu0 %v142
  %378 = vmatprep.subr.mxu0 0.0
  %379 = vmatpush1.msra.mxu0 %v143
  %380 = vmatprep.subr.mxu0 0.0
  %381 = vmatpush1.msra.mxu0 %v144
  %382 = vmatprep.subr.mxu0 0.0
  %383 = vmatpush1.msra.mxu0 %v145
  %384 = vmatprep.subr.mxu0 0.0
  %385 = vmatpush1.msra.mxu0 %v146
  %386 = vmatprep.subr.mxu0 0.0
  %387 = vmatpush1.msra.mxu0 %v147
  %388 = vmatprep.subr.mxu0 0.0
  %389 = vmatpush1.msra.mxu0 %v148
  %390 = vmatprep.subr.mxu0 0.0
  %391 = vmatpush1.msra.mxu0 %v149
  %392 = vmatprep.subr.mxu0 0.0
  %393 = vmatpush1.msra.mxu0 %v150
  %394 = vmatprep.subr.mxu0 0.0
  %395 = vmatpush1.msra.mxu0 %v151
  %396 = vmatprep.subr.mxu0 0.0
  %397 = vmatpush1.msra.mxu0 %v152
  %398 = vmatprep.subr.mxu0 0.0
  %399 = vmatpush1.msra.mxu0 %v153
  %400 = vmatprep.subr.mxu0 0.0
  %401 = vmatpush1.msra.mxu0 %v154
  %402 = vmatprep.subr.mxu0 0.0
  %403 = vmatpush1.msra.mxu0 %v155
  %404 = vmatprep.subr.mxu0 0.0
  %405 = vmatpush1.msra.mxu0 %v156
  %406 = vmatprep.mubr.f32.mxu0 %v31
  %407 = vmatmul.mubr.f32.gmra.mrb[0].mxu0 %v30
  %v408 = vpop.f32.mrb[0].mxu0
  %v409 = vadd.f32 %v279, %v408
  %v410 = vpop.f32.mrb[0].mxu0
  %411 = vmatprep.mubr.f32.mxu0 %v36
  %412 = vmatmul.mubr.f32.gmra.mrb[0].mxu0 %v35
  %v413 = vpop.f32.mrb[0].mxu0
  %v414 = vadd.f32 %v284, %v413
  %v415 = vpop.f32.mrb[0].mxu0
  %416 = vmatprep.mubr.f32.mxu0 %v41
  %417 = vmatmul.mubr.f32.gmra.mrb[0].mxu0 %v40
  %v418 = vpop.f32.mrb[0].mxu0
  %v419 = vadd.f32 %v289, %v418
  %v420 = vpop.f32.mrb[0].mxu0
  %421 = vmatprep.mubr.f32.mxu0 %v46
  %422 = vmatmul.mubr.f32.gmra.mrb[0].mxu0 %v45
  %v423 = vpop.f32.mrb[0].mxu0
  %v424 = vadd.f32 %v294, %v423
  %v425 = vpop.f32.mrb[0].mxu0
  %426 = vmatprep.mubr.f32.mxu0 %v51
  %427 = vmatmul.mubr.f32.gmra.mrb[0].mxu0 %v50
  %v428 = vpop.f32.mrb[0].mxu0
  %v429 = vadd.f32 %v299, %v428
  %v430 = vpop.f32.mrb[0].mxu0
  %431 = vmatprep.mubr.f32.mxu0 %v56
  %432 = vmatmul.mubr.f32.gmra.mrb[0].mxu0 %v55
  %v433 = vpop.f32.mrb[0].mxu0
  %v434 = vadd.f32 %v304, %v433
  %v435 = vpop.f32.mrb[0].mxu0
  %436 = vmatprep.mubr.f32.mxu0 %v61
  %437 = vmatmul.mubr.f32.gmra.mrb[0].mxu0 %v60
  %v438 = vpop.f32.mrb[0].mxu0
  %v439 = vadd.f32 %v309, %v438
  %v440 = vpop.f32.mrb[0].mxu0
  %441 = vmatprep.mubr.f32.mxu0 %v66
  %442 = vmatmul.mubr.f32.gmra.mrb[0].mxu0 %v65
  %v443 = vpop.f32.mrb[0].mxu0
  %v444 = vadd.f32 %v314, %v443
  %v445 = vpop.f32.mrb[0].mxu0
  %446 = vmatprep.mubr.f32.mxu0 %v71
  %447 = vmatmul.mubr.f32.gmra.mrb[0].mxu0 %v70
  %v448 = vpop.f32.mrb[0].mxu0
  %v449 = vadd.f32 %v319, %v448
  %v450 = vpop.f32.mrb[0].mxu0
  %451 = vmatprep.mubr.f32.mxu0 %v76
  %452 = vmatmul.mubr.f32.gmra.mrb[0].mxu0 %v75
  %v453 = vpop.f32.mrb[0].mxu0
  %v454 = vadd.f32 %v324, %v453
  %v455 = vpop.f32.mrb[0].mxu0
  %456 = vmatprep.mubr.f32.mxu0 %v81
  %457 = vmatmul.mubr.f32.gmra.mrb[0].mxu0 %v80
  %v458 = vpop.f32.mrb[0].mxu0
  %v459 = vadd.f32 %v329, %v458
  %v460 = vpop.f32.mrb[0].mxu0
  %461 = vmatprep.mubr.f32.mxu0 %v86
  %462 = vmatmul.mubr.f32.gmra.mrb[0].mxu0 %v85
  %v463 = vpop.f32.mrb[0].mxu0
  %v464 = vadd.f32 %v334, %v463
  %v465 = vpop.f32.mrb[0].mxu0
  %466 = vmatprep.mubr.f32.mxu0 %v91
  %467 = vmatmul.mubr.f32.gmra.mrb[0].mxu0 %v90
  %v468 = vpop.f32.mrb[0].mxu0
  %v469 = vadd.f32 %v339, %v468
  %v470 = vpop.f32.mrb[0].mxu0
  %471 = vdwg.mxu0
  %472 = vmatprep.subr.mxu0 0.0
  %473 = vmatpush1.msra.mxu0 %v157
  %474 = vmatprep.subr.mxu0 0.0
  %475 = vmatpush1.msra.mxu0 %v158
  %476 = vmatprep.subr.mxu0 0.0
  %477 = vmatpush1.msra.mxu0 %v159
  %478 = vmatprep.subr.mxu0 0.0
  %479 = vmatpush1.msra.mxu0 %v160
  %480 = vmatprep.subr.mxu0 0.0
  %481 = vmatpush1.msra.mxu0 %v161
  %482 = vmatprep.subr.mxu0 0.0
  %483 = vmatpush1.msra.mxu0 %v162
  %484 = vmatprep.subr.mxu0 0.0
  %485 = vmatpush1.msra.mxu0 %v163
  %486 = vmatprep.subr.mxu0 0.0
  %487 = vmatpush1.msra.mxu0 %v164
  %488 = vmatprep.subr.mxu0 0.0
  %489 = vmatpush1.msra.mxu0 0.0
  %490 = vmatprep.subr.mxu0 0.0
  %491 = vmatpush1.msra.mxu0 0.0
  %492 = vmatprep.subr.mxu0 0.0
  %493 = vmatpush1.msra.mxu0 0.0
  %494 = vmatprep.subr.mxu0 0.0
  %495 = vmatpush1.msra.mxu0 0.0
  %496 = vmatprep.subr.mxu0 0.0
  %497 = vmatpush1.msra.mxu0 0.0
  %498 = vmatprep.subr.mxu0 0.0
  %499 = vmatpush1.msra.mxu0 0.0
  %500 = vmatprep.subr.mxu0 0.0
  %501 = vmatpush1.msra.mxu0 0.0
  %502 = vmatprep.subr.mxu0 0.0
  %503 = vmatpush1.msra.mxu0 0.0
  %504 = vmatprep.subr.mxu0 0.0
  %505 = vmatpush1.msra.mxu0 0.0
  %506 = vmatprep.subr.mxu0 0.0
  %507 = vmatpush1.msra.mxu0 0.0
  %508 = vmatprep.subr.mxu0 0.0
  %509 = vmatpush1.msra.mxu0 0.0
  %510 = vmatprep.subr.mxu0 0.0
  %511 = vmatpush1.msra.mxu0 0.0
  %512 = vmatprep.subr.mxu0 0.0
  %513 = vmatpush1.msra.mxu0 0.0
  %514 = vmatprep.subr.mxu0 0.0
  %515 = vmatpush1.msra.mxu0 0.0
  %516 = vmatprep.subr.mxu0 0.0
  %517 = vmatpush1.msra.mxu0 0.0
  %518 = vmatprep.subr.mxu0 0.0
  %519 = vmatpush1.msra.mxu0 0.0
  %520 = vmatprep.subr.mxu0 0.0
  %521 = vmatpush1.msra.mxu0 0.0
  %522 = vmatprep.subr.mxu0 0.0
  %523 = vmatpush1.msra.mxu0 0.0
  %524 = vmatprep.subr.mxu0 0.0
  %525 = vmatpush1.msra.mxu0 0.0
  %526 = vmatprep.subr.mxu0 0.0
  %527 = vmatpush1.msra.mxu0 0.0
  %528 = vmatprep.subr.mxu0 0.0
  %529 = vmatpush1.msra.mxu0 0.0
  %530 = vmatprep.subr.mxu0 0.0
  %531 = vmatpush1.msra.mxu0 0.0
  %532 = vmatprep.subr.mxu0 0.0
  %533 = vmatpush1.msra.mxu0 0.0
  %534 = vmatprep.subr.mxu0 0.0
  %535 = vmatpush1.msra.mxu0 0.0
  %536 = vmatprep.mubr.f32.mxu0 0.0
  %537 = vmatmul.mubr.f32.gmra.mrb[0].mxu0 %v174
  %v538 = vpop.f32.mrb[0].mxu0
  %v539 = vadd.f32 %v409, %v538
  %v540 = vpop.f32.mrb[0].mxu0
  %541 = vmatprep.mubr.f32.mxu0 0.0
  %542 = vmatmul.mubr.f32.gmra.mrb[0].mxu0 %v177
  %v543 = vpop.f32.mrb[0].mxu0
  %v544 = vadd.f32 %v414, %v543
  %v545 = vpop.f32.mrb[0].mxu0
  %546 = vmatprep.mubr.f32.mxu0 0.0
  %547 = vmatmul.mubr.f32.gmra.mrb[0].mxu0 %v180
  %v548 = vpop.f32.mrb[0].mxu0
  %v549 = vadd.f32 %v419, %v548
  %v550 = vpop.f32.mrb[0].mxu0
  %551 = vmatprep.mubr.f32.mxu0 0.0
  %552 = vmatmul.mubr.f32.gmra.mrb[0].mxu0 %v183
  %v553 = vpop.f32.mrb[0].mxu0
  %v554 = vadd.f32 %v424, %v553
  %v555 = vpop.f32.mrb[0].mxu0
  %556 = vmatprep.mubr.f32.mxu0 0.0
  %557 = vmatmul.mubr.f32.gmra.mrb[0].mxu0 %v186
  %v558 = vpop.f32.mrb[0].mxu0
  %v559 = vadd.f32 %v429, %v558
  %v560 = vpop.f32.mrb[0].mxu0
  %561 = vmatprep.mubr.f32.mxu0 0.0
  %562 = vmatmul.mubr.f32.gmra.mrb[0].mxu0 %v189
  %v563 = vpop.f32.mrb[0].mxu0
  %v564 = vadd.f32 %v434, %v563
  %v565 = vpop.f32.mrb[0].mxu0
  %566 = vmatprep.mubr.f32.mxu0 0.0
  %567 = vmatmul.mubr.f32.gmra.mrb[0].mxu0 %v192
  %v568 = vpop.f32.mrb[0].mxu0
  %v569 = vadd.f32 %v439, %v568
  %v570 = vpop.f32.mrb[0].mxu0
  %571 = vmatprep.mubr.f32.mxu0 0.0
  %572 = vmatmul.mubr.f32.gmra.mrb[0].mxu0 %v195
  %v573 = vpop.f32.mrb[0].mxu0
  %v574 = vadd.f32 %v444, %v573
  %v575 = vpop.f32.mrb[0].mxu0
  %576 = vmatprep.mubr.f32.mxu0 0.0
  %577 = vmatmul.mubr.f32.gmra.mrb[0].mxu0 %v198
  %v578 = vpop.f32.mrb[0].mxu0
  %v579 = vadd.f32 %v449, %v578
  %v580 = vpop.f32.mrb[0].mxu0
  %581 = vmatprep.mubr.f32.mxu0 0.0
  %582 = vmatmul.mubr.f32.gmra.mrb[0].mxu0 %v201
  %v583 = vpop.f32.mrb[0].mxu0
  %v584 = vadd.f32 %v454, %v583
  %v585 = vpop.f32.mrb[0].mxu0
  %586 = vmatprep.mubr.f32.mxu0 0.0
  %587 = vmatmul.mubr.f32.gmra.mrb[0].mxu0 %v204
  %v588 = vpop.f32.mrb[0].mxu0
  %v589 = vadd.f32 %v459, %v588
  %v590 = vpop.f32.mrb[0].mxu0
  %591 = vmatprep.mubr.f32.mxu0 0.0
  %592 = vmatmul.mubr.f32.gmra.mrb[0].mxu0 %v207
  %v593 = vpop.f32.mrb[0].mxu0
  %v594 = vadd.f32 %v464, %v593
  %v595 = vpop.f32.mrb[0].mxu0
  %596 = vmatprep.mubr.f32.mxu0 0.0
  %597 = vmatmul.mubr.f32.gmra.mrb[0].mxu0 %v210
  %v598 = vpop.f32.mrb[0].mxu0
  %v599 = vadd.f32 %v469, %v598
  %v600 = vpop.f32.mrb[0].mxu0
  %601 = vdwg.mxu0
  %v602 = vmax.f32 %v539, 0.0
  %v603 = vmax.f32 %v544, 0.0
  %v604 = vmax.f32 %v549, 0.0
  %v605 = vmax.f32 %v554, 0.0
  %v606 = vmax.f32 %v559, 0.0
  %v607 = vmax.f32 %v564, 0.0
  %v608 = vmax.f32 %v569, 0.0
  %v609 = vmax.f32 %v574, 0.0
  %v610 = vmax.f32 %v579, 0.0
  %v611 = vmax.f32 %v584, 0.0
  %v612 = vmax.f32 %v589, 0.0
  %v613 = vmax.f32 %v594, 0.0
  %v614 = vmax.f32 %v599, 0.0
  %v615 = vld [vmem:[%s3] sm:$0xff]
  %v616 = vld [vmem:[%s3 + $0x8] sm:$0xff]
  %v617 = vld [vmem:[%s3 + $0x10] sm:$0xff]
  %v618 = vld [vmem:[%s3 + $0x18] sm:$0xff]
  %v619 = vld [vmem:[%s3 + $0x20] sm:$0xff]
  %v620 = vld [vmem:[%s3 + $0x28] sm:$0xff]
  %v621 = vld [vmem:[%s3 + $0x30] sm:$0xff]
  %v622 = vld [vmem:[%s3 + $0x38] sm:$0xff]
  %v623 = vld [vmem:[%s3 + $0x40] sm:$0xff]
  %v624 = vld [vmem:[%s3 + $0x48] sm:$0xff]
  %v625 = vld [vmem:[%s3 + $0x50] sm:$0xff]
  %v626 = vld [vmem:[%s3 + $0x58] sm:$0xff]
  %v627 = vld [vmem:[%s3 + $0x60] sm:$0xff]
  %v628 = vld [vmem:[%s3 + $0x68] sm:$0xff]
  %v629 = vld [vmem:[%s3 + $0x70] sm:$0xff]
  %v630 = vld [vmem:[%s3 + $0x78] sm:$0xff]
  %v631 = vld [vmem:[%s3 + $0x80] sm:$0xff]
  %v632 = vld [vmem:[%s3 + $0x88] sm:$0xff]
  %v633 = vld [vmem:[%s3 + $0x90] sm:$0xff]
  %v634 = vld [vmem:[%s3 + $0x98] sm:$0xff]
  %v635 = vld [vmem:[%s3 + $0xa0] sm:$0xff]
  %v636 = vld [vmem:[%s3 + $0xa8] sm:$0xff]
  %v637 = vld [vmem:[%s3 + $0xb0] sm:$0xff]
  %v638 = vld [vmem:[%s3 + $0xb8] sm:$0xff]
  %v639 = vld [vmem:[%s3 + $0xc0] sm:$0xff]
  %v640 = vld [vmem:[%s3 + $0xc8] sm:$0xff]
  %v641 = vld [vmem:[%s3 + $0xd0] sm:$0xff]
  %v642 = vld [vmem:[%s3 + $0xd8] sm:$0xff]
  %v643 = vld [vmem:[%s3 + $0xe0] sm:$0xff]
  %v644 = vld [vmem:[%s3 + $0xe8] sm:$0xff]
  %v645 = vld [vmem:[%s3 + $0xf0] sm:$0xff]
  %v646 = vld [vmem:[%s3 + $0xf8] sm:$0xff]
  %s647 = scalar_lea.vmem %s3, 256
  %v648 = vld [vmem:[%s647] sm:$0xff]
  %v649 = vld [vmem:[%s647 + $0x8] sm:$0xff]
  %v650 = vld [vmem:[%s647 + $0x10] sm:$0xff]
  %v651 = vld [vmem:[%s647 + $0x18] sm:$0xff]
  %v652 = vld [vmem:[%s647 + $0x20] sm:$0xff]
  %v653 = vld [vmem:[%s647 + $0x28] sm:$0xff]
  %v654 = vld [vmem:[%s647 + $0x30] sm:$0xff]
  %v655 = vld [vmem:[%s647 + $0x38] sm:$0xff]
  %v656 = vld [vmem:[%s647 + $0x40] sm:$0xff]
  %v657 = vld [vmem:[%s647 + $0x48] sm:$0xff]
  %v658 = vld [vmem:[%s647 + $0x50] sm:$0xff]
  %v659 = vld [vmem:[%s647 + $0x58] sm:$0xff]
  %v660 = vld [vmem:[%s647 + $0x60] sm:$0xff]
  %v661 = vld [vmem:[%s647 + $0x68] sm:$0xff]
  %v662 = vld [vmem:[%s647 + $0x70] sm:$0xff]
  %v663 = vld [vmem:[%s647 + $0x78] sm:$0xff]
  %v664 = vld [vmem:[%s647 + $0x80] sm:$0xff]
  %v665 = vld [vmem:[%s647 + $0x88] sm:$0xff]
  %v666 = vld [vmem:[%s647 + $0x90] sm:$0xff]
  %v667 = vld [vmem:[%s647 + $0x98] sm:$0xff]
  %v668 = vld [vmem:[%s647 + $0xa0] sm:$0xff]
  %v669 = vld [vmem:[%s647 + $0xa8] sm:$0xff]
  %v670 = vld [vmem:[%s647 + $0xb0] sm:$0xff]
  %v671 = vld [vmem:[%s647 + $0xb8] sm:$0xff]
  %v672 = vld [vmem:[%s647 + $0xc0] sm:$0xff]
  %v673 = vld [vmem:[%s647 + $0xc8] sm:$0xff]
  %v674 = vld [vmem:[%s647 + $0xd0] sm:$0xff]
  %v675 = vld [vmem:[%s647 + $0xd8] sm:$0xff]
  %v676 = vld [vmem:[%s647 + $0xe0] sm:$0xff]
  %v677 = vld [vmem:[%s647 + $0xe8] sm:$0xff]
  %v678 = vld [vmem:[%s647 + $0xf0] sm:$0xff]
  %v679 = vld [vmem:[%s647 + $0xf8] sm:$0xff]
  %v681 = vrot.slane %v602, 2
  %v682 = vsel %vm172, %v681, 0
  %684 = vmatprep.subr.mxu0 %v649
  %685 = vmatpush1.msra.mxu0 %v648
  %686 = vmatprep.subr.mxu0 %v653
  %687 = vmatpush1.msra.mxu0 %v652
  %688 = vmatprep.subr.mxu0 %v657
  %689 = vmatpush1.msra.mxu0 %v656
  %690 = vmatprep.subr.mxu0 %v661
  %691 = vmatpush1.msra.mxu0 %v660
  %692 = vmatprep.subr.mxu0 %v665
  %693 = vmatpush1.msra.mxu0 %v664
  %694 = vmatprep.subr.mxu0 %v669
  %695 = vmatpush1.msra.mxu0 %v668
  %696 = vmatprep.subr.mxu0 %v673
  %697 = vmatpush1.msra.mxu0 %v672
  %698 = vmatprep.subr.mxu0 %v677
  %699 = vmatpush1.msra.mxu0 %v676
  %700 = vmatprep.subr.mxu0 0.0
  %701 = vmatpush1.msra.mxu0 0.0
  %702 = vmatprep.subr.mxu0 0.0
  %703 = vmatpush1.msra.mxu0 0.0
  %704 = vmatprep.subr.mxu0 0.0
  %705 = vmatpush1.msra.mxu0 0.0
  %706 = vmatprep.subr.mxu0 0.0
  %707 = vmatpush1.msra.mxu0 0.0
  %708 = vmatprep.subr.mxu0 0.0
  %709 = vmatpush1.msra.mxu0 0.0
  %710 = vmatprep.subr.mxu0 0.0
  %711 = vmatpush1.msra.mxu0 0.0
  %712 = vmatprep.subr.mxu0 0.0
  %713 = vmatpush1.msra.mxu0 0.0
  %714 = vmatprep.subr.mxu0 0.0
  %715 = vmatpush1.msra.mxu0 0.0
  %716 = vmatprep.subr.mxu0 0.0
  %717 = vmatpush1.msra.mxu0 0.0
  %718 = vmatprep.subr.mxu0 0.0
  %719 = vmatpush1.msra.mxu0 0.0
  %720 = vmatprep.subr.mxu0 0.0
  %721 = vmatpush1.msra.mxu0 0.0
  %722 = vmatprep.subr.mxu0 0.0
  %723 = vmatpush1.msra.mxu0 0.0
  %724 = vmatprep.subr.mxu0 0.0
  %725 = vmatpush1.msra.mxu0 0.0
  %726 = vmatprep.subr.mxu0 0.0
  %727 = vmatpush1.msra.mxu0 0.0
  %728 = vmatprep.subr.mxu0 0.0
  %729 = vmatpush1.msra.mxu0 0.0
  %730 = vmatprep.subr.mxu0 0.0
  %731 = vmatpush1.msra.mxu0 0.0
  %732 = vmatprep.subr.mxu0 0.0
  %733 = vmatpush1.msra.mxu0 0.0
  %734 = vmatprep.subr.mxu0 0.0
  %735 = vmatpush1.msra.mxu0 0.0
  %736 = vmatprep.subr.mxu0 0.0
  %737 = vmatpush1.msra.mxu0 0.0
  %738 = vmatprep.subr.mxu0 0.0
  %739 = vmatpush1.msra.mxu0 0.0
  %740 = vmatprep.subr.mxu0 0.0
  %741 = vmatpush1.msra.mxu0 0.0
  %742 = vmatprep.subr.mxu0 0.0
  %743 = vmatpush1.msra.mxu0 0.0
  %744 = vmatprep.subr.mxu0 0.0
  %745 = vmatpush1.msra.mxu0 0.0
  %746 = vmatprep.subr.mxu0 0.0
  %747 = vmatpush1.msra.mxu0 0.0
  %748 = vmatprep.mubr.f32.mxu0 0.0
  %749 = vmatmul.mubr.f32.gmra.mrb[0].mxu0 %v682
  %v750 = vpop.f32.mrb[0].mxu0
  %v751 = vadd.f32 0.0, %v750
  %v752 = vpop.f32.mrb[0].mxu0
  %v753 = vadd.f32 0.0, %v752
  %754 = vdwg.mxu0
  %755 = vmatprep.subr.mxu0 %v651
  %756 = vmatpush1.msra.mxu0 %v650
  %757 = vmatprep.subr.mxu0 %v655
  %758 = vmatpush1.msra.mxu0 %v654
  %759 = vmatprep.subr.mxu0 %v659
  %760 = vmatpush1.msra.mxu0 %v658
  %761 = vmatprep.subr.mxu0 %v663
  %762 = vmatpush1.msra.mxu0 %v662
  %763 = vmatprep.subr.mxu0 %v667
  %764 = vmatpush1.msra.mxu0 %v666
  %765 = vmatprep.subr.mxu0 %v671
  %766 = vmatpush1.msra.mxu0 %v670
  %767 = vmatprep.subr.mxu0 %v675
  %768 = vmatpush1.msra.mxu0 %v674
  %769 = vmatprep.subr.mxu0 %v679
  %770 = vmatpush1.msra.mxu0 %v678
  %771 = vmatprep.subr.mxu0 0.0
  %772 = vmatpush1.msra.mxu0 0.0
  %773 = vmatprep.subr.mxu0 0.0
  %774 = vmatpush1.msra.mxu0 0.0
  %775 = vmatprep.subr.mxu0 0.0
  %776 = vmatpush1.msra.mxu0 0.0
  %777 = vmatprep.subr.mxu0 0.0
  %778 = vmatpush1.msra.mxu0 0.0
  %779 = vmatprep.subr.mxu0 0.0
  %780 = vmatpush1.msra.mxu0 0.0
  %781 = vmatprep.subr.mxu0 0.0
  %782 = vmatpush1.msra.mxu0 0.0
  %783 = vmatprep.subr.mxu0 0.0
  %784 = vmatpush1.msra.mxu0 0.0
  %785 = vmatprep.subr.mxu0 0.0
  %786 = vmatpush1.msra.mxu0 0.0
  %787 = vmatprep.subr.mxu0 0.0
  %788 = vmatpush1.msra.mxu0 0.0
  %789 = vmatprep.subr.mxu0 0.0
  %790 = vmatpush1.msra.mxu0 0.0
  %791 = vmatprep.subr.mxu0 0.0
  %792 = vmatpush1.msra.mxu0 0.0
  %793 = vmatprep.subr.mxu0 0.0
  %794 = vmatpush1.msra.mxu0 0.0
  %795 = vmatprep.subr.mxu0 0.0
  %796 = vmatpush1.msra.mxu0 0.0
  %797 = vmatprep.subr.mxu0 0.0
  %798 = vmatpush1.msra.mxu0 0.0
  %799 = vmatprep.subr.mxu0 0.0
  %800 = vmatpush1.msra.mxu0 0.0
  %801 = vmatprep.subr.mxu0 0.0
  %802 = vmatpush1.msra.mxu0 0.0
  %803 = vmatprep.subr.mxu0 0.0
  %804 = vmatpush1.msra.mxu0 0.0
  %805 = vmatprep.subr.mxu0 0.0
  %806 = vmatpush1.msra.mxu0 0.0
  %807 = vmatprep.subr.mxu0 0.0
  %808 = vmatpush1.msra.mxu0 0.0
  %809 = vmatprep.subr.mxu0 0.0
  %810 = vmatpush1.msra.mxu0 0.0
  %811 = vmatprep.subr.mxu0 0.0
  %812 = vmatpush1.msra.mxu0 0.0
  %813 = vmatprep.subr.mxu0 0.0
  %814 = vmatpush1.msra.mxu0 0.0
  %815 = vmatprep.subr.mxu0 0.0
  %816 = vmatpush1.msra.mxu0 0.0
  %817 = vmatprep.subr.mxu0 0.0
  %818 = vmatpush1.msra.mxu0 0.0
  %819 = vmatprep.mubr.f32.mxu0 0.0
  %820 = vmatmul.mubr.f32.gmra.mrb[0].mxu0 %v682
  %v821 = vpop.f32.mrb[0].mxu0
  %v822 = vadd.f32 0.0, %v821
  %v823 = vpop.f32.mrb[0].mxu0
  %v824 = vadd.f32 0.0, %v823
  %825 = vdwg.mxu0
  %v826 = vsel %vm172, %v602, 0
  %828 = vmatprep.subr.mxu0 %v616
  %829 = vmatpush1.msra.mxu0 %v615
  %830 = vmatprep.subr.mxu0 %v620
  %831 = vmatpush1.msra.mxu0 %v619
  %832 = vmatprep.subr.mxu0 %v624
  %833 = vmatpush1.msra.mxu0 %v623
  %834 = vmatprep.subr.mxu0 %v628
  %835 = vmatpush1.msra.mxu0 %v627
  %836 = vmatprep.subr.mxu0 %v632
  %837 = vmatpush1.msra.mxu0 %v631
  %838 = vmatprep.subr.mxu0 %v636
  %839 = vmatpush1.msra.mxu0 %v635
  %840 = vmatprep.subr.mxu0 %v640
  %841 = vmatpush1.msra.mxu0 %v639
  %842 = vmatprep.subr.mxu0 %v644
  %843 = vmatpush1.msra.mxu0 %v643
  %844 = vmatprep.subr.mxu0 0.0
  %845 = vmatpush1.msra.mxu0 0.0
  %846 = vmatprep.subr.mxu0 0.0
  %847 = vmatpush1.msra.mxu0 0.0
  %848 = vmatprep.subr.mxu0 0.0
  %849 = vmatpush1.msra.mxu0 0.0
  %850 = vmatprep.subr.mxu0 0.0
  %851 = vmatpush1.msra.mxu0 0.0
  %852 = vmatprep.subr.mxu0 0.0
  %853 = vmatpush1.msra.mxu0 0.0
  %854 = vmatprep.subr.mxu0 0.0
  %855 = vmatpush1.msra.mxu0 0.0
  %856 = vmatprep.subr.mxu0 0.0
  %857 = vmatpush1.msra.mxu0 0.0
  %858 = vmatprep.subr.mxu0 0.0
  %859 = vmatpush1.msra.mxu0 0.0
  %860 = vmatprep.subr.mxu0 0.0
  %861 = vmatpush1.msra.mxu0 0.0
  %862 = vmatprep.subr.mxu0 0.0
  %863 = vmatpush1.msra.mxu0 0.0
  %864 = vmatprep.subr.mxu0 0.0
  %865 = vmatpush1.msra.mxu0 0.0
  %866 = vmatprep.subr.mxu0 0.0
  %867 = vmatpush1.msra.mxu0 0.0
  %868 = vmatprep.subr.mxu0 0.0
  %869 = vmatpush1.msra.mxu0 0.0
  %870 = vmatprep.subr.mxu0 0.0
  %871 = vmatpush1.msra.mxu0 0.0
  %872 = vmatprep.subr.mxu0 0.0
  %873 = vmatpush1.msra.mxu0 0.0
  %874 = vmatprep.subr.mxu0 0.0
  %875 = vmatpush1.msra.mxu0 0.0
  %876 = vmatprep.subr.mxu0 0.0
  %877 = vmatpush1.msra.mxu0 0.0
  %878 = vmatprep.subr.mxu0 0.0
  %879 = vmatpush1.msra.mxu0 0.0
  %880 = vmatprep.subr.mxu0 0.0
  %881 = vmatpush1.msra.mxu0 0.0
  %882 = vmatprep.subr.mxu0 0.0
  %883 = vmatpush1.msra.mxu0 0.0
  %884 = vmatprep.subr.mxu0 0.0
  %885 = vmatpush1.msra.mxu0 0.0
  %886 = vmatprep.subr.mxu0 0.0
  %887 = vmatpush1.msra.mxu0 0.0
  %888 = vmatprep.subr.mxu0 0.0
  %889 = vmatpush1.msra.mxu0 0.0
  %890 = vmatprep.subr.mxu0 0.0
  %891 = vmatpush1.msra.mxu0 0.0
  %892 = vmatprep.mubr.f32.mxu0 0.0
  %893 = vmatmul.mubr.f32.gmra.mrb[0].mxu0 %v826
  %v894 = vpop.f32.mrb[0].mxu0
  %v895 = vadd.f32 %v751, %v894
  %v896 = vpop.f32.mrb[0].mxu0
  %v897 = vadd.f32 %v753, %v896
  %898 = vdwg.mxu0
  %899 = vmatprep.subr.mxu0 %v618
  %900 = vmatpush1.msra.mxu0 %v617
  %901 = vmatprep.subr.mxu0 %v622
  %902 = vmatpush1.msra.mxu0 %v621
  %903 = vmatprep.subr.mxu0 %v626
  %904 = vmatpush1.msra.mxu0 %v625
  %905 = vmatprep.subr.mxu0 %v630
  %906 = vmatpush1.msra.mxu0 %v629
  %907 = vmatprep.subr.mxu0 %v634
  %908 = vmatpush1.msra.mxu0 %v633
  %909 = vmatprep.subr.mxu0 %v638
  %910 = vmatpush1.msra.mxu0 %v637
  %911 = vmatprep.subr.mxu0 %v642
  %912 = vmatpush1.msra.mxu0 %v641
  %913 = vmatprep.subr.mxu0 %v646
  %914 = vmatpush1.msra.mxu0 %v645
  %915 = vmatprep.subr.mxu0 0.0
  %916 = vmatpush1.msra.mxu0 0.0
  %917 = vmatprep.subr.mxu0 0.0
  %918 = vmatpush1.msra.mxu0 0.0
  %919 = vmatprep.subr.mxu0 0.0
  %920 = vmatpush1.msra.mxu0 0.0
  %921 = vmatprep.subr.mxu0 0.0
  %922 = vmatpush1.msra.mxu0 0.0
  %923 = vmatprep.subr.mxu0 0.0
  %924 = vmatpush1.msra.mxu0 0.0
  %925 = vmatprep.subr.mxu0 0.0
  %926 = vmatpush1.msra.mxu0 0.0
  %927 = vmatprep.subr.mxu0 0.0
  %928 = vmatpush1.msra.mxu0 0.0
  %929 = vmatprep.subr.mxu0 0.0
  %930 = vmatpush1.msra.mxu0 0.0
  %931 = vmatprep.subr.mxu0 0.0
  %932 = vmatpush1.msra.mxu0 0.0
  %933 = vmatprep.subr.mxu0 0.0
  %934 = vmatpush1.msra.mxu0 0.0
  %935 = vmatprep.subr.mxu0 0.0
  %936 = vmatpush1.msra.mxu0 0.0
  %937 = vmatprep.subr.mxu0 0.0
  %938 = vmatpush1.msra.mxu0 0.0
  %939 = vmatprep.subr.mxu0 0.0
  %940 = vmatpush1.msra.mxu0 0.0
  %941 = vmatprep.subr.mxu0 0.0
  %942 = vmatpush1.msra.mxu0 0.0
  %943 = vmatprep.subr.mxu0 0.0
  %944 = vmatpush1.msra.mxu0 0.0
  %945 = vmatprep.subr.mxu0 0.0
  %946 = vmatpush1.msra.mxu0 0.0
  %947 = vmatprep.subr.mxu0 0.0
  %948 = vmatpush1.msra.mxu0 0.0
  %949 = vmatprep.subr.mxu0 0.0
  %950 = vmatpush1.msra.mxu0 0.0
  %951 = vmatprep.subr.mxu0 0.0
  %952 = vmatpush1.msra.mxu0 0.0
  %953 = vmatprep.subr.mxu0 0.0
  %954 = vmatpush1.msra.mxu0 0.0
  %955 = vmatprep.subr.mxu0 0.0
  %956 = vmatpush1.msra.mxu0 0.0
  %957 = vmatprep.subr.mxu0 0.0
  %958 = vmatpush1.msra.mxu0 0.0
  %959 = vmatprep.subr.mxu0 0.0
  %960 = vmatpush1.msra.mxu0 0.0
  %961 = vmatprep.subr.mxu0 0.0
  %962 = vmatpush1.msra.mxu0 0.0
  %963 = vmatprep.mubr.f32.mxu0 0.0
  %964 = vmatmul.mubr.f32.gmra.mrb[0].mxu0 %v826
  %v965 = vpop.f32.mrb[0].mxu0
  %v966 = vadd.f32 %v822, %v965
  %v967 = vpop.f32.mrb[0].mxu0
  %v968 = vadd.f32 %v824, %v967
  %969 = vdwg.mxu0
  %s970 = scalar_lea.vmem %s3, 512
  %v971 = vld [vmem:[%s970] sm:$0xff]
  %v972 = vld [vmem:[%s970 + $0x8] sm:$0xff]
  %v973 = vld [vmem:[%s970 + $0x10] sm:$0xff]
  %v974 = vld [vmem:[%s970 + $0x18] sm:$0xff]
  %v975 = vld [vmem:[%s970 + $0x20] sm:$0xff]
  %v976 = vld [vmem:[%s970 + $0x28] sm:$0xff]
  %v977 = vld [vmem:[%s970 + $0x30] sm:$0xff]
  %v978 = vld [vmem:[%s970 + $0x38] sm:$0xff]
  %v979 = vld [vmem:[%s970 + $0x40] sm:$0xff]
  %v980 = vld [vmem:[%s970 + $0x48] sm:$0xff]
  %v981 = vld [vmem:[%s970 + $0x50] sm:$0xff]
  %v982 = vld [vmem:[%s970 + $0x58] sm:$0xff]
  %v983 = vld [vmem:[%s970 + $0x60] sm:$0xff]
  %v984 = vld [vmem:[%s970 + $0x68] sm:$0xff]
  %v985 = vld [vmem:[%s970 + $0x70] sm:$0xff]
  %v986 = vld [vmem:[%s970 + $0x78] sm:$0xff]
  %v987 = vld [vmem:[%s970 + $0x80] sm:$0xff]
  %v988 = vld [vmem:[%s970 + $0x88] sm:$0xff]
  %v989 = vld [vmem:[%s970 + $0x90] sm:$0xff]
  %v990 = vld [vmem:[%s970 + $0x98] sm:$0xff]
  %v991 = vld [vmem:[%s970 + $0xa0] sm:$0xff]
  %v992 = vld [vmem:[%s970 + $0xa8] sm:$0xff]
  %v993 = vld [vmem:[%s970 + $0xb0] sm:$0xff]
  %v994 = vld [vmem:[%s970 + $0xb8] sm:$0xff]
  %v995 = vld [vmem:[%s970 + $0xc0] sm:$0xff]
  %v996 = vld [vmem:[%s970 + $0xc8] sm:$0xff]
  %v997 = vld [vmem:[%s970 + $0xd0] sm:$0xff]
  %v998 = vld [vmem:[%s970 + $0xd8] sm:$0xff]
  %v999 = vld [vmem:[%s970 + $0xe0] sm:$0xff]
  %v1000 = vld [vmem:[%s970 + $0xe8] sm:$0xff]
  %v1001 = vld [vmem:[%s970 + $0xf0] sm:$0xff]
  %v1002 = vld [vmem:[%s970 + $0xf8] sm:$0xff]
  %v1003 = vrot.slane %v602, 4
  %v1004 = vsel %vm172, %v1003, 0
  %1006 = vmatprep.subr.mxu0 %v972
  %1007 = vmatpush1.msra.mxu0 %v971
  %1008 = vmatprep.subr.mxu0 %v976
  %1009 = vmatpush1.msra.mxu0 %v975
  %1010 = vmatprep.subr.mxu0 %v980
  %1011 = vmatpush1.msra.mxu0 %v979
  %1012 = vmatprep.subr.mxu0 %v984
  %1013 = vmatpush1.msra.mxu0 %v983
  %1014 = vmatprep.subr.mxu0 %v988
  %1015 = vmatpush1.msra.mxu0 %v987
  %1016 = vmatprep.subr.mxu0 %v992
  %1017 = vmatpush1.msra.mxu0 %v991
  %1018 = vmatprep.subr.mxu0 %v996
  %1019 = vmatpush1.msra.mxu0 %v995
  %1020 = vmatprep.subr.mxu0 %v1000
  %1021 = vmatpush1.msra.mxu0 %v999
  %1022 = vmatprep.subr.mxu0 0.0
  %1023 = vmatpush1.msra.mxu0 0.0
  %1024 = vmatprep.subr.mxu0 0.0
  %1025 = vmatpush1.msra.mxu0 0.0
  %1026 = vmatprep.subr.mxu0 0.0
  %1027 = vmatpush1.msra.mxu0 0.0
  %1028 = vmatprep.subr.mxu0 0.0
  %1029 = vmatpush1.msra.mxu0 0.0
  %1030 = vmatprep.subr.mxu0 0.0
  %1031 = vmatpush1.msra.mxu0 0.0
  %1032 = vmatprep.subr.mxu0 0.0
  %1033 = vmatpush1.msra.mxu0 0.0
  %1034 = vmatprep.subr.mxu0 0.0
  %1035 = vmatpush1.msra.mxu0 0.0
  %1036 = vmatprep.subr.mxu0 0.0
  %1037 = vmatpush1.msra.mxu0 0.0
  %1038 = vmatprep.subr.mxu0 0.0
  %1039 = vmatpush1.msra.mxu0 0.0
  %1040 = vmatprep.subr.mxu0 0.0
  %1041 = vmatpush1.msra.mxu0 0.0
  %1042 = vmatprep.subr.mxu0 0.0
  %1043 = vmatpush1.msra.mxu0 0.0
  %1044 = vmatprep.subr.mxu0 0.0
  %1045 = vmatpush1.msra.mxu0 0.0
  %1046 = vmatprep.subr.mxu0 0.0
  %1047 = vmatpush1.msra.mxu0 0.0
  %1048 = vmatprep.subr.mxu0 0.0
  %1049 = vmatpush1.msra.mxu0 0.0
  %1050 = vmatprep.subr.mxu0 0.0
  %1051 = vmatpush1.msra.mxu0 0.0
  %1052 = vmatprep.subr.mxu0 0.0
  %1053 = vmatpush1.msra.mxu0 0.0
  %1054 = vmatprep.subr.mxu0 0.0
  %1055 = vmatpush1.msra.mxu0 0.0
  %1056 = vmatprep.subr.mxu0 0.0
  %1057 = vmatpush1.msra.mxu0 0.0
  %1058 = vmatprep.subr.mxu0 0.0
  %1059 = vmatpush1.msra.mxu0 0.0
  %1060 = vmatprep.subr.mxu0 0.0
  %1061 = vmatpush1.msra.mxu0 0.0
  %1062 = vmatprep.subr.mxu0 0.0
  %1063 = vmatpush1.msra.mxu0 0.0
  %1064 = vmatprep.subr.mxu0 0.0
  %1065 = vmatpush1.msra.mxu0 0.0
  %1066 = vmatprep.subr.mxu0 0.0
  %1067 = vmatpush1.msra.mxu0 0.0
  %1068 = vmatprep.subr.mxu0 0.0
  %1069 = vmatpush1.msra.mxu0 0.0
  %1070 = vmatprep.mubr.f32.mxu0 0.0
  %1071 = vmatmul.mubr.f32.gmra.mrb[0].mxu0 %v1004
  %v1072 = vpop.f32.mrb[0].mxu0
  %v1073 = vadd.f32 0.0, %v1072
  %v1074 = vpop.f32.mrb[0].mxu0
  %v1075 = vadd.f32 0.0, %v1074
  %1076 = vdwg.mxu0
  %1077 = vmatprep.subr.mxu0 %v974
  %1078 = vmatpush1.msra.mxu0 %v973
  %1079 = vmatprep.subr.mxu0 %v978
  %1080 = vmatpush1.msra.mxu0 %v977
  %1081 = vmatprep.subr.mxu0 %v982
  %1082 = vmatpush1.msra.mxu0 %v981
  %1083 = vmatprep.subr.mxu0 %v986
  %1084 = vmatpush1.msra.mxu0 %v985
  %1085 = vmatprep.subr.mxu0 %v990
  %1086 = vmatpush1.msra.mxu0 %v989
  %1087 = vmatprep.subr.mxu0 %v994
  %1088 = vmatpush1.msra.mxu0 %v993
  %1089 = vmatprep.subr.mxu0 %v998
  %1090 = vmatpush1.msra.mxu0 %v997
  %1091 = vmatprep.subr.mxu0 %v1002
  %1092 = vmatpush1.msra.mxu0 %v1001
  %1093 = vmatprep.subr.mxu0 0.0
  %1094 = vmatpush1.msra.mxu0 0.0
  %1095 = vmatprep.subr.mxu0 0.0
  %1096 = vmatpush1.msra.mxu0 0.0
  %1097 = vmatprep.subr.mxu0 0.0
  %1098 = vmatpush1.msra.mxu0 0.0
  %1099 = vmatprep.subr.mxu0 0.0
  %1100 = vmatpush1.msra.mxu0 0.0
  %1101 = vmatprep.subr.mxu0 0.0
  %1102 = vmatpush1.msra.mxu0 0.0
  %1103 = vmatprep.subr.mxu0 0.0
  %1104 = vmatpush1.msra.mxu0 0.0
  %1105 = vmatprep.subr.mxu0 0.0
  %1106 = vmatpush1.msra.mxu0 0.0
  %1107 = vmatprep.subr.mxu0 0.0
  %1108 = vmatpush1.msra.mxu0 0.0
  %1109 = vmatprep.subr.mxu0 0.0
  %1110 = vmatpush1.msra.mxu0 0.0
  %1111 = vmatprep.subr.mxu0 0.0
  %1112 = vmatpush1.msra.mxu0 0.0
  %1113 = vmatprep.subr.mxu0 0.0
  %1114 = vmatpush1.msra.mxu0 0.0
  %1115 = vmatprep.subr.mxu0 0.0
  %1116 = vmatpush1.msra.mxu0 0.0
  %1117 = vmatprep.subr.mxu0 0.0
  %1118 = vmatpush1.msra.mxu0 0.0
  %1119 = vmatprep.subr.mxu0 0.0
  %1120 = vmatpush1.msra.mxu0 0.0
  %1121 = vmatprep.subr.mxu0 0.0
  %1122 = vmatpush1.msra.mxu0 0.0
  %1123 = vmatprep.subr.mxu0 0.0
  %1124 = vmatpush1.msra.mxu0 0.0
  %1125 = vmatprep.subr.mxu0 0.0
  %1126 = vmatpush1.msra.mxu0 0.0
  %1127 = vmatprep.subr.mxu0 0.0
  %1128 = vmatpush1.msra.mxu0 0.0
  %1129 = vmatprep.subr.mxu0 0.0
  %1130 = vmatpush1.msra.mxu0 0.0
  %1131 = vmatprep.subr.mxu0 0.0
  %1132 = vmatpush1.msra.mxu0 0.0
  %1133 = vmatprep.subr.mxu0 0.0
  %1134 = vmatpush1.msra.mxu0 0.0
  %1135 = vmatprep.subr.mxu0 0.0
  %1136 = vmatpush1.msra.mxu0 0.0
  %1137 = vmatprep.subr.mxu0 0.0
  %1138 = vmatpush1.msra.mxu0 0.0
  %1139 = vmatprep.subr.mxu0 0.0
  %1140 = vmatpush1.msra.mxu0 0.0
  %1141 = vmatprep.mubr.f32.mxu0 0.0
  %1142 = vmatmul.mubr.f32.gmra.mrb[0].mxu0 %v1004
  %v1143 = vpop.f32.mrb[0].mxu0
  %v1144 = vadd.f32 0.0, %v1143
  %v1145 = vpop.f32.mrb[0].mxu0
  %v1146 = vadd.f32 0.0, %v1145
  %1147 = vdwg.mxu0
  %v1148 = vadd.f32 %v895, %v1073
  %v1149 = vadd.f32 %v897, %v1075
  %v1150 = vadd.f32 %v966, %v1144
  %v1151 = vadd.f32 %v968, %v1146
  %s1152 = scalar_lea.vmem %s3, 768
  %v1153 = vld [vmem:[%s1152] sm:$0xff]
  %v1154 = vld [vmem:[%s1152 + $0x8] sm:$0xff]
  %v1155 = vld [vmem:[%s1152 + $0x10] sm:$0xff]
  %v1156 = vld [vmem:[%s1152 + $0x18] sm:$0xff]
  %v1157 = vld [vmem:[%s1152 + $0x20] sm:$0xff]
  %v1158 = vld [vmem:[%s1152 + $0x28] sm:$0xff]
  %v1159 = vld [vmem:[%s1152 + $0x30] sm:$0xff]
  %v1160 = vld [vmem:[%s1152 + $0x38] sm:$0xff]
  %v1161 = vld [vmem:[%s1152 + $0x40] sm:$0xff]
  %v1162 = vld [vmem:[%s1152 + $0x48] sm:$0xff]
  %v1163 = vld [vmem:[%s1152 + $0x50] sm:$0xff]
  %v1164 = vld [vmem:[%s1152 + $0x58] sm:$0xff]
  %v1165 = vld [vmem:[%s1152 + $0x60] sm:$0xff]
  %v1166 = vld [vmem:[%s1152 + $0x68] sm:$0xff]
  %v1167 = vld [vmem:[%s1152 + $0x70] sm:$0xff]
  %v1168 = vld [vmem:[%s1152 + $0x78] sm:$0xff]
  %v1169 = vld [vmem:[%s1152 + $0x80] sm:$0xff]
  %v1170 = vld [vmem:[%s1152 + $0x88] sm:$0xff]
  %v1171 = vld [vmem:[%s1152 + $0x90] sm:$0xff]
  %v1172 = vld [vmem:[%s1152 + $0x98] sm:$0xff]
  %v1173 = vld [vmem:[%s1152 + $0xa0] sm:$0xff]
  %v1174 = vld [vmem:[%s1152 + $0xa8] sm:$0xff]
  %v1175 = vld [vmem:[%s1152 + $0xb0] sm:$0xff]
  %v1176 = vld [vmem:[%s1152 + $0xb8] sm:$0xff]
  %v1177 = vld [vmem:[%s1152 + $0xc0] sm:$0xff]
  %v1178 = vld [vmem:[%s1152 + $0xc8] sm:$0xff]
  %v1179 = vld [vmem:[%s1152 + $0xd0] sm:$0xff]
  %v1180 = vld [vmem:[%s1152 + $0xd8] sm:$0xff]
  %v1181 = vld [vmem:[%s1152 + $0xe0] sm:$0xff]
  %v1182 = vld [vmem:[%s1152 + $0xe8] sm:$0xff]
  %v1183 = vld [vmem:[%s1152 + $0xf0] sm:$0xff]
  %v1184 = vld [vmem:[%s1152 + $0xf8] sm:$0xff]
  %v1185 = vrot.slane %v602, 6
  %v1186 = vsel %vm172, %v1185, 0
  %1188 = vmatprep.subr.mxu0 %v1154
  %1189 = vmatpush1.msra.mxu0 %v1153
  %1190 = vmatprep.subr.mxu0 %v1158
  %1191 = vmatpush1.msra.mxu0 %v1157
  %1192 = vmatprep.subr.mxu0 %v1162
  %1193 = vmatpush1.msra.mxu0 %v1161
  %1194 = vmatprep.subr.mxu0 %v1166
  %1195 = vmatpush1.msra.mxu0 %v1165
  %1196 = vmatprep.subr.mxu0 %v1170
  %1197 = vmatpush1.msra.mxu0 %v1169
  %1198 = vmatprep.subr.mxu0 %v1174
  %1199 = vmatpush1.msra.mxu0 %v1173
  %1200 = vmatprep.subr.mxu0 %v1178
  %1201 = vmatpush1.msra.mxu0 %v1177
  %1202 = vmatprep.subr.mxu0 %v1182
  %1203 = vmatpush1.msra.mxu0 %v1181
  %1204 = vmatprep.subr.mxu0 0.0
  %1205 = vmatpush1.msra.mxu0 0.0
  %1206 = vmatprep.subr.mxu0 0.0
  %1207 = vmatpush1.msra.mxu0 0.0
  %1208 = vmatprep.subr.mxu0 0.0
  %1209 = vmatpush1.msra.mxu0 0.0
  %1210 = vmatprep.subr.mxu0 0.0
  %1211 = vmatpush1.msra.mxu0 0.0
  %1212 = vmatprep.subr.mxu0 0.0
  %1213 = vmatpush1.msra.mxu0 0.0
  %1214 = vmatprep.subr.mxu0 0.0
  %1215 = vmatpush1.msra.mxu0 0.0
  %1216 = vmatprep.subr.mxu0 0.0
  %1217 = vmatpush1.msra.mxu0 0.0
  %1218 = vmatprep.subr.mxu0 0.0
  %1219 = vmatpush1.msra.mxu0 0.0
  %1220 = vmatprep.subr.mxu0 0.0
  %1221 = vmatpush1.msra.mxu0 0.0
  %1222 = vmatprep.subr.mxu0 0.0
  %1223 = vmatpush1.msra.mxu0 0.0
  %1224 = vmatprep.subr.mxu0 0.0
  %1225 = vmatpush1.msra.mxu0 0.0
  %1226 = vmatprep.subr.mxu0 0.0
  %1227 = vmatpush1.msra.mxu0 0.0
  %1228 = vmatprep.subr.mxu0 0.0
  %1229 = vmatpush1.msra.mxu0 0.0
  %1230 = vmatprep.subr.mxu0 0.0
  %1231 = vmatpush1.msra.mxu0 0.0
  %1232 = vmatprep.subr.mxu0 0.0
  %1233 = vmatpush1.msra.mxu0 0.0
  %1234 = vmatprep.subr.mxu0 0.0
  %1235 = vmatpush1.msra.mxu0 0.0
  %1236 = vmatprep.subr.mxu0 0.0
  %1237 = vmatpush1.msra.mxu0 0.0
  %1238 = vmatprep.subr.mxu0 0.0
  %1239 = vmatpush1.msra.mxu0 0.0
  %1240 = vmatprep.subr.mxu0 0.0
  %1241 = vmatpush1.msra.mxu0 0.0
  %1242 = vmatprep.subr.mxu0 0.0
  %1243 = vmatpush1.msra.mxu0 0.0
  %1244 = vmatprep.subr.mxu0 0.0
  %1245 = vmatpush1.msra.mxu0 0.0
  %1246 = vmatprep.subr.mxu0 0.0
  %1247 = vmatpush1.msra.mxu0 0.0
  %1248 = vmatprep.subr.mxu0 0.0
  %1249 = vmatpush1.msra.mxu0 0.0
  %1250 = vmatprep.subr.mxu0 0.0
  %1251 = vmatpush1.msra.mxu0 0.0
  %1252 = vmatprep.mubr.f32.mxu0 0.0
  %1253 = vmatmul.mubr.f32.gmra.mrb[0].mxu0 %v1186
  %v1254 = vpop.f32.mrb[0].mxu0
  %v1255 = vadd.f32 0.0, %v1254
  %v1256 = vpop.f32.mrb[0].mxu0
  %v1257 = vadd.f32 0.0, %v1256
  %1258 = vdwg.mxu0
  %1259 = vmatprep.subr.mxu0 %v1156
  %1260 = vmatpush1.msra.mxu0 %v1155
  %1261 = vmatprep.subr.mxu0 %v1160
  %1262 = vmatpush1.msra.mxu0 %v1159
  %1263 = vmatprep.subr.mxu0 %v1164
  %1264 = vmatpush1.msra.mxu0 %v1163
  %1265 = vmatprep.subr.mxu0 %v1168
  %1266 = vmatpush1.msra.mxu0 %v1167
  %1267 = vmatprep.subr.mxu0 %v1172
  %1268 = vmatpush1.msra.mxu0 %v1171
  %1269 = vmatprep.subr.mxu0 %v1176
  %1270 = vmatpush1.msra.mxu0 %v1175
  %1271 = vmatprep.subr.mxu0 %v1180
  %1272 = vmatpush1.msra.mxu0 %v1179
  %1273 = vmatprep.subr.mxu0 %v1184
  %1274 = vmatpush1.msra.mxu0 %v1183
  %1275 = vmatprep.subr.mxu0 0.0
  %1276 = vmatpush1.msra.mxu0 0.0
  %1277 = vmatprep.subr.mxu0 0.0
  %1278 = vmatpush1.msra.mxu0 0.0
  %1279 = vmatprep.subr.mxu0 0.0
  %1280 = vmatpush1.msra.mxu0 0.0
  %1281 = vmatprep.subr.mxu0 0.0
  %1282 = vmatpush1.msra.mxu0 0.0
  %1283 = vmatprep.subr.mxu0 0.0
  %1284 = vmatpush1.msra.mxu0 0.0
  %1285 = vmatprep.subr.mxu0 0.0
  %1286 = vmatpush1.msra.mxu0 0.0
  %1287 = vmatprep.subr.mxu0 0.0
  %1288 = vmatpush1.msra.mxu0 0.0
  %1289 = vmatprep.subr.mxu0 0.0
  %1290 = vmatpush1.msra.mxu0 0.0
  %1291 = vmatprep.subr.mxu0 0.0
  %1292 = vmatpush1.msra.mxu0 0.0
  %1293 = vmatprep.subr.mxu0 0.0
  %1294 = vmatpush1.msra.mxu0 0.0
  %1295 = vmatprep.subr.mxu0 0.0
  %1296 = vmatpush1.msra.mxu0 0.0
  %1297 = vmatprep.subr.mxu0 0.0
  %1298 = vmatpush1.msra.mxu0 0.0
  %1299 = vmatprep.subr.mxu0 0.0
  %1300 = vmatpush1.msra.mxu0 0.0
  %1301 = vmatprep.subr.mxu0 0.0
  %1302 = vmatpush1.msra.mxu0 0.0
  %1303 = vmatprep.subr.mxu0 0.0
  %1304 = vmatpush1.msra.mxu0 0.0
  %1305 = vmatprep.subr.mxu0 0.0
  %1306 = vmatpush1.msra.mxu0 0.0
  %1307 = vmatprep.subr.mxu0 0.0
  %1308 = vmatpush1.msra.mxu0 0.0
  %1309 = vmatprep.subr.mxu0 0.0
  %1310 = vmatpush1.msra.mxu0 0.0
  %1311 = vmatprep.subr.mxu0 0.0
  %1312 = vmatpush1.msra.mxu0 0.0
  %1313 = vmatprep.subr.mxu0 0.0
  %1314 = vmatpush1.msra.mxu0 0.0
  %1315 = vmatprep.subr.mxu0 0.0
  %1316 = vmatpush1.msra.mxu0 0.0
  %1317 = vmatprep.subr.mxu0 0.0
  %1318 = vmatpush1.msra.mxu0 0.0
  %1319 = vmatprep.subr.mxu0 0.0
  %1320 = vmatpush1.msra.mxu0 0.0
  %1321 = vmatprep.subr.mxu0 0.0
  %1322 = vmatpush1.msra.mxu0 0.0
  %1323 = vmatprep.mubr.f32.mxu0 0.0
  %1324 = vmatmul.mubr.f32.gmra.mrb[0].mxu0 %v1186
  %v1325 = vpop.f32.mrb[0].mxu0
  %v1326 = vadd.f32 0.0, %v1325
  %v1327 = vpop.f32.mrb[0].mxu0
  %v1328 = vadd.f32 0.0, %v1327
  %1329 = vdwg.mxu0
  %v1330 = vadd.f32 %v1148, %v1255
  %v1331 = vadd.f32 %v1149, %v1257
  %v1332 = vadd.f32 %v1150, %v1326
  %v1333 = vadd.f32 %v1151, %v1328
  %s1334 = scalar_lea.vmem %s3, 1024
  %v1335 = vld [vmem:[%s1334] sm:$0xff]
  %v1336 = vld [vmem:[%s1334 + $0x8] sm:$0xff]
  %v1337 = vld [vmem:[%s1334 + $0x10] sm:$0xff]
  %v1338 = vld [vmem:[%s1334 + $0x18] sm:$0xff]
  %v1339 = vld [vmem:[%s1334 + $0x20] sm:$0xff]
  %v1340 = vld [vmem:[%s1334 + $0x28] sm:$0xff]
  %v1341 = vld [vmem:[%s1334 + $0x30] sm:$0xff]
  %v1342 = vld [vmem:[%s1334 + $0x38] sm:$0xff]
  %v1343 = vld [vmem:[%s1334 + $0x40] sm:$0xff]
  %v1344 = vld [vmem:[%s1334 + $0x48] sm:$0xff]
  %v1345 = vld [vmem:[%s1334 + $0x50] sm:$0xff]
  %v1346 = vld [vmem:[%s1334 + $0x58] sm:$0xff]
  %v1347 = vld [vmem:[%s1334 + $0x60] sm:$0xff]
  %v1348 = vld [vmem:[%s1334 + $0x68] sm:$0xff]
  %v1349 = vld [vmem:[%s1334 + $0x70] sm:$0xff]
  %v1350 = vld [vmem:[%s1334 + $0x78] sm:$0xff]
  %v1351 = vld [vmem:[%s1334 + $0x80] sm:$0xff]
  %v1352 = vld [vmem:[%s1334 + $0x88] sm:$0xff]
  %v1353 = vld [vmem:[%s1334 + $0x90] sm:$0xff]
  %v1354 = vld [vmem:[%s1334 + $0x98] sm:$0xff]
  %v1355 = vld [vmem:[%s1334 + $0xa0] sm:$0xff]
  %v1356 = vld [vmem:[%s1334 + $0xa8] sm:$0xff]
  %v1357 = vld [vmem:[%s1334 + $0xb0] sm:$0xff]
  %v1358 = vld [vmem:[%s1334 + $0xb8] sm:$0xff]
  %v1359 = vld [vmem:[%s1334 + $0xc0] sm:$0xff]
  %v1360 = vld [vmem:[%s1334 + $0xc8] sm:$0xff]
  %v1361 = vld [vmem:[%s1334 + $0xd0] sm:$0xff]
  %v1362 = vld [vmem:[%s1334 + $0xd8] sm:$0xff]
  %v1363 = vld [vmem:[%s1334 + $0xe0] sm:$0xff]
  %v1364 = vld [vmem:[%s1334 + $0xe8] sm:$0xff]
  %v1365 = vld [vmem:[%s1334 + $0xf0] sm:$0xff]
  %v1366 = vld [vmem:[%s1334 + $0xf8] sm:$0xff]
  %v1368 = vsel %vm172, %v603, 0
  %1370 = vmatprep.subr.mxu0 %v1336
  %1371 = vmatpush1.msra.mxu0 %v1335
  %1372 = vmatprep.subr.mxu0 %v1340
  %1373 = vmatpush1.msra.mxu0 %v1339
  %1374 = vmatprep.subr.mxu0 %v1344
  %1375 = vmatpush1.msra.mxu0 %v1343
  %1376 = vmatprep.subr.mxu0 %v1348
  %1377 = vmatpush1.msra.mxu0 %v1347
  %1378 = vmatprep.subr.mxu0 %v1352
  %1379 = vmatpush1.msra.mxu0 %v1351
  %1380 = vmatprep.subr.mxu0 %v1356
  %1381 = vmatpush1.msra.mxu0 %v1355
  %1382 = vmatprep.subr.mxu0 %v1360
  %1383 = vmatpush1.msra.mxu0 %v1359
  %1384 = vmatprep.subr.mxu0 %v1364
  %1385 = vmatpush1.msra.mxu0 %v1363
  %1386 = vmatprep.subr.mxu0 0.0
  %1387 = vmatpush1.msra.mxu0 0.0
  %1388 = vmatprep.subr.mxu0 0.0
  %1389 = vmatpush1.msra.mxu0 0.0
  %1390 = vmatprep.subr.mxu0 0.0
  %1391 = vmatpush1.msra.mxu0 0.0
  %1392 = vmatprep.subr.mxu0 0.0
  %1393 = vmatpush1.msra.mxu0 0.0
  %1394 = vmatprep.subr.mxu0 0.0
  %1395 = vmatpush1.msra.mxu0 0.0
  %1396 = vmatprep.subr.mxu0 0.0
  %1397 = vmatpush1.msra.mxu0 0.0
  %1398 = vmatprep.subr.mxu0 0.0
  %1399 = vmatpush1.msra.mxu0 0.0
  %1400 = vmatprep.subr.mxu0 0.0
  %1401 = vmatpush1.msra.mxu0 0.0
  %1402 = vmatprep.subr.mxu0 0.0
  %1403 = vmatpush1.msra.mxu0 0.0
  %1404 = vmatprep.subr.mxu0 0.0
  %1405 = vmatpush1.msra.mxu0 0.0
  %1406 = vmatprep.subr.mxu0 0.0
  %1407 = vmatpush1.msra.mxu0 0.0
  %1408 = vmatprep.subr.mxu0 0.0
  %1409 = vmatpush1.msra.mxu0 0.0
  %1410 = vmatprep.subr.mxu0 0.0
  %1411 = vmatpush1.msra.mxu0 0.0
  %1412 = vmatprep.subr.mxu0 0.0
  %1413 = vmatpush1.msra.mxu0 0.0
  %1414 = vmatprep.subr.mxu0 0.0
  %1415 = vmatpush1.msra.mxu0 0.0
  %1416 = vmatprep.subr.mxu0 0.0
  %1417 = vmatpush1.msra.mxu0 0.0
  %1418 = vmatprep.subr.mxu0 0.0
  %1419 = vmatpush1.msra.mxu0 0.0
  %1420 = vmatprep.subr.mxu0 0.0
  %1421 = vmatpush1.msra.mxu0 0.0
  %1422 = vmatprep.subr.mxu0 0.0
  %1423 = vmatpush1.msra.mxu0 0.0
  %1424 = vmatprep.subr.mxu0 0.0
  %1425 = vmatpush1.msra.mxu0 0.0
  %1426 = vmatprep.subr.mxu0 0.0
  %1427 = vmatpush1.msra.mxu0 0.0
  %1428 = vmatprep.subr.mxu0 0.0
  %1429 = vmatpush1.msra.mxu0 0.0
  %1430 = vmatprep.subr.mxu0 0.0
  %1431 = vmatpush1.msra.mxu0 0.0
  %1432 = vmatprep.subr.mxu0 0.0
  %1433 = vmatpush1.msra.mxu0 0.0
  %1434 = vmatprep.mubr.f32.mxu0 0.0
  %1435 = vmatmul.mubr.f32.gmra.mrb[0].mxu0 %v1368
  %v1436 = vpop.f32.mrb[0].mxu0
  %v1437 = vadd.f32 0.0, %v1436
  %v1438 = vpop.f32.mrb[0].mxu0
  %v1439 = vadd.f32 0.0, %v1438
  %1440 = vdwg.mxu0
  %1441 = vmatprep.subr.mxu0 %v1338
  %1442 = vmatpush1.msra.mxu0 %v1337
  %1443 = vmatprep.subr.mxu0 %v1342
  %1444 = vmatpush1.msra.mxu0 %v1341
  %1445 = vmatprep.subr.mxu0 %v1346
  %1446 = vmatpush1.msra.mxu0 %v1345
  %1447 = vmatprep.subr.mxu0 %v1350
  %1448 = vmatpush1.msra.mxu0 %v1349
  %1449 = vmatprep.subr.mxu0 %v1354
  %1450 = vmatpush1.msra.mxu0 %v1353
  %1451 = vmatprep.subr.mxu0 %v1358
  %1452 = vmatpush1.msra.mxu0 %v1357
  %1453 = vmatprep.subr.mxu0 %v1362
  %1454 = vmatpush1.msra.mxu0 %v1361
  %1455 = vmatprep.subr.mxu0 %v1366
  %1456 = vmatpush1.msra.mxu0 %v1365
  %1457 = vmatprep.subr.mxu0 0.0
  %1458 = vmatpush1.msra.mxu0 0.0
  %1459 = vmatprep.subr.mxu0 0.0
  %1460 = vmatpush1.msra.mxu0 0.0
  %1461 = vmatprep.subr.mxu0 0.0
  %1462 = vmatpush1.msra.mxu0 0.0
  %1463 = vmatprep.subr.mxu0 0.0
  %1464 = vmatpush1.msra.mxu0 0.0
  %1465 = vmatprep.subr.mxu0 0.0
  %1466 = vmatpush1.msra.mxu0 0.0
  %1467 = vmatprep.subr.mxu0 0.0
  %1468 = vmatpush1.msra.mxu0 0.0
  %1469 = vmatprep.subr.mxu0 0.0
  %1470 = vmatpush1.msra.mxu0 0.0
  %1471 = vmatprep.subr.mxu0 0.0
  %1472 = vmatpush1.msra.mxu0 0.0
  %1473 = vmatprep.subr.mxu0 0.0
  %1474 = vmatpush1.msra.mxu0 0.0
  %1475 = vmatprep.subr.mxu0 0.0
  %1476 = vmatpush1.msra.mxu0 0.0
  %1477 = vmatprep.subr.mxu0 0.0
  %1478 = vmatpush1.msra.mxu0 0.0
  %1479 = vmatprep.subr.mxu0 0.0
  %1480 = vmatpush1.msra.mxu0 0.0
  %1481 = vmatprep.subr.mxu0 0.0
  %1482 = vmatpush1.msra.mxu0 0.0
  %1483 = vmatprep.subr.mxu0 0.0
  %1484 = vmatpush1.msra.mxu0 0.0
  %1485 = vmatprep.subr.mxu0 0.0
  %1486 = vmatpush1.msra.mxu0 0.0
  %1487 = vmatprep.subr.mxu0 0.0
  %1488 = vmatpush1.msra.mxu0 0.0
  %1489 = vmatprep.subr.mxu0 0.0
  %1490 = vmatpush1.msra.mxu0 0.0
  %1491 = vmatprep.subr.mxu0 0.0
  %1492 = vmatpush1.msra.mxu0 0.0
  %1493 = vmatprep.subr.mxu0 0.0
  %1494 = vmatpush1.msra.mxu0 0.0
  %1495 = vmatprep.subr.mxu0 0.0
  %1496 = vmatpush1.msra.mxu0 0.0
  %1497 = vmatprep.subr.mxu0 0.0
  %1498 = vmatpush1.msra.mxu0 0.0
  %1499 = vmatprep.subr.mxu0 0.0
  %1500 = vmatpush1.msra.mxu0 0.0
  %1501 = vmatprep.subr.mxu0 0.0
  %1502 = vmatpush1.msra.mxu0 0.0
  %1503 = vmatprep.subr.mxu0 0.0
  %1504 = vmatpush1.msra.mxu0 0.0
  %1505 = vmatprep.mubr.f32.mxu0 0.0
  %1506 = vmatmul.mubr.f32.gmra.mrb[0].mxu0 %v1368
  %v1507 = vpop.f32.mrb[0].mxu0
  %v1508 = vadd.f32 0.0, %v1507
  %v1509 = vpop.f32.mrb[0].mxu0
  %v1510 = vadd.f32 0.0, %v1509
  %1511 = vdwg.mxu0
  %v1512 = vadd.f32 %v1330, %v1437
  %v1513 = vadd.f32 %v1331, %v1439
  %v1514 = vadd.f32 %v1332, %v1508
  %v1515 = vadd.f32 %v1333, %v1510
  %s1516 = scalar_lea.vmem %s3, 1280
  %v1517 = vld [vmem:[%s1516] sm:$0xff]
  %v1518 = vld [vmem:[%s1516 + $0x8] sm:$0xff]
  %v1519 = vld [vmem:[%s1516 + $0x10] sm:$0xff]
  %v1520 = vld [vmem:[%s1516 + $0x18] sm:$0xff]
  %v1521 = vld [vmem:[%s1516 + $0x20] sm:$0xff]
  %v1522 = vld [vmem:[%s1516 + $0x28] sm:$0xff]
  %v1523 = vld [vmem:[%s1516 + $0x30] sm:$0xff]
  %v1524 = vld [vmem:[%s1516 + $0x38] sm:$0xff]
  %v1525 = vld [vmem:[%s1516 + $0x40] sm:$0xff]
  %v1526 = vld [vmem:[%s1516 + $0x48] sm:$0xff]
  %v1527 = vld [vmem:[%s1516 + $0x50] sm:$0xff]
  %v1528 = vld [vmem:[%s1516 + $0x58] sm:$0xff]
  %v1529 = vld [vmem:[%s1516 + $0x60] sm:$0xff]
  %v1530 = vld [vmem:[%s1516 + $0x68] sm:$0xff]
  %v1531 = vld [vmem:[%s1516 + $0x70] sm:$0xff]
  %v1532 = vld [vmem:[%s1516 + $0x78] sm:$0xff]
  %v1533 = vld [vmem:[%s1516 + $0x80] sm:$0xff]
  %v1534 = vld [vmem:[%s1516 + $0x88] sm:$0xff]
  %v1535 = vld [vmem:[%s1516 + $0x90] sm:$0xff]
  %v1536 = vld [vmem:[%s1516 + $0x98] sm:$0xff]
  %v1537 = vld [vmem:[%s1516 + $0xa0] sm:$0xff]
  %v1538 = vld [vmem:[%s1516 + $0xa8] sm:$0xff]
  %v1539 = vld [vmem:[%s1516 + $0xb0] sm:$0xff]
  %v1540 = vld [vmem:[%s1516 + $0xb8] sm:$0xff]
  %v1541 = vld [vmem:[%s1516 + $0xc0] sm:$0xff]
  %v1542 = vld [vmem:[%s1516 + $0xc8] sm:$0xff]
  %v1543 = vld [vmem:[%s1516 + $0xd0] sm:$0xff]
  %v1544 = vld [vmem:[%s1516 + $0xd8] sm:$0xff]
  %v1545 = vld [vmem:[%s1516 + $0xe0] sm:$0xff]
  %v1546 = vld [vmem:[%s1516 + $0xe8] sm:$0xff]
  %v1547 = vld [vmem:[%s1516 + $0xf0] sm:$0xff]
  %v1548 = vld [vmem:[%s1516 + $0xf8] sm:$0xff]
  %v1549 = vrot.slane %v603, 2
  %v1550 = vsel %vm172, %v1549, 0
  %1552 = vmatprep.subr.mxu0 %v1518
  %1553 = vmatpush1.msra.mxu0 %v1517
  %1554 = vmatprep.subr.mxu0 %v1522
  %1555 = vmatpush1.msra.mxu0 %v1521
  %1556 = vmatprep.subr.mxu0 %v1526
  %1557 = vmatpush1.msra.mxu0 %v1525
  %1558 = vmatprep.subr.mxu0 %v1530
  %1559 = vmatpush1.msra.mxu0 %v1529
  %1560 = vmatprep.subr.mxu0 %v1534
  %1561 = vmatpush1.msra.mxu0 %v1533
  %1562 = vmatprep.subr.mxu0 %v1538
  %1563 = vmatpush1.msra.mxu0 %v1537
  %1564 = vmatprep.subr.mxu0 %v1542
  %1565 = vmatpush1.msra.mxu0 %v1541
  %1566 = vmatprep.subr.mxu0 %v1546
  %1567 = vmatpush1.msra.mxu0 %v1545
  %1568 = vmatprep.subr.mxu0 0.0
  %1569 = vmatpush1.msra.mxu0 0.0
  %1570 = vmatprep.subr.mxu0 0.0
  %1571 = vmatpush1.msra.mxu0 0.0
  %1572 = vmatprep.subr.mxu0 0.0
  %1573 = vmatpush1.msra.mxu0 0.0
  %1574 = vmatprep.subr.mxu0 0.0
  %1575 = vmatpush1.msra.mxu0 0.0
  %1576 = vmatprep.subr.mxu0 0.0
  %1577 = vmatpush1.msra.mxu0 0.0
  %1578 = vmatprep.subr.mxu0 0.0
  %1579 = vmatpush1.msra.mxu0 0.0
  %1580 = vmatprep.subr.mxu0 0.0
  %1581 = vmatpush1.msra.mxu0 0.0
  %1582 = vmatprep.subr.mxu0 0.0
  %1583 = vmatpush1.msra.mxu0 0.0
  %1584 = vmatprep.subr.mxu0 0.0
  %1585 = vmatpush1.msra.mxu0 0.0
  %1586 = vmatprep.subr.mxu0 0.0
  %1587 = vmatpush1.msra.mxu0 0.0
  %1588 = vmatprep.subr.mxu0 0.0
  %1589 = vmatpush1.msra.mxu0 0.0
  %1590 = vmatprep.subr.mxu0 0.0
  %1591 = vmatpush1.msra.mxu0 0.0
  %1592 = vmatprep.subr.mxu0 0.0
  %1593 = vmatpush1.msra.mxu0 0.0
  %1594 = vmatprep.subr.mxu0 0.0
  %1595 = vmatpush1.msra.mxu0 0.0
  %1596 = vmatprep.subr.mxu0 0.0
  %1597 = vmatpush1.msra.mxu0 0.0
  %1598 = vmatprep.subr.mxu0 0.0
  %1599 = vmatpush1.msra.mxu0 0.0
  %1600 = vmatprep.subr.mxu0 0.0
  %1601 = vmatpush1.msra.mxu0 0.0
  %1602 = vmatprep.subr.mxu0 0.0
  %1603 = vmatpush1.msra.mxu0 0.0
  %1604 = vmatprep.subr.mxu0 0.0
  %1605 = vmatpush1.msra.mxu0 0.0
  %1606 = vmatprep.subr.mxu0 0.0
  %1607 = vmatpush1.msra.mxu0 0.0
  %1608 = vmatprep.subr.mxu0 0.0
  %1609 = vmatpush1.msra.mxu0 0.0
  %1610 = vmatprep.subr.mxu0 0.0
  %1611 = vmatpush1.msra.mxu0 0.0
  %1612 = vmatprep.subr.mxu0 0.0
  %1613 = vmatpush1.msra.mxu0 0.0
  %1614 = vmatprep.subr.mxu0 0.0
  %1615 = vmatpush1.msra.mxu0 0.0
  %1616 = vmatprep.mubr.f32.mxu0 0.0
  %1617 = vmatmul.mubr.f32.gmra.mrb[0].mxu0 %v1550
  %v1618 = vpop.f32.mrb[0].mxu0
  %v1619 = vadd.f32 0.0, %v1618
  %v1620 = vpop.f32.mrb[0].mxu0
  %v1621 = vadd.f32 0.0, %v1620
  %1622 = vdwg.mxu0
  %1623 = vmatprep.subr.mxu0 %v1520
  %1624 = vmatpush1.msra.mxu0 %v1519
  %1625 = vmatprep.subr.mxu0 %v1524
  %1626 = vmatpush1.msra.mxu0 %v1523
  %1627 = vmatprep.subr.mxu0 %v1528
  %1628 = vmatpush1.msra.mxu0 %v1527
  %1629 = vmatprep.subr.mxu0 %v1532
  %1630 = vmatpush1.msra.mxu0 %v1531
  %1631 = vmatprep.subr.mxu0 %v1536
  %1632 = vmatpush1.msra.mxu0 %v1535
  %1633 = vmatprep.subr.mxu0 %v1540
  %1634 = vmatpush1.msra.mxu0 %v1539
  %1635 = vmatprep.subr.mxu0 %v1544
  %1636 = vmatpush1.msra.mxu0 %v1543
  %1637 = vmatprep.subr.mxu0 %v1548
  %1638 = vmatpush1.msra.mxu0 %v1547
  %1639 = vmatprep.subr.mxu0 0.0
  %1640 = vmatpush1.msra.mxu0 0.0
  %1641 = vmatprep.subr.mxu0 0.0
  %1642 = vmatpush1.msra.mxu0 0.0
  %1643 = vmatprep.subr.mxu0 0.0
  %1644 = vmatpush1.msra.mxu0 0.0
  %1645 = vmatprep.subr.mxu0 0.0
  %1646 = vmatpush1.msra.mxu0 0.0
  %1647 = vmatprep.subr.mxu0 0.0
  %1648 = vmatpush1.msra.mxu0 0.0
  %1649 = vmatprep.subr.mxu0 0.0
  %1650 = vmatpush1.msra.mxu0 0.0
  %1651 = vmatprep.subr.mxu0 0.0
  %1652 = vmatpush1.msra.mxu0 0.0
  %1653 = vmatprep.subr.mxu0 0.0
  %1654 = vmatpush1.msra.mxu0 0.0
  %1655 = vmatprep.subr.mxu0 0.0
  %1656 = vmatpush1.msra.mxu0 0.0
  %1657 = vmatprep.subr.mxu0 0.0
  %1658 = vmatpush1.msra.mxu0 0.0
  %1659 = vmatprep.subr.mxu0 0.0
  %1660 = vmatpush1.msra.mxu0 0.0
  %1661 = vmatprep.subr.mxu0 0.0
  %1662 = vmatpush1.msra.mxu0 0.0
  %1663 = vmatprep.subr.mxu0 0.0
  %1664 = vmatpush1.msra.mxu0 0.0
  %1665 = vmatprep.subr.mxu0 0.0
  %1666 = vmatpush1.msra.mxu0 0.0
  %1667 = vmatprep.subr.mxu0 0.0
  %1668 = vmatpush1.msra.mxu0 0.0
  %1669 = vmatprep.subr.mxu0 0.0
  %1670 = vmatpush1.msra.mxu0 0.0
  %1671 = vmatprep.subr.mxu0 0.0
  %1672 = vmatpush1.msra.mxu0 0.0
  %1673 = vmatprep.subr.mxu0 0.0
  %1674 = vmatpush1.msra.mxu0 0.0
  %1675 = vmatprep.subr.mxu0 0.0
  %1676 = vmatpush1.msra.mxu0 0.0
  %1677 = vmatprep.subr.mxu0 0.0
  %1678 = vmatpush1.msra.mxu0 0.0
  %1679 = vmatprep.subr.mxu0 0.0
  %1680 = vmatpush1.msra.mxu0 0.0
  %1681 = vmatprep.subr.mxu0 0.0
  %1682 = vmatpush1.msra.mxu0 0.0
  %1683 = vmatprep.subr.mxu0 0.0
  %1684 = vmatpush1.msra.mxu0 0.0
  %1685 = vmatprep.subr.mxu0 0.0
  %1686 = vmatpush1.msra.mxu0 0.0
  %1687 = vmatprep.mubr.f32.mxu0 0.0
  %1688 = vmatmul.mubr.f32.gmra.mrb[0].mxu0 %v1550
  %v1689 = vpop.f32.mrb[0].mxu0
  %v1690 = vadd.f32 0.0, %v1689
  %v1691 = vpop.f32.mrb[0].mxu0
  %v1692 = vadd.f32 0.0, %v1691
  %1693 = vdwg.mxu0
  %v1694 = vadd.f32 %v1512, %v1619
  %v1695 = vadd.f32 %v1513, %v1621
  %v1696 = vadd.f32 %v1514, %v1690
  %v1697 = vadd.f32 %v1515, %v1692
  %s1698 = scalar_lea.vmem %s3, 1536
  %v1699 = vld [vmem:[%s1698] sm:$0xff]
  %v1700 = vld [vmem:[%s1698 + $0x8] sm:$0xff]
  %v1701 = vld [vmem:[%s1698 + $0x10] sm:$0xff]
  %v1702 = vld [vmem:[%s1698 + $0x18] sm:$0xff]
  %v1703 = vld [vmem:[%s1698 + $0x20] sm:$0xff]
  %v1704 = vld [vmem:[%s1698 + $0x28] sm:$0xff]
  %v1705 = vld [vmem:[%s1698 + $0x30] sm:$0xff]
  %v1706 = vld [vmem:[%s1698 + $0x38] sm:$0xff]
  %v1707 = vld [vmem:[%s1698 + $0x40] sm:$0xff]
  %v1708 = vld [vmem:[%s1698 + $0x48] sm:$0xff]
  %v1709 = vld [vmem:[%s1698 + $0x50] sm:$0xff]
  %v1710 = vld [vmem:[%s1698 + $0x58] sm:$0xff]
  %v1711 = vld [vmem:[%s1698 + $0x60] sm:$0xff]
  %v1712 = vld [vmem:[%s1698 + $0x68] sm:$0xff]
  %v1713 = vld [vmem:[%s1698 + $0x70] sm:$0xff]
  %v1714 = vld [vmem:[%s1698 + $0x78] sm:$0xff]
  %v1715 = vld [vmem:[%s1698 + $0x80] sm:$0xff]
  %v1716 = vld [vmem:[%s1698 + $0x88] sm:$0xff]
  %v1717 = vld [vmem:[%s1698 + $0x90] sm:$0xff]
  %v1718 = vld [vmem:[%s1698 + $0x98] sm:$0xff]
  %v1719 = vld [vmem:[%s1698 + $0xa0] sm:$0xff]
  %v1720 = vld [vmem:[%s1698 + $0xa8] sm:$0xff]
  %v1721 = vld [vmem:[%s1698 + $0xb0] sm:$0xff]
  %v1722 = vld [vmem:[%s1698 + $0xb8] sm:$0xff]
  %v1723 = vld [vmem:[%s1698 + $0xc0] sm:$0xff]
  %v1724 = vld [vmem:[%s1698 + $0xc8] sm:$0xff]
  %v1725 = vld [vmem:[%s1698 + $0xd0] sm:$0xff]
  %v1726 = vld [vmem:[%s1698 + $0xd8] sm:$0xff]
  %v1727 = vld [vmem:[%s1698 + $0xe0] sm:$0xff]
  %v1728 = vld [vmem:[%s1698 + $0xe8] sm:$0xff]
  %v1729 = vld [vmem:[%s1698 + $0xf0] sm:$0xff]
  %v1730 = vld [vmem:[%s1698 + $0xf8] sm:$0xff]
  %v1731 = vrot.slane %v603, 4
  %v1732 = vsel %vm172, %v1731, 0
  %1734 = vmatprep.subr.mxu0 %v1700
  %1735 = vmatpush1.msra.mxu0 %v1699
  %1736 = vmatprep.subr.mxu0 %v1704
  %1737 = vmatpush1.msra.mxu0 %v1703
  %1738 = vmatprep.subr.mxu0 %v1708
  %1739 = vmatpush1.msra.mxu0 %v1707
  %1740 = vmatprep.subr.mxu0 %v1712
  %1741 = vmatpush1.msra.mxu0 %v1711
  %1742 = vmatprep.subr.mxu0 %v1716
  %1743 = vmatpush1.msra.mxu0 %v1715
  %1744 = vmatprep.subr.mxu0 %v1720
  %1745 = vmatpush1.msra.mxu0 %v1719
  %1746 = vmatprep.subr.mxu0 %v1724
  %1747 = vmatpush1.msra.mxu0 %v1723
  %1748 = vmatprep.subr.mxu0 %v1728
  %1749 = vmatpush1.msra.mxu0 %v1727
  %1750 = vmatprep.subr.mxu0 0.0
  %1751 = vmatpush1.msra.mxu0 0.0
  %1752 = vmatprep.subr.mxu0 0.0
  %1753 = vmatpush1.msra.mxu0 0.0
  %1754 = vmatprep.subr.mxu0 0.0
  %1755 = vmatpush1.msra.mxu0 0.0
  %1756 = vmatprep.subr.mxu0 0.0
  %1757 = vmatpush1.msra.mxu0 0.0
  %1758 = vmatprep.subr.mxu0 0.0
  %1759 = vmatpush1.msra.mxu0 0.0
  %1760 = vmatprep.subr.mxu0 0.0
  %1761 = vmatpush1.msra.mxu0 0.0
  %1762 = vmatprep.subr.mxu0 0.0
  %1763 = vmatpush1.msra.mxu0 0.0
  %1764 = vmatprep.subr.mxu0 0.0
  %1765 = vmatpush1.msra.mxu0 0.0
  %1766 = vmatprep.subr.mxu0 0.0
  %1767 = vmatpush1.msra.mxu0 0.0
  %1768 = vmatprep.subr.mxu0 0.0
  %1769 = vmatpush1.msra.mxu0 0.0
  %1770 = vmatprep.subr.mxu0 0.0
  %1771 = vmatpush1.msra.mxu0 0.0
  %1772 = vmatprep.subr.mxu0 0.0
  %1773 = vmatpush1.msra.mxu0 0.0
  %1774 = vmatprep.subr.mxu0 0.0
  %1775 = vmatpush1.msra.mxu0 0.0
  %1776 = vmatprep.subr.mxu0 0.0
  %1777 = vmatpush1.msra.mxu0 0.0
  %1778 = vmatprep.subr.mxu0 0.0
  %1779 = vmatpush1.msra.mxu0 0.0
  %1780 = vmatprep.subr.mxu0 0.0
  %1781 = vmatpush1.msra.mxu0 0.0
  %1782 = vmatprep.subr.mxu0 0.0
  %1783 = vmatpush1.msra.mxu0 0.0
  %1784 = vmatprep.subr.mxu0 0.0
  %1785 = vmatpush1.msra.mxu0 0.0
  %1786 = vmatprep.subr.mxu0 0.0
  %1787 = vmatpush1.msra.mxu0 0.0
  %1788 = vmatprep.subr.mxu0 0.0
  %1789 = vmatpush1.msra.mxu0 0.0
  %1790 = vmatprep.subr.mxu0 0.0
  %1791 = vmatpush1.msra.mxu0 0.0
  %1792 = vmatprep.subr.mxu0 0.0
  %1793 = vmatpush1.msra.mxu0 0.0
  %1794 = vmatprep.subr.mxu0 0.0
  %1795 = vmatpush1.msra.mxu0 0.0
  %1796 = vmatprep.subr.mxu0 0.0
  %1797 = vmatpush1.msra.mxu0 0.0
  %1798 = vmatprep.mubr.f32.mxu0 0.0
  %1799 = vmatmul.mubr.f32.gmra.mrb[0].mxu0 %v1732
  %v1800 = vpop.f32.mrb[0].mxu0
  %v1801 = vadd.f32 0.0, %v1800
  %v1802 = vpop.f32.mrb[0].mxu0
  %v1803 = vadd.f32 0.0, %v1802
  %1804 = vdwg.mxu0
  %1805 = vmatprep.subr.mxu0 %v1702
  %1806 = vmatpush1.msra.mxu0 %v1701
  %1807 = vmatprep.subr.mxu0 %v1706
  %1808 = vmatpush1.msra.mxu0 %v1705
  %1809 = vmatprep.subr.mxu0 %v1710
  %1810 = vmatpush1.msra.mxu0 %v1709
  %1811 = vmatprep.subr.mxu0 %v1714
  %1812 = vmatpush1.msra.mxu0 %v1713
  %1813 = vmatprep.subr.mxu0 %v1718
  %1814 = vmatpush1.msra.mxu0 %v1717
  %1815 = vmatprep.subr.mxu0 %v1722
  %1816 = vmatpush1.msra.mxu0 %v1721
  %1817 = vmatprep.subr.mxu0 %v1726
  %1818 = vmatpush1.msra.mxu0 %v1725
  %1819 = vmatprep.subr.mxu0 %v1730
  %1820 = vmatpush1.msra.mxu0 %v1729
  %1821 = vmatprep.subr.mxu0 0.0
  %1822 = vmatpush1.msra.mxu0 0.0
  %1823 = vmatprep.subr.mxu0 0.0
  %1824 = vmatpush1.msra.mxu0 0.0
  %1825 = vmatprep.subr.mxu0 0.0
  %1826 = vmatpush1.msra.mxu0 0.0
  %1827 = vmatprep.subr.mxu0 0.0
  %1828 = vmatpush1.msra.mxu0 0.0
  %1829 = vmatprep.subr.mxu0 0.0
  %1830 = vmatpush1.msra.mxu0 0.0
  %1831 = vmatprep.subr.mxu0 0.0
  %1832 = vmatpush1.msra.mxu0 0.0
  %1833 = vmatprep.subr.mxu0 0.0
  %1834 = vmatpush1.msra.mxu0 0.0
  %1835 = vmatprep.subr.mxu0 0.0
  %1836 = vmatpush1.msra.mxu0 0.0
  %1837 = vmatprep.subr.mxu0 0.0
  %1838 = vmatpush1.msra.mxu0 0.0
  %1839 = vmatprep.subr.mxu0 0.0
  %1840 = vmatpush1.msra.mxu0 0.0
  %1841 = vmatprep.subr.mxu0 0.0
  %1842 = vmatpush1.msra.mxu0 0.0
  %1843 = vmatprep.subr.mxu0 0.0
  %1844 = vmatpush1.msra.mxu0 0.0
  %1845 = vmatprep.subr.mxu0 0.0
  %1846 = vmatpush1.msra.mxu0 0.0
  %1847 = vmatprep.subr.mxu0 0.0
  %1848 = vmatpush1.msra.mxu0 0.0
  %1849 = vmatprep.subr.mxu0 0.0
  %1850 = vmatpush1.msra.mxu0 0.0
  %1851 = vmatprep.subr.mxu0 0.0
  %1852 = vmatpush1.msra.mxu0 0.0
  %1853 = vmatprep.subr.mxu0 0.0
  %1854 = vmatpush1.msra.mxu0 0.0
  %1855 = vmatprep.subr.mxu0 0.0
  %1856 = vmatpush1.msra.mxu0 0.0
  %1857 = vmatprep.subr.mxu0 0.0
  %1858 = vmatpush1.msra.mxu0 0.0
  %1859 = vmatprep.subr.mxu0 0.0
  %1860 = vmatpush1.msra.mxu0 0.0
  %1861 = vmatprep.subr.mxu0 0.0
  %1862 = vmatpush1.msra.mxu0 0.0
  %1863 = vmatprep.subr.mxu0 0.0
  %1864 = vmatpush1.msra.mxu0 0.0
  %1865 = vmatprep.subr.mxu0 0.0
  %1866 = vmatpush1.msra.mxu0 0.0
  %1867 = vmatprep.subr.mxu0 0.0
  %1868 = vmatpush1.msra.mxu0 0.0
  %1869 = vmatprep.mubr.f32.mxu0 0.0
  %1870 = vmatmul.mubr.f32.gmra.mrb[0].mxu0 %v1732
  %v1871 = vpop.f32.mrb[0].mxu0
  %v1872 = vadd.f32 0.0, %v1871
  %v1873 = vpop.f32.mrb[0].mxu0
  %v1874 = vadd.f32 0.0, %v1873
  %1875 = vdwg.mxu0
  %v1876 = vadd.f32 %v1694, %v1801
  %v1877 = vadd.f32 %v1695, %v1803
  %v1878 = vadd.f32 %v1696, %v1872
  %v1879 = vadd.f32 %v1697, %v1874
  %s1880 = scalar_lea.vmem %s3, 1792
  %v1881 = vld [vmem:[%s1880] sm:$0xff]
  %v1882 = vld [vmem:[%s1880 + $0x8] sm:$0xff]
  %v1883 = vld [vmem:[%s1880 + $0x10] sm:$0xff]
  %v1884 = vld [vmem:[%s1880 + $0x18] sm:$0xff]
  %v1885 = vld [vmem:[%s1880 + $0x20] sm:$0xff]
  %v1886 = vld [vmem:[%s1880 + $0x28] sm:$0xff]
  %v1887 = vld [vmem:[%s1880 + $0x30] sm:$0xff]
  %v1888 = vld [vmem:[%s1880 + $0x38] sm:$0xff]
  %v1889 = vld [vmem:[%s1880 + $0x40] sm:$0xff]
  %v1890 = vld [vmem:[%s1880 + $0x48] sm:$0xff]
  %v1891 = vld [vmem:[%s1880 + $0x50] sm:$0xff]
  %v1892 = vld [vmem:[%s1880 + $0x58] sm:$0xff]
  %v1893 = vld [vmem:[%s1880 + $0x60] sm:$0xff]
  %v1894 = vld [vmem:[%s1880 + $0x68] sm:$0xff]
  %v1895 = vld [vmem:[%s1880 + $0x70] sm:$0xff]
  %v1896 = vld [vmem:[%s1880 + $0x78] sm:$0xff]
  %v1897 = vld [vmem:[%s1880 + $0x80] sm:$0xff]
  %v1898 = vld [vmem:[%s1880 + $0x88] sm:$0xff]
  %v1899 = vld [vmem:[%s1880 + $0x90] sm:$0xff]
  %v1900 = vld [vmem:[%s1880 + $0x98] sm:$0xff]
  %v1901 = vld [vmem:[%s1880 + $0xa0] sm:$0xff]
  %v1902 = vld [vmem:[%s1880 + $0xa8] sm:$0xff]
  %v1903 = vld [vmem:[%s1880 + $0xb0] sm:$0xff]
  %v1904 = vld [vmem:[%s1880 + $0xb8] sm:$0xff]
  %v1905 = vld [vmem:[%s1880 + $0xc0] sm:$0xff]
  %v1906 = vld [vmem:[%s1880 + $0xc8] sm:$0xff]
  %v1907 = vld [vmem:[%s1880 + $0xd0] sm:$0xff]
  %v1908 = vld [vmem:[%s1880 + $0xd8] sm:$0xff]
  %v1909 = vld [vmem:[%s1880 + $0xe0] sm:$0xff]
  %v1910 = vld [vmem:[%s1880 + $0xe8] sm:$0xff]
  %v1911 = vld [vmem:[%s1880 + $0xf0] sm:$0xff]
  %v1912 = vld [vmem:[%s1880 + $0xf8] sm:$0xff]
  %v1913 = vrot.slane %v603, 6
  %v1914 = vsel %vm172, %v1913, 0
  %1916 = vmatprep.subr.mxu0 %v1882
  %1917 = vmatpush1.msra.mxu0 %v1881
  %1918 = vmatprep.subr.mxu0 %v1886
  %1919 = vmatpush1.msra.mxu0 %v1885
  %1920 = vmatprep.subr.mxu0 %v1890
  %1921 = vmatpush1.msra.mxu0 %v1889
  %1922 = vmatprep.subr.mxu0 %v1894
  %1923 = vmatpush1.msra.mxu0 %v1893
  %1924 = vmatprep.subr.mxu0 %v1898
  %1925 = vmatpush1.msra.mxu0 %v1897
  %1926 = vmatprep.subr.mxu0 %v1902
  %1927 = vmatpush1.msra.mxu0 %v1901
  %1928 = vmatprep.subr.mxu0 %v1906
  %1929 = vmatpush1.msra.mxu0 %v1905
  %1930 = vmatprep.subr.mxu0 %v1910
  %1931 = vmatpush1.msra.mxu0 %v1909
  %1932 = vmatprep.subr.mxu0 0.0
  %1933 = vmatpush1.msra.mxu0 0.0
  %1934 = vmatprep.subr.mxu0 0.0
  %1935 = vmatpush1.msra.mxu0 0.0
  %1936 = vmatprep.subr.mxu0 0.0
  %1937 = vmatpush1.msra.mxu0 0.0
  %1938 = vmatprep.subr.mxu0 0.0
  %1939 = vmatpush1.msra.mxu0 0.0
  %1940 = vmatprep.subr.mxu0 0.0
  %1941 = vmatpush1.msra.mxu0 0.0
  %1942 = vmatprep.subr.mxu0 0.0
  %1943 = vmatpush1.msra.mxu0 0.0
  %1944 = vmatprep.subr.mxu0 0.0
  %1945 = vmatpush1.msra.mxu0 0.0
  %1946 = vmatprep.subr.mxu0 0.0
  %1947 = vmatpush1.msra.mxu0 0.0
  %1948 = vmatprep.subr.mxu0 0.0
  %1949 = vmatpush1.msra.mxu0 0.0
  %1950 = vmatprep.subr.mxu0 0.0
  %1951 = vmatpush1.msra.mxu0 0.0
  %1952 = vmatprep.subr.mxu0 0.0
  %1953 = vmatpush1.msra.mxu0 0.0
  %1954 = vmatprep.subr.mxu0 0.0
  %1955 = vmatpush1.msra.mxu0 0.0
  %1956 = vmatprep.subr.mxu0 0.0
  %1957 = vmatpush1.msra.mxu0 0.0
  %1958 = vmatprep.subr.mxu0 0.0
  %1959 = vmatpush1.msra.mxu0 0.0
  %1960 = vmatprep.subr.mxu0 0.0
  %1961 = vmatpush1.msra.mxu0 0.0
  %1962 = vmatprep.subr.mxu0 0.0
  %1963 = vmatpush1.msra.mxu0 0.0
  %1964 = vmatprep.subr.mxu0 0.0
  %1965 = vmatpush1.msra.mxu0 0.0
  %1966 = vmatprep.subr.mxu0 0.0
  %1967 = vmatpush1.msra.mxu0 0.0
  %1968 = vmatprep.subr.mxu0 0.0
  %1969 = vmatpush1.msra.mxu0 0.0
  %1970 = vmatprep.subr.mxu0 0.0
  %1971 = vmatpush1.msra.mxu0 0.0
  %1972 = vmatprep.subr.mxu0 0.0
  %1973 = vmatpush1.msra.mxu0 0.0
  %1974 = vmatprep.subr.mxu0 0.0
  %1975 = vmatpush1.msra.mxu0 0.0
  %1976 = vmatprep.subr.mxu0 0.0
  %1977 = vmatpush1.msra.mxu0 0.0
  %1978 = vmatprep.subr.mxu0 0.0
  %1979 = vmatpush1.msra.mxu0 0.0
  %1980 = vmatprep.mubr.f32.mxu0 0.0
  %1981 = vmatmul.mubr.f32.gmra.mrb[0].mxu0 %v1914
  %v1982 = vpop.f32.mrb[0].mxu0
  %v1983 = vadd.f32 0.0, %v1982
  %v1984 = vpop.f32.mrb[0].mxu0
  %v1985 = vadd.f32 0.0, %v1984
  %1986 = vdwg.mxu0
  %1987 = vmatprep.subr.mxu0 %v1884
  %1988 = vmatpush1.msra.mxu0 %v1883
  %1989 = vmatprep.subr.mxu0 %v1888
  %1990 = vmatpush1.msra.mxu0 %v1887
  %1991 = vmatprep.subr.mxu0 %v1892
  %1992 = vmatpush1.msra.mxu0 %v1891
  %1993 = vmatprep.subr.mxu0 %v1896
  %1994 = vmatpush1.msra.mxu0 %v1895
  %1995 = vmatprep.subr.mxu0 %v1900
  %1996 = vmatpush1.msra.mxu0 %v1899
  %1997 = vmatprep.subr.mxu0 %v1904
  %1998 = vmatpush1.msra.mxu0 %v1903
  %1999 = vmatprep.subr.mxu0 %v1908
  %2000 = vmatpush1.msra.mxu0 %v1907
  %2001 = vmatprep.subr.mxu0 %v1912
  %2002 = vmatpush1.msra.mxu0 %v1911
  %2003 = vmatprep.subr.mxu0 0.0
  %2004 = vmatpush1.msra.mxu0 0.0
  %2005 = vmatprep.subr.mxu0 0.0
  %2006 = vmatpush1.msra.mxu0 0.0
  %2007 = vmatprep.subr.mxu0 0.0
  %2008 = vmatpush1.msra.mxu0 0.0
  %2009 = vmatprep.subr.mxu0 0.0
  %2010 = vmatpush1.msra.mxu0 0.0
  %2011 = vmatprep.subr.mxu0 0.0
  %2012 = vmatpush1.msra.mxu0 0.0
  %2013 = vmatprep.subr.mxu0 0.0
  %2014 = vmatpush1.msra.mxu0 0.0
  %2015 = vmatprep.subr.mxu0 0.0
  %2016 = vmatpush1.msra.mxu0 0.0
  %2017 = vmatprep.subr.mxu0 0.0
  %2018 = vmatpush1.msra.mxu0 0.0
  %2019 = vmatprep.subr.mxu0 0.0
  %2020 = vmatpush1.msra.mxu0 0.0
  %2021 = vmatprep.subr.mxu0 0.0
  %2022 = vmatpush1.msra.mxu0 0.0
  %2023 = vmatprep.subr.mxu0 0.0
  %2024 = vmatpush1.msra.mxu0 0.0
  %2025 = vmatprep.subr.mxu0 0.0
  %2026 = vmatpush1.msra.mxu0 0.0
  %2027 = vmatprep.subr.mxu0 0.0
  %2028 = vmatpush1.msra.mxu0 0.0
  %2029 = vmatprep.subr.mxu0 0.0
  %2030 = vmatpush1.msra.mxu0 0.0
  %2031 = vmatprep.subr.mxu0 0.0
  %2032 = vmatpush1.msra.mxu0 0.0
  %2033 = vmatprep.subr.mxu0 0.0
  %2034 = vmatpush1.msra.mxu0 0.0
  %2035 = vmatprep.subr.mxu0 0.0
  %2036 = vmatpush1.msra.mxu0 0.0
  %2037 = vmatprep.subr.mxu0 0.0
  %2038 = vmatpush1.msra.mxu0 0.0
  %2039 = vmatprep.subr.mxu0 0.0
  %2040 = vmatpush1.msra.mxu0 0.0
  %2041 = vmatprep.subr.mxu0 0.0
  %2042 = vmatpush1.msra.mxu0 0.0
  %2043 = vmatprep.subr.mxu0 0.0
  %2044 = vmatpush1.msra.mxu0 0.0
  %2045 = vmatprep.subr.mxu0 0.0
  %2046 = vmatpush1.msra.mxu0 0.0
  %2047 = vmatprep.subr.mxu0 0.0
  %2048 = vmatpush1.msra.mxu0 0.0
  %2049 = vmatprep.subr.mxu0 0.0
  %2050 = vmatpush1.msra.mxu0 0.0
  %2051 = vmatprep.mubr.f32.mxu0 0.0
  %2052 = vmatmul.mubr.f32.gmra.mrb[0].mxu0 %v1914
  %v2053 = vpop.f32.mrb[0].mxu0
  %v2054 = vadd.f32 0.0, %v2053
  %v2055 = vpop.f32.mrb[0].mxu0
  %v2056 = vadd.f32 0.0, %v2055
  %2057 = vdwg.mxu0
  %v2058 = vadd.f32 %v1876, %v1983
  %v2059 = vadd.f32 %v1877, %v1985
  %v2060 = vadd.f32 %v1878, %v2054
  %v2061 = vadd.f32 %v1879, %v2056
  %s2062 = scalar_lea.vmem %s3, 2048
  %v2063 = vld [vmem:[%s2062] sm:$0xff]
  %v2064 = vld [vmem:[%s2062 + $0x8] sm:$0xff]
  %v2065 = vld [vmem:[%s2062 + $0x10] sm:$0xff]
  %v2066 = vld [vmem:[%s2062 + $0x18] sm:$0xff]
  %v2067 = vld [vmem:[%s2062 + $0x20] sm:$0xff]
  %v2068 = vld [vmem:[%s2062 + $0x28] sm:$0xff]
  %v2069 = vld [vmem:[%s2062 + $0x30] sm:$0xff]
  %v2070 = vld [vmem:[%s2062 + $0x38] sm:$0xff]
  %v2071 = vld [vmem:[%s2062 + $0x40] sm:$0xff]
  %v2072 = vld [vmem:[%s2062 + $0x48] sm:$0xff]
  %v2073 = vld [vmem:[%s2062 + $0x50] sm:$0xff]
  %v2074 = vld [vmem:[%s2062 + $0x58] sm:$0xff]
  %v2075 = vld [vmem:[%s2062 + $0x60] sm:$0xff]
  %v2076 = vld [vmem:[%s2062 + $0x68] sm:$0xff]
  %v2077 = vld [vmem:[%s2062 + $0x70] sm:$0xff]
  %v2078 = vld [vmem:[%s2062 + $0x78] sm:$0xff]
  %v2079 = vld [vmem:[%s2062 + $0x80] sm:$0xff]
  %v2080 = vld [vmem:[%s2062 + $0x88] sm:$0xff]
  %v2081 = vld [vmem:[%s2062 + $0x90] sm:$0xff]
  %v2082 = vld [vmem:[%s2062 + $0x98] sm:$0xff]
  %v2083 = vld [vmem:[%s2062 + $0xa0] sm:$0xff]
  %v2084 = vld [vmem:[%s2062 + $0xa8] sm:$0xff]
  %v2085 = vld [vmem:[%s2062 + $0xb0] sm:$0xff]
  %v2086 = vld [vmem:[%s2062 + $0xb8] sm:$0xff]
  %v2087 = vld [vmem:[%s2062 + $0xc0] sm:$0xff]
  %v2088 = vld [vmem:[%s2062 + $0xc8] sm:$0xff]
  %v2089 = vld [vmem:[%s2062 + $0xd0] sm:$0xff]
  %v2090 = vld [vmem:[%s2062 + $0xd8] sm:$0xff]
  %v2091 = vld [vmem:[%s2062 + $0xe0] sm:$0xff]
  %v2092 = vld [vmem:[%s2062 + $0xe8] sm:$0xff]
  %v2093 = vld [vmem:[%s2062 + $0xf0] sm:$0xff]
  %v2094 = vld [vmem:[%s2062 + $0xf8] sm:$0xff]
  %v2096 = vsel %vm172, %v604, 0
  %2098 = vmatprep.subr.mxu0 %v2064
  %2099 = vmatpush1.msra.mxu0 %v2063
  %2100 = vmatprep.subr.mxu0 %v2068
  %2101 = vmatpush1.msra.mxu0 %v2067
  %2102 = vmatprep.subr.mxu0 %v2072
  %2103 = vmatpush1.msra.mxu0 %v2071
  %2104 = vmatprep.subr.mxu0 %v2076
  %2105 = vmatpush1.msra.mxu0 %v2075
  %2106 = vmatprep.subr.mxu0 %v2080
  %2107 = vmatpush1.msra.mxu0 %v2079
  %2108 = vmatprep.subr.mxu0 %v2084
  %2109 = vmatpush1.msra.mxu0 %v2083
  %2110 = vmatprep.subr.mxu0 %v2088
  %2111 = vmatpush1.msra.mxu0 %v2087
  %2112 = vmatprep.subr.mxu0 %v2092
  %2113 = vmatpush1.msra.mxu0 %v2091
  %2114 = vmatprep.subr.mxu0 0.0
  %2115 = vmatpush1.msra.mxu0 0.0
  %2116 = vmatprep.subr.mxu0 0.0
  %2117 = vmatpush1.msra.mxu0 0.0
  %2118 = vmatprep.subr.mxu0 0.0
  %2119 = vmatpush1.msra.mxu0 0.0
  %2120 = vmatprep.subr.mxu0 0.0
  %2121 = vmatpush1.msra.mxu0 0.0
  %2122 = vmatprep.subr.mxu0 0.0
  %2123 = vmatpush1.msra.mxu0 0.0
  %2124 = vmatprep.subr.mxu0 0.0
  %2125 = vmatpush1.msra.mxu0 0.0
  %2126 = vmatprep.subr.mxu0 0.0
  %2127 = vmatpush1.msra.mxu0 0.0
  %2128 = vmatprep.subr.mxu0 0.0
  %2129 = vmatpush1.msra.mxu0 0.0
  %2130 = vmatprep.subr.mxu0 0.0
  %2131 = vmatpush1.msra.mxu0 0.0
  %2132 = vmatprep.subr.mxu0 0.0
  %2133 = vmatpush1.msra.mxu0 0.0
  %2134 = vmatprep.subr.mxu0 0.0
  %2135 = vmatpush1.msra.mxu0 0.0
  %2136 = vmatprep.subr.mxu0 0.0
  %2137 = vmatpush1.msra.mxu0 0.0
  %2138 = vmatprep.subr.mxu0 0.0
  %2139 = vmatpush1.msra.mxu0 0.0
  %2140 = vmatprep.subr.mxu0 0.0
  %2141 = vmatpush1.msra.mxu0 0.0
  %2142 = vmatprep.subr.mxu0 0.0
  %2143 = vmatpush1.msra.mxu0 0.0
  %2144 = vmatprep.subr.mxu0 0.0
  %2145 = vmatpush1.msra.mxu0 0.0
  %2146 = vmatprep.subr.mxu0 0.0
  %2147 = vmatpush1.msra.mxu0 0.0
  %2148 = vmatprep.subr.mxu0 0.0
  %2149 = vmatpush1.msra.mxu0 0.0
  %2150 = vmatprep.subr.mxu0 0.0
  %2151 = vmatpush1.msra.mxu0 0.0
  %2152 = vmatprep.subr.mxu0 0.0
  %2153 = vmatpush1.msra.mxu0 0.0
  %2154 = vmatprep.subr.mxu0 0.0
  %2155 = vmatpush1.msra.mxu0 0.0
  %2156 = vmatprep.subr.mxu0 0.0
  %2157 = vmatpush1.msra.mxu0 0.0
  %2158 = vmatprep.subr.mxu0 0.0
  %2159 = vmatpush1.msra.mxu0 0.0
  %2160 = vmatprep.subr.mxu0 0.0
  %2161 = vmatpush1.msra.mxu0 0.0
  %2162 = vmatprep.mubr.f32.mxu0 0.0
  %2163 = vmatmul.mubr.f32.gmra.mrb[0].mxu0 %v2096
  %v2164 = vpop.f32.mrb[0].mxu0
  %v2165 = vadd.f32 0.0, %v2164
  %v2166 = vpop.f32.mrb[0].mxu0
  %v2167 = vadd.f32 0.0, %v2166
  %2168 = vdwg.mxu0
  %2169 = vmatprep.subr.mxu0 %v2066
  %2170 = vmatpush1.msra.mxu0 %v2065
  %2171 = vmatprep.subr.mxu0 %v2070
  %2172 = vmatpush1.msra.mxu0 %v2069
  %2173 = vmatprep.subr.mxu0 %v2074
  %2174 = vmatpush1.msra.mxu0 %v2073
  %2175 = vmatprep.subr.mxu0 %v2078
  %2176 = vmatpush1.msra.mxu0 %v2077
  %2177 = vmatprep.subr.mxu0 %v2082
  %2178 = vmatpush1.msra.mxu0 %v2081
  %2179 = vmatprep.subr.mxu0 %v2086
  %2180 = vmatpush1.msra.mxu0 %v2085
  %2181 = vmatprep.subr.mxu0 %v2090
  %2182 = vmatpush1.msra.mxu0 %v2089
  %2183 = vmatprep.subr.mxu0 %v2094
  %2184 = vmatpush1.msra.mxu0 %v2093
  %2185 = vmatprep.subr.mxu0 0.0
  %2186 = vmatpush1.msra.mxu0 0.0
  %2187 = vmatprep.subr.mxu0 0.0
  %2188 = vmatpush1.msra.mxu0 0.0
  %2189 = vmatprep.subr.mxu0 0.0
  %2190 = vmatpush1.msra.mxu0 0.0
  %2191 = vmatprep.subr.mxu0 0.0
  %2192 = vmatpush1.msra.mxu0 0.0
  %2193 = vmatprep.subr.mxu0 0.0
  %2194 = vmatpush1.msra.mxu0 0.0
  %2195 = vmatprep.subr.mxu0 0.0
  %2196 = vmatpush1.msra.mxu0 0.0
  %2197 = vmatprep.subr.mxu0 0.0
  %2198 = vmatpush1.msra.mxu0 0.0
  %2199 = vmatprep.subr.mxu0 0.0
  %2200 = vmatpush1.msra.mxu0 0.0
  %2201 = vmatprep.subr.mxu0 0.0
  %2202 = vmatpush1.msra.mxu0 0.0
  %2203 = vmatprep.subr.mxu0 0.0
  %2204 = vmatpush1.msra.mxu0 0.0
  %2205 = vmatprep.subr.mxu0 0.0
  %2206 = vmatpush1.msra.mxu0 0.0
  %2207 = vmatprep.subr.mxu0 0.0
  %2208 = vmatpush1.msra.mxu0 0.0
  %2209 = vmatprep.subr.mxu0 0.0
  %2210 = vmatpush1.msra.mxu0 0.0
  %2211 = vmatprep.subr.mxu0 0.0
  %2212 = vmatpush1.msra.mxu0 0.0
  %2213 = vmatprep.subr.mxu0 0.0
  %2214 = vmatpush1.msra.mxu0 0.0
  %2215 = vmatprep.subr.mxu0 0.0
  %2216 = vmatpush1.msra.mxu0 0.0
  %2217 = vmatprep.subr.mxu0 0.0
  %2218 = vmatpush1.msra.mxu0 0.0
  %2219 = vmatprep.subr.mxu0 0.0
  %2220 = vmatpush1.msra.mxu0 0.0
  %2221 = vmatprep.subr.mxu0 0.0
  %2222 = vmatpush1.msra.mxu0 0.0
  %2223 = vmatprep.subr.mxu0 0.0
  %2224 = vmatpush1.msra.mxu0 0.0
  %2225 = vmatprep.subr.mxu0 0.0
  %2226 = vmatpush1.msra.mxu0 0.0
  %2227 = vmatprep.subr.mxu0 0.0
  %2228 = vmatpush1.msra.mxu0 0.0
  %2229 = vmatprep.subr.mxu0 0.0
  %2230 = vmatpush1.msra.mxu0 0.0
  %2231 = vmatprep.subr.mxu0 0.0
  %2232 = vmatpush1.msra.mxu0 0.0
  %2233 = vmatprep.mubr.f32.mxu0 0.0
  %2234 = vmatmul.mubr.f32.gmra.mrb[0].mxu0 %v2096
  %v2235 = vpop.f32.mrb[0].mxu0
  %v2236 = vadd.f32 0.0, %v2235
  %v2237 = vpop.f32.mrb[0].mxu0
  %v2238 = vadd.f32 0.0, %v2237
  %2239 = vdwg.mxu0
  %v2240 = vadd.f32 %v2058, %v2165
  %v2241 = vadd.f32 %v2059, %v2167
  %v2242 = vadd.f32 %v2060, %v2236
  %v2243 = vadd.f32 %v2061, %v2238
  %s2244 = scalar_lea.vmem %s3, 2304
  %v2245 = vld [vmem:[%s2244] sm:$0xff]
  %v2246 = vld [vmem:[%s2244 + $0x8] sm:$0xff]
  %v2247 = vld [vmem:[%s2244 + $0x10] sm:$0xff]
  %v2248 = vld [vmem:[%s2244 + $0x18] sm:$0xff]
  %v2249 = vld [vmem:[%s2244 + $0x20] sm:$0xff]
  %v2250 = vld [vmem:[%s2244 + $0x28] sm:$0xff]
  %v2251 = vld [vmem:[%s2244 + $0x30] sm:$0xff]
  %v2252 = vld [vmem:[%s2244 + $0x38] sm:$0xff]
  %v2253 = vld [vmem:[%s2244 + $0x40] sm:$0xff]
  %v2254 = vld [vmem:[%s2244 + $0x48] sm:$0xff]
  %v2255 = vld [vmem:[%s2244 + $0x50] sm:$0xff]
  %v2256 = vld [vmem:[%s2244 + $0x58] sm:$0xff]
  %v2257 = vld [vmem:[%s2244 + $0x60] sm:$0xff]
  %v2258 = vld [vmem:[%s2244 + $0x68] sm:$0xff]
  %v2259 = vld [vmem:[%s2244 + $0x70] sm:$0xff]
  %v2260 = vld [vmem:[%s2244 + $0x78] sm:$0xff]
  %v2261 = vld [vmem:[%s2244 + $0x80] sm:$0xff]
  %v2262 = vld [vmem:[%s2244 + $0x88] sm:$0xff]
  %v2263 = vld [vmem:[%s2244 + $0x90] sm:$0xff]
  %v2264 = vld [vmem:[%s2244 + $0x98] sm:$0xff]
  %v2265 = vld [vmem:[%s2244 + $0xa0] sm:$0xff]
  %v2266 = vld [vmem:[%s2244 + $0xa8] sm:$0xff]
  %v2267 = vld [vmem:[%s2244 + $0xb0] sm:$0xff]
  %v2268 = vld [vmem:[%s2244 + $0xb8] sm:$0xff]
  %v2269 = vld [vmem:[%s2244 + $0xc0] sm:$0xff]
  %v2270 = vld [vmem:[%s2244 + $0xc8] sm:$0xff]
  %v2271 = vld [vmem:[%s2244 + $0xd0] sm:$0xff]
  %v2272 = vld [vmem:[%s2244 + $0xd8] sm:$0xff]
  %v2273 = vld [vmem:[%s2244 + $0xe0] sm:$0xff]
  %v2274 = vld [vmem:[%s2244 + $0xe8] sm:$0xff]
  %v2275 = vld [vmem:[%s2244 + $0xf0] sm:$0xff]
  %v2276 = vld [vmem:[%s2244 + $0xf8] sm:$0xff]
  %v2277 = vrot.slane %v604, 2
  %v2278 = vsel %vm172, %v2277, 0
  %2280 = vmatprep.subr.mxu0 %v2246
  %2281 = vmatpush1.msra.mxu0 %v2245
  %2282 = vmatprep.subr.mxu0 %v2250
  %2283 = vmatpush1.msra.mxu0 %v2249
  %2284 = vmatprep.subr.mxu0 %v2254
  %2285 = vmatpush1.msra.mxu0 %v2253
  %2286 = vmatprep.subr.mxu0 %v2258
  %2287 = vmatpush1.msra.mxu0 %v2257
  %2288 = vmatprep.subr.mxu0 %v2262
  %2289 = vmatpush1.msra.mxu0 %v2261
  %2290 = vmatprep.subr.mxu0 %v2266
  %2291 = vmatpush1.msra.mxu0 %v2265
  %2292 = vmatprep.subr.mxu0 %v2270
  %2293 = vmatpush1.msra.mxu0 %v2269
  %2294 = vmatprep.subr.mxu0 %v2274
  %2295 = vmatpush1.msra.mxu0 %v2273
  %2296 = vmatprep.subr.mxu0 0.0
  %2297 = vmatpush1.msra.mxu0 0.0
  %2298 = vmatprep.subr.mxu0 0.0
  %2299 = vmatpush1.msra.mxu0 0.0
  %2300 = vmatprep.subr.mxu0 0.0
  %2301 = vmatpush1.msra.mxu0 0.0
  %2302 = vmatprep.subr.mxu0 0.0
  %2303 = vmatpush1.msra.mxu0 0.0
  %2304 = vmatprep.subr.mxu0 0.0
  %2305 = vmatpush1.msra.mxu0 0.0
  %2306 = vmatprep.subr.mxu0 0.0
  %2307 = vmatpush1.msra.mxu0 0.0
  %2308 = vmatprep.subr.mxu0 0.0
  %2309 = vmatpush1.msra.mxu0 0.0
  %2310 = vmatprep.subr.mxu0 0.0
  %2311 = vmatpush1.msra.mxu0 0.0
  %2312 = vmatprep.subr.mxu0 0.0
  %2313 = vmatpush1.msra.mxu0 0.0
  %2314 = vmatprep.subr.mxu0 0.0
  %2315 = vmatpush1.msra.mxu0 0.0
  %2316 = vmatprep.subr.mxu0 0.0
  %2317 = vmatpush1.msra.mxu0 0.0
  %2318 = vmatprep.subr.mxu0 0.0
  %2319 = vmatpush1.msra.mxu0 0.0
  %2320 = vmatprep.subr.mxu0 0.0
  %2321 = vmatpush1.msra.mxu0 0.0
  %2322 = vmatprep.subr.mxu0 0.0
  %2323 = vmatpush1.msra.mxu0 0.0
  %2324 = vmatprep.subr.mxu0 0.0
  %2325 = vmatpush1.msra.mxu0 0.0
  %2326 = vmatprep.subr.mxu0 0.0
  %2327 = vmatpush1.msra.mxu0 0.0
  %2328 = vmatprep.subr.mxu0 0.0
  %2329 = vmatpush1.msra.mxu0 0.0
  %2330 = vmatprep.subr.mxu0 0.0
  %2331 = vmatpush1.msra.mxu0 0.0
  %2332 = vmatprep.subr.mxu0 0.0
  %2333 = vmatpush1.msra.mxu0 0.0
  %2334 = vmatprep.subr.mxu0 0.0
  %2335 = vmatpush1.msra.mxu0 0.0
  %2336 = vmatprep.subr.mxu0 0.0
  %2337 = vmatpush1.msra.mxu0 0.0
  %2338 = vmatprep.subr.mxu0 0.0
  %2339 = vmatpush1.msra.mxu0 0.0
  %2340 = vmatprep.subr.mxu0 0.0
  %2341 = vmatpush1.msra.mxu0 0.0
  %2342 = vmatprep.subr.mxu0 0.0
  %2343 = vmatpush1.msra.mxu0 0.0
  %2344 = vmatprep.mubr.f32.mxu0 0.0
  %2345 = vmatmul.mubr.f32.gmra.mrb[0].mxu0 %v2278
  %v2346 = vpop.f32.mrb[0].mxu0
  %v2347 = vadd.f32 0.0, %v2346
  %v2348 = vpop.f32.mrb[0].mxu0
  %v2349 = vadd.f32 0.0, %v2348
  %2350 = vdwg.mxu0
  %2351 = vmatprep.subr.mxu0 %v2248
  %2352 = vmatpush1.msra.mxu0 %v2247
  %2353 = vmatprep.subr.mxu0 %v2252
  %2354 = vmatpush1.msra.mxu0 %v2251
  %2355 = vmatprep.subr.mxu0 %v2256
  %2356 = vmatpush1.msra.mxu0 %v2255
  %2357 = vmatprep.subr.mxu0 %v2260
  %2358 = vmatpush1.msra.mxu0 %v2259
  %2359 = vmatprep.subr.mxu0 %v2264
  %2360 = vmatpush1.msra.mxu0 %v2263
  %2361 = vmatprep.subr.mxu0 %v2268
  %2362 = vmatpush1.msra.mxu0 %v2267
  %2363 = vmatprep.subr.mxu0 %v2272
  %2364 = vmatpush1.msra.mxu0 %v2271
  %2365 = vmatprep.subr.mxu0 %v2276
  %2366 = vmatpush1.msra.mxu0 %v2275
  %2367 = vmatprep.subr.mxu0 0.0
  %2368 = vmatpush1.msra.mxu0 0.0
  %2369 = vmatprep.subr.mxu0 0.0
  %2370 = vmatpush1.msra.mxu0 0.0
  %2371 = vmatprep.subr.mxu0 0.0
  %2372 = vmatpush1.msra.mxu0 0.0
  %2373 = vmatprep.subr.mxu0 0.0
  %2374 = vmatpush1.msra.mxu0 0.0
  %2375 = vmatprep.subr.mxu0 0.0
  %2376 = vmatpush1.msra.mxu0 0.0
  %2377 = vmatprep.subr.mxu0 0.0
  %2378 = vmatpush1.msra.mxu0 0.0
  %2379 = vmatprep.subr.mxu0 0.0
  %2380 = vmatpush1.msra.mxu0 0.0
  %2381 = vmatprep.subr.mxu0 0.0
  %2382 = vmatpush1.msra.mxu0 0.0
  %2383 = vmatprep.subr.mxu0 0.0
  %2384 = vmatpush1.msra.mxu0 0.0
  %2385 = vmatprep.subr.mxu0 0.0
  %2386 = vmatpush1.msra.mxu0 0.0
  %2387 = vmatprep.subr.mxu0 0.0
  %2388 = vmatpush1.msra.mxu0 0.0
  %2389 = vmatprep.subr.mxu0 0.0
  %2390 = vmatpush1.msra.mxu0 0.0
  %2391 = vmatprep.subr.mxu0 0.0
  %2392 = vmatpush1.msra.mxu0 0.0
  %2393 = vmatprep.subr.mxu0 0.0
  %2394 = vmatpush1.msra.mxu0 0.0
  %2395 = vmatprep.subr.mxu0 0.0
  %2396 = vmatpush1.msra.mxu0 0.0
  %2397 = vmatprep.subr.mxu0 0.0
  %2398 = vmatpush1.msra.mxu0 0.0
  %2399 = vmatprep.subr.mxu0 0.0
  %2400 = vmatpush1.msra.mxu0 0.0
  %2401 = vmatprep.subr.mxu0 0.0
  %2402 = vmatpush1.msra.mxu0 0.0
  %2403 = vmatprep.subr.mxu0 0.0
  %2404 = vmatpush1.msra.mxu0 0.0
  %2405 = vmatprep.subr.mxu0 0.0
  %2406 = vmatpush1.msra.mxu0 0.0
  %2407 = vmatprep.subr.mxu0 0.0
  %2408 = vmatpush1.msra.mxu0 0.0
  %2409 = vmatprep.subr.mxu0 0.0
  %2410 = vmatpush1.msra.mxu0 0.0
  %2411 = vmatprep.subr.mxu0 0.0
  %2412 = vmatpush1.msra.mxu0 0.0
  %2413 = vmatprep.subr.mxu0 0.0
  %2414 = vmatpush1.msra.mxu0 0.0
  %2415 = vmatprep.mubr.f32.mxu0 0.0
  %2416 = vmatmul.mubr.f32.gmra.mrb[0].mxu0 %v2278
  %v2417 = vpop.f32.mrb[0].mxu0
  %v2418 = vadd.f32 0.0, %v2417
  %v2419 = vpop.f32.mrb[0].mxu0
  %v2420 = vadd.f32 0.0, %v2419
  %2421 = vdwg.mxu0
  %v2422 = vadd.f32 %v2240, %v2347
  %v2423 = vadd.f32 %v2241, %v2349
  %v2424 = vadd.f32 %v2242, %v2418
  %v2425 = vadd.f32 %v2243, %v2420
  %s2426 = scalar_lea.vmem %s3, 2560
  %v2427 = vld [vmem:[%s2426] sm:$0xff]
  %v2428 = vld [vmem:[%s2426 + $0x8] sm:$0xff]
  %v2429 = vld [vmem:[%s2426 + $0x10] sm:$0xff]
  %v2430 = vld [vmem:[%s2426 + $0x18] sm:$0xff]
  %v2431 = vld [vmem:[%s2426 + $0x20] sm:$0xff]
  %v2432 = vld [vmem:[%s2426 + $0x28] sm:$0xff]
  %v2433 = vld [vmem:[%s2426 + $0x30] sm:$0xff]
  %v2434 = vld [vmem:[%s2426 + $0x38] sm:$0xff]
  %v2435 = vld [vmem:[%s2426 + $0x40] sm:$0xff]
  %v2436 = vld [vmem:[%s2426 + $0x48] sm:$0xff]
  %v2437 = vld [vmem:[%s2426 + $0x50] sm:$0xff]
  %v2438 = vld [vmem:[%s2426 + $0x58] sm:$0xff]
  %v2439 = vld [vmem:[%s2426 + $0x60] sm:$0xff]
  %v2440 = vld [vmem:[%s2426 + $0x68] sm:$0xff]
  %v2441 = vld [vmem:[%s2426 + $0x70] sm:$0xff]
  %v2442 = vld [vmem:[%s2426 + $0x78] sm:$0xff]
  %v2443 = vld [vmem:[%s2426 + $0x80] sm:$0xff]
  %v2444 = vld [vmem:[%s2426 + $0x88] sm:$0xff]
  %v2445 = vld [vmem:[%s2426 + $0x90] sm:$0xff]
  %v2446 = vld [vmem:[%s2426 + $0x98] sm:$0xff]
  %v2447 = vld [vmem:[%s2426 + $0xa0] sm:$0xff]
  %v2448 = vld [vmem:[%s2426 + $0xa8] sm:$0xff]
  %v2449 = vld [vmem:[%s2426 + $0xb0] sm:$0xff]
  %v2450 = vld [vmem:[%s2426 + $0xb8] sm:$0xff]
  %v2451 = vld [vmem:[%s2426 + $0xc0] sm:$0xff]
  %v2452 = vld [vmem:[%s2426 + $0xc8] sm:$0xff]
  %v2453 = vld [vmem:[%s2426 + $0xd0] sm:$0xff]
  %v2454 = vld [vmem:[%s2426 + $0xd8] sm:$0xff]
  %v2455 = vld [vmem:[%s2426 + $0xe0] sm:$0xff]
  %v2456 = vld [vmem:[%s2426 + $0xe8] sm:$0xff]
  %v2457 = vld [vmem:[%s2426 + $0xf0] sm:$0xff]
  %v2458 = vld [vmem:[%s2426 + $0xf8] sm:$0xff]
  %v2459 = vrot.slane %v604, 4
  %v2460 = vsel %vm172, %v2459, 0
  %2462 = vmatprep.subr.mxu0 %v2428
  %2463 = vmatpush1.msra.mxu0 %v2427
  %2464 = vmatprep.subr.mxu0 %v2432
  %2465 = vmatpush1.msra.mxu0 %v2431
  %2466 = vmatprep.subr.mxu0 %v2436
  %2467 = vmatpush1.msra.mxu0 %v2435
  %2468 = vmatprep.subr.mxu0 %v2440
  %2469 = vmatpush1.msra.mxu0 %v2439
  %2470 = vmatprep.subr.mxu0 %v2444
  %2471 = vmatpush1.msra.mxu0 %v2443
  %2472 = vmatprep.subr.mxu0 %v2448
  %2473 = vmatpush1.msra.mxu0 %v2447
  %2474 = vmatprep.subr.mxu0 %v2452
  %2475 = vmatpush1.msra.mxu0 %v2451
  %2476 = vmatprep.subr.mxu0 %v2456
  %2477 = vmatpush1.msra.mxu0 %v2455
  %2478 = vmatprep.subr.mxu0 0.0
  %2479 = vmatpush1.msra.mxu0 0.0
  %2480 = vmatprep.subr.mxu0 0.0
  %2481 = vmatpush1.msra.mxu0 0.0
  %2482 = vmatprep.subr.mxu0 0.0
  %2483 = vmatpush1.msra.mxu0 0.0
  %2484 = vmatprep.subr.mxu0 0.0
  %2485 = vmatpush1.msra.mxu0 0.0
  %2486 = vmatprep.subr.mxu0 0.0
  %2487 = vmatpush1.msra.mxu0 0.0
  %2488 = vmatprep.subr.mxu0 0.0
  %2489 = vmatpush1.msra.mxu0 0.0
  %2490 = vmatprep.subr.mxu0 0.0
  %2491 = vmatpush1.msra.mxu0 0.0
  %2492 = vmatprep.subr.mxu0 0.0
  %2493 = vmatpush1.msra.mxu0 0.0
  %2494 = vmatprep.subr.mxu0 0.0
  %2495 = vmatpush1.msra.mxu0 0.0
  %2496 = vmatprep.subr.mxu0 0.0
  %2497 = vmatpush1.msra.mxu0 0.0
  %2498 = vmatprep.subr.mxu0 0.0
  %2499 = vmatpush1.msra.mxu0 0.0
  %2500 = vmatprep.subr.mxu0 0.0
  %2501 = vmatpush1.msra.mxu0 0.0
  %2502 = vmatprep.subr.mxu0 0.0
  %2503 = vmatpush1.msra.mxu0 0.0
  %2504 = vmatprep.subr.mxu0 0.0
  %2505 = vmatpush1.msra.mxu0 0.0
  %2506 = vmatprep.subr.mxu0 0.0
  %2507 = vmatpush1.msra.mxu0 0.0
  %2508 = vmatprep.subr.mxu0 0.0
  %2509 = vmatpush1.msra.mxu0 0.0
  %2510 = vmatprep.subr.mxu0 0.0
  %2511 = vmatpush1.msra.mxu0 0.0
  %2512 = vmatprep.subr.mxu0 0.0
  %2513 = vmatpush1.msra.mxu0 0.0
  %2514 = vmatprep.subr.mxu0 0.0
  %2515 = vmatpush1.msra.mxu0 0.0
  %2516 = vmatprep.subr.mxu0 0.0
  %2517 = vmatpush1.msra.mxu0 0.0
  %2518 = vmatprep.subr.mxu0 0.0
  %2519 = vmatpush1.msra.mxu0 0.0
  %2520 = vmatprep.subr.mxu0 0.0
  %2521 = vmatpush1.msra.mxu0 0.0
  %2522 = vmatprep.subr.mxu0 0.0
  %2523 = vmatpush1.msra.mxu0 0.0
  %2524 = vmatprep.subr.mxu0 0.0
  %2525 = vmatpush1.msra.mxu0 0.0
  %2526 = vmatprep.mubr.f32.mxu0 0.0
  %2527 = vmatmul.mubr.f32.gmra.mrb[0].mxu0 %v2460
  %v2528 = vpop.f32.mrb[0].mxu0
  %v2529 = vadd.f32 0.0, %v2528
  %v2530 = vpop.f32.mrb[0].mxu0
  %v2531 = vadd.f32 0.0, %v2530
  %2532 = vdwg.mxu0
  %2533 = vmatprep.subr.mxu0 %v2430
  %2534 = vmatpush1.msra.mxu0 %v2429
  %2535 = vmatprep.subr.mxu0 %v2434
  %2536 = vmatpush1.msra.mxu0 %v2433
  %2537 = vmatprep.subr.mxu0 %v2438
  %2538 = vmatpush1.msra.mxu0 %v2437
  %2539 = vmatprep.subr.mxu0 %v2442
  %2540 = vmatpush1.msra.mxu0 %v2441
  %2541 = vmatprep.subr.mxu0 %v2446
  %2542 = vmatpush1.msra.mxu0 %v2445
  %2543 = vmatprep.subr.mxu0 %v2450
  %2544 = vmatpush1.msra.mxu0 %v2449
  %2545 = vmatprep.subr.mxu0 %v2454
  %2546 = vmatpush1.msra.mxu0 %v2453
  %2547 = vmatprep.subr.mxu0 %v2458
  %2548 = vmatpush1.msra.mxu0 %v2457
  %2549 = vmatprep.subr.mxu0 0.0
  %2550 = vmatpush1.msra.mxu0 0.0
  %2551 = vmatprep.subr.mxu0 0.0
  %2552 = vmatpush1.msra.mxu0 0.0
  %2553 = vmatprep.subr.mxu0 0.0
  %2554 = vmatpush1.msra.mxu0 0.0
  %2555 = vmatprep.subr.mxu0 0.0
  %2556 = vmatpush1.msra.mxu0 0.0
  %2557 = vmatprep.subr.mxu0 0.0
  %2558 = vmatpush1.msra.mxu0 0.0
  %2559 = vmatprep.subr.mxu0 0.0
  %2560 = vmatpush1.msra.mxu0 0.0
  %2561 = vmatprep.subr.mxu0 0.0
  %2562 = vmatpush1.msra.mxu0 0.0
  %2563 = vmatprep.subr.mxu0 0.0
  %2564 = vmatpush1.msra.mxu0 0.0
  %2565 = vmatprep.subr.mxu0 0.0
  %2566 = vmatpush1.msra.mxu0 0.0
  %2567 = vmatprep.subr.mxu0 0.0
  %2568 = vmatpush1.msra.mxu0 0.0
  %2569 = vmatprep.subr.mxu0 0.0
  %2570 = vmatpush1.msra.mxu0 0.0
  %2571 = vmatprep.subr.mxu0 0.0
  %2572 = vmatpush1.msra.mxu0 0.0
  %2573 = vmatprep.subr.mxu0 0.0
  %2574 = vmatpush1.msra.mxu0 0.0
  %2575 = vmatprep.subr.mxu0 0.0
  %2576 = vmatpush1.msra.mxu0 0.0
  %2577 = vmatprep.subr.mxu0 0.0
  %2578 = vmatpush1.msra.mxu0 0.0
  %2579 = vmatprep.subr.mxu0 0.0
  %2580 = vmatpush1.msra.mxu0 0.0
  %2581 = vmatprep.subr.mxu0 0.0
  %2582 = vmatpush1.msra.mxu0 0.0
  %2583 = vmatprep.subr.mxu0 0.0
  %2584 = vmatpush1.msra.mxu0 0.0
  %2585 = vmatprep.subr.mxu0 0.0
  %2586 = vmatpush1.msra.mxu0 0.0
  %2587 = vmatprep.subr.mxu0 0.0
  %2588 = vmatpush1.msra.mxu0 0.0
  %2589 = vmatprep.subr.mxu0 0.0
  %2590 = vmatpush1.msra.mxu0 0.0
  %2591 = vmatprep.subr.mxu0 0.0
  %2592 = vmatpush1.msra.mxu0 0.0
  %2593 = vmatprep.subr.mxu0 0.0
  %2594 = vmatpush1.msra.mxu0 0.0
  %2595 = vmatprep.subr.mxu0 0.0
  %2596 = vmatpush1.msra.mxu0 0.0
  %2597 = vmatprep.mubr.f32.mxu0 0.0
  %2598 = vmatmul.mubr.f32.gmra.mrb[0].mxu0 %v2460
  %v2599 = vpop.f32.mrb[0].mxu0
  %v2600 = vadd.f32 0.0, %v2599
  %v2601 = vpop.f32.mrb[0].mxu0
  %v2602 = vadd.f32 0.0, %v2601
  %2603 = vdwg.mxu0
  %v2604 = vadd.f32 %v2422, %v2529
  %v2605 = vadd.f32 %v2423, %v2531
  %v2606 = vadd.f32 %v2424, %v2600
  %v2607 = vadd.f32 %v2425, %v2602
  %s2608 = scalar_lea.vmem %s3, 2816
  %v2609 = vld [vmem:[%s2608] sm:$0xff]
  %v2610 = vld [vmem:[%s2608 + $0x8] sm:$0xff]
  %v2611 = vld [vmem:[%s2608 + $0x10] sm:$0xff]
  %v2612 = vld [vmem:[%s2608 + $0x18] sm:$0xff]
  %v2613 = vld [vmem:[%s2608 + $0x20] sm:$0xff]
  %v2614 = vld [vmem:[%s2608 + $0x28] sm:$0xff]
  %v2615 = vld [vmem:[%s2608 + $0x30] sm:$0xff]
  %v2616 = vld [vmem:[%s2608 + $0x38] sm:$0xff]
  %v2617 = vld [vmem:[%s2608 + $0x40] sm:$0xff]
  %v2618 = vld [vmem:[%s2608 + $0x48] sm:$0xff]
  %v2619 = vld [vmem:[%s2608 + $0x50] sm:$0xff]
  %v2620 = vld [vmem:[%s2608 + $0x58] sm:$0xff]
  %v2621 = vld [vmem:[%s2608 + $0x60] sm:$0xff]
  %v2622 = vld [vmem:[%s2608 + $0x68] sm:$0xff]
  %v2623 = vld [vmem:[%s2608 + $0x70] sm:$0xff]
  %v2624 = vld [vmem:[%s2608 + $0x78] sm:$0xff]
  %v2625 = vld [vmem:[%s2608 + $0x80] sm:$0xff]
  %v2626 = vld [vmem:[%s2608 + $0x88] sm:$0xff]
  %v2627 = vld [vmem:[%s2608 + $0x90] sm:$0xff]
  %v2628 = vld [vmem:[%s2608 + $0x98] sm:$0xff]
  %v2629 = vld [vmem:[%s2608 + $0xa0] sm:$0xff]
  %v2630 = vld [vmem:[%s2608 + $0xa8] sm:$0xff]
  %v2631 = vld [vmem:[%s2608 + $0xb0] sm:$0xff]
  %v2632 = vld [vmem:[%s2608 + $0xb8] sm:$0xff]
  %v2633 = vld [vmem:[%s2608 + $0xc0] sm:$0xff]
  %v2634 = vld [vmem:[%s2608 + $0xc8] sm:$0xff]
  %v2635 = vld [vmem:[%s2608 + $0xd0] sm:$0xff]
  %v2636 = vld [vmem:[%s2608 + $0xd8] sm:$0xff]
  %v2637 = vld [vmem:[%s2608 + $0xe0] sm:$0xff]
  %v2638 = vld [vmem:[%s2608 + $0xe8] sm:$0xff]
  %v2639 = vld [vmem:[%s2608 + $0xf0] sm:$0xff]
  %v2640 = vld [vmem:[%s2608 + $0xf8] sm:$0xff]
  %v2641 = vrot.slane %v604, 6
  %v2642 = vsel %vm172, %v2641, 0
  %2644 = vmatprep.subr.mxu0 %v2610
  %2645 = vmatpush1.msra.mxu0 %v2609
  %2646 = vmatprep.subr.mxu0 %v2614
  %2647 = vmatpush1.msra.mxu0 %v2613
  %2648 = vmatprep.subr.mxu0 %v2618
  %2649 = vmatpush1.msra.mxu0 %v2617
  %2650 = vmatprep.subr.mxu0 %v2622
  %2651 = vmatpush1.msra.mxu0 %v2621
  %2652 = vmatprep.subr.mxu0 %v2626
  %2653 = vmatpush1.msra.mxu0 %v2625
  %2654 = vmatprep.subr.mxu0 %v2630
  %2655 = vmatpush1.msra.mxu0 %v2629
  %2656 = vmatprep.subr.mxu0 %v2634
  %2657 = vmatpush1.msra.mxu0 %v2633
  %2658 = vmatprep.subr.mxu0 %v2638
  %2659 = vmatpush1.msra.mxu0 %v2637
  %2660 = vmatprep.subr.mxu0 0.0
  %2661 = vmatpush1.msra.mxu0 0.0
  %2662 = vmatprep.subr.mxu0 0.0
  %2663 = vmatpush1.msra.mxu0 0.0
  %2664 = vmatprep.subr.mxu0 0.0
  %2665 = vmatpush1.msra.mxu0 0.0
  %2666 = vmatprep.subr.mxu0 0.0
  %2667 = vmatpush1.msra.mxu0 0.0
  %2668 = vmatprep.subr.mxu0 0.0
  %2669 = vmatpush1.msra.mxu0 0.0
  %2670 = vmatprep.subr.mxu0 0.0
  %2671 = vmatpush1.msra.mxu0 0.0
  %2672 = vmatprep.subr.mxu0 0.0
  %2673 = vmatpush1.msra.mxu0 0.0
  %2674 = vmatprep.subr.mxu0 0.0
  %2675 = vmatpush1.msra.mxu0 0.0
  %2676 = vmatprep.subr.mxu0 0.0
  %2677 = vmatpush1.msra.mxu0 0.0
  %2678 = vmatprep.subr.mxu0 0.0
  %2679 = vmatpush1.msra.mxu0 0.0
  %2680 = vmatprep.subr.mxu0 0.0
  %2681 = vmatpush1.msra.mxu0 0.0
  %2682 = vmatprep.subr.mxu0 0.0
  %2683 = vmatpush1.msra.mxu0 0.0
  %2684 = vmatprep.subr.mxu0 0.0
  %2685 = vmatpush1.msra.mxu0 0.0
  %2686 = vmatprep.subr.mxu0 0.0
  %2687 = vmatpush1.msra.mxu0 0.0
  %2688 = vmatprep.subr.mxu0 0.0
  %2689 = vmatpush1.msra.mxu0 0.0
  %2690 = vmatprep.subr.mxu0 0.0
  %2691 = vmatpush1.msra.mxu0 0.0
  %2692 = vmatprep.subr.mxu0 0.0
  %2693 = vmatpush1.msra.mxu0 0.0
  %2694 = vmatprep.subr.mxu0 0.0
  %2695 = vmatpush1.msra.mxu0 0.0
  %2696 = vmatprep.subr.mxu0 0.0
  %2697 = vmatpush1.msra.mxu0 0.0
  %2698 = vmatprep.subr.mxu0 0.0
  %2699 = vmatpush1.msra.mxu0 0.0
  %2700 = vmatprep.subr.mxu0 0.0
  %2701 = vmatpush1.msra.mxu0 0.0
  %2702 = vmatprep.subr.mxu0 0.0
  %2703 = vmatpush1.msra.mxu0 0.0
  %2704 = vmatprep.subr.mxu0 0.0
  %2705 = vmatpush1.msra.mxu0 0.0
  %2706 = vmatprep.subr.mxu0 0.0
  %2707 = vmatpush1.msra.mxu0 0.0
  %2708 = vmatprep.mubr.f32.mxu0 0.0
  %2709 = vmatmul.mubr.f32.gmra.mrb[0].mxu0 %v2642
  %v2710 = vpop.f32.mrb[0].mxu0
  %v2711 = vadd.f32 0.0, %v2710
  %v2712 = vpop.f32.mrb[0].mxu0
  %v2713 = vadd.f32 0.0, %v2712
  %2714 = vdwg.mxu0
  %2715 = vmatprep.subr.mxu0 %v2612
  %2716 = vmatpush1.msra.mxu0 %v2611
  %2717 = vmatprep.subr.mxu0 %v2616
  %2718 = vmatpush1.msra.mxu0 %v2615
  %2719 = vmatprep.subr.mxu0 %v2620
  %2720 = vmatpush1.msra.mxu0 %v2619
  %2721 = vmatprep.subr.mxu0 %v2624
  %2722 = vmatpush1.msra.mxu0 %v2623
  %2723 = vmatprep.subr.mxu0 %v2628
  %2724 = vmatpush1.msra.mxu0 %v2627
  %2725 = vmatprep.subr.mxu0 %v2632
  %2726 = vmatpush1.msra.mxu0 %v2631
  %2727 = vmatprep.subr.mxu0 %v2636
  %2728 = vmatpush1.msra.mxu0 %v2635
  %2729 = vmatprep.subr.mxu0 %v2640
  %2730 = vmatpush1.msra.mxu0 %v2639
  %2731 = vmatprep.subr.mxu0 0.0
  %2732 = vmatpush1.msra.mxu0 0.0
  %2733 = vmatprep.subr.mxu0 0.0
  %2734 = vmatpush1.msra.mxu0 0.0
  %2735 = vmatprep.subr.mxu0 0.0
  %2736 = vmatpush1.msra.mxu0 0.0
  %2737 = vmatprep.subr.mxu0 0.0
  %2738 = vmatpush1.msra.mxu0 0.0
  %2739 = vmatprep.subr.mxu0 0.0
  %2740 = vmatpush1.msra.mxu0 0.0
  %2741 = vmatprep.subr.mxu0 0.0
  %2742 = vmatpush1.msra.mxu0 0.0
  %2743 = vmatprep.subr.mxu0 0.0
  %2744 = vmatpush1.msra.mxu0 0.0
  %2745 = vmatprep.subr.mxu0 0.0
  %2746 = vmatpush1.msra.mxu0 0.0
  %2747 = vmatprep.subr.mxu0 0.0
  %2748 = vmatpush1.msra.mxu0 0.0
  %2749 = vmatprep.subr.mxu0 0.0
  %2750 = vmatpush1.msra.mxu0 0.0
  %2751 = vmatprep.subr.mxu0 0.0
  %2752 = vmatpush1.msra.mxu0 0.0
  %2753 = vmatprep.subr.mxu0 0.0
  %2754 = vmatpush1.msra.mxu0 0.0
  %2755 = vmatprep.subr.mxu0 0.0
  %2756 = vmatpush1.msra.mxu0 0.0
  %2757 = vmatprep.subr.mxu0 0.0
  %2758 = vmatpush1.msra.mxu0 0.0
  %2759 = vmatprep.subr.mxu0 0.0
  %2760 = vmatpush1.msra.mxu0 0.0
  %2761 = vmatprep.subr.mxu0 0.0
  %2762 = vmatpush1.msra.mxu0 0.0
  %2763 = vmatprep.subr.mxu0 0.0
  %2764 = vmatpush1.msra.mxu0 0.0
  %2765 = vmatprep.subr.mxu0 0.0
  %2766 = vmatpush1.msra.mxu0 0.0
  %2767 = vmatprep.subr.mxu0 0.0
  %2768 = vmatpush1.msra.mxu0 0.0
  %2769 = vmatprep.subr.mxu0 0.0
  %2770 = vmatpush1.msra.mxu0 0.0
  %2771 = vmatprep.subr.mxu0 0.0
  %2772 = vmatpush1.msra.mxu0 0.0
  %2773 = vmatprep.subr.mxu0 0.0
  %2774 = vmatpush1.msra.mxu0 0.0
  %2775 = vmatprep.subr.mxu0 0.0
  %2776 = vmatpush1.msra.mxu0 0.0
  %2777 = vmatprep.subr.mxu0 0.0
  %2778 = vmatpush1.msra.mxu0 0.0
  %2779 = vmatprep.mubr.f32.mxu0 0.0
  %2780 = vmatmul.mubr.f32.gmra.mrb[0].mxu0 %v2642
  %v2781 = vpop.f32.mrb[0].mxu0
  %v2782 = vadd.f32 0.0, %v2781
  %v2783 = vpop.f32.mrb[0].mxu0
  %v2784 = vadd.f32 0.0, %v2783
  %2785 = vdwg.mxu0
  %v2786 = vadd.f32 %v2604, %v2711
  %v2787 = vadd.f32 %v2605, %v2713
  %v2788 = vadd.f32 %v2606, %v2782
  %v2789 = vadd.f32 %v2607, %v2784
  %s2790 = scalar_lea.vmem %s3, 3072
  %v2791 = vld [vmem:[%s2790] sm:$0xff]
  %v2792 = vld [vmem:[%s2790 + $0x8] sm:$0xff]
  %v2793 = vld [vmem:[%s2790 + $0x10] sm:$0xff]
  %v2794 = vld [vmem:[%s2790 + $0x18] sm:$0xff]
  %v2795 = vld [vmem:[%s2790 + $0x20] sm:$0xff]
  %v2796 = vld [vmem:[%s2790 + $0x28] sm:$0xff]
  %v2797 = vld [vmem:[%s2790 + $0x30] sm:$0xff]
  %v2798 = vld [vmem:[%s2790 + $0x38] sm:$0xff]
  %v2799 = vld [vmem:[%s2790 + $0x40] sm:$0xff]
  %v2800 = vld [vmem:[%s2790 + $0x48] sm:$0xff]
  %v2801 = vld [vmem:[%s2790 + $0x50] sm:$0xff]
  %v2802 = vld [vmem:[%s2790 + $0x58] sm:$0xff]
  %v2803 = vld [vmem:[%s2790 + $0x60] sm:$0xff]
  %v2804 = vld [vmem:[%s2790 + $0x68] sm:$0xff]
  %v2805 = vld [vmem:[%s2790 + $0x70] sm:$0xff]
  %v2806 = vld [vmem:[%s2790 + $0x78] sm:$0xff]
  %v2807 = vld [vmem:[%s2790 + $0x80] sm:$0xff]
  %v2808 = vld [vmem:[%s2790 + $0x88] sm:$0xff]
  %v2809 = vld [vmem:[%s2790 + $0x90] sm:$0xff]
  %v2810 = vld [vmem:[%s2790 + $0x98] sm:$0xff]
  %v2811 = vld [vmem:[%s2790 + $0xa0] sm:$0xff]
  %v2812 = vld [vmem:[%s2790 + $0xa8] sm:$0xff]
  %v2813 = vld [vmem:[%s2790 + $0xb0] sm:$0xff]
  %v2814 = vld [vmem:[%s2790 + $0xb8] sm:$0xff]
  %v2815 = vld [vmem:[%s2790 + $0xc0] sm:$0xff]
  %v2816 = vld [vmem:[%s2790 + $0xc8] sm:$0xff]
  %v2817 = vld [vmem:[%s2790 + $0xd0] sm:$0xff]
  %v2818 = vld [vmem:[%s2790 + $0xd8] sm:$0xff]
  %v2819 = vld [vmem:[%s2790 + $0xe0] sm:$0xff]
  %v2820 = vld [vmem:[%s2790 + $0xe8] sm:$0xff]
  %v2821 = vld [vmem:[%s2790 + $0xf0] sm:$0xff]
  %v2822 = vld [vmem:[%s2790 + $0xf8] sm:$0xff]
  %v2824 = vsel %vm172, %v605, 0
  %2826 = vmatprep.subr.mxu0 %v2792
  %2827 = vmatpush1.msra.mxu0 %v2791
  %2828 = vmatprep.subr.mxu0 %v2796
  %2829 = vmatpush1.msra.mxu0 %v2795
  %2830 = vmatprep.subr.mxu0 %v2800
  %2831 = vmatpush1.msra.mxu0 %v2799
  %2832 = vmatprep.subr.mxu0 %v2804
  %2833 = vmatpush1.msra.mxu0 %v2803
  %2834 = vmatprep.subr.mxu0 %v2808
  %2835 = vmatpush1.msra.mxu0 %v2807
  %2836 = vmatprep.subr.mxu0 %v2812
  %2837 = vmatpush1.msra.mxu0 %v2811
  %2838 = vmatprep.subr.mxu0 %v2816
  %2839 = vmatpush1.msra.mxu0 %v2815
  %2840 = vmatprep.subr.mxu0 %v2820
  %2841 = vmatpush1.msra.mxu0 %v2819
  %2842 = vmatprep.subr.mxu0 0.0
  %2843 = vmatpush1.msra.mxu0 0.0
  %2844 = vmatprep.subr.mxu0 0.0
  %2845 = vmatpush1.msra.mxu0 0.0
  %2846 = vmatprep.subr.mxu0 0.0
  %2847 = vmatpush1.msra.mxu0 0.0
  %2848 = vmatprep.subr.mxu0 0.0
  %2849 = vmatpush1.msra.mxu0 0.0
  %2850 = vmatprep.subr.mxu0 0.0
  %2851 = vmatpush1.msra.mxu0 0.0
  %2852 = vmatprep.subr.mxu0 0.0
  %2853 = vmatpush1.msra.mxu0 0.0
  %2854 = vmatprep.subr.mxu0 0.0
  %2855 = vmatpush1.msra.mxu0 0.0
  %2856 = vmatprep.subr.mxu0 0.0
  %2857 = vmatpush1.msra.mxu0 0.0
  %2858 = vmatprep.subr.mxu0 0.0
  %2859 = vmatpush1.msra.mxu0 0.0
  %2860 = vmatprep.subr.mxu0 0.0
  %2861 = vmatpush1.msra.mxu0 0.0
  %2862 = vmatprep.subr.mxu0 0.0
  %2863 = vmatpush1.msra.mxu0 0.0
  %2864 = vmatprep.subr.mxu0 0.0
  %2865 = vmatpush1.msra.mxu0 0.0
  %2866 = vmatprep.subr.mxu0 0.0
  %2867 = vmatpush1.msra.mxu0 0.0
  %2868 = vmatprep.subr.mxu0 0.0
  %2869 = vmatpush1.msra.mxu0 0.0
  %2870 = vmatprep.subr.mxu0 0.0
  %2871 = vmatpush1.msra.mxu0 0.0
  %2872 = vmatprep.subr.mxu0 0.0
  %2873 = vmatpush1.msra.mxu0 0.0
  %2874 = vmatprep.subr.mxu0 0.0
  %2875 = vmatpush1.msra.mxu0 0.0
  %2876 = vmatprep.subr.mxu0 0.0
  %2877 = vmatpush1.msra.mxu0 0.0
  %2878 = vmatprep.subr.mxu0 0.0
  %2879 = vmatpush1.msra.mxu0 0.0
  %2880 = vmatprep.subr.mxu0 0.0
  %2881 = vmatpush1.msra.mxu0 0.0
  %2882 = vmatprep.subr.mxu0 0.0
  %2883 = vmatpush1.msra.mxu0 0.0
  %2884 = vmatprep.subr.mxu0 0.0
  %2885 = vmatpush1.msra.mxu0 0.0
  %2886 = vmatprep.subr.mxu0 0.0
  %2887 = vmatpush1.msra.mxu0 0.0
  %2888 = vmatprep.subr.mxu0 0.0
  %2889 = vmatpush1.msra.mxu0 0.0
  %2890 = vmatprep.mubr.f32.mxu0 0.0
  %2891 = vmatmul.mubr.f32.gmra.mrb[0].mxu0 %v2824
  %v2892 = vpop.f32.mrb[0].mxu0
  %v2893 = vadd.f32 0.0, %v2892
  %v2894 = vpop.f32.mrb[0].mxu0
  %v2895 = vadd.f32 0.0, %v2894
  %2896 = vdwg.mxu0
  %2897 = vmatprep.subr.mxu0 %v2794
  %2898 = vmatpush1.msra.mxu0 %v2793
  %2899 = vmatprep.subr.mxu0 %v2798
  %2900 = vmatpush1.msra.mxu0 %v2797
  %2901 = vmatprep.subr.mxu0 %v2802
  %2902 = vmatpush1.msra.mxu0 %v2801
  %2903 = vmatprep.subr.mxu0 %v2806
  %2904 = vmatpush1.msra.mxu0 %v2805
  %2905 = vmatprep.subr.mxu0 %v2810
  %2906 = vmatpush1.msra.mxu0 %v2809
  %2907 = vmatprep.subr.mxu0 %v2814
  %2908 = vmatpush1.msra.mxu0 %v2813
  %2909 = vmatprep.subr.mxu0 %v2818
  %2910 = vmatpush1.msra.mxu0 %v2817
  %2911 = vmatprep.subr.mxu0 %v2822
  %2912 = vmatpush1.msra.mxu0 %v2821
  %2913 = vmatprep.subr.mxu0 0.0
  %2914 = vmatpush1.msra.mxu0 0.0
  %2915 = vmatprep.subr.mxu0 0.0
  %2916 = vmatpush1.msra.mxu0 0.0
  %2917 = vmatprep.subr.mxu0 0.0
  %2918 = vmatpush1.msra.mxu0 0.0
  %2919 = vmatprep.subr.mxu0 0.0
  %2920 = vmatpush1.msra.mxu0 0.0
  %2921 = vmatprep.subr.mxu0 0.0
  %2922 = vmatpush1.msra.mxu0 0.0
  %2923 = vmatprep.subr.mxu0 0.0
  %2924 = vmatpush1.msra.mxu0 0.0
  %2925 = vmatprep.subr.mxu0 0.0
  %2926 = vmatpush1.msra.mxu0 0.0
  %2927 = vmatprep.subr.mxu0 0.0
  %2928 = vmatpush1.msra.mxu0 0.0
  %2929 = vmatprep.subr.mxu0 0.0
  %2930 = vmatpush1.msra.mxu0 0.0
  %2931 = vmatprep.subr.mxu0 0.0
  %2932 = vmatpush1.msra.mxu0 0.0
  %2933 = vmatprep.subr.mxu0 0.0
  %2934 = vmatpush1.msra.mxu0 0.0
  %2935 = vmatprep.subr.mxu0 0.0
  %2936 = vmatpush1.msra.mxu0 0.0
  %2937 = vmatprep.subr.mxu0 0.0
  %2938 = vmatpush1.msra.mxu0 0.0
  %2939 = vmatprep.subr.mxu0 0.0
  %2940 = vmatpush1.msra.mxu0 0.0
  %2941 = vmatprep.subr.mxu0 0.0
  %2942 = vmatpush1.msra.mxu0 0.0
  %2943 = vmatprep.subr.mxu0 0.0
  %2944 = vmatpush1.msra.mxu0 0.0
  %2945 = vmatprep.subr.mxu0 0.0
  %2946 = vmatpush1.msra.mxu0 0.0
  %2947 = vmatprep.subr.mxu0 0.0
  %2948 = vmatpush1.msra.mxu0 0.0
  %2949 = vmatprep.subr.mxu0 0.0
  %2950 = vmatpush1.msra.mxu0 0.0
  %2951 = vmatprep.subr.mxu0 0.0
  %2952 = vmatpush1.msra.mxu0 0.0
  %2953 = vmatprep.subr.mxu0 0.0
  %2954 = vmatpush1.msra.mxu0 0.0
  %2955 = vmatprep.subr.mxu0 0.0
  %2956 = vmatpush1.msra.mxu0 0.0
  %2957 = vmatprep.subr.mxu0 0.0
  %2958 = vmatpush1.msra.mxu0 0.0
  %2959 = vmatprep.subr.mxu0 0.0
  %2960 = vmatpush1.msra.mxu0 0.0
  %2961 = vmatprep.mubr.f32.mxu0 0.0
  %2962 = vmatmul.mubr.f32.gmra.mrb[0].mxu0 %v2824
  %v2963 = vpop.f32.mrb[0].mxu0
  %v2964 = vadd.f32 0.0, %v2963
  %v2965 = vpop.f32.mrb[0].mxu0
  %v2966 = vadd.f32 0.0, %v2965
  %2967 = vdwg.mxu0
  %v2968 = vadd.f32 %v2786, %v2893
  %v2969 = vadd.f32 %v2787, %v2895
  %v2970 = vadd.f32 %v2788, %v2964
  %v2971 = vadd.f32 %v2789, %v2966
  %s2972 = scalar_lea.vmem %s3, 3328
  %v2973 = vld [vmem:[%s2972] sm:$0xff]
  %v2974 = vld [vmem:[%s2972 + $0x8] sm:$0xff]
  %v2975 = vld [vmem:[%s2972 + $0x10] sm:$0xff]
  %v2976 = vld [vmem:[%s2972 + $0x18] sm:$0xff]
  %v2977 = vld [vmem:[%s2972 + $0x20] sm:$0xff]
  %v2978 = vld [vmem:[%s2972 + $0x28] sm:$0xff]
  %v2979 = vld [vmem:[%s2972 + $0x30] sm:$0xff]
  %v2980 = vld [vmem:[%s2972 + $0x38] sm:$0xff]
  %v2981 = vld [vmem:[%s2972 + $0x40] sm:$0xff]
  %v2982 = vld [vmem:[%s2972 + $0x48] sm:$0xff]
  %v2983 = vld [vmem:[%s2972 + $0x50] sm:$0xff]
  %v2984 = vld [vmem:[%s2972 + $0x58] sm:$0xff]
  %v2985 = vld [vmem:[%s2972 + $0x60] sm:$0xff]
  %v2986 = vld [vmem:[%s2972 + $0x68] sm:$0xff]
  %v2987 = vld [vmem:[%s2972 + $0x70] sm:$0xff]
  %v2988 = vld [vmem:[%s2972 + $0x78] sm:$0xff]
  %v2989 = vld [vmem:[%s2972 + $0x80] sm:$0xff]
  %v2990 = vld [vmem:[%s2972 + $0x88] sm:$0xff]
  %v2991 = vld [vmem:[%s2972 + $0x90] sm:$0xff]
  %v2992 = vld [vmem:[%s2972 + $0x98] sm:$0xff]
  %v2993 = vld [vmem:[%s2972 + $0xa0] sm:$0xff]
  %v2994 = vld [vmem:[%s2972 + $0xa8] sm:$0xff]
  %v2995 = vld [vmem:[%s2972 + $0xb0] sm:$0xff]
  %v2996 = vld [vmem:[%s2972 + $0xb8] sm:$0xff]
  %v2997 = vld [vmem:[%s2972 + $0xc0] sm:$0xff]
  %v2998 = vld [vmem:[%s2972 + $0xc8] sm:$0xff]
  %v2999 = vld [vmem:[%s2972 + $0xd0] sm:$0xff]
  %v3000 = vld [vmem:[%s2972 + $0xd8] sm:$0xff]
  %v3001 = vld [vmem:[%s2972 + $0xe0] sm:$0xff]
  %v3002 = vld [vmem:[%s2972 + $0xe8] sm:$0xff]
  %v3003 = vld [vmem:[%s2972 + $0xf0] sm:$0xff]
  %v3004 = vld [vmem:[%s2972 + $0xf8] sm:$0xff]
  %v3005 = vrot.slane %v605, 2
  %v3006 = vsel %vm172, %v3005, 0
  %3008 = vmatprep.subr.mxu0 %v2974
  %3009 = vmatpush1.msra.mxu0 %v2973
  %3010 = vmatprep.subr.mxu0 %v2978
  %3011 = vmatpush1.msra.mxu0 %v2977
  %3012 = vmatprep.subr.mxu0 %v2982
  %3013 = vmatpush1.msra.mxu0 %v2981
  %3014 = vmatprep.subr.mxu0 %v2986
  %3015 = vmatpush1.msra.mxu0 %v2985
  %3016 = vmatprep.subr.mxu0 %v2990
  %3017 = vmatpush1.msra.mxu0 %v2989
  %3018 = vmatprep.subr.mxu0 %v2994
  %3019 = vmatpush1.msra.mxu0 %v2993
  %3020 = vmatprep.subr.mxu0 %v2998
  %3021 = vmatpush1.msra.mxu0 %v2997
  %3022 = vmatprep.subr.mxu0 %v3002
  %3023 = vmatpush1.msra.mxu0 %v3001
  %3024 = vmatprep.subr.mxu0 0.0
  %3025 = vmatpush1.msra.mxu0 0.0
  %3026 = vmatprep.subr.mxu0 0.0
  %3027 = vmatpush1.msra.mxu0 0.0
  %3028 = vmatprep.subr.mxu0 0.0
  %3029 = vmatpush1.msra.mxu0 0.0
  %3030 = vmatprep.subr.mxu0 0.0
  %3031 = vmatpush1.msra.mxu0 0.0
  %3032 = vmatprep.subr.mxu0 0.0
  %3033 = vmatpush1.msra.mxu0 0.0
  %3034 = vmatprep.subr.mxu0 0.0
  %3035 = vmatpush1.msra.mxu0 0.0
  %3036 = vmatprep.subr.mxu0 0.0
  %3037 = vmatpush1.msra.mxu0 0.0
  %3038 = vmatprep.subr.mxu0 0.0
  %3039 = vmatpush1.msra.mxu0 0.0
  %3040 = vmatprep.subr.mxu0 0.0
  %3041 = vmatpush1.msra.mxu0 0.0
  %3042 = vmatprep.subr.mxu0 0.0
  %3043 = vmatpush1.msra.mxu0 0.0
  %3044 = vmatprep.subr.mxu0 0.0
  %3045 = vmatpush1.msra.mxu0 0.0
  %3046 = vmatprep.subr.mxu0 0.0
  %3047 = vmatpush1.msra.mxu0 0.0
  %3048 = vmatprep.subr.mxu0 0.0
  %3049 = vmatpush1.msra.mxu0 0.0
  %3050 = vmatprep.subr.mxu0 0.0
  %3051 = vmatpush1.msra.mxu0 0.0
  %3052 = vmatprep.subr.mxu0 0.0
  %3053 = vmatpush1.msra.mxu0 0.0
  %3054 = vmatprep.subr.mxu0 0.0
  %3055 = vmatpush1.msra.mxu0 0.0
  %3056 = vmatprep.subr.mxu0 0.0
  %3057 = vmatpush1.msra.mxu0 0.0
  %3058 = vmatprep.subr.mxu0 0.0
  %3059 = vmatpush1.msra.mxu0 0.0
  %3060 = vmatprep.subr.mxu0 0.0
  %3061 = vmatpush1.msra.mxu0 0.0
  %3062 = vmatprep.subr.mxu0 0.0
  %3063 = vmatpush1.msra.mxu0 0.0
  %3064 = vmatprep.subr.mxu0 0.0
  %3065 = vmatpush1.msra.mxu0 0.0
  %3066 = vmatprep.subr.mxu0 0.0
  %3067 = vmatpush1.msra.mxu0 0.0
  %3068 = vmatprep.subr.mxu0 0.0
  %3069 = vmatpush1.msra.mxu0 0.0
  %3070 = vmatprep.subr.mxu0 0.0
  %3071 = vmatpush1.msra.mxu0 0.0
  %3072 = vmatprep.mubr.f32.mxu0 0.0
  %3073 = vmatmul.mubr.f32.gmra.mrb[0].mxu0 %v3006
  %v3074 = vpop.f32.mrb[0].mxu0
  %v3075 = vadd.f32 0.0, %v3074
  %v3076 = vpop.f32.mrb[0].mxu0
  %v3077 = vadd.f32 0.0, %v3076
  %3078 = vdwg.mxu0
  %3079 = vmatprep.subr.mxu0 %v2976
  %3080 = vmatpush1.msra.mxu0 %v2975
  %3081 = vmatprep.subr.mxu0 %v2980
  %3082 = vmatpush1.msra.mxu0 %v2979
  %3083 = vmatprep.subr.mxu0 %v2984
  %3084 = vmatpush1.msra.mxu0 %v2983
  %3085 = vmatprep.subr.mxu0 %v2988
  %3086 = vmatpush1.msra.mxu0 %v2987
  %3087 = vmatprep.subr.mxu0 %v2992
  %3088 = vmatpush1.msra.mxu0 %v2991
  %3089 = vmatprep.subr.mxu0 %v2996
  %3090 = vmatpush1.msra.mxu0 %v2995
  %3091 = vmatprep.subr.mxu0 %v3000
  %3092 = vmatpush1.msra.mxu0 %v2999
  %3093 = vmatprep.subr.mxu0 %v3004
  %3094 = vmatpush1.msra.mxu0 %v3003
  %3095 = vmatprep.subr.mxu0 0.0
  %3096 = vmatpush1.msra.mxu0 0.0
  %3097 = vmatprep.subr.mxu0 0.0
  %3098 = vmatpush1.msra.mxu0 0.0
  %3099 = vmatprep.subr.mxu0 0.0
  %3100 = vmatpush1.msra.mxu0 0.0
  %3101 = vmatprep.subr.mxu0 0.0
  %3102 = vmatpush1.msra.mxu0 0.0
  %3103 = vmatprep.subr.mxu0 0.0
  %3104 = vmatpush1.msra.mxu0 0.0
  %3105 = vmatprep.subr.mxu0 0.0
  %3106 = vmatpush1.msra.mxu0 0.0
  %3107 = vmatprep.subr.mxu0 0.0
  %3108 = vmatpush1.msra.mxu0 0.0
  %3109 = vmatprep.subr.mxu0 0.0
  %3110 = vmatpush1.msra.mxu0 0.0
  %3111 = vmatprep.subr.mxu0 0.0
  %3112 = vmatpush1.msra.mxu0 0.0
  %3113 = vmatprep.subr.mxu0 0.0
  %3114 = vmatpush1.msra.mxu0 0.0
  %3115 = vmatprep.subr.mxu0 0.0
  %3116 = vmatpush1.msra.mxu0 0.0
  %3117 = vmatprep.subr.mxu0 0.0
  %3118 = vmatpush1.msra.mxu0 0.0
  %3119 = vmatprep.subr.mxu0 0.0
  %3120 = vmatpush1.msra.mxu0 0.0
  %3121 = vmatprep.subr.mxu0 0.0
  %3122 = vmatpush1.msra.mxu0 0.0
  %3123 = vmatprep.subr.mxu0 0.0
  %3124 = vmatpush1.msra.mxu0 0.0
  %3125 = vmatprep.subr.mxu0 0.0
  %3126 = vmatpush1.msra.mxu0 0.0
  %3127 = vmatprep.subr.mxu0 0.0
  %3128 = vmatpush1.msra.mxu0 0.0
  %3129 = vmatprep.subr.mxu0 0.0
  %3130 = vmatpush1.msra.mxu0 0.0
  %3131 = vmatprep.subr.mxu0 0.0
  %3132 = vmatpush1.msra.mxu0 0.0
  %3133 = vmatprep.subr.mxu0 0.0
  %3134 = vmatpush1.msra.mxu0 0.0
  %3135 = vmatprep.subr.mxu0 0.0
  %3136 = vmatpush1.msra.mxu0 0.0
  %3137 = vmatprep.subr.mxu0 0.0
  %3138 = vmatpush1.msra.mxu0 0.0
  %3139 = vmatprep.subr.mxu0 0.0
  %3140 = vmatpush1.msra.mxu0 0.0
  %3141 = vmatprep.subr.mxu0 0.0
  %3142 = vmatpush1.msra.mxu0 0.0
  %3143 = vmatprep.mubr.f32.mxu0 0.0
  %3144 = vmatmul.mubr.f32.gmra.mrb[0].mxu0 %v3006
  %v3145 = vpop.f32.mrb[0].mxu0
  %v3146 = vadd.f32 0.0, %v3145
  %v3147 = vpop.f32.mrb[0].mxu0
  %v3148 = vadd.f32 0.0, %v3147
  %3149 = vdwg.mxu0
  %v3150 = vadd.f32 %v2968, %v3075
  %v3151 = vadd.f32 %v2969, %v3077
  %v3152 = vadd.f32 %v2970, %v3146
  %v3153 = vadd.f32 %v2971, %v3148
  %s3154 = scalar_lea.vmem %s3, 3584
  %v3155 = vld [vmem:[%s3154] sm:$0xff]
  %v3156 = vld [vmem:[%s3154 + $0x8] sm:$0xff]
  %v3157 = vld [vmem:[%s3154 + $0x10] sm:$0xff]
  %v3158 = vld [vmem:[%s3154 + $0x18] sm:$0xff]
  %v3159 = vld [vmem:[%s3154 + $0x20] sm:$0xff]
  %v3160 = vld [vmem:[%s3154 + $0x28] sm:$0xff]
  %v3161 = vld [vmem:[%s3154 + $0x30] sm:$0xff]
  %v3162 = vld [vmem:[%s3154 + $0x38] sm:$0xff]
  %v3163 = vld [vmem:[%s3154 + $0x40] sm:$0xff]
  %v3164 = vld [vmem:[%s3154 + $0x48] sm:$0xff]
  %v3165 = vld [vmem:[%s3154 + $0x50] sm:$0xff]
  %v3166 = vld [vmem:[%s3154 + $0x58] sm:$0xff]
  %v3167 = vld [vmem:[%s3154 + $0x60] sm:$0xff]
  %v3168 = vld [vmem:[%s3154 + $0x68] sm:$0xff]
  %v3169 = vld [vmem:[%s3154 + $0x70] sm:$0xff]
  %v3170 = vld [vmem:[%s3154 + $0x78] sm:$0xff]
  %v3171 = vld [vmem:[%s3154 + $0x80] sm:$0xff]
  %v3172 = vld [vmem:[%s3154 + $0x88] sm:$0xff]
  %v3173 = vld [vmem:[%s3154 + $0x90] sm:$0xff]
  %v3174 = vld [vmem:[%s3154 + $0x98] sm:$0xff]
  %v3175 = vld [vmem:[%s3154 + $0xa0] sm:$0xff]
  %v3176 = vld [vmem:[%s3154 + $0xa8] sm:$0xff]
  %v3177 = vld [vmem:[%s3154 + $0xb0] sm:$0xff]
  %v3178 = vld [vmem:[%s3154 + $0xb8] sm:$0xff]
  %v3179 = vld [vmem:[%s3154 + $0xc0] sm:$0xff]
  %v3180 = vld [vmem:[%s3154 + $0xc8] sm:$0xff]
  %v3181 = vld [vmem:[%s3154 + $0xd0] sm:$0xff]
  %v3182 = vld [vmem:[%s3154 + $0xd8] sm:$0xff]
  %v3183 = vld [vmem:[%s3154 + $0xe0] sm:$0xff]
  %v3184 = vld [vmem:[%s3154 + $0xe8] sm:$0xff]
  %v3185 = vld [vmem:[%s3154 + $0xf0] sm:$0xff]
  %v3186 = vld [vmem:[%s3154 + $0xf8] sm:$0xff]
  %v3187 = vrot.slane %v605, 4
  %v3188 = vsel %vm172, %v3187, 0
  %3190 = vmatprep.subr.mxu0 %v3156
  %3191 = vmatpush1.msra.mxu0 %v3155
  %3192 = vmatprep.subr.mxu0 %v3160
  %3193 = vmatpush1.msra.mxu0 %v3159
  %3194 = vmatprep.subr.mxu0 %v3164
  %3195 = vmatpush1.msra.mxu0 %v3163
  %3196 = vmatprep.subr.mxu0 %v3168
  %3197 = vmatpush1.msra.mxu0 %v3167
  %3198 = vmatprep.subr.mxu0 %v3172
  %3199 = vmatpush1.msra.mxu0 %v3171
  %3200 = vmatprep.subr.mxu0 %v3176
  %3201 = vmatpush1.msra.mxu0 %v3175
  %3202 = vmatprep.subr.mxu0 %v3180
  %3203 = vmatpush1.msra.mxu0 %v3179
  %3204 = vmatprep.subr.mxu0 %v3184
  %3205 = vmatpush1.msra.mxu0 %v3183
  %3206 = vmatprep.subr.mxu0 0.0
  %3207 = vmatpush1.msra.mxu0 0.0
  %3208 = vmatprep.subr.mxu0 0.0
  %3209 = vmatpush1.msra.mxu0 0.0
  %3210 = vmatprep.subr.mxu0 0.0
  %3211 = vmatpush1.msra.mxu0 0.0
  %3212 = vmatprep.subr.mxu0 0.0
  %3213 = vmatpush1.msra.mxu0 0.0
  %3214 = vmatprep.subr.mxu0 0.0
  %3215 = vmatpush1.msra.mxu0 0.0
  %3216 = vmatprep.subr.mxu0 0.0
  %3217 = vmatpush1.msra.mxu0 0.0
  %3218 = vmatprep.subr.mxu0 0.0
  %3219 = vmatpush1.msra.mxu0 0.0
  %3220 = vmatprep.subr.mxu0 0.0
  %3221 = vmatpush1.msra.mxu0 0.0
  %3222 = vmatprep.subr.mxu0 0.0
  %3223 = vmatpush1.msra.mxu0 0.0
  %3224 = vmatprep.subr.mxu0 0.0
  %3225 = vmatpush1.msra.mxu0 0.0
  %3226 = vmatprep.subr.mxu0 0.0
  %3227 = vmatpush1.msra.mxu0 0.0
  %3228 = vmatprep.subr.mxu0 0.0
  %3229 = vmatpush1.msra.mxu0 0.0
  %3230 = vmatprep.subr.mxu0 0.0
  %3231 = vmatpush1.msra.mxu0 0.0
  %3232 = vmatprep.subr.mxu0 0.0
  %3233 = vmatpush1.msra.mxu0 0.0
  %3234 = vmatprep.subr.mxu0 0.0
  %3235 = vmatpush1.msra.mxu0 0.0
  %3236 = vmatprep.subr.mxu0 0.0
  %3237 = vmatpush1.msra.mxu0 0.0
  %3238 = vmatprep.subr.mxu0 0.0
  %3239 = vmatpush1.msra.mxu0 0.0
  %3240 = vmatprep.subr.mxu0 0.0
  %3241 = vmatpush1.msra.mxu0 0.0
  %3242 = vmatprep.subr.mxu0 0.0
  %3243 = vmatpush1.msra.mxu0 0.0
  %3244 = vmatprep.subr.mxu0 0.0
  %3245 = vmatpush1.msra.mxu0 0.0
  %3246 = vmatprep.subr.mxu0 0.0
  %3247 = vmatpush1.msra.mxu0 0.0
  %3248 = vmatprep.subr.mxu0 0.0
  %3249 = vmatpush1.msra.mxu0 0.0
  %3250 = vmatprep.subr.mxu0 0.0
  %3251 = vmatpush1.msra.mxu0 0.0
  %3252 = vmatprep.subr.mxu0 0.0
  %3253 = vmatpush1.msra.mxu0 0.0
  %3254 = vmatprep.mubr.f32.mxu0 0.0
  %3255 = vmatmul.mubr.f32.gmra.mrb[0].mxu0 %v3188
  %v3256 = vpop.f32.mrb[0].mxu0
  %v3257 = vadd.f32 0.0, %v3256
  %v3258 = vpop.f32.mrb[0].mxu0
  %v3259 = vadd.f32 0.0, %v3258
  %3260 = vdwg.mxu0
  %3261 = vmatprep.subr.mxu0 %v3158
  %3262 = vmatpush1.msra.mxu0 %v3157
  %3263 = vmatprep.subr.mxu0 %v3162
  %3264 = vmatpush1.msra.mxu0 %v3161
  %3265 = vmatprep.subr.mxu0 %v3166
  %3266 = vmatpush1.msra.mxu0 %v3165
  %3267 = vmatprep.subr.mxu0 %v3170
  %3268 = vmatpush1.msra.mxu0 %v3169
  %3269 = vmatprep.subr.mxu0 %v3174
  %3270 = vmatpush1.msra.mxu0 %v3173
  %3271 = vmatprep.subr.mxu0 %v3178
  %3272 = vmatpush1.msra.mxu0 %v3177
  %3273 = vmatprep.subr.mxu0 %v3182
  %3274 = vmatpush1.msra.mxu0 %v3181
  %3275 = vmatprep.subr.mxu0 %v3186
  %3276 = vmatpush1.msra.mxu0 %v3185
  %3277 = vmatprep.subr.mxu0 0.0
  %3278 = vmatpush1.msra.mxu0 0.0
  %3279 = vmatprep.subr.mxu0 0.0
  %3280 = vmatpush1.msra.mxu0 0.0
  %3281 = vmatprep.subr.mxu0 0.0
  %3282 = vmatpush1.msra.mxu0 0.0
  %3283 = vmatprep.subr.mxu0 0.0
  %3284 = vmatpush1.msra.mxu0 0.0
  %3285 = vmatprep.subr.mxu0 0.0
  %3286 = vmatpush1.msra.mxu0 0.0
  %3287 = vmatprep.subr.mxu0 0.0
  %3288 = vmatpush1.msra.mxu0 0.0
  %3289 = vmatprep.subr.mxu0 0.0
  %3290 = vmatpush1.msra.mxu0 0.0
  %3291 = vmatprep.subr.mxu0 0.0
  %3292 = vmatpush1.msra.mxu0 0.0
  %3293 = vmatprep.subr.mxu0 0.0
  %3294 = vmatpush1.msra.mxu0 0.0
  %3295 = vmatprep.subr.mxu0 0.0
  %3296 = vmatpush1.msra.mxu0 0.0
  %3297 = vmatprep.subr.mxu0 0.0
  %3298 = vmatpush1.msra.mxu0 0.0
  %3299 = vmatprep.subr.mxu0 0.0
  %3300 = vmatpush1.msra.mxu0 0.0
  %3301 = vmatprep.subr.mxu0 0.0
  %3302 = vmatpush1.msra.mxu0 0.0
  %3303 = vmatprep.subr.mxu0 0.0
  %3304 = vmatpush1.msra.mxu0 0.0
  %3305 = vmatprep.subr.mxu0 0.0
  %3306 = vmatpush1.msra.mxu0 0.0
  %3307 = vmatprep.subr.mxu0 0.0
  %3308 = vmatpush1.msra.mxu0 0.0
  %3309 = vmatprep.subr.mxu0 0.0
  %3310 = vmatpush1.msra.mxu0 0.0
  %3311 = vmatprep.subr.mxu0 0.0
  %3312 = vmatpush1.msra.mxu0 0.0
  %3313 = vmatprep.subr.mxu0 0.0
  %3314 = vmatpush1.msra.mxu0 0.0
  %3315 = vmatprep.subr.mxu0 0.0
  %3316 = vmatpush1.msra.mxu0 0.0
  %3317 = vmatprep.subr.mxu0 0.0
  %3318 = vmatpush1.msra.mxu0 0.0
  %3319 = vmatprep.subr.mxu0 0.0
  %3320 = vmatpush1.msra.mxu0 0.0
  %3321 = vmatprep.subr.mxu0 0.0
  %3322 = vmatpush1.msra.mxu0 0.0
  %3323 = vmatprep.subr.mxu0 0.0
  %3324 = vmatpush1.msra.mxu0 0.0
  %3325 = vmatprep.mubr.f32.mxu0 0.0
  %3326 = vmatmul.mubr.f32.gmra.mrb[0].mxu0 %v3188
  %v3327 = vpop.f32.mrb[0].mxu0
  %v3328 = vadd.f32 0.0, %v3327
  %v3329 = vpop.f32.mrb[0].mxu0
  %v3330 = vadd.f32 0.0, %v3329
  %3331 = vdwg.mxu0
  %v3332 = vadd.f32 %v3150, %v3257
  %v3333 = vadd.f32 %v3151, %v3259
  %v3334 = vadd.f32 %v3152, %v3328
  %v3335 = vadd.f32 %v3153, %v3330
  %s3336 = scalar_lea.vmem %s3, 3840
  %v3337 = vld [vmem:[%s3336] sm:$0xff]
  %v3338 = vld [vmem:[%s3336 + $0x8] sm:$0xff]
  %v3339 = vld [vmem:[%s3336 + $0x10] sm:$0xff]
  %v3340 = vld [vmem:[%s3336 + $0x18] sm:$0xff]
  %v3341 = vld [vmem:[%s3336 + $0x20] sm:$0xff]
  %v3342 = vld [vmem:[%s3336 + $0x28] sm:$0xff]
  %v3343 = vld [vmem:[%s3336 + $0x30] sm:$0xff]
  %v3344 = vld [vmem:[%s3336 + $0x38] sm:$0xff]
  %v3345 = vld [vmem:[%s3336 + $0x40] sm:$0xff]
  %v3346 = vld [vmem:[%s3336 + $0x48] sm:$0xff]
  %v3347 = vld [vmem:[%s3336 + $0x50] sm:$0xff]
  %v3348 = vld [vmem:[%s3336 + $0x58] sm:$0xff]
  %v3349 = vld [vmem:[%s3336 + $0x60] sm:$0xff]
  %v3350 = vld [vmem:[%s3336 + $0x68] sm:$0xff]
  %v3351 = vld [vmem:[%s3336 + $0x70] sm:$0xff]
  %v3352 = vld [vmem:[%s3336 + $0x78] sm:$0xff]
  %v3353 = vld [vmem:[%s3336 + $0x80] sm:$0xff]
  %v3354 = vld [vmem:[%s3336 + $0x88] sm:$0xff]
  %v3355 = vld [vmem:[%s3336 + $0x90] sm:$0xff]
  %v3356 = vld [vmem:[%s3336 + $0x98] sm:$0xff]
  %v3357 = vld [vmem:[%s3336 + $0xa0] sm:$0xff]
  %v3358 = vld [vmem:[%s3336 + $0xa8] sm:$0xff]
  %v3359 = vld [vmem:[%s3336 + $0xb0] sm:$0xff]
  %v3360 = vld [vmem:[%s3336 + $0xb8] sm:$0xff]
  %v3361 = vld [vmem:[%s3336 + $0xc0] sm:$0xff]
  %v3362 = vld [vmem:[%s3336 + $0xc8] sm:$0xff]
  %v3363 = vld [vmem:[%s3336 + $0xd0] sm:$0xff]
  %v3364 = vld [vmem:[%s3336 + $0xd8] sm:$0xff]
  %v3365 = vld [vmem:[%s3336 + $0xe0] sm:$0xff]
  %v3366 = vld [vmem:[%s3336 + $0xe8] sm:$0xff]
  %v3367 = vld [vmem:[%s3336 + $0xf0] sm:$0xff]
  %v3368 = vld [vmem:[%s3336 + $0xf8] sm:$0xff]
  %v3369 = vrot.slane %v605, 6
  %v3370 = vsel %vm172, %v3369, 0
  %3372 = vmatprep.subr.mxu0 %v3338
  %3373 = vmatpush1.msra.mxu0 %v3337
  %3374 = vmatprep.subr.mxu0 %v3342
  %3375 = vmatpush1.msra.mxu0 %v3341
  %3376 = vmatprep.subr.mxu0 %v3346
  %3377 = vmatpush1.msra.mxu0 %v3345
  %3378 = vmatprep.subr.mxu0 %v3350
  %3379 = vmatpush1.msra.mxu0 %v3349
  %3380 = vmatprep.subr.mxu0 %v3354
  %3381 = vmatpush1.msra.mxu0 %v3353
  %3382 = vmatprep.subr.mxu0 %v3358
  %3383 = vmatpush1.msra.mxu0 %v3357
  %3384 = vmatprep.subr.mxu0 %v3362
  %3385 = vmatpush1.msra.mxu0 %v3361
  %3386 = vmatprep.subr.mxu0 %v3366
  %3387 = vmatpush1.msra.mxu0 %v3365
  %3388 = vmatprep.subr.mxu0 0.0
  %3389 = vmatpush1.msra.mxu0 0.0
  %3390 = vmatprep.subr.mxu0 0.0
  %3391 = vmatpush1.msra.mxu0 0.0
  %3392 = vmatprep.subr.mxu0 0.0
  %3393 = vmatpush1.msra.mxu0 0.0
  %3394 = vmatprep.subr.mxu0 0.0
  %3395 = vmatpush1.msra.mxu0 0.0
  %3396 = vmatprep.subr.mxu0 0.0
  %3397 = vmatpush1.msra.mxu0 0.0
  %3398 = vmatprep.subr.mxu0 0.0
  %3399 = vmatpush1.msra.mxu0 0.0
  %3400 = vmatprep.subr.mxu0 0.0
  %3401 = vmatpush1.msra.mxu0 0.0
  %3402 = vmatprep.subr.mxu0 0.0
  %3403 = vmatpush1.msra.mxu0 0.0
  %3404 = vmatprep.subr.mxu0 0.0
  %3405 = vmatpush1.msra.mxu0 0.0
  %3406 = vmatprep.subr.mxu0 0.0
  %3407 = vmatpush1.msra.mxu0 0.0
  %3408 = vmatprep.subr.mxu0 0.0
  %3409 = vmatpush1.msra.mxu0 0.0
  %3410 = vmatprep.subr.mxu0 0.0
  %3411 = vmatpush1.msra.mxu0 0.0
  %3412 = vmatprep.subr.mxu0 0.0
  %3413 = vmatpush1.msra.mxu0 0.0
  %3414 = vmatprep.subr.mxu0 0.0
  %3415 = vmatpush1.msra.mxu0 0.0
  %3416 = vmatprep.subr.mxu0 0.0
  %3417 = vmatpush1.msra.mxu0 0.0
  %3418 = vmatprep.subr.mxu0 0.0
  %3419 = vmatpush1.msra.mxu0 0.0
  %3420 = vmatprep.subr.mxu0 0.0
  %3421 = vmatpush1.msra.mxu0 0.0
  %3422 = vmatprep.subr.mxu0 0.0
  %3423 = vmatpush1.msra.mxu0 0.0
  %3424 = vmatprep.subr.mxu0 0.0
  %3425 = vmatpush1.msra.mxu0 0.0
  %3426 = vmatprep.subr.mxu0 0.0
  %3427 = vmatpush1.msra.mxu0 0.0
  %3428 = vmatprep.subr.mxu0 0.0
  %3429 = vmatpush1.msra.mxu0 0.0
  %3430 = vmatprep.subr.mxu0 0.0
  %3431 = vmatpush1.msra.mxu0 0.0
  %3432 = vmatprep.subr.mxu0 0.0
  %3433 = vmatpush1.msra.mxu0 0.0
  %3434 = vmatprep.subr.mxu0 0.0
  %3435 = vmatpush1.msra.mxu0 0.0
  %3436 = vmatprep.mubr.f32.mxu0 0.0
  %3437 = vmatmul.mubr.f32.gmra.mrb[0].mxu0 %v3370
  %v3438 = vpop.f32.mrb[0].mxu0
  %v3439 = vadd.f32 0.0, %v3438
  %v3440 = vpop.f32.mrb[0].mxu0
  %v3441 = vadd.f32 0.0, %v3440
  %3442 = vdwg.mxu0
  %3443 = vmatprep.subr.mxu0 %v3340
  %3444 = vmatpush1.msra.mxu0 %v3339
  %3445 = vmatprep.subr.mxu0 %v3344
  %3446 = vmatpush1.msra.mxu0 %v3343
  %3447 = vmatprep.subr.mxu0 %v3348
  %3448 = vmatpush1.msra.mxu0 %v3347
  %3449 = vmatprep.subr.mxu0 %v3352
  %3450 = vmatpush1.msra.mxu0 %v3351
  %3451 = vmatprep.subr.mxu0 %v3356
  %3452 = vmatpush1.msra.mxu0 %v3355
  %3453 = vmatprep.subr.mxu0 %v3360
  %3454 = vmatpush1.msra.mxu0 %v3359
  %3455 = vmatprep.subr.mxu0 %v3364
  %3456 = vmatpush1.msra.mxu0 %v3363
  %3457 = vmatprep.subr.mxu0 %v3368
  %3458 = vmatpush1.msra.mxu0 %v3367
  %3459 = vmatprep.subr.mxu0 0.0
  %3460 = vmatpush1.msra.mxu0 0.0
  %3461 = vmatprep.subr.mxu0 0.0
  %3462 = vmatpush1.msra.mxu0 0.0
  %3463 = vmatprep.subr.mxu0 0.0
  %3464 = vmatpush1.msra.mxu0 0.0
  %3465 = vmatprep.subr.mxu0 0.0
  %3466 = vmatpush1.msra.mxu0 0.0
  %3467 = vmatprep.subr.mxu0 0.0
  %3468 = vmatpush1.msra.mxu0 0.0
  %3469 = vmatprep.subr.mxu0 0.0
  %3470 = vmatpush1.msra.mxu0 0.0
  %3471 = vmatprep.subr.mxu0 0.0
  %3472 = vmatpush1.msra.mxu0 0.0
  %3473 = vmatprep.subr.mxu0 0.0
  %3474 = vmatpush1.msra.mxu0 0.0
  %3475 = vmatprep.subr.mxu0 0.0
  %3476 = vmatpush1.msra.mxu0 0.0
  %3477 = vmatprep.subr.mxu0 0.0
  %3478 = vmatpush1.msra.mxu0 0.0
  %3479 = vmatprep.subr.mxu0 0.0
  %3480 = vmatpush1.msra.mxu0 0.0
  %3481 = vmatprep.subr.mxu0 0.0
  %3482 = vmatpush1.msra.mxu0 0.0
  %3483 = vmatprep.subr.mxu0 0.0
  %3484 = vmatpush1.msra.mxu0 0.0
  %3485 = vmatprep.subr.mxu0 0.0
  %3486 = vmatpush1.msra.mxu0 0.0
  %3487 = vmatprep.subr.mxu0 0.0
  %3488 = vmatpush1.msra.mxu0 0.0
  %3489 = vmatprep.subr.mxu0 0.0
  %3490 = vmatpush1.msra.mxu0 0.0
  %3491 = vmatprep.subr.mxu0 0.0
  %3492 = vmatpush1.msra.mxu0 0.0
  %3493 = vmatprep.subr.mxu0 0.0
  %3494 = vmatpush1.msra.mxu0 0.0
  %3495 = vmatprep.subr.mxu0 0.0
  %3496 = vmatpush1.msra.mxu0 0.0
  %3497 = vmatprep.subr.mxu0 0.0
  %3498 = vmatpush1.msra.mxu0 0.0
  %3499 = vmatprep.subr.mxu0 0.0
  %3500 = vmatpush1.msra.mxu0 0.0
  %3501 = vmatprep.subr.mxu0 0.0
  %3502 = vmatpush1.msra.mxu0 0.0
  %3503 = vmatprep.subr.mxu0 0.0
  %3504 = vmatpush1.msra.mxu0 0.0
  %3505 = vmatprep.subr.mxu0 0.0
  %3506 = vmatpush1.msra.mxu0 0.0
  %3507 = vmatprep.mubr.f32.mxu0 0.0
  %3508 = vmatmul.mubr.f32.gmra.mrb[0].mxu0 %v3370
  %v3509 = vpop.f32.mrb[0].mxu0
  %v3510 = vadd.f32 0.0, %v3509
  %v3511 = vpop.f32.mrb[0].mxu0
  %v3512 = vadd.f32 0.0, %v3511
  %3513 = vdwg.mxu0
  %v3514 = vadd.f32 %v3332, %v3439
  %v3515 = vadd.f32 %v3333, %v3441
  %v3516 = vadd.f32 %v3334, %v3510
  %v3517 = vadd.f32 %v3335, %v3512
  %s3518 = scalar_lea.vmem %s3, 4096
  %v3519 = vld [vmem:[%s3518] sm:$0xff]
  %v3520 = vld [vmem:[%s3518 + $0x8] sm:$0xff]
  %v3521 = vld [vmem:[%s3518 + $0x10] sm:$0xff]
  %v3522 = vld [vmem:[%s3518 + $0x18] sm:$0xff]
  %v3523 = vld [vmem:[%s3518 + $0x20] sm:$0xff]
  %v3524 = vld [vmem:[%s3518 + $0x28] sm:$0xff]
  %v3525 = vld [vmem:[%s3518 + $0x30] sm:$0xff]
  %v3526 = vld [vmem:[%s3518 + $0x38] sm:$0xff]
  %v3527 = vld [vmem:[%s3518 + $0x40] sm:$0xff]
  %v3528 = vld [vmem:[%s3518 + $0x48] sm:$0xff]
  %v3529 = vld [vmem:[%s3518 + $0x50] sm:$0xff]
  %v3530 = vld [vmem:[%s3518 + $0x58] sm:$0xff]
  %v3531 = vld [vmem:[%s3518 + $0x60] sm:$0xff]
  %v3532 = vld [vmem:[%s3518 + $0x68] sm:$0xff]
  %v3533 = vld [vmem:[%s3518 + $0x70] sm:$0xff]
  %v3534 = vld [vmem:[%s3518 + $0x78] sm:$0xff]
  %v3535 = vld [vmem:[%s3518 + $0x80] sm:$0xff]
  %v3536 = vld [vmem:[%s3518 + $0x88] sm:$0xff]
  %v3537 = vld [vmem:[%s3518 + $0x90] sm:$0xff]
  %v3538 = vld [vmem:[%s3518 + $0x98] sm:$0xff]
  %v3539 = vld [vmem:[%s3518 + $0xa0] sm:$0xff]
  %v3540 = vld [vmem:[%s3518 + $0xa8] sm:$0xff]
  %v3541 = vld [vmem:[%s3518 + $0xb0] sm:$0xff]
  %v3542 = vld [vmem:[%s3518 + $0xb8] sm:$0xff]
  %v3543 = vld [vmem:[%s3518 + $0xc0] sm:$0xff]
  %v3544 = vld [vmem:[%s3518 + $0xc8] sm:$0xff]
  %v3545 = vld [vmem:[%s3518 + $0xd0] sm:$0xff]
  %v3546 = vld [vmem:[%s3518 + $0xd8] sm:$0xff]
  %v3547 = vld [vmem:[%s3518 + $0xe0] sm:$0xff]
  %v3548 = vld [vmem:[%s3518 + $0xe8] sm:$0xff]
  %v3549 = vld [vmem:[%s3518 + $0xf0] sm:$0xff]
  %v3550 = vld [vmem:[%s3518 + $0xf8] sm:$0xff]
  %v3552 = vsel %vm172, %v606, 0
  %3554 = vmatprep.subr.mxu0 %v3520
  %3555 = vmatpush1.msra.mxu0 %v3519
  %3556 = vmatprep.subr.mxu0 %v3524
  %3557 = vmatpush1.msra.mxu0 %v3523
  %3558 = vmatprep.subr.mxu0 %v3528
  %3559 = vmatpush1.msra.mxu0 %v3527
  %3560 = vmatprep.subr.mxu0 %v3532
  %3561 = vmatpush1.msra.mxu0 %v3531
  %3562 = vmatprep.subr.mxu0 %v3536
  %3563 = vmatpush1.msra.mxu0 %v3535
  %3564 = vmatprep.subr.mxu0 %v3540
  %3565 = vmatpush1.msra.mxu0 %v3539
  %3566 = vmatprep.subr.mxu0 %v3544
  %3567 = vmatpush1.msra.mxu0 %v3543
  %3568 = vmatprep.subr.mxu0 %v3548
  %3569 = vmatpush1.msra.mxu0 %v3547
  %3570 = vmatprep.subr.mxu0 0.0
  %3571 = vmatpush1.msra.mxu0 0.0
  %3572 = vmatprep.subr.mxu0 0.0
  %3573 = vmatpush1.msra.mxu0 0.0
  %3574 = vmatprep.subr.mxu0 0.0
  %3575 = vmatpush1.msra.mxu0 0.0
  %3576 = vmatprep.subr.mxu0 0.0
  %3577 = vmatpush1.msra.mxu0 0.0
  %3578 = vmatprep.subr.mxu0 0.0
  %3579 = vmatpush1.msra.mxu0 0.0
  %3580 = vmatprep.subr.mxu0 0.0
  %3581 = vmatpush1.msra.mxu0 0.0
  %3582 = vmatprep.subr.mxu0 0.0
  %3583 = vmatpush1.msra.mxu0 0.0
  %3584 = vmatprep.subr.mxu0 0.0
  %3585 = vmatpush1.msra.mxu0 0.0
  %3586 = vmatprep.subr.mxu0 0.0
  %3587 = vmatpush1.msra.mxu0 0.0
  %3588 = vmatprep.subr.mxu0 0.0
  %3589 = vmatpush1.msra.mxu0 0.0
  %3590 = vmatprep.subr.mxu0 0.0
  %3591 = vmatpush1.msra.mxu0 0.0
  %3592 = vmatprep.subr.mxu0 0.0
  %3593 = vmatpush1.msra.mxu0 0.0
  %3594 = vmatprep.subr.mxu0 0.0
  %3595 = vmatpush1.msra.mxu0 0.0
  %3596 = vmatprep.subr.mxu0 0.0
  %3597 = vmatpush1.msra.mxu0 0.0
  %3598 = vmatprep.subr.mxu0 0.0
  %3599 = vmatpush1.msra.mxu0 0.0
  %3600 = vmatprep.subr.mxu0 0.0
  %3601 = vmatpush1.msra.mxu0 0.0
  %3602 = vmatprep.subr.mxu0 0.0
  %3603 = vmatpush1.msra.mxu0 0.0
  %3604 = vmatprep.subr.mxu0 0.0
  %3605 = vmatpush1.msra.mxu0 0.0
  %3606 = vmatprep.subr.mxu0 0.0
  %3607 = vmatpush1.msra.mxu0 0.0
  %3608 = vmatprep.subr.mxu0 0.0
  %3609 = vmatpush1.msra.mxu0 0.0
  %3610 = vmatprep.subr.mxu0 0.0
  %3611 = vmatpush1.msra.mxu0 0.0
  %3612 = vmatprep.subr.mxu0 0.0
  %3613 = vmatpush1.msra.mxu0 0.0
  %3614 = vmatprep.subr.mxu0 0.0
  %3615 = vmatpush1.msra.mxu0 0.0
  %3616 = vmatprep.subr.mxu0 0.0
  %3617 = vmatpush1.msra.mxu0 0.0
  %3618 = vmatprep.mubr.f32.mxu0 0.0
  %3619 = vmatmul.mubr.f32.gmra.mrb[0].mxu0 %v3552
  %v3620 = vpop.f32.mrb[0].mxu0
  %v3621 = vadd.f32 0.0, %v3620
  %v3622 = vpop.f32.mrb[0].mxu0
  %v3623 = vadd.f32 0.0, %v3622
  %3624 = vdwg.mxu0
  %3625 = vmatprep.subr.mxu0 %v3522
  %3626 = vmatpush1.msra.mxu0 %v3521
  %3627 = vmatprep.subr.mxu0 %v3526
  %3628 = vmatpush1.msra.mxu0 %v3525
  %3629 = vmatprep.subr.mxu0 %v3530
  %3630 = vmatpush1.msra.mxu0 %v3529
  %3631 = vmatprep.subr.mxu0 %v3534
  %3632 = vmatpush1.msra.mxu0 %v3533
  %3633 = vmatprep.subr.mxu0 %v3538
  %3634 = vmatpush1.msra.mxu0 %v3537
  %3635 = vmatprep.subr.mxu0 %v3542
  %3636 = vmatpush1.msra.mxu0 %v3541
  %3637 = vmatprep.subr.mxu0 %v3546
  %3638 = vmatpush1.msra.mxu0 %v3545
  %3639 = vmatprep.subr.mxu0 %v3550
  %3640 = vmatpush1.msra.mxu0 %v3549
  %3641 = vmatprep.subr.mxu0 0.0
  %3642 = vmatpush1.msra.mxu0 0.0
  %3643 = vmatprep.subr.mxu0 0.0
  %3644 = vmatpush1.msra.mxu0 0.0
  %3645 = vmatprep.subr.mxu0 0.0
  %3646 = vmatpush1.msra.mxu0 0.0
  %3647 = vmatprep.subr.mxu0 0.0
  %3648 = vmatpush1.msra.mxu0 0.0
  %3649 = vmatprep.subr.mxu0 0.0
  %3650 = vmatpush1.msra.mxu0 0.0
  %3651 = vmatprep.subr.mxu0 0.0
  %3652 = vmatpush1.msra.mxu0 0.0
  %3653 = vmatprep.subr.mxu0 0.0
  %3654 = vmatpush1.msra.mxu0 0.0
  %3655 = vmatprep.subr.mxu0 0.0
  %3656 = vmatpush1.msra.mxu0 0.0
  %3657 = vmatprep.subr.mxu0 0.0
  %3658 = vmatpush1.msra.mxu0 0.0
  %3659 = vmatprep.subr.mxu0 0.0
  %3660 = vmatpush1.msra.mxu0 0.0
  %3661 = vmatprep.subr.mxu0 0.0
  %3662 = vmatpush1.msra.mxu0 0.0
  %3663 = vmatprep.subr.mxu0 0.0
  %3664 = vmatpush1.msra.mxu0 0.0
  %3665 = vmatprep.subr.mxu0 0.0
  %3666 = vmatpush1.msra.mxu0 0.0
  %3667 = vmatprep.subr.mxu0 0.0
  %3668 = vmatpush1.msra.mxu0 0.0
  %3669 = vmatprep.subr.mxu0 0.0
  %3670 = vmatpush1.msra.mxu0 0.0
  %3671 = vmatprep.subr.mxu0 0.0
  %3672 = vmatpush1.msra.mxu0 0.0
  %3673 = vmatprep.subr.mxu0 0.0
  %3674 = vmatpush1.msra.mxu0 0.0
  %3675 = vmatprep.subr.mxu0 0.0
  %3676 = vmatpush1.msra.mxu0 0.0
  %3677 = vmatprep.subr.mxu0 0.0
  %3678 = vmatpush1.msra.mxu0 0.0
  %3679 = vmatprep.subr.mxu0 0.0
  %3680 = vmatpush1.msra.mxu0 0.0
  %3681 = vmatprep.subr.mxu0 0.0
  %3682 = vmatpush1.msra.mxu0 0.0
  %3683 = vmatprep.subr.mxu0 0.0
  %3684 = vmatpush1.msra.mxu0 0.0
  %3685 = vmatprep.subr.mxu0 0.0
  %3686 = vmatpush1.msra.mxu0 0.0
  %3687 = vmatprep.subr.mxu0 0.0
  %3688 = vmatpush1.msra.mxu0 0.0
  %3689 = vmatprep.mubr.f32.mxu0 0.0
  %3690 = vmatmul.mubr.f32.gmra.mrb[0].mxu0 %v3552
  %v3691 = vpop.f32.mrb[0].mxu0
  %v3692 = vadd.f32 0.0, %v3691
  %v3693 = vpop.f32.mrb[0].mxu0
  %v3694 = vadd.f32 0.0, %v3693
  %3695 = vdwg.mxu0
  %v3696 = vadd.f32 %v3514, %v3621
  %v3697 = vadd.f32 %v3515, %v3623
  %v3698 = vadd.f32 %v3516, %v3692
  %v3699 = vadd.f32 %v3517, %v3694
  %s3700 = scalar_lea.vmem %s3, 4352
  %v3701 = vld [vmem:[%s3700] sm:$0xff]
  %v3702 = vld [vmem:[%s3700 + $0x8] sm:$0xff]
  %v3703 = vld [vmem:[%s3700 + $0x10] sm:$0xff]
  %v3704 = vld [vmem:[%s3700 + $0x18] sm:$0xff]
  %v3705 = vld [vmem:[%s3700 + $0x20] sm:$0xff]
  %v3706 = vld [vmem:[%s3700 + $0x28] sm:$0xff]
  %v3707 = vld [vmem:[%s3700 + $0x30] sm:$0xff]
  %v3708 = vld [vmem:[%s3700 + $0x38] sm:$0xff]
  %v3709 = vld [vmem:[%s3700 + $0x40] sm:$0xff]
  %v3710 = vld [vmem:[%s3700 + $0x48] sm:$0xff]
  %v3711 = vld [vmem:[%s3700 + $0x50] sm:$0xff]
  %v3712 = vld [vmem:[%s3700 + $0x58] sm:$0xff]
  %v3713 = vld [vmem:[%s3700 + $0x60] sm:$0xff]
  %v3714 = vld [vmem:[%s3700 + $0x68] sm:$0xff]
  %v3715 = vld [vmem:[%s3700 + $0x70] sm:$0xff]
  %v3716 = vld [vmem:[%s3700 + $0x78] sm:$0xff]
  %v3717 = vld [vmem:[%s3700 + $0x80] sm:$0xff]
  %v3718 = vld [vmem:[%s3700 + $0x88] sm:$0xff]
  %v3719 = vld [vmem:[%s3700 + $0x90] sm:$0xff]
  %v3720 = vld [vmem:[%s3700 + $0x98] sm:$0xff]
  %v3721 = vld [vmem:[%s3700 + $0xa0] sm:$0xff]
  %v3722 = vld [vmem:[%s3700 + $0xa8] sm:$0xff]
  %v3723 = vld [vmem:[%s3700 + $0xb0] sm:$0xff]
  %v3724 = vld [vmem:[%s3700 + $0xb8] sm:$0xff]
  %v3725 = vld [vmem:[%s3700 + $0xc0] sm:$0xff]
  %v3726 = vld [vmem:[%s3700 + $0xc8] sm:$0xff]
  %v3727 = vld [vmem:[%s3700 + $0xd0] sm:$0xff]
  %v3728 = vld [vmem:[%s3700 + $0xd8] sm:$0xff]
  %v3729 = vld [vmem:[%s3700 + $0xe0] sm:$0xff]
  %v3730 = vld [vmem:[%s3700 + $0xe8] sm:$0xff]
  %v3731 = vld [vmem:[%s3700 + $0xf0] sm:$0xff]
  %v3732 = vld [vmem:[%s3700 + $0xf8] sm:$0xff]
  %v3733 = vrot.slane %v606, 2
  %v3734 = vsel %vm172, %v3733, 0
  %3736 = vmatprep.subr.mxu0 %v3702
  %3737 = vmatpush1.msra.mxu0 %v3701
  %3738 = vmatprep.subr.mxu0 %v3706
  %3739 = vmatpush1.msra.mxu0 %v3705
  %3740 = vmatprep.subr.mxu0 %v3710
  %3741 = vmatpush1.msra.mxu0 %v3709
  %3742 = vmatprep.subr.mxu0 %v3714
  %3743 = vmatpush1.msra.mxu0 %v3713
  %3744 = vmatprep.subr.mxu0 %v3718
  %3745 = vmatpush1.msra.mxu0 %v3717
  %3746 = vmatprep.subr.mxu0 %v3722
  %3747 = vmatpush1.msra.mxu0 %v3721
  %3748 = vmatprep.subr.mxu0 %v3726
  %3749 = vmatpush1.msra.mxu0 %v3725
  %3750 = vmatprep.subr.mxu0 %v3730
  %3751 = vmatpush1.msra.mxu0 %v3729
  %3752 = vmatprep.subr.mxu0 0.0
  %3753 = vmatpush1.msra.mxu0 0.0
  %3754 = vmatprep.subr.mxu0 0.0
  %3755 = vmatpush1.msra.mxu0 0.0
  %3756 = vmatprep.subr.mxu0 0.0
  %3757 = vmatpush1.msra.mxu0 0.0
  %3758 = vmatprep.subr.mxu0 0.0
  %3759 = vmatpush1.msra.mxu0 0.0
  %3760 = vmatprep.subr.mxu0 0.0
  %3761 = vmatpush1.msra.mxu0 0.0
  %3762 = vmatprep.subr.mxu0 0.0
  %3763 = vmatpush1.msra.mxu0 0.0
  %3764 = vmatprep.subr.mxu0 0.0
  %3765 = vmatpush1.msra.mxu0 0.0
  %3766 = vmatprep.subr.mxu0 0.0
  %3767 = vmatpush1.msra.mxu0 0.0
  %3768 = vmatprep.subr.mxu0 0.0
  %3769 = vmatpush1.msra.mxu0 0.0
  %3770 = vmatprep.subr.mxu0 0.0
  %3771 = vmatpush1.msra.mxu0 0.0
  %3772 = vmatprep.subr.mxu0 0.0
  %3773 = vmatpush1.msra.mxu0 0.0
  %3774 = vmatprep.subr.mxu0 0.0
  %3775 = vmatpush1.msra.mxu0 0.0
  %3776 = vmatprep.subr.mxu0 0.0
  %3777 = vmatpush1.msra.mxu0 0.0
  %3778 = vmatprep.subr.mxu0 0.0
  %3779 = vmatpush1.msra.mxu0 0.0
  %3780 = vmatprep.subr.mxu0 0.0
  %3781 = vmatpush1.msra.mxu0 0.0
  %3782 = vmatprep.subr.mxu0 0.0
  %3783 = vmatpush1.msra.mxu0 0.0
  %3784 = vmatprep.subr.mxu0 0.0
  %3785 = vmatpush1.msra.mxu0 0.0
  %3786 = vmatprep.subr.mxu0 0.0
  %3787 = vmatpush1.msra.mxu0 0.0
  %3788 = vmatprep.subr.mxu0 0.0
  %3789 = vmatpush1.msra.mxu0 0.0
  %3790 = vmatprep.subr.mxu0 0.0
  %3791 = vmatpush1.msra.mxu0 0.0
  %3792 = vmatprep.subr.mxu0 0.0
  %3793 = vmatpush1.msra.mxu0 0.0
  %3794 = vmatprep.subr.mxu0 0.0
  %3795 = vmatpush1.msra.mxu0 0.0
  %3796 = vmatprep.subr.mxu0 0.0
  %3797 = vmatpush1.msra.mxu0 0.0
  %3798 = vmatprep.subr.mxu0 0.0
  %3799 = vmatpush1.msra.mxu0 0.0
  %3800 = vmatprep.mubr.f32.mxu0 0.0
  %3801 = vmatmul.mubr.f32.gmra.mrb[0].mxu0 %v3734
  %v3802 = vpop.f32.mrb[0].mxu0
  %v3803 = vadd.f32 0.0, %v3802
  %v3804 = vpop.f32.mrb[0].mxu0
  %v3805 = vadd.f32 0.0, %v3804
  %3806 = vdwg.mxu0
  %3807 = vmatprep.subr.mxu0 %v3704
  %3808 = vmatpush1.msra.mxu0 %v3703
  %3809 = vmatprep.subr.mxu0 %v3708
  %3810 = vmatpush1.msra.mxu0 %v3707
  %3811 = vmatprep.subr.mxu0 %v3712
  %3812 = vmatpush1.msra.mxu0 %v3711
  %3813 = vmatprep.subr.mxu0 %v3716
  %3814 = vmatpush1.msra.mxu0 %v3715
  %3815 = vmatprep.subr.mxu0 %v3720
  %3816 = vmatpush1.msra.mxu0 %v3719
  %3817 = vmatprep.subr.mxu0 %v3724
  %3818 = vmatpush1.msra.mxu0 %v3723
  %3819 = vmatprep.subr.mxu0 %v3728
  %3820 = vmatpush1.msra.mxu0 %v3727
  %3821 = vmatprep.subr.mxu0 %v3732
  %3822 = vmatpush1.msra.mxu0 %v3731
  %3823 = vmatprep.subr.mxu0 0.0
  %3824 = vmatpush1.msra.mxu0 0.0
  %3825 = vmatprep.subr.mxu0 0.0
  %3826 = vmatpush1.msra.mxu0 0.0
  %3827 = vmatprep.subr.mxu0 0.0
  %3828 = vmatpush1.msra.mxu0 0.0
  %3829 = vmatprep.subr.mxu0 0.0
  %3830 = vmatpush1.msra.mxu0 0.0
  %3831 = vmatprep.subr.mxu0 0.0
  %3832 = vmatpush1.msra.mxu0 0.0
  %3833 = vmatprep.subr.mxu0 0.0
  %3834 = vmatpush1.msra.mxu0 0.0
  %3835 = vmatprep.subr.mxu0 0.0
  %3836 = vmatpush1.msra.mxu0 0.0
  %3837 = vmatprep.subr.mxu0 0.0
  %3838 = vmatpush1.msra.mxu0 0.0
  %3839 = vmatprep.subr.mxu0 0.0
  %3840 = vmatpush1.msra.mxu0 0.0
  %3841 = vmatprep.subr.mxu0 0.0
  %3842 = vmatpush1.msra.mxu0 0.0
  %3843 = vmatprep.subr.mxu0 0.0
  %3844 = vmatpush1.msra.mxu0 0.0
  %3845 = vmatprep.subr.mxu0 0.0
  %3846 = vmatpush1.msra.mxu0 0.0
  %3847 = vmatprep.subr.mxu0 0.0
  %3848 = vmatpush1.msra.mxu0 0.0
  %3849 = vmatprep.subr.mxu0 0.0
  %3850 = vmatpush1.msra.mxu0 0.0
  %3851 = vmatprep.subr.mxu0 0.0
  %3852 = vmatpush1.msra.mxu0 0.0
  %3853 = vmatprep.subr.mxu0 0.0
  %3854 = vmatpush1.msra.mxu0 0.0
  %3855 = vmatprep.subr.mxu0 0.0
  %3856 = vmatpush1.msra.mxu0 0.0
  %3857 = vmatprep.subr.mxu0 0.0
  %3858 = vmatpush1.msra.mxu0 0.0
  %3859 = vmatprep.subr.mxu0 0.0
  %3860 = vmatpush1.msra.mxu0 0.0
  %3861 = vmatprep.subr.mxu0 0.0
  %3862 = vmatpush1.msra.mxu0 0.0
  %3863 = vmatprep.subr.mxu0 0.0
  %3864 = vmatpush1.msra.mxu0 0.0
  %3865 = vmatprep.subr.mxu0 0.0
  %3866 = vmatpush1.msra.mxu0 0.0
  %3867 = vmatprep.subr.mxu0 0.0
  %3868 = vmatpush1.msra.mxu0 0.0
  %3869 = vmatprep.subr.mxu0 0.0
  %3870 = vmatpush1.msra.mxu0 0.0
  %3871 = vmatprep.mubr.f32.mxu0 0.0
  %3872 = vmatmul.mubr.f32.gmra.mrb[0].mxu0 %v3734
  %v3873 = vpop.f32.mrb[0].mxu0
  %v3874 = vadd.f32 0.0, %v3873
  %v3875 = vpop.f32.mrb[0].mxu0
  %v3876 = vadd.f32 0.0, %v3875
  %3877 = vdwg.mxu0
  %v3878 = vadd.f32 %v3696, %v3803
  %v3879 = vadd.f32 %v3697, %v3805
  %v3880 = vadd.f32 %v3698, %v3874
  %v3881 = vadd.f32 %v3699, %v3876
  %s3882 = scalar_lea.vmem %s3, 4608
  %v3883 = vld [vmem:[%s3882] sm:$0xff]
  %v3884 = vld [vmem:[%s3882 + $0x8] sm:$0xff]
  %v3885 = vld [vmem:[%s3882 + $0x10] sm:$0xff]
  %v3886 = vld [vmem:[%s3882 + $0x18] sm:$0xff]
  %v3887 = vld [vmem:[%s3882 + $0x20] sm:$0xff]
  %v3888 = vld [vmem:[%s3882 + $0x28] sm:$0xff]
  %v3889 = vld [vmem:[%s3882 + $0x30] sm:$0xff]
  %v3890 = vld [vmem:[%s3882 + $0x38] sm:$0xff]
  %v3891 = vld [vmem:[%s3882 + $0x40] sm:$0xff]
  %v3892 = vld [vmem:[%s3882 + $0x48] sm:$0xff]
  %v3893 = vld [vmem:[%s3882 + $0x50] sm:$0xff]
  %v3894 = vld [vmem:[%s3882 + $0x58] sm:$0xff]
  %v3895 = vld [vmem:[%s3882 + $0x60] sm:$0xff]
  %v3896 = vld [vmem:[%s3882 + $0x68] sm:$0xff]
  %v3897 = vld [vmem:[%s3882 + $0x70] sm:$0xff]
  %v3898 = vld [vmem:[%s3882 + $0x78] sm:$0xff]
  %v3899 = vld [vmem:[%s3882 + $0x80] sm:$0xff]
  %v3900 = vld [vmem:[%s3882 + $0x88] sm:$0xff]
  %v3901 = vld [vmem:[%s3882 + $0x90] sm:$0xff]
  %v3902 = vld [vmem:[%s3882 + $0x98] sm:$0xff]
  %v3903 = vld [vmem:[%s3882 + $0xa0] sm:$0xff]
  %v3904 = vld [vmem:[%s3882 + $0xa8] sm:$0xff]
  %v3905 = vld [vmem:[%s3882 + $0xb0] sm:$0xff]
  %v3906 = vld [vmem:[%s3882 + $0xb8] sm:$0xff]
  %v3907 = vld [vmem:[%s3882 + $0xc0] sm:$0xff]
  %v3908 = vld [vmem:[%s3882 + $0xc8] sm:$0xff]
  %v3909 = vld [vmem:[%s3882 + $0xd0] sm:$0xff]
  %v3910 = vld [vmem:[%s3882 + $0xd8] sm:$0xff]
  %v3911 = vld [vmem:[%s3882 + $0xe0] sm:$0xff]
  %v3912 = vld [vmem:[%s3882 + $0xe8] sm:$0xff]
  %v3913 = vld [vmem:[%s3882 + $0xf0] sm:$0xff]
  %v3914 = vld [vmem:[%s3882 + $0xf8] sm:$0xff]
  %v3915 = vrot.slane %v606, 4
  %v3916 = vsel %vm172, %v3915, 0
  %3918 = vmatprep.subr.mxu0 %v3884
  %3919 = vmatpush1.msra.mxu0 %v3883
  %3920 = vmatprep.subr.mxu0 %v3888
  %3921 = vmatpush1.msra.mxu0 %v3887
  %3922 = vmatprep.subr.mxu0 %v3892
  %3923 = vmatpush1.msra.mxu0 %v3891
  %3924 = vmatprep.subr.mxu0 %v3896
  %3925 = vmatpush1.msra.mxu0 %v3895
  %3926 = vmatprep.subr.mxu0 %v3900
  %3927 = vmatpush1.msra.mxu0 %v3899
  %3928 = vmatprep.subr.mxu0 %v3904
  %3929 = vmatpush1.msra.mxu0 %v3903
  %3930 = vmatprep.subr.mxu0 %v3908
  %3931 = vmatpush1.msra.mxu0 %v3907
  %3932 = vmatprep.subr.mxu0 %v3912
  %3933 = vmatpush1.msra.mxu0 %v3911
  %3934 = vmatprep.subr.mxu0 0.0
  %3935 = vmatpush1.msra.mxu0 0.0
  %3936 = vmatprep.subr.mxu0 0.0
  %3937 = vmatpush1.msra.mxu0 0.0
  %3938 = vmatprep.subr.mxu0 0.0
  %3939 = vmatpush1.msra.mxu0 0.0
  %3940 = vmatprep.subr.mxu0 0.0
  %3941 = vmatpush1.msra.mxu0 0.0
  %3942 = vmatprep.subr.mxu0 0.0
  %3943 = vmatpush1.msra.mxu0 0.0
  %3944 = vmatprep.subr.mxu0 0.0
  %3945 = vmatpush1.msra.mxu0 0.0
  %3946 = vmatprep.subr.mxu0 0.0
  %3947 = vmatpush1.msra.mxu0 0.0
  %3948 = vmatprep.subr.mxu0 0.0
  %3949 = vmatpush1.msra.mxu0 0.0
  %3950 = vmatprep.subr.mxu0 0.0
  %3951 = vmatpush1.msra.mxu0 0.0
  %3952 = vmatprep.subr.mxu0 0.0
  %3953 = vmatpush1.msra.mxu0 0.0
  %3954 = vmatprep.subr.mxu0 0.0
  %3955 = vmatpush1.msra.mxu0 0.0
  %3956 = vmatprep.subr.mxu0 0.0
  %3957 = vmatpush1.msra.mxu0 0.0
  %3958 = vmatprep.subr.mxu0 0.0
  %3959 = vmatpush1.msra.mxu0 0.0
  %3960 = vmatprep.subr.mxu0 0.0
  %3961 = vmatpush1.msra.mxu0 0.0
  %3962 = vmatprep.subr.mxu0 0.0
  %3963 = vmatpush1.msra.mxu0 0.0
  %3964 = vmatprep.subr.mxu0 0.0
  %3965 = vmatpush1.msra.mxu0 0.0
  %3966 = vmatprep.subr.mxu0 0.0
  %3967 = vmatpush1.msra.mxu0 0.0
  %3968 = vmatprep.subr.mxu0 0.0
  %3969 = vmatpush1.msra.mxu0 0.0
  %3970 = vmatprep.subr.mxu0 0.0
  %3971 = vmatpush1.msra.mxu0 0.0
  %3972 = vmatprep.subr.mxu0 0.0
  %3973 = vmatpush1.msra.mxu0 0.0
  %3974 = vmatprep.subr.mxu0 0.0
  %3975 = vmatpush1.msra.mxu0 0.0
  %3976 = vmatprep.subr.mxu0 0.0
  %3977 = vmatpush1.msra.mxu0 0.0
  %3978 = vmatprep.subr.mxu0 0.0
  %3979 = vmatpush1.msra.mxu0 0.0
  %3980 = vmatprep.subr.mxu0 0.0
  %3981 = vmatpush1.msra.mxu0 0.0
  %3982 = vmatprep.mubr.f32.mxu0 0.0
  %3983 = vmatmul.mubr.f32.gmra.mrb[0].mxu0 %v3916
  %v3984 = vpop.f32.mrb[0].mxu0
  %v3985 = vadd.f32 0.0, %v3984
  %v3986 = vpop.f32.mrb[0].mxu0
  %v3987 = vadd.f32 0.0, %v3986
  %3988 = vdwg.mxu0
  %3989 = vmatprep.subr.mxu0 %v3886
  %3990 = vmatpush1.msra.mxu0 %v3885
  %3991 = vmatprep.subr.mxu0 %v3890
  %3992 = vmatpush1.msra.mxu0 %v3889
  %3993 = vmatprep.subr.mxu0 %v3894
  %3994 = vmatpush1.msra.mxu0 %v3893
  %3995 = vmatprep.subr.mxu0 %v3898
  %3996 = vmatpush1.msra.mxu0 %v3897
  %3997 = vmatprep.subr.mxu0 %v3902
  %3998 = vmatpush1.msra.mxu0 %v3901
  %3999 = vmatprep.subr.mxu0 %v3906
  %4000 = vmatpush1.msra.mxu0 %v3905
  %4001 = vmatprep.subr.mxu0 %v3910
  %4002 = vmatpush1.msra.mxu0 %v3909
  %4003 = vmatprep.subr.mxu0 %v3914
  %4004 = vmatpush1.msra.mxu0 %v3913
  %4005 = vmatprep.subr.mxu0 0.0
  %4006 = vmatpush1.msra.mxu0 0.0
  %4007 = vmatprep.subr.mxu0 0.0
  %4008 = vmatpush1.msra.mxu0 0.0
  %4009 = vmatprep.subr.mxu0 0.0
  %4010 = vmatpush1.msra.mxu0 0.0
  %4011 = vmatprep.subr.mxu0 0.0
  %4012 = vmatpush1.msra.mxu0 0.0
  %4013 = vmatprep.subr.mxu0 0.0
  %4014 = vmatpush1.msra.mxu0 0.0
  %4015 = vmatprep.subr.mxu0 0.0
  %4016 = vmatpush1.msra.mxu0 0.0
  %4017 = vmatprep.subr.mxu0 0.0
  %4018 = vmatpush1.msra.mxu0 0.0
  %4019 = vmatprep.subr.mxu0 0.0
  %4020 = vmatpush1.msra.mxu0 0.0
  %4021 = vmatprep.subr.mxu0 0.0
  %4022 = vmatpush1.msra.mxu0 0.0
  %4023 = vmatprep.subr.mxu0 0.0
  %4024 = vmatpush1.msra.mxu0 0.0
  %4025 = vmatprep.subr.mxu0 0.0
  %4026 = vmatpush1.msra.mxu0 0.0
  %4027 = vmatprep.subr.mxu0 0.0
  %4028 = vmatpush1.msra.mxu0 0.0
  %4029 = vmatprep.subr.mxu0 0.0
  %4030 = vmatpush1.msra.mxu0 0.0
  %4031 = vmatprep.subr.mxu0 0.0
  %4032 = vmatpush1.msra.mxu0 0.0
  %4033 = vmatprep.subr.mxu0 0.0
  %4034 = vmatpush1.msra.mxu0 0.0
  %4035 = vmatprep.subr.mxu0 0.0
  %4036 = vmatpush1.msra.mxu0 0.0
  %4037 = vmatprep.subr.mxu0 0.0
  %4038 = vmatpush1.msra.mxu0 0.0
  %4039 = vmatprep.subr.mxu0 0.0
  %4040 = vmatpush1.msra.mxu0 0.0
  %4041 = vmatprep.subr.mxu0 0.0
  %4042 = vmatpush1.msra.mxu0 0.0
  %4043 = vmatprep.subr.mxu0 0.0
  %4044 = vmatpush1.msra.mxu0 0.0
  %4045 = vmatprep.subr.mxu0 0.0
  %4046 = vmatpush1.msra.mxu0 0.0
  %4047 = vmatprep.subr.mxu0 0.0
  %4048 = vmatpush1.msra.mxu0 0.0
  %4049 = vmatprep.subr.mxu0 0.0
  %4050 = vmatpush1.msra.mxu0 0.0
  %4051 = vmatprep.subr.mxu0 0.0
  %4052 = vmatpush1.msra.mxu0 0.0
  %4053 = vmatprep.mubr.f32.mxu0 0.0
  %4054 = vmatmul.mubr.f32.gmra.mrb[0].mxu0 %v3916
  %v4055 = vpop.f32.mrb[0].mxu0
  %v4056 = vadd.f32 0.0, %v4055
  %v4057 = vpop.f32.mrb[0].mxu0
  %v4058 = vadd.f32 0.0, %v4057
  %4059 = vdwg.mxu0
  %v4060 = vadd.f32 %v3878, %v3985
  %v4061 = vadd.f32 %v3879, %v3987
  %v4062 = vadd.f32 %v3880, %v4056
  %v4063 = vadd.f32 %v3881, %v4058
  %s4064 = scalar_lea.vmem %s3, 4864
  %v4065 = vld [vmem:[%s4064] sm:$0xff]
  %v4066 = vld [vmem:[%s4064 + $0x8] sm:$0xff]
  %v4067 = vld [vmem:[%s4064 + $0x10] sm:$0xff]
  %v4068 = vld [vmem:[%s4064 + $0x18] sm:$0xff]
  %v4069 = vld [vmem:[%s4064 + $0x20] sm:$0xff]
  %v4070 = vld [vmem:[%s4064 + $0x28] sm:$0xff]
  %v4071 = vld [vmem:[%s4064 + $0x30] sm:$0xff]
  %v4072 = vld [vmem:[%s4064 + $0x38] sm:$0xff]
  %v4073 = vld [vmem:[%s4064 + $0x40] sm:$0xff]
  %v4074 = vld [vmem:[%s4064 + $0x48] sm:$0xff]
  %v4075 = vld [vmem:[%s4064 + $0x50] sm:$0xff]
  %v4076 = vld [vmem:[%s4064 + $0x58] sm:$0xff]
  %v4077 = vld [vmem:[%s4064 + $0x60] sm:$0xff]
  %v4078 = vld [vmem:[%s4064 + $0x68] sm:$0xff]
  %v4079 = vld [vmem:[%s4064 + $0x70] sm:$0xff]
  %v4080 = vld [vmem:[%s4064 + $0x78] sm:$0xff]
  %v4081 = vld [vmem:[%s4064 + $0x80] sm:$0xff]
  %v4082 = vld [vmem:[%s4064 + $0x88] sm:$0xff]
  %v4083 = vld [vmem:[%s4064 + $0x90] sm:$0xff]
  %v4084 = vld [vmem:[%s4064 + $0x98] sm:$0xff]
  %v4085 = vld [vmem:[%s4064 + $0xa0] sm:$0xff]
  %v4086 = vld [vmem:[%s4064 + $0xa8] sm:$0xff]
  %v4087 = vld [vmem:[%s4064 + $0xb0] sm:$0xff]
  %v4088 = vld [vmem:[%s4064 + $0xb8] sm:$0xff]
  %v4089 = vld [vmem:[%s4064 + $0xc0] sm:$0xff]
  %v4090 = vld [vmem:[%s4064 + $0xc8] sm:$0xff]
  %v4091 = vld [vmem:[%s4064 + $0xd0] sm:$0xff]
  %v4092 = vld [vmem:[%s4064 + $0xd8] sm:$0xff]
  %v4093 = vld [vmem:[%s4064 + $0xe0] sm:$0xff]
  %v4094 = vld [vmem:[%s4064 + $0xe8] sm:$0xff]
  %v4095 = vld [vmem:[%s4064 + $0xf0] sm:$0xff]
  %v4096 = vld [vmem:[%s4064 + $0xf8] sm:$0xff]
  %v4097 = vrot.slane %v606, 6
  %v4098 = vsel %vm172, %v4097, 0
  %4100 = vmatprep.subr.mxu0 %v4066
  %4101 = vmatpush1.msra.mxu0 %v4065
  %4102 = vmatprep.subr.mxu0 %v4070
  %4103 = vmatpush1.msra.mxu0 %v4069
  %4104 = vmatprep.subr.mxu0 %v4074
  %4105 = vmatpush1.msra.mxu0 %v4073
  %4106 = vmatprep.subr.mxu0 %v4078
  %4107 = vmatpush1.msra.mxu0 %v4077
  %4108 = vmatprep.subr.mxu0 %v4082
  %4109 = vmatpush1.msra.mxu0 %v4081
  %4110 = vmatprep.subr.mxu0 %v4086
  %4111 = vmatpush1.msra.mxu0 %v4085
  %4112 = vmatprep.subr.mxu0 %v4090
  %4113 = vmatpush1.msra.mxu0 %v4089
  %4114 = vmatprep.subr.mxu0 %v4094
  %4115 = vmatpush1.msra.mxu0 %v4093
  %4116 = vmatprep.subr.mxu0 0.0
  %4117 = vmatpush1.msra.mxu0 0.0
  %4118 = vmatprep.subr.mxu0 0.0
  %4119 = vmatpush1.msra.mxu0 0.0
  %4120 = vmatprep.subr.mxu0 0.0
  %4121 = vmatpush1.msra.mxu0 0.0
  %4122 = vmatprep.subr.mxu0 0.0
  %4123 = vmatpush1.msra.mxu0 0.0
  %4124 = vmatprep.subr.mxu0 0.0
  %4125 = vmatpush1.msra.mxu0 0.0
  %4126 = vmatprep.subr.mxu0 0.0
  %4127 = vmatpush1.msra.mxu0 0.0
  %4128 = vmatprep.subr.mxu0 0.0
  %4129 = vmatpush1.msra.mxu0 0.0
  %4130 = vmatprep.subr.mxu0 0.0
  %4131 = vmatpush1.msra.mxu0 0.0
  %4132 = vmatprep.subr.mxu0 0.0
  %4133 = vmatpush1.msra.mxu0 0.0
  %4134 = vmatprep.subr.mxu0 0.0
  %4135 = vmatpush1.msra.mxu0 0.0
  %4136 = vmatprep.subr.mxu0 0.0
  %4137 = vmatpush1.msra.mxu0 0.0
  %4138 = vmatprep.subr.mxu0 0.0
  %4139 = vmatpush1.msra.mxu0 0.0
  %4140 = vmatprep.subr.mxu0 0.0
  %4141 = vmatpush1.msra.mxu0 0.0
  %4142 = vmatprep.subr.mxu0 0.0
  %4143 = vmatpush1.msra.mxu0 0.0
  %4144 = vmatprep.subr.mxu0 0.0
  %4145 = vmatpush1.msra.mxu0 0.0
  %4146 = vmatprep.subr.mxu0 0.0
  %4147 = vmatpush1.msra.mxu0 0.0
  %4148 = vmatprep.subr.mxu0 0.0
  %4149 = vmatpush1.msra.mxu0 0.0
  %4150 = vmatprep.subr.mxu0 0.0
  %4151 = vmatpush1.msra.mxu0 0.0
  %4152 = vmatprep.subr.mxu0 0.0
  %4153 = vmatpush1.msra.mxu0 0.0
  %4154 = vmatprep.subr.mxu0 0.0
  %4155 = vmatpush1.msra.mxu0 0.0
  %4156 = vmatprep.subr.mxu0 0.0
  %4157 = vmatpush1.msra.mxu0 0.0
  %4158 = vmatprep.subr.mxu0 0.0
  %4159 = vmatpush1.msra.mxu0 0.0
  %4160 = vmatprep.subr.mxu0 0.0
  %4161 = vmatpush1.msra.mxu0 0.0
  %4162 = vmatprep.subr.mxu0 0.0
  %4163 = vmatpush1.msra.mxu0 0.0
  %4164 = vmatprep.mubr.f32.mxu0 0.0
  %4165 = vmatmul.mubr.f32.gmra.mrb[0].mxu0 %v4098
  %v4166 = vpop.f32.mrb[0].mxu0
  %v4167 = vadd.f32 0.0, %v4166
  %v4168 = vpop.f32.mrb[0].mxu0
  %v4169 = vadd.f32 0.0, %v4168
  %4170 = vdwg.mxu0
  %4171 = vmatprep.subr.mxu0 %v4068
  %4172 = vmatpush1.msra.mxu0 %v4067
  %4173 = vmatprep.subr.mxu0 %v4072
  %4174 = vmatpush1.msra.mxu0 %v4071
  %4175 = vmatprep.subr.mxu0 %v4076
  %4176 = vmatpush1.msra.mxu0 %v4075
  %4177 = vmatprep.subr.mxu0 %v4080
  %4178 = vmatpush1.msra.mxu0 %v4079
  %4179 = vmatprep.subr.mxu0 %v4084
  %4180 = vmatpush1.msra.mxu0 %v4083
  %4181 = vmatprep.subr.mxu0 %v4088
  %4182 = vmatpush1.msra.mxu0 %v4087
  %4183 = vmatprep.subr.mxu0 %v4092
  %4184 = vmatpush1.msra.mxu0 %v4091
  %4185 = vmatprep.subr.mxu0 %v4096
  %4186 = vmatpush1.msra.mxu0 %v4095
  %4187 = vmatprep.subr.mxu0 0.0
  %4188 = vmatpush1.msra.mxu0 0.0
  %4189 = vmatprep.subr.mxu0 0.0
  %4190 = vmatpush1.msra.mxu0 0.0
  %4191 = vmatprep.subr.mxu0 0.0
  %4192 = vmatpush1.msra.mxu0 0.0
  %4193 = vmatprep.subr.mxu0 0.0
  %4194 = vmatpush1.msra.mxu0 0.0
  %4195 = vmatprep.subr.mxu0 0.0
  %4196 = vmatpush1.msra.mxu0 0.0
  %4197 = vmatprep.subr.mxu0 0.0
  %4198 = vmatpush1.msra.mxu0 0.0
  %4199 = vmatprep.subr.mxu0 0.0
  %4200 = vmatpush1.msra.mxu0 0.0
  %4201 = vmatprep.subr.mxu0 0.0
  %4202 = vmatpush1.msra.mxu0 0.0
  %4203 = vmatprep.subr.mxu0 0.0
  %4204 = vmatpush1.msra.mxu0 0.0
  %4205 = vmatprep.subr.mxu0 0.0
  %4206 = vmatpush1.msra.mxu0 0.0
  %4207 = vmatprep.subr.mxu0 0.0
  %4208 = vmatpush1.msra.mxu0 0.0
  %4209 = vmatprep.subr.mxu0 0.0
  %4210 = vmatpush1.msra.mxu0 0.0
  %4211 = vmatprep.subr.mxu0 0.0
  %4212 = vmatpush1.msra.mxu0 0.0
  %4213 = vmatprep.subr.mxu0 0.0
  %4214 = vmatpush1.msra.mxu0 0.0
  %4215 = vmatprep.subr.mxu0 0.0
  %4216 = vmatpush1.msra.mxu0 0.0
  %4217 = vmatprep.subr.mxu0 0.0
  %4218 = vmatpush1.msra.mxu0 0.0
  %4219 = vmatprep.subr.mxu0 0.0
  %4220 = vmatpush1.msra.mxu0 0.0
  %4221 = vmatprep.subr.mxu0 0.0
  %4222 = vmatpush1.msra.mxu0 0.0
  %4223 = vmatprep.subr.mxu0 0.0
  %4224 = vmatpush1.msra.mxu0 0.0
  %4225 = vmatprep.subr.mxu0 0.0
  %4226 = vmatpush1.msra.mxu0 0.0
  %4227 = vmatprep.subr.mxu0 0.0
  %4228 = vmatpush1.msra.mxu0 0.0
  %4229 = vmatprep.subr.mxu0 0.0
  %4230 = vmatpush1.msra.mxu0 0.0
  %4231 = vmatprep.subr.mxu0 0.0
  %4232 = vmatpush1.msra.mxu0 0.0
  %4233 = vmatprep.subr.mxu0 0.0
  %4234 = vmatpush1.msra.mxu0 0.0
  %4235 = vmatprep.mubr.f32.mxu0 0.0
  %4236 = vmatmul.mubr.f32.gmra.mrb[0].mxu0 %v4098
  %v4237 = vpop.f32.mrb[0].mxu0
  %v4238 = vadd.f32 0.0, %v4237
  %v4239 = vpop.f32.mrb[0].mxu0
  %v4240 = vadd.f32 0.0, %v4239
  %4241 = vdwg.mxu0
  %v4242 = vadd.f32 %v4060, %v4167
  %v4243 = vadd.f32 %v4061, %v4169
  %v4244 = vadd.f32 %v4062, %v4238
  %v4245 = vadd.f32 %v4063, %v4240
  %s4246 = scalar_lea.vmem %s3, 5120
  %v4247 = vld [vmem:[%s4246] sm:$0xff]
  %v4248 = vld [vmem:[%s4246 + $0x8] sm:$0xff]
  %v4249 = vld [vmem:[%s4246 + $0x10] sm:$0xff]
  %v4250 = vld [vmem:[%s4246 + $0x18] sm:$0xff]
  %v4251 = vld [vmem:[%s4246 + $0x20] sm:$0xff]
  %v4252 = vld [vmem:[%s4246 + $0x28] sm:$0xff]
  %v4253 = vld [vmem:[%s4246 + $0x30] sm:$0xff]
  %v4254 = vld [vmem:[%s4246 + $0x38] sm:$0xff]
  %v4255 = vld [vmem:[%s4246 + $0x40] sm:$0xff]
  %v4256 = vld [vmem:[%s4246 + $0x48] sm:$0xff]
  %v4257 = vld [vmem:[%s4246 + $0x50] sm:$0xff]
  %v4258 = vld [vmem:[%s4246 + $0x58] sm:$0xff]
  %v4259 = vld [vmem:[%s4246 + $0x60] sm:$0xff]
  %v4260 = vld [vmem:[%s4246 + $0x68] sm:$0xff]
  %v4261 = vld [vmem:[%s4246 + $0x70] sm:$0xff]
  %v4262 = vld [vmem:[%s4246 + $0x78] sm:$0xff]
  %v4263 = vld [vmem:[%s4246 + $0x80] sm:$0xff]
  %v4264 = vld [vmem:[%s4246 + $0x88] sm:$0xff]
  %v4265 = vld [vmem:[%s4246 + $0x90] sm:$0xff]
  %v4266 = vld [vmem:[%s4246 + $0x98] sm:$0xff]
  %v4267 = vld [vmem:[%s4246 + $0xa0] sm:$0xff]
  %v4268 = vld [vmem:[%s4246 + $0xa8] sm:$0xff]
  %v4269 = vld [vmem:[%s4246 + $0xb0] sm:$0xff]
  %v4270 = vld [vmem:[%s4246 + $0xb8] sm:$0xff]
  %v4271 = vld [vmem:[%s4246 + $0xc0] sm:$0xff]
  %v4272 = vld [vmem:[%s4246 + $0xc8] sm:$0xff]
  %v4273 = vld [vmem:[%s4246 + $0xd0] sm:$0xff]
  %v4274 = vld [vmem:[%s4246 + $0xd8] sm:$0xff]
  %v4275 = vld [vmem:[%s4246 + $0xe0] sm:$0xff]
  %v4276 = vld [vmem:[%s4246 + $0xe8] sm:$0xff]
  %v4277 = vld [vmem:[%s4246 + $0xf0] sm:$0xff]
  %v4278 = vld [vmem:[%s4246 + $0xf8] sm:$0xff]
  %v4280 = vsel %vm172, %v607, 0
  %4282 = vmatprep.subr.mxu0 %v4248
  %4283 = vmatpush1.msra.mxu0 %v4247
  %4284 = vmatprep.subr.mxu0 %v4252
  %4285 = vmatpush1.msra.mxu0 %v4251
  %4286 = vmatprep.subr.mxu0 %v4256
  %4287 = vmatpush1.msra.mxu0 %v4255
  %4288 = vmatprep.subr.mxu0 %v4260
  %4289 = vmatpush1.msra.mxu0 %v4259
  %4290 = vmatprep.subr.mxu0 %v4264
  %4291 = vmatpush1.msra.mxu0 %v4263
  %4292 = vmatprep.subr.mxu0 %v4268
  %4293 = vmatpush1.msra.mxu0 %v4267
  %4294 = vmatprep.subr.mxu0 %v4272
  %4295 = vmatpush1.msra.mxu0 %v4271
  %4296 = vmatprep.subr.mxu0 %v4276
  %4297 = vmatpush1.msra.mxu0 %v4275
  %4298 = vmatprep.subr.mxu0 0.0
  %4299 = vmatpush1.msra.mxu0 0.0
  %4300 = vmatprep.subr.mxu0 0.0
  %4301 = vmatpush1.msra.mxu0 0.0
  %4302 = vmatprep.subr.mxu0 0.0
  %4303 = vmatpush1.msra.mxu0 0.0
  %4304 = vmatprep.subr.mxu0 0.0
  %4305 = vmatpush1.msra.mxu0 0.0
  %4306 = vmatprep.subr.mxu0 0.0
  %4307 = vmatpush1.msra.mxu0 0.0
  %4308 = vmatprep.subr.mxu0 0.0
  %4309 = vmatpush1.msra.mxu0 0.0
  %4310 = vmatprep.subr.mxu0 0.0
  %4311 = vmatpush1.msra.mxu0 0.0
  %4312 = vmatprep.subr.mxu0 0.0
  %4313 = vmatpush1.msra.mxu0 0.0
  %4314 = vmatprep.subr.mxu0 0.0
  %4315 = vmatpush1.msra.mxu0 0.0
  %4316 = vmatprep.subr.mxu0 0.0
  %4317 = vmatpush1.msra.mxu0 0.0
  %4318 = vmatprep.subr.mxu0 0.0
  %4319 = vmatpush1.msra.mxu0 0.0
  %4320 = vmatprep.subr.mxu0 0.0
  %4321 = vmatpush1.msra.mxu0 0.0
  %4322 = vmatprep.subr.mxu0 0.0
  %4323 = vmatpush1.msra.mxu0 0.0
  %4324 = vmatprep.subr.mxu0 0.0
  %4325 = vmatpush1.msra.mxu0 0.0
  %4326 = vmatprep.subr.mxu0 0.0
  %4327 = vmatpush1.msra.mxu0 0.0
  %4328 = vmatprep.subr.mxu0 0.0
  %4329 = vmatpush1.msra.mxu0 0.0
  %4330 = vmatprep.subr.mxu0 0.0
  %4331 = vmatpush1.msra.mxu0 0.0
  %4332 = vmatprep.subr.mxu0 0.0
  %4333 = vmatpush1.msra.mxu0 0.0
  %4334 = vmatprep.subr.mxu0 0.0
  %4335 = vmatpush1.msra.mxu0 0.0
  %4336 = vmatprep.subr.mxu0 0.0
  %4337 = vmatpush1.msra.mxu0 0.0
  %4338 = vmatprep.subr.mxu0 0.0
  %4339 = vmatpush1.msra.mxu0 0.0
  %4340 = vmatprep.subr.mxu0 0.0
  %4341 = vmatpush1.msra.mxu0 0.0
  %4342 = vmatprep.subr.mxu0 0.0
  %4343 = vmatpush1.msra.mxu0 0.0
  %4344 = vmatprep.subr.mxu0 0.0
  %4345 = vmatpush1.msra.mxu0 0.0
  %4346 = vmatprep.mubr.f32.mxu0 0.0
  %4347 = vmatmul.mubr.f32.gmra.mrb[0].mxu0 %v4280
  %v4348 = vpop.f32.mrb[0].mxu0
  %v4349 = vadd.f32 0.0, %v4348
  %v4350 = vpop.f32.mrb[0].mxu0
  %v4351 = vadd.f32 0.0, %v4350
  %4352 = vdwg.mxu0
  %4353 = vmatprep.subr.mxu0 %v4250
  %4354 = vmatpush1.msra.mxu0 %v4249
  %4355 = vmatprep.subr.mxu0 %v4254
  %4356 = vmatpush1.msra.mxu0 %v4253
  %4357 = vmatprep.subr.mxu0 %v4258
  %4358 = vmatpush1.msra.mxu0 %v4257
  %4359 = vmatprep.subr.mxu0 %v4262
  %4360 = vmatpush1.msra.mxu0 %v4261
  %4361 = vmatprep.subr.mxu0 %v4266
  %4362 = vmatpush1.msra.mxu0 %v4265
  %4363 = vmatprep.subr.mxu0 %v4270
  %4364 = vmatpush1.msra.mxu0 %v4269
  %4365 = vmatprep.subr.mxu0 %v4274
  %4366 = vmatpush1.msra.mxu0 %v4273
  %4367 = vmatprep.subr.mxu0 %v4278
  %4368 = vmatpush1.msra.mxu0 %v4277
  %4369 = vmatprep.subr.mxu0 0.0
  %4370 = vmatpush1.msra.mxu0 0.0
  %4371 = vmatprep.subr.mxu0 0.0
  %4372 = vmatpush1.msra.mxu0 0.0
  %4373 = vmatprep.subr.mxu0 0.0
  %4374 = vmatpush1.msra.mxu0 0.0
  %4375 = vmatprep.subr.mxu0 0.0
  %4376 = vmatpush1.msra.mxu0 0.0
  %4377 = vmatprep.subr.mxu0 0.0
  %4378 = vmatpush1.msra.mxu0 0.0
  %4379 = vmatprep.subr.mxu0 0.0
  %4380 = vmatpush1.msra.mxu0 0.0
  %4381 = vmatprep.subr.mxu0 0.0
  %4382 = vmatpush1.msra.mxu0 0.0
  %4383 = vmatprep.subr.mxu0 0.0
  %4384 = vmatpush1.msra.mxu0 0.0
  %4385 = vmatprep.subr.mxu0 0.0
  %4386 = vmatpush1.msra.mxu0 0.0
  %4387 = vmatprep.subr.mxu0 0.0
  %4388 = vmatpush1.msra.mxu0 0.0
  %4389 = vmatprep.subr.mxu0 0.0
  %4390 = vmatpush1.msra.mxu0 0.0
  %4391 = vmatprep.subr.mxu0 0.0
  %4392 = vmatpush1.msra.mxu0 0.0
  %4393 = vmatprep.subr.mxu0 0.0
  %4394 = vmatpush1.msra.mxu0 0.0
  %4395 = vmatprep.subr.mxu0 0.0
  %4396 = vmatpush1.msra.mxu0 0.0
  %4397 = vmatprep.subr.mxu0 0.0
  %4398 = vmatpush1.msra.mxu0 0.0
  %4399 = vmatprep.subr.mxu0 0.0
  %4400 = vmatpush1.msra.mxu0 0.0
  %4401 = vmatprep.subr.mxu0 0.0
  %4402 = vmatpush1.msra.mxu0 0.0
  %4403 = vmatprep.subr.mxu0 0.0
  %4404 = vmatpush1.msra.mxu0 0.0
  %4405 = vmatprep.subr.mxu0 0.0
  %4406 = vmatpush1.msra.mxu0 0.0
  %4407 = vmatprep.subr.mxu0 0.0
  %4408 = vmatpush1.msra.mxu0 0.0
  %4409 = vmatprep.subr.mxu0 0.0
  %4410 = vmatpush1.msra.mxu0 0.0
  %4411 = vmatprep.subr.mxu0 0.0
  %4412 = vmatpush1.msra.mxu0 0.0
  %4413 = vmatprep.subr.mxu0 0.0
  %4414 = vmatpush1.msra.mxu0 0.0
  %4415 = vmatprep.subr.mxu0 0.0
  %4416 = vmatpush1.msra.mxu0 0.0
  %4417 = vmatprep.mubr.f32.mxu0 0.0
  %4418 = vmatmul.mubr.f32.gmra.mrb[0].mxu0 %v4280
  %v4419 = vpop.f32.mrb[0].mxu0
  %v4420 = vadd.f32 0.0, %v4419
  %v4421 = vpop.f32.mrb[0].mxu0
  %v4422 = vadd.f32 0.0, %v4421
  %4423 = vdwg.mxu0
  %v4424 = vadd.f32 %v4242, %v4349
  %v4425 = vadd.f32 %v4243, %v4351
  %v4426 = vadd.f32 %v4244, %v4420
  %v4427 = vadd.f32 %v4245, %v4422
  %s4428 = scalar_lea.vmem %s3, 5376
  %v4429 = vld [vmem:[%s4428] sm:$0xff]
  %v4430 = vld [vmem:[%s4428 + $0x8] sm:$0xff]
  %v4431 = vld [vmem:[%s4428 + $0x10] sm:$0xff]
  %v4432 = vld [vmem:[%s4428 + $0x18] sm:$0xff]
  %v4433 = vld [vmem:[%s4428 + $0x20] sm:$0xff]
  %v4434 = vld [vmem:[%s4428 + $0x28] sm:$0xff]
  %v4435 = vld [vmem:[%s4428 + $0x30] sm:$0xff]
  %v4436 = vld [vmem:[%s4428 + $0x38] sm:$0xff]
  %v4437 = vld [vmem:[%s4428 + $0x40] sm:$0xff]
  %v4438 = vld [vmem:[%s4428 + $0x48] sm:$0xff]
  %v4439 = vld [vmem:[%s4428 + $0x50] sm:$0xff]
  %v4440 = vld [vmem:[%s4428 + $0x58] sm:$0xff]
  %v4441 = vld [vmem:[%s4428 + $0x60] sm:$0xff]
  %v4442 = vld [vmem:[%s4428 + $0x68] sm:$0xff]
  %v4443 = vld [vmem:[%s4428 + $0x70] sm:$0xff]
  %v4444 = vld [vmem:[%s4428 + $0x78] sm:$0xff]
  %v4445 = vld [vmem:[%s4428 + $0x80] sm:$0xff]
  %v4446 = vld [vmem:[%s4428 + $0x88] sm:$0xff]
  %v4447 = vld [vmem:[%s4428 + $0x90] sm:$0xff]
  %v4448 = vld [vmem:[%s4428 + $0x98] sm:$0xff]
  %v4449 = vld [vmem:[%s4428 + $0xa0] sm:$0xff]
  %v4450 = vld [vmem:[%s4428 + $0xa8] sm:$0xff]
  %v4451 = vld [vmem:[%s4428 + $0xb0] sm:$0xff]
  %v4452 = vld [vmem:[%s4428 + $0xb8] sm:$0xff]
  %v4453 = vld [vmem:[%s4428 + $0xc0] sm:$0xff]
  %v4454 = vld [vmem:[%s4428 + $0xc8] sm:$0xff]
  %v4455 = vld [vmem:[%s4428 + $0xd0] sm:$0xff]
  %v4456 = vld [vmem:[%s4428 + $0xd8] sm:$0xff]
  %v4457 = vld [vmem:[%s4428 + $0xe0] sm:$0xff]
  %v4458 = vld [vmem:[%s4428 + $0xe8] sm:$0xff]
  %v4459 = vld [vmem:[%s4428 + $0xf0] sm:$0xff]
  %v4460 = vld [vmem:[%s4428 + $0xf8] sm:$0xff]
  %v4461 = vrot.slane %v607, 2
  %v4462 = vsel %vm172, %v4461, 0
  %4464 = vmatprep.subr.mxu0 %v4430
  %4465 = vmatpush1.msra.mxu0 %v4429
  %4466 = vmatprep.subr.mxu0 %v4434
  %4467 = vmatpush1.msra.mxu0 %v4433
  %4468 = vmatprep.subr.mxu0 %v4438
  %4469 = vmatpush1.msra.mxu0 %v4437
  %4470 = vmatprep.subr.mxu0 %v4442
  %4471 = vmatpush1.msra.mxu0 %v4441
  %4472 = vmatprep.subr.mxu0 %v4446
  %4473 = vmatpush1.msra.mxu0 %v4445
  %4474 = vmatprep.subr.mxu0 %v4450
  %4475 = vmatpush1.msra.mxu0 %v4449
  %4476 = vmatprep.subr.mxu0 %v4454
  %4477 = vmatpush1.msra.mxu0 %v4453
  %4478 = vmatprep.subr.mxu0 %v4458
  %4479 = vmatpush1.msra.mxu0 %v4457
  %4480 = vmatprep.subr.mxu0 0.0
  %4481 = vmatpush1.msra.mxu0 0.0
  %4482 = vmatprep.subr.mxu0 0.0
  %4483 = vmatpush1.msra.mxu0 0.0
  %4484 = vmatprep.subr.mxu0 0.0
  %4485 = vmatpush1.msra.mxu0 0.0
  %4486 = vmatprep.subr.mxu0 0.0
  %4487 = vmatpush1.msra.mxu0 0.0
  %4488 = vmatprep.subr.mxu0 0.0
  %4489 = vmatpush1.msra.mxu0 0.0
  %4490 = vmatprep.subr.mxu0 0.0
  %4491 = vmatpush1.msra.mxu0 0.0
  %4492 = vmatprep.subr.mxu0 0.0
  %4493 = vmatpush1.msra.mxu0 0.0
  %4494 = vmatprep.subr.mxu0 0.0
  %4495 = vmatpush1.msra.mxu0 0.0
  %4496 = vmatprep.subr.mxu0 0.0
  %4497 = vmatpush1.msra.mxu0 0.0
  %4498 = vmatprep.subr.mxu0 0.0
  %4499 = vmatpush1.msra.mxu0 0.0
  %4500 = vmatprep.subr.mxu0 0.0
  %4501 = vmatpush1.msra.mxu0 0.0
  %4502 = vmatprep.subr.mxu0 0.0
  %4503 = vmatpush1.msra.mxu0 0.0
  %4504 = vmatprep.subr.mxu0 0.0
  %4505 = vmatpush1.msra.mxu0 0.0
  %4506 = vmatprep.subr.mxu0 0.0
  %4507 = vmatpush1.msra.mxu0 0.0
  %4508 = vmatprep.subr.mxu0 0.0
  %4509 = vmatpush1.msra.mxu0 0.0
  %4510 = vmatprep.subr.mxu0 0.0
  %4511 = vmatpush1.msra.mxu0 0.0
  %4512 = vmatprep.subr.mxu0 0.0
  %4513 = vmatpush1.msra.mxu0 0.0
  %4514 = vmatprep.subr.mxu0 0.0
  %4515 = vmatpush1.msra.mxu0 0.0
  %4516 = vmatprep.subr.mxu0 0.0
  %4517 = vmatpush1.msra.mxu0 0.0
  %4518 = vmatprep.subr.mxu0 0.0
  %4519 = vmatpush1.msra.mxu0 0.0
  %4520 = vmatprep.subr.mxu0 0.0
  %4521 = vmatpush1.msra.mxu0 0.0
  %4522 = vmatprep.subr.mxu0 0.0
  %4523 = vmatpush1.msra.mxu0 0.0
  %4524 = vmatprep.subr.mxu0 0.0
  %4525 = vmatpush1.msra.mxu0 0.0
  %4526 = vmatprep.subr.mxu0 0.0
  %4527 = vmatpush1.msra.mxu0 0.0
  %4528 = vmatprep.mubr.f32.mxu0 0.0
  %4529 = vmatmul.mubr.f32.gmra.mrb[0].mxu0 %v4462
  %v4530 = vpop.f32.mrb[0].mxu0
  %v4531 = vadd.f32 0.0, %v4530
  %v4532 = vpop.f32.mrb[0].mxu0
  %v4533 = vadd.f32 0.0, %v4532
  %4534 = vdwg.mxu0
  %4535 = vmatprep.subr.mxu0 %v4432
  %4536 = vmatpush1.msra.mxu0 %v4431
  %4537 = vmatprep.subr.mxu0 %v4436
  %4538 = vmatpush1.msra.mxu0 %v4435
  %4539 = vmatprep.subr.mxu0 %v4440
  %4540 = vmatpush1.msra.mxu0 %v4439
  %4541 = vmatprep.subr.mxu0 %v4444
  %4542 = vmatpush1.msra.mxu0 %v4443
  %4543 = vmatprep.subr.mxu0 %v4448
  %4544 = vmatpush1.msra.mxu0 %v4447
  %4545 = vmatprep.subr.mxu0 %v4452
  %4546 = vmatpush1.msra.mxu0 %v4451
  %4547 = vmatprep.subr.mxu0 %v4456
  %4548 = vmatpush1.msra.mxu0 %v4455
  %4549 = vmatprep.subr.mxu0 %v4460
  %4550 = vmatpush1.msra.mxu0 %v4459
  %4551 = vmatprep.subr.mxu0 0.0
  %4552 = vmatpush1.msra.mxu0 0.0
  %4553 = vmatprep.subr.mxu0 0.0
  %4554 = vmatpush1.msra.mxu0 0.0
  %4555 = vmatprep.subr.mxu0 0.0
  %4556 = vmatpush1.msra.mxu0 0.0
  %4557 = vmatprep.subr.mxu0 0.0
  %4558 = vmatpush1.msra.mxu0 0.0
  %4559 = vmatprep.subr.mxu0 0.0
  %4560 = vmatpush1.msra.mxu0 0.0
  %4561 = vmatprep.subr.mxu0 0.0
  %4562 = vmatpush1.msra.mxu0 0.0
  %4563 = vmatprep.subr.mxu0 0.0
  %4564 = vmatpush1.msra.mxu0 0.0
  %4565 = vmatprep.subr.mxu0 0.0
  %4566 = vmatpush1.msra.mxu0 0.0
  %4567 = vmatprep.subr.mxu0 0.0
  %4568 = vmatpush1.msra.mxu0 0.0
  %4569 = vmatprep.subr.mxu0 0.0
  %4570 = vmatpush1.msra.mxu0 0.0
  %4571 = vmatprep.subr.mxu0 0.0
  %4572 = vmatpush1.msra.mxu0 0.0
  %4573 = vmatprep.subr.mxu0 0.0
  %4574 = vmatpush1.msra.mxu0 0.0
  %4575 = vmatprep.subr.mxu0 0.0
  %4576 = vmatpush1.msra.mxu0 0.0
  %4577 = vmatprep.subr.mxu0 0.0
  %4578 = vmatpush1.msra.mxu0 0.0
  %4579 = vmatprep.subr.mxu0 0.0
  %4580 = vmatpush1.msra.mxu0 0.0
  %4581 = vmatprep.subr.mxu0 0.0
  %4582 = vmatpush1.msra.mxu0 0.0
  %4583 = vmatprep.subr.mxu0 0.0
  %4584 = vmatpush1.msra.mxu0 0.0
  %4585 = vmatprep.subr.mxu0 0.0
  %4586 = vmatpush1.msra.mxu0 0.0
  %4587 = vmatprep.subr.mxu0 0.0
  %4588 = vmatpush1.msra.mxu0 0.0
  %4589 = vmatprep.subr.mxu0 0.0
  %4590 = vmatpush1.msra.mxu0 0.0
  %4591 = vmatprep.subr.mxu0 0.0
  %4592 = vmatpush1.msra.mxu0 0.0
  %4593 = vmatprep.subr.mxu0 0.0
  %4594 = vmatpush1.msra.mxu0 0.0
  %4595 = vmatprep.subr.mxu0 0.0
  %4596 = vmatpush1.msra.mxu0 0.0
  %4597 = vmatprep.subr.mxu0 0.0
  %4598 = vmatpush1.msra.mxu0 0.0
  %4599 = vmatprep.mubr.f32.mxu0 0.0
  %4600 = vmatmul.mubr.f32.gmra.mrb[0].mxu0 %v4462
  %v4601 = vpop.f32.mrb[0].mxu0
  %v4602 = vadd.f32 0.0, %v4601
  %v4603 = vpop.f32.mrb[0].mxu0
  %v4604 = vadd.f32 0.0, %v4603
  %4605 = vdwg.mxu0
  %v4606 = vadd.f32 %v4424, %v4531
  %v4607 = vadd.f32 %v4425, %v4533
  %v4608 = vadd.f32 %v4426, %v4602
  %v4609 = vadd.f32 %v4427, %v4604
  %s4610 = scalar_lea.vmem %s3, 5632
  %v4611 = vld [vmem:[%s4610] sm:$0xff]
  %v4612 = vld [vmem:[%s4610 + $0x8] sm:$0xff]
  %v4613 = vld [vmem:[%s4610 + $0x10] sm:$0xff]
  %v4614 = vld [vmem:[%s4610 + $0x18] sm:$0xff]
  %v4615 = vld [vmem:[%s4610 + $0x20] sm:$0xff]
  %v4616 = vld [vmem:[%s4610 + $0x28] sm:$0xff]
  %v4617 = vld [vmem:[%s4610 + $0x30] sm:$0xff]
  %v4618 = vld [vmem:[%s4610 + $0x38] sm:$0xff]
  %v4619 = vld [vmem:[%s4610 + $0x40] sm:$0xff]
  %v4620 = vld [vmem:[%s4610 + $0x48] sm:$0xff]
  %v4621 = vld [vmem:[%s4610 + $0x50] sm:$0xff]
  %v4622 = vld [vmem:[%s4610 + $0x58] sm:$0xff]
  %v4623 = vld [vmem:[%s4610 + $0x60] sm:$0xff]
  %v4624 = vld [vmem:[%s4610 + $0x68] sm:$0xff]
  %v4625 = vld [vmem:[%s4610 + $0x70] sm:$0xff]
  %v4626 = vld [vmem:[%s4610 + $0x78] sm:$0xff]
  %v4627 = vld [vmem:[%s4610 + $0x80] sm:$0xff]
  %v4628 = vld [vmem:[%s4610 + $0x88] sm:$0xff]
  %v4629 = vld [vmem:[%s4610 + $0x90] sm:$0xff]
  %v4630 = vld [vmem:[%s4610 + $0x98] sm:$0xff]
  %v4631 = vld [vmem:[%s4610 + $0xa0] sm:$0xff]
  %v4632 = vld [vmem:[%s4610 + $0xa8] sm:$0xff]
  %v4633 = vld [vmem:[%s4610 + $0xb0] sm:$0xff]
  %v4634 = vld [vmem:[%s4610 + $0xb8] sm:$0xff]
  %v4635 = vld [vmem:[%s4610 + $0xc0] sm:$0xff]
  %v4636 = vld [vmem:[%s4610 + $0xc8] sm:$0xff]
  %v4637 = vld [vmem:[%s4610 + $0xd0] sm:$0xff]
  %v4638 = vld [vmem:[%s4610 + $0xd8] sm:$0xff]
  %v4639 = vld [vmem:[%s4610 + $0xe0] sm:$0xff]
  %v4640 = vld [vmem:[%s4610 + $0xe8] sm:$0xff]
  %v4641 = vld [vmem:[%s4610 + $0xf0] sm:$0xff]
  %v4642 = vld [vmem:[%s4610 + $0xf8] sm:$0xff]
  %v4643 = vrot.slane %v607, 4
  %v4644 = vsel %vm172, %v4643, 0
  %4646 = vmatprep.subr.mxu0 %v4612
  %4647 = vmatpush1.msra.mxu0 %v4611
  %4648 = vmatprep.subr.mxu0 %v4616
  %4649 = vmatpush1.msra.mxu0 %v4615
  %4650 = vmatprep.subr.mxu0 %v4620
  %4651 = vmatpush1.msra.mxu0 %v4619
  %4652 = vmatprep.subr.mxu0 %v4624
  %4653 = vmatpush1.msra.mxu0 %v4623
  %4654 = vmatprep.subr.mxu0 %v4628
  %4655 = vmatpush1.msra.mxu0 %v4627
  %4656 = vmatprep.subr.mxu0 %v4632
  %4657 = vmatpush1.msra.mxu0 %v4631
  %4658 = vmatprep.subr.mxu0 %v4636
  %4659 = vmatpush1.msra.mxu0 %v4635
  %4660 = vmatprep.subr.mxu0 %v4640
  %4661 = vmatpush1.msra.mxu0 %v4639
  %4662 = vmatprep.subr.mxu0 0.0
  %4663 = vmatpush1.msra.mxu0 0.0
  %4664 = vmatprep.subr.mxu0 0.0
  %4665 = vmatpush1.msra.mxu0 0.0
  %4666 = vmatprep.subr.mxu0 0.0
  %4667 = vmatpush1.msra.mxu0 0.0
  %4668 = vmatprep.subr.mxu0 0.0
  %4669 = vmatpush1.msra.mxu0 0.0
  %4670 = vmatprep.subr.mxu0 0.0
  %4671 = vmatpush1.msra.mxu0 0.0
  %4672 = vmatprep.subr.mxu0 0.0
  %4673 = vmatpush1.msra.mxu0 0.0
  %4674 = vmatprep.subr.mxu0 0.0
  %4675 = vmatpush1.msra.mxu0 0.0
  %4676 = vmatprep.subr.mxu0 0.0
  %4677 = vmatpush1.msra.mxu0 0.0
  %4678 = vmatprep.subr.mxu0 0.0
  %4679 = vmatpush1.msra.mxu0 0.0
  %4680 = vmatprep.subr.mxu0 0.0
  %4681 = vmatpush1.msra.mxu0 0.0
  %4682 = vmatprep.subr.mxu0 0.0
  %4683 = vmatpush1.msra.mxu0 0.0
  %4684 = vmatprep.subr.mxu0 0.0
  %4685 = vmatpush1.msra.mxu0 0.0
  %4686 = vmatprep.subr.mxu0 0.0
  %4687 = vmatpush1.msra.mxu0 0.0
  %4688 = vmatprep.subr.mxu0 0.0
  %4689 = vmatpush1.msra.mxu0 0.0
  %4690 = vmatprep.subr.mxu0 0.0
  %4691 = vmatpush1.msra.mxu0 0.0
  %4692 = vmatprep.subr.mxu0 0.0
  %4693 = vmatpush1.msra.mxu0 0.0
  %4694 = vmatprep.subr.mxu0 0.0
  %4695 = vmatpush1.msra.mxu0 0.0
  %4696 = vmatprep.subr.mxu0 0.0
  %4697 = vmatpush1.msra.mxu0 0.0
  %4698 = vmatprep.subr.mxu0 0.0
  %4699 = vmatpush1.msra.mxu0 0.0
  %4700 = vmatprep.subr.mxu0 0.0
  %4701 = vmatpush1.msra.mxu0 0.0
  %4702 = vmatprep.subr.mxu0 0.0
  %4703 = vmatpush1.msra.mxu0 0.0
  %4704 = vmatprep.subr.mxu0 0.0
  %4705 = vmatpush1.msra.mxu0 0.0
  %4706 = vmatprep.subr.mxu0 0.0
  %4707 = vmatpush1.msra.mxu0 0.0
  %4708 = vmatprep.subr.mxu0 0.0
  %4709 = vmatpush1.msra.mxu0 0.0
  %4710 = vmatprep.mubr.f32.mxu0 0.0
  %4711 = vmatmul.mubr.f32.gmra.mrb[0].mxu0 %v4644
  %v4712 = vpop.f32.mrb[0].mxu0
  %v4713 = vadd.f32 0.0, %v4712
  %v4714 = vpop.f32.mrb[0].mxu0
  %v4715 = vadd.f32 0.0, %v4714
  %4716 = vdwg.mxu0
  %4717 = vmatprep.subr.mxu0 %v4614
  %4718 = vmatpush1.msra.mxu0 %v4613
  %4719 = vmatprep.subr.mxu0 %v4618
  %4720 = vmatpush1.msra.mxu0 %v4617
  %4721 = vmatprep.subr.mxu0 %v4622
  %4722 = vmatpush1.msra.mxu0 %v4621
  %4723 = vmatprep.subr.mxu0 %v4626
  %4724 = vmatpush1.msra.mxu0 %v4625
  %4725 = vmatprep.subr.mxu0 %v4630
  %4726 = vmatpush1.msra.mxu0 %v4629
  %4727 = vmatprep.subr.mxu0 %v4634
  %4728 = vmatpush1.msra.mxu0 %v4633
  %4729 = vmatprep.subr.mxu0 %v4638
  %4730 = vmatpush1.msra.mxu0 %v4637
  %4731 = vmatprep.subr.mxu0 %v4642
  %4732 = vmatpush1.msra.mxu0 %v4641
  %4733 = vmatprep.subr.mxu0 0.0
  %4734 = vmatpush1.msra.mxu0 0.0
  %4735 = vmatprep.subr.mxu0 0.0
  %4736 = vmatpush1.msra.mxu0 0.0
  %4737 = vmatprep.subr.mxu0 0.0
  %4738 = vmatpush1.msra.mxu0 0.0
  %4739 = vmatprep.subr.mxu0 0.0
  %4740 = vmatpush1.msra.mxu0 0.0
  %4741 = vmatprep.subr.mxu0 0.0
  %4742 = vmatpush1.msra.mxu0 0.0
  %4743 = vmatprep.subr.mxu0 0.0
  %4744 = vmatpush1.msra.mxu0 0.0
  %4745 = vmatprep.subr.mxu0 0.0
  %4746 = vmatpush1.msra.mxu0 0.0
  %4747 = vmatprep.subr.mxu0 0.0
  %4748 = vmatpush1.msra.mxu0 0.0
  %4749 = vmatprep.subr.mxu0 0.0
  %4750 = vmatpush1.msra.mxu0 0.0
  %4751 = vmatprep.subr.mxu0 0.0
  %4752 = vmatpush1.msra.mxu0 0.0
  %4753 = vmatprep.subr.mxu0 0.0
  %4754 = vmatpush1.msra.mxu0 0.0
  %4755 = vmatprep.subr.mxu0 0.0
  %4756 = vmatpush1.msra.mxu0 0.0
  %4757 = vmatprep.subr.mxu0 0.0
  %4758 = vmatpush1.msra.mxu0 0.0
  %4759 = vmatprep.subr.mxu0 0.0
  %4760 = vmatpush1.msra.mxu0 0.0
  %4761 = vmatprep.subr.mxu0 0.0
  %4762 = vmatpush1.msra.mxu0 0.0
  %4763 = vmatprep.subr.mxu0 0.0
  %4764 = vmatpush1.msra.mxu0 0.0
  %4765 = vmatprep.subr.mxu0 0.0
  %4766 = vmatpush1.msra.mxu0 0.0
  %4767 = vmatprep.subr.mxu0 0.0
  %4768 = vmatpush1.msra.mxu0 0.0
  %4769 = vmatprep.subr.mxu0 0.0
  %4770 = vmatpush1.msra.mxu0 0.0
  %4771 = vmatprep.subr.mxu0 0.0
  %4772 = vmatpush1.msra.mxu0 0.0
  %4773 = vmatprep.subr.mxu0 0.0
  %4774 = vmatpush1.msra.mxu0 0.0
  %4775 = vmatprep.subr.mxu0 0.0
  %4776 = vmatpush1.msra.mxu0 0.0
  %4777 = vmatprep.subr.mxu0 0.0
  %4778 = vmatpush1.msra.mxu0 0.0
  %4779 = vmatprep.subr.mxu0 0.0
  %4780 = vmatpush1.msra.mxu0 0.0
  %4781 = vmatprep.mubr.f32.mxu0 0.0
  %4782 = vmatmul.mubr.f32.gmra.mrb[0].mxu0 %v4644
  %v4783 = vpop.f32.mrb[0].mxu0
  %v4784 = vadd.f32 0.0, %v4783
  %v4785 = vpop.f32.mrb[0].mxu0
  %v4786 = vadd.f32 0.0, %v4785
  %4787 = vdwg.mxu0
  %v4788 = vadd.f32 %v4606, %v4713
  %v4789 = vadd.f32 %v4607, %v4715
  %v4790 = vadd.f32 %v4608, %v4784
  %v4791 = vadd.f32 %v4609, %v4786
  %s4792 = scalar_lea.vmem %s3, 5888
  %v4793 = vld [vmem:[%s4792] sm:$0xff]
  %v4794 = vld [vmem:[%s4792 + $0x8] sm:$0xff]
  %v4795 = vld [vmem:[%s4792 + $0x10] sm:$0xff]
  %v4796 = vld [vmem:[%s4792 + $0x18] sm:$0xff]
  %v4797 = vld [vmem:[%s4792 + $0x20] sm:$0xff]
  %v4798 = vld [vmem:[%s4792 + $0x28] sm:$0xff]
  %v4799 = vld [vmem:[%s4792 + $0x30] sm:$0xff]
  %v4800 = vld [vmem:[%s4792 + $0x38] sm:$0xff]
  %v4801 = vld [vmem:[%s4792 + $0x40] sm:$0xff]
  %v4802 = vld [vmem:[%s4792 + $0x48] sm:$0xff]
  %v4803 = vld [vmem:[%s4792 + $0x50] sm:$0xff]
  %v4804 = vld [vmem:[%s4792 + $0x58] sm:$0xff]
  %v4805 = vld [vmem:[%s4792 + $0x60] sm:$0xff]
  %v4806 = vld [vmem:[%s4792 + $0x68] sm:$0xff]
  %v4807 = vld [vmem:[%s4792 + $0x70] sm:$0xff]
  %v4808 = vld [vmem:[%s4792 + $0x78] sm:$0xff]
  %v4809 = vld [vmem:[%s4792 + $0x80] sm:$0xff]
  %v4810 = vld [vmem:[%s4792 + $0x88] sm:$0xff]
  %v4811 = vld [vmem:[%s4792 + $0x90] sm:$0xff]
  %v4812 = vld [vmem:[%s4792 + $0x98] sm:$0xff]
  %v4813 = vld [vmem:[%s4792 + $0xa0] sm:$0xff]
  %v4814 = vld [vmem:[%s4792 + $0xa8] sm:$0xff]
  %v4815 = vld [vmem:[%s4792 + $0xb0] sm:$0xff]
  %v4816 = vld [vmem:[%s4792 + $0xb8] sm:$0xff]
  %v4817 = vld [vmem:[%s4792 + $0xc0] sm:$0xff]
  %v4818 = vld [vmem:[%s4792 + $0xc8] sm:$0xff]
  %v4819 = vld [vmem:[%s4792 + $0xd0] sm:$0xff]
  %v4820 = vld [vmem:[%s4792 + $0xd8] sm:$0xff]
  %v4821 = vld [vmem:[%s4792 + $0xe0] sm:$0xff]
  %v4822 = vld [vmem:[%s4792 + $0xe8] sm:$0xff]
  %v4823 = vld [vmem:[%s4792 + $0xf0] sm:$0xff]
  %v4824 = vld [vmem:[%s4792 + $0xf8] sm:$0xff]
  %v4825 = vrot.slane %v607, 6
  %v4826 = vsel %vm172, %v4825, 0
  %4828 = vmatprep.subr.mxu0 %v4794
  %4829 = vmatpush1.msra.mxu0 %v4793
  %4830 = vmatprep.subr.mxu0 %v4798
  %4831 = vmatpush1.msra.mxu0 %v4797
  %4832 = vmatprep.subr.mxu0 %v4802
  %4833 = vmatpush1.msra.mxu0 %v4801
  %4834 = vmatprep.subr.mxu0 %v4806
  %4835 = vmatpush1.msra.mxu0 %v4805
  %4836 = vmatprep.subr.mxu0 %v4810
  %4837 = vmatpush1.msra.mxu0 %v4809
  %4838 = vmatprep.subr.mxu0 %v4814
  %4839 = vmatpush1.msra.mxu0 %v4813
  %4840 = vmatprep.subr.mxu0 %v4818
  %4841 = vmatpush1.msra.mxu0 %v4817
  %4842 = vmatprep.subr.mxu0 %v4822
  %4843 = vmatpush1.msra.mxu0 %v4821
  %4844 = vmatprep.subr.mxu0 0.0
  %4845 = vmatpush1.msra.mxu0 0.0
  %4846 = vmatprep.subr.mxu0 0.0
  %4847 = vmatpush1.msra.mxu0 0.0
  %4848 = vmatprep.subr.mxu0 0.0
  %4849 = vmatpush1.msra.mxu0 0.0
  %4850 = vmatprep.subr.mxu0 0.0
  %4851 = vmatpush1.msra.mxu0 0.0
  %4852 = vmatprep.subr.mxu0 0.0
  %4853 = vmatpush1.msra.mxu0 0.0
  %4854 = vmatprep.subr.mxu0 0.0
  %4855 = vmatpush1.msra.mxu0 0.0
  %4856 = vmatprep.subr.mxu0 0.0
  %4857 = vmatpush1.msra.mxu0 0.0
  %4858 = vmatprep.subr.mxu0 0.0
  %4859 = vmatpush1.msra.mxu0 0.0
  %4860 = vmatprep.subr.mxu0 0.0
  %4861 = vmatpush1.msra.mxu0 0.0
  %4862 = vmatprep.subr.mxu0 0.0
  %4863 = vmatpush1.msra.mxu0 0.0
  %4864 = vmatprep.subr.mxu0 0.0
  %4865 = vmatpush1.msra.mxu0 0.0
  %4866 = vmatprep.subr.mxu0 0.0
  %4867 = vmatpush1.msra.mxu0 0.0
  %4868 = vmatprep.subr.mxu0 0.0
  %4869 = vmatpush1.msra.mxu0 0.0
  %4870 = vmatprep.subr.mxu0 0.0
  %4871 = vmatpush1.msra.mxu0 0.0
  %4872 = vmatprep.subr.mxu0 0.0
  %4873 = vmatpush1.msra.mxu0 0.0
  %4874 = vmatprep.subr.mxu0 0.0
  %4875 = vmatpush1.msra.mxu0 0.0
  %4876 = vmatprep.subr.mxu0 0.0
  %4877 = vmatpush1.msra.mxu0 0.0
  %4878 = vmatprep.subr.mxu0 0.0
  %4879 = vmatpush1.msra.mxu0 0.0
  %4880 = vmatprep.subr.mxu0 0.0
  %4881 = vmatpush1.msra.mxu0 0.0
  %4882 = vmatprep.subr.mxu0 0.0
  %4883 = vmatpush1.msra.mxu0 0.0
  %4884 = vmatprep.subr.mxu0 0.0
  %4885 = vmatpush1.msra.mxu0 0.0
  %4886 = vmatprep.subr.mxu0 0.0
  %4887 = vmatpush1.msra.mxu0 0.0
  %4888 = vmatprep.subr.mxu0 0.0
  %4889 = vmatpush1.msra.mxu0 0.0
  %4890 = vmatprep.subr.mxu0 0.0
  %4891 = vmatpush1.msra.mxu0 0.0
  %4892 = vmatprep.mubr.f32.mxu0 0.0
  %4893 = vmatmul.mubr.f32.gmra.mrb[0].mxu0 %v4826
  %v4894 = vpop.f32.mrb[0].mxu0
  %v4895 = vadd.f32 0.0, %v4894
  %v4896 = vpop.f32.mrb[0].mxu0
  %v4897 = vadd.f32 0.0, %v4896
  %4898 = vdwg.mxu0
  %4899 = vmatprep.subr.mxu0 %v4796
  %4900 = vmatpush1.msra.mxu0 %v4795
  %4901 = vmatprep.subr.mxu0 %v4800
  %4902 = vmatpush1.msra.mxu0 %v4799
  %4903 = vmatprep.subr.mxu0 %v4804
  %4904 = vmatpush1.msra.mxu0 %v4803
  %4905 = vmatprep.subr.mxu0 %v4808
  %4906 = vmatpush1.msra.mxu0 %v4807
  %4907 = vmatprep.subr.mxu0 %v4812
  %4908 = vmatpush1.msra.mxu0 %v4811
  %4909 = vmatprep.subr.mxu0 %v4816
  %4910 = vmatpush1.msra.mxu0 %v4815
  %4911 = vmatprep.subr.mxu0 %v4820
  %4912 = vmatpush1.msra.mxu0 %v4819
  %4913 = vmatprep.subr.mxu0 %v4824
  %4914 = vmatpush1.msra.mxu0 %v4823
  %4915 = vmatprep.subr.mxu0 0.0
  %4916 = vmatpush1.msra.mxu0 0.0
  %4917 = vmatprep.subr.mxu0 0.0
  %4918 = vmatpush1.msra.mxu0 0.0
  %4919 = vmatprep.subr.mxu0 0.0
  %4920 = vmatpush1.msra.mxu0 0.0
  %4921 = vmatprep.subr.mxu0 0.0
  %4922 = vmatpush1.msra.mxu0 0.0
  %4923 = vmatprep.subr.mxu0 0.0
  %4924 = vmatpush1.msra.mxu0 0.0
  %4925 = vmatprep.subr.mxu0 0.0
  %4926 = vmatpush1.msra.mxu0 0.0
  %4927 = vmatprep.subr.mxu0 0.0
  %4928 = vmatpush1.msra.mxu0 0.0
  %4929 = vmatprep.subr.mxu0 0.0
  %4930 = vmatpush1.msra.mxu0 0.0
  %4931 = vmatprep.subr.mxu0 0.0
  %4932 = vmatpush1.msra.mxu0 0.0
  %4933 = vmatprep.subr.mxu0 0.0
  %4934 = vmatpush1.msra.mxu0 0.0
  %4935 = vmatprep.subr.mxu0 0.0
  %4936 = vmatpush1.msra.mxu0 0.0
  %4937 = vmatprep.subr.mxu0 0.0
  %4938 = vmatpush1.msra.mxu0 0.0
  %4939 = vmatprep.subr.mxu0 0.0
  %4940 = vmatpush1.msra.mxu0 0.0
  %4941 = vmatprep.subr.mxu0 0.0
  %4942 = vmatpush1.msra.mxu0 0.0
  %4943 = vmatprep.subr.mxu0 0.0
  %4944 = vmatpush1.msra.mxu0 0.0
  %4945 = vmatprep.subr.mxu0 0.0
  %4946 = vmatpush1.msra.mxu0 0.0
  %4947 = vmatprep.subr.mxu0 0.0
  %4948 = vmatpush1.msra.mxu0 0.0
  %4949 = vmatprep.subr.mxu0 0.0
  %4950 = vmatpush1.msra.mxu0 0.0
  %4951 = vmatprep.subr.mxu0 0.0
  %4952 = vmatpush1.msra.mxu0 0.0
  %4953 = vmatprep.subr.mxu0 0.0
  %4954 = vmatpush1.msra.mxu0 0.0
  %4955 = vmatprep.subr.mxu0 0.0
  %4956 = vmatpush1.msra.mxu0 0.0
  %4957 = vmatprep.subr.mxu0 0.0
  %4958 = vmatpush1.msra.mxu0 0.0
  %4959 = vmatprep.subr.mxu0 0.0
  %4960 = vmatpush1.msra.mxu0 0.0
  %4961 = vmatprep.subr.mxu0 0.0
  %4962 = vmatpush1.msra.mxu0 0.0
  %4963 = vmatprep.mubr.f32.mxu0 0.0
  %4964 = vmatmul.mubr.f32.gmra.mrb[0].mxu0 %v4826
  %v4965 = vpop.f32.mrb[0].mxu0
  %v4966 = vadd.f32 0.0, %v4965
  %v4967 = vpop.f32.mrb[0].mxu0
  %v4968 = vadd.f32 0.0, %v4967
  %4969 = vdwg.mxu0
  %v4970 = vadd.f32 %v4788, %v4895
  %v4971 = vadd.f32 %v4789, %v4897
  %v4972 = vadd.f32 %v4790, %v4966
  %v4973 = vadd.f32 %v4791, %v4968
  %s4974 = scalar_lea.vmem %s3, 6144
  %v4975 = vld [vmem:[%s4974] sm:$0xff]
  %v4976 = vld [vmem:[%s4974 + $0x8] sm:$0xff]
  %v4977 = vld [vmem:[%s4974 + $0x10] sm:$0xff]
  %v4978 = vld [vmem:[%s4974 + $0x18] sm:$0xff]
  %v4979 = vld [vmem:[%s4974 + $0x20] sm:$0xff]
  %v4980 = vld [vmem:[%s4974 + $0x28] sm:$0xff]
  %v4981 = vld [vmem:[%s4974 + $0x30] sm:$0xff]
  %v4982 = vld [vmem:[%s4974 + $0x38] sm:$0xff]
  %v4983 = vld [vmem:[%s4974 + $0x40] sm:$0xff]
  %v4984 = vld [vmem:[%s4974 + $0x48] sm:$0xff]
  %v4985 = vld [vmem:[%s4974 + $0x50] sm:$0xff]
  %v4986 = vld [vmem:[%s4974 + $0x58] sm:$0xff]
  %v4987 = vld [vmem:[%s4974 + $0x60] sm:$0xff]
  %v4988 = vld [vmem:[%s4974 + $0x68] sm:$0xff]
  %v4989 = vld [vmem:[%s4974 + $0x70] sm:$0xff]
  %v4990 = vld [vmem:[%s4974 + $0x78] sm:$0xff]
  %v4991 = vld [vmem:[%s4974 + $0x80] sm:$0xff]
  %v4992 = vld [vmem:[%s4974 + $0x88] sm:$0xff]
  %v4993 = vld [vmem:[%s4974 + $0x90] sm:$0xff]
  %v4994 = vld [vmem:[%s4974 + $0x98] sm:$0xff]
  %v4995 = vld [vmem:[%s4974 + $0xa0] sm:$0xff]
  %v4996 = vld [vmem:[%s4974 + $0xa8] sm:$0xff]
  %v4997 = vld [vmem:[%s4974 + $0xb0] sm:$0xff]
  %v4998 = vld [vmem:[%s4974 + $0xb8] sm:$0xff]
  %v4999 = vld [vmem:[%s4974 + $0xc0] sm:$0xff]
  %v5000 = vld [vmem:[%s4974 + $0xc8] sm:$0xff]
  %v5001 = vld [vmem:[%s4974 + $0xd0] sm:$0xff]
  %v5002 = vld [vmem:[%s4974 + $0xd8] sm:$0xff]
  %v5003 = vld [vmem:[%s4974 + $0xe0] sm:$0xff]
  %v5004 = vld [vmem:[%s4974 + $0xe8] sm:$0xff]
  %v5005 = vld [vmem:[%s4974 + $0xf0] sm:$0xff]
  %v5006 = vld [vmem:[%s4974 + $0xf8] sm:$0xff]
  %v5008 = vsel %vm172, %v608, 0
  %5010 = vmatprep.subr.mxu0 %v4976
  %5011 = vmatpush1.msra.mxu0 %v4975
  %5012 = vmatprep.subr.mxu0 %v4980
  %5013 = vmatpush1.msra.mxu0 %v4979
  %5014 = vmatprep.subr.mxu0 %v4984
  %5015 = vmatpush1.msra.mxu0 %v4983
  %5016 = vmatprep.subr.mxu0 %v4988
  %5017 = vmatpush1.msra.mxu0 %v4987
  %5018 = vmatprep.subr.mxu0 %v4992
  %5019 = vmatpush1.msra.mxu0 %v4991
  %5020 = vmatprep.subr.mxu0 %v4996
  %5021 = vmatpush1.msra.mxu0 %v4995
  %5022 = vmatprep.subr.mxu0 %v5000
  %5023 = vmatpush1.msra.mxu0 %v4999
  %5024 = vmatprep.subr.mxu0 %v5004
  %5025 = vmatpush1.msra.mxu0 %v5003
  %5026 = vmatprep.subr.mxu0 0.0
  %5027 = vmatpush1.msra.mxu0 0.0
  %5028 = vmatprep.subr.mxu0 0.0
  %5029 = vmatpush1.msra.mxu0 0.0
  %5030 = vmatprep.subr.mxu0 0.0
  %5031 = vmatpush1.msra.mxu0 0.0
  %5032 = vmatprep.subr.mxu0 0.0
  %5033 = vmatpush1.msra.mxu0 0.0
  %5034 = vmatprep.subr.mxu0 0.0
  %5035 = vmatpush1.msra.mxu0 0.0
  %5036 = vmatprep.subr.mxu0 0.0
  %5037 = vmatpush1.msra.mxu0 0.0
  %5038 = vmatprep.subr.mxu0 0.0
  %5039 = vmatpush1.msra.mxu0 0.0
  %5040 = vmatprep.subr.mxu0 0.0
  %5041 = vmatpush1.msra.mxu0 0.0
  %5042 = vmatprep.subr.mxu0 0.0
  %5043 = vmatpush1.msra.mxu0 0.0
  %5044 = vmatprep.subr.mxu0 0.0
  %5045 = vmatpush1.msra.mxu0 0.0
  %5046 = vmatprep.subr.mxu0 0.0
  %5047 = vmatpush1.msra.mxu0 0.0
  %5048 = vmatprep.subr.mxu0 0.0
  %5049 = vmatpush1.msra.mxu0 0.0
  %5050 = vmatprep.subr.mxu0 0.0
  %5051 = vmatpush1.msra.mxu0 0.0
  %5052 = vmatprep.subr.mxu0 0.0
  %5053 = vmatpush1.msra.mxu0 0.0
  %5054 = vmatprep.subr.mxu0 0.0
  %5055 = vmatpush1.msra.mxu0 0.0
  %5056 = vmatprep.subr.mxu0 0.0
  %5057 = vmatpush1.msra.mxu0 0.0
  %5058 = vmatprep.subr.mxu0 0.0
  %5059 = vmatpush1.msra.mxu0 0.0
  %5060 = vmatprep.subr.mxu0 0.0
  %5061 = vmatpush1.msra.mxu0 0.0
  %5062 = vmatprep.subr.mxu0 0.0
  %5063 = vmatpush1.msra.mxu0 0.0
  %5064 = vmatprep.subr.mxu0 0.0
  %5065 = vmatpush1.msra.mxu0 0.0
  %5066 = vmatprep.subr.mxu0 0.0
  %5067 = vmatpush1.msra.mxu0 0.0
  %5068 = vmatprep.subr.mxu0 0.0
  %5069 = vmatpush1.msra.mxu0 0.0
  %5070 = vmatprep.subr.mxu0 0.0
  %5071 = vmatpush1.msra.mxu0 0.0
  %5072 = vmatprep.subr.mxu0 0.0
  %5073 = vmatpush1.msra.mxu0 0.0
  %5074 = vmatprep.mubr.f32.mxu0 0.0
  %5075 = vmatmul.mubr.f32.gmra.mrb[0].mxu0 %v5008
  %v5076 = vpop.f32.mrb[0].mxu0
  %v5077 = vadd.f32 0.0, %v5076
  %v5078 = vpop.f32.mrb[0].mxu0
  %v5079 = vadd.f32 0.0, %v5078
  %5080 = vdwg.mxu0
  %5081 = vmatprep.subr.mxu0 %v4978
  %5082 = vmatpush1.msra.mxu0 %v4977
  %5083 = vmatprep.subr.mxu0 %v4982
  %5084 = vmatpush1.msra.mxu0 %v4981
  %5085 = vmatprep.subr.mxu0 %v4986
  %5086 = vmatpush1.msra.mxu0 %v4985
  %5087 = vmatprep.subr.mxu0 %v4990
  %5088 = vmatpush1.msra.mxu0 %v4989
  %5089 = vmatprep.subr.mxu0 %v4994
  %5090 = vmatpush1.msra.mxu0 %v4993
  %5091 = vmatprep.subr.mxu0 %v4998
  %5092 = vmatpush1.msra.mxu0 %v4997
  %5093 = vmatprep.subr.mxu0 %v5002
  %5094 = vmatpush1.msra.mxu0 %v5001
  %5095 = vmatprep.subr.mxu0 %v5006
  %5096 = vmatpush1.msra.mxu0 %v5005
  %5097 = vmatprep.subr.mxu0 0.0
  %5098 = vmatpush1.msra.mxu0 0.0
  %5099 = vmatprep.subr.mxu0 0.0
  %5100 = vmatpush1.msra.mxu0 0.0
  %5101 = vmatprep.subr.mxu0 0.0
  %5102 = vmatpush1.msra.mxu0 0.0
  %5103 = vmatprep.subr.mxu0 0.0
  %5104 = vmatpush1.msra.mxu0 0.0
  %5105 = vmatprep.subr.mxu0 0.0
  %5106 = vmatpush1.msra.mxu0 0.0
  %5107 = vmatprep.subr.mxu0 0.0
  %5108 = vmatpush1.msra.mxu0 0.0
  %5109 = vmatprep.subr.mxu0 0.0
  %5110 = vmatpush1.msra.mxu0 0.0
  %5111 = vmatprep.subr.mxu0 0.0
  %5112 = vmatpush1.msra.mxu0 0.0
  %5113 = vmatprep.subr.mxu0 0.0
  %5114 = vmatpush1.msra.mxu0 0.0
  %5115 = vmatprep.subr.mxu0 0.0
  %5116 = vmatpush1.msra.mxu0 0.0
  %5117 = vmatprep.subr.mxu0 0.0
  %5118 = vmatpush1.msra.mxu0 0.0
  %5119 = vmatprep.subr.mxu0 0.0
  %5120 = vmatpush1.msra.mxu0 0.0
  %5121 = vmatprep.subr.mxu0 0.0
  %5122 = vmatpush1.msra.mxu0 0.0
  %5123 = vmatprep.subr.mxu0 0.0
  %5124 = vmatpush1.msra.mxu0 0.0
  %5125 = vmatprep.subr.mxu0 0.0
  %5126 = vmatpush1.msra.mxu0 0.0
  %5127 = vmatprep.subr.mxu0 0.0
  %5128 = vmatpush1.msra.mxu0 0.0
  %5129 = vmatprep.subr.mxu0 0.0
  %5130 = vmatpush1.msra.mxu0 0.0
  %5131 = vmatprep.subr.mxu0 0.0
  %5132 = vmatpush1.msra.mxu0 0.0
  %5133 = vmatprep.subr.mxu0 0.0
  %5134 = vmatpush1.msra.mxu0 0.0
  %5135 = vmatprep.subr.mxu0 0.0
  %5136 = vmatpush1.msra.mxu0 0.0
  %5137 = vmatprep.subr.mxu0 0.0
  %5138 = vmatpush1.msra.mxu0 0.0
  %5139 = vmatprep.subr.mxu0 0.0
  %5140 = vmatpush1.msra.mxu0 0.0
  %5141 = vmatprep.subr.mxu0 0.0
  %5142 = vmatpush1.msra.mxu0 0.0
  %5143 = vmatprep.subr.mxu0 0.0
  %5144 = vmatpush1.msra.mxu0 0.0
  %5145 = vmatprep.mubr.f32.mxu0 0.0
  %5146 = vmatmul.mubr.f32.gmra.mrb[0].mxu0 %v5008
  %v5147 = vpop.f32.mrb[0].mxu0
  %v5148 = vadd.f32 0.0, %v5147
  %v5149 = vpop.f32.mrb[0].mxu0
  %v5150 = vadd.f32 0.0, %v5149
  %5151 = vdwg.mxu0
  %v5152 = vadd.f32 %v4970, %v5077
  %v5153 = vadd.f32 %v4971, %v5079
  %v5154 = vadd.f32 %v4972, %v5148
  %v5155 = vadd.f32 %v4973, %v5150
  %s5156 = scalar_lea.vmem %s3, 6400
  %v5157 = vld [vmem:[%s5156] sm:$0xff]
  %v5158 = vld [vmem:[%s5156 + $0x8] sm:$0xff]
  %v5159 = vld [vmem:[%s5156 + $0x10] sm:$0xff]
  %v5160 = vld [vmem:[%s5156 + $0x18] sm:$0xff]
  %v5161 = vld [vmem:[%s5156 + $0x20] sm:$0xff]
  %v5162 = vld [vmem:[%s5156 + $0x28] sm:$0xff]
  %v5163 = vld [vmem:[%s5156 + $0x30] sm:$0xff]
  %v5164 = vld [vmem:[%s5156 + $0x38] sm:$0xff]
  %v5165 = vld [vmem:[%s5156 + $0x40] sm:$0xff]
  %v5166 = vld [vmem:[%s5156 + $0x48] sm:$0xff]
  %v5167 = vld [vmem:[%s5156 + $0x50] sm:$0xff]
  %v5168 = vld [vmem:[%s5156 + $0x58] sm:$0xff]
  %v5169 = vld [vmem:[%s5156 + $0x60] sm:$0xff]
  %v5170 = vld [vmem:[%s5156 + $0x68] sm:$0xff]
  %v5171 = vld [vmem:[%s5156 + $0x70] sm:$0xff]
  %v5172 = vld [vmem:[%s5156 + $0x78] sm:$0xff]
  %v5173 = vld [vmem:[%s5156 + $0x80] sm:$0xff]
  %v5174 = vld [vmem:[%s5156 + $0x88] sm:$0xff]
  %v5175 = vld [vmem:[%s5156 + $0x90] sm:$0xff]
  %v5176 = vld [vmem:[%s5156 + $0x98] sm:$0xff]
  %v5177 = vld [vmem:[%s5156 + $0xa0] sm:$0xff]
  %v5178 = vld [vmem:[%s5156 + $0xa8] sm:$0xff]
  %v5179 = vld [vmem:[%s5156 + $0xb0] sm:$0xff]
  %v5180 = vld [vmem:[%s5156 + $0xb8] sm:$0xff]
  %v5181 = vld [vmem:[%s5156 + $0xc0] sm:$0xff]
  %v5182 = vld [vmem:[%s5156 + $0xc8] sm:$0xff]
  %v5183 = vld [vmem:[%s5156 + $0xd0] sm:$0xff]
  %v5184 = vld [vmem:[%s5156 + $0xd8] sm:$0xff]
  %v5185 = vld [vmem:[%s5156 + $0xe0] sm:$0xff]
  %v5186 = vld [vmem:[%s5156 + $0xe8] sm:$0xff]
  %v5187 = vld [vmem:[%s5156 + $0xf0] sm:$0xff]
  %v5188 = vld [vmem:[%s5156 + $0xf8] sm:$0xff]
  %v5189 = vrot.slane %v608, 2
  %v5190 = vsel %vm172, %v5189, 0
  %5192 = vmatprep.subr.mxu0 %v5158
  %5193 = vmatpush1.msra.mxu0 %v5157
  %5194 = vmatprep.subr.mxu0 %v5162
  %5195 = vmatpush1.msra.mxu0 %v5161
  %5196 = vmatprep.subr.mxu0 %v5166
  %5197 = vmatpush1.msra.mxu0 %v5165
  %5198 = vmatprep.subr.mxu0 %v5170
  %5199 = vmatpush1.msra.mxu0 %v5169
  %5200 = vmatprep.subr.mxu0 %v5174
  %5201 = vmatpush1.msra.mxu0 %v5173
  %5202 = vmatprep.subr.mxu0 %v5178
  %5203 = vmatpush1.msra.mxu0 %v5177
  %5204 = vmatprep.subr.mxu0 %v5182
  %5205 = vmatpush1.msra.mxu0 %v5181
  %5206 = vmatprep.subr.mxu0 %v5186
  %5207 = vmatpush1.msra.mxu0 %v5185
  %5208 = vmatprep.subr.mxu0 0.0
  %5209 = vmatpush1.msra.mxu0 0.0
  %5210 = vmatprep.subr.mxu0 0.0
  %5211 = vmatpush1.msra.mxu0 0.0
  %5212 = vmatprep.subr.mxu0 0.0
  %5213 = vmatpush1.msra.mxu0 0.0
  %5214 = vmatprep.subr.mxu0 0.0
  %5215 = vmatpush1.msra.mxu0 0.0
  %5216 = vmatprep.subr.mxu0 0.0
  %5217 = vmatpush1.msra.mxu0 0.0
  %5218 = vmatprep.subr.mxu0 0.0
  %5219 = vmatpush1.msra.mxu0 0.0
  %5220 = vmatprep.subr.mxu0 0.0
  %5221 = vmatpush1.msra.mxu0 0.0
  %5222 = vmatprep.subr.mxu0 0.0
  %5223 = vmatpush1.msra.mxu0 0.0
  %5224 = vmatprep.subr.mxu0 0.0
  %5225 = vmatpush1.msra.mxu0 0.0
  %5226 = vmatprep.subr.mxu0 0.0
  %5227 = vmatpush1.msra.mxu0 0.0
  %5228 = vmatprep.subr.mxu0 0.0
  %5229 = vmatpush1.msra.mxu0 0.0
  %5230 = vmatprep.subr.mxu0 0.0
  %5231 = vmatpush1.msra.mxu0 0.0
  %5232 = vmatprep.subr.mxu0 0.0
  %5233 = vmatpush1.msra.mxu0 0.0
  %5234 = vmatprep.subr.mxu0 0.0
  %5235 = vmatpush1.msra.mxu0 0.0
  %5236 = vmatprep.subr.mxu0 0.0
  %5237 = vmatpush1.msra.mxu0 0.0
  %5238 = vmatprep.subr.mxu0 0.0
  %5239 = vmatpush1.msra.mxu0 0.0
  %5240 = vmatprep.subr.mxu0 0.0
  %5241 = vmatpush1.msra.mxu0 0.0
  %5242 = vmatprep.subr.mxu0 0.0
  %5243 = vmatpush1.msra.mxu0 0.0
  %5244 = vmatprep.subr.mxu0 0.0
  %5245 = vmatpush1.msra.mxu0 0.0
  %5246 = vmatprep.subr.mxu0 0.0
  %5247 = vmatpush1.msra.mxu0 0.0
  %5248 = vmatprep.subr.mxu0 0.0
  %5249 = vmatpush1.msra.mxu0 0.0
  %5250 = vmatprep.subr.mxu0 0.0
  %5251 = vmatpush1.msra.mxu0 0.0
  %5252 = vmatprep.subr.mxu0 0.0
  %5253 = vmatpush1.msra.mxu0 0.0
  %5254 = vmatprep.subr.mxu0 0.0
  %5255 = vmatpush1.msra.mxu0 0.0
  %5256 = vmatprep.mubr.f32.mxu0 0.0
  %5257 = vmatmul.mubr.f32.gmra.mrb[0].mxu0 %v5190
  %v5258 = vpop.f32.mrb[0].mxu0
  %v5259 = vadd.f32 0.0, %v5258
  %v5260 = vpop.f32.mrb[0].mxu0
  %v5261 = vadd.f32 0.0, %v5260
  %5262 = vdwg.mxu0
  %5263 = vmatprep.subr.mxu0 %v5160
  %5264 = vmatpush1.msra.mxu0 %v5159
  %5265 = vmatprep.subr.mxu0 %v5164
  %5266 = vmatpush1.msra.mxu0 %v5163
  %5267 = vmatprep.subr.mxu0 %v5168
  %5268 = vmatpush1.msra.mxu0 %v5167
  %5269 = vmatprep.subr.mxu0 %v5172
  %5270 = vmatpush1.msra.mxu0 %v5171
  %5271 = vmatprep.subr.mxu0 %v5176
  %5272 = vmatpush1.msra.mxu0 %v5175
  %5273 = vmatprep.subr.mxu0 %v5180
  %5274 = vmatpush1.msra.mxu0 %v5179
  %5275 = vmatprep.subr.mxu0 %v5184
  %5276 = vmatpush1.msra.mxu0 %v5183
  %5277 = vmatprep.subr.mxu0 %v5188
  %5278 = vmatpush1.msra.mxu0 %v5187
  %5279 = vmatprep.subr.mxu0 0.0
  %5280 = vmatpush1.msra.mxu0 0.0
  %5281 = vmatprep.subr.mxu0 0.0
  %5282 = vmatpush1.msra.mxu0 0.0
  %5283 = vmatprep.subr.mxu0 0.0
  %5284 = vmatpush1.msra.mxu0 0.0
  %5285 = vmatprep.subr.mxu0 0.0
  %5286 = vmatpush1.msra.mxu0 0.0
  %5287 = vmatprep.subr.mxu0 0.0
  %5288 = vmatpush1.msra.mxu0 0.0
  %5289 = vmatprep.subr.mxu0 0.0
  %5290 = vmatpush1.msra.mxu0 0.0
  %5291 = vmatprep.subr.mxu0 0.0
  %5292 = vmatpush1.msra.mxu0 0.0
  %5293 = vmatprep.subr.mxu0 0.0
  %5294 = vmatpush1.msra.mxu0 0.0
  %5295 = vmatprep.subr.mxu0 0.0
  %5296 = vmatpush1.msra.mxu0 0.0
  %5297 = vmatprep.subr.mxu0 0.0
  %5298 = vmatpush1.msra.mxu0 0.0
  %5299 = vmatprep.subr.mxu0 0.0
  %5300 = vmatpush1.msra.mxu0 0.0
  %5301 = vmatprep.subr.mxu0 0.0
  %5302 = vmatpush1.msra.mxu0 0.0
  %5303 = vmatprep.subr.mxu0 0.0
  %5304 = vmatpush1.msra.mxu0 0.0
  %5305 = vmatprep.subr.mxu0 0.0
  %5306 = vmatpush1.msra.mxu0 0.0
  %5307 = vmatprep.subr.mxu0 0.0
  %5308 = vmatpush1.msra.mxu0 0.0
  %5309 = vmatprep.subr.mxu0 0.0
  %5310 = vmatpush1.msra.mxu0 0.0
  %5311 = vmatprep.subr.mxu0 0.0
  %5312 = vmatpush1.msra.mxu0 0.0
  %5313 = vmatprep.subr.mxu0 0.0
  %5314 = vmatpush1.msra.mxu0 0.0
  %5315 = vmatprep.subr.mxu0 0.0
  %5316 = vmatpush1.msra.mxu0 0.0
  %5317 = vmatprep.subr.mxu0 0.0
  %5318 = vmatpush1.msra.mxu0 0.0
  %5319 = vmatprep.subr.mxu0 0.0
  %5320 = vmatpush1.msra.mxu0 0.0
  %5321 = vmatprep.subr.mxu0 0.0
  %5322 = vmatpush1.msra.mxu0 0.0
  %5323 = vmatprep.subr.mxu0 0.0
  %5324 = vmatpush1.msra.mxu0 0.0
  %5325 = vmatprep.subr.mxu0 0.0
  %5326 = vmatpush1.msra.mxu0 0.0
  %5327 = vmatprep.mubr.f32.mxu0 0.0
  %5328 = vmatmul.mubr.f32.gmra.mrb[0].mxu0 %v5190
  %v5329 = vpop.f32.mrb[0].mxu0
  %v5330 = vadd.f32 0.0, %v5329
  %v5331 = vpop.f32.mrb[0].mxu0
  %v5332 = vadd.f32 0.0, %v5331
  %5333 = vdwg.mxu0
  %v5334 = vadd.f32 %v5152, %v5259
  %v5335 = vadd.f32 %v5153, %v5261
  %v5336 = vadd.f32 %v5154, %v5330
  %v5337 = vadd.f32 %v5155, %v5332
  %s5338 = scalar_lea.vmem %s3, 6656
  %v5339 = vld [vmem:[%s5338] sm:$0xff]
  %v5340 = vld [vmem:[%s5338 + $0x8] sm:$0xff]
  %v5341 = vld [vmem:[%s5338 + $0x10] sm:$0xff]
  %v5342 = vld [vmem:[%s5338 + $0x18] sm:$0xff]
  %v5343 = vld [vmem:[%s5338 + $0x20] sm:$0xff]
  %v5344 = vld [vmem:[%s5338 + $0x28] sm:$0xff]
  %v5345 = vld [vmem:[%s5338 + $0x30] sm:$0xff]
  %v5346 = vld [vmem:[%s5338 + $0x38] sm:$0xff]
  %v5347 = vld [vmem:[%s5338 + $0x40] sm:$0xff]
  %v5348 = vld [vmem:[%s5338 + $0x48] sm:$0xff]
  %v5349 = vld [vmem:[%s5338 + $0x50] sm:$0xff]
  %v5350 = vld [vmem:[%s5338 + $0x58] sm:$0xff]
  %v5351 = vld [vmem:[%s5338 + $0x60] sm:$0xff]
  %v5352 = vld [vmem:[%s5338 + $0x68] sm:$0xff]
  %v5353 = vld [vmem:[%s5338 + $0x70] sm:$0xff]
  %v5354 = vld [vmem:[%s5338 + $0x78] sm:$0xff]
  %v5355 = vld [vmem:[%s5338 + $0x80] sm:$0xff]
  %v5356 = vld [vmem:[%s5338 + $0x88] sm:$0xff]
  %v5357 = vld [vmem:[%s5338 + $0x90] sm:$0xff]
  %v5358 = vld [vmem:[%s5338 + $0x98] sm:$0xff]
  %v5359 = vld [vmem:[%s5338 + $0xa0] sm:$0xff]
  %v5360 = vld [vmem:[%s5338 + $0xa8] sm:$0xff]
  %v5361 = vld [vmem:[%s5338 + $0xb0] sm:$0xff]
  %v5362 = vld [vmem:[%s5338 + $0xb8] sm:$0xff]
  %v5363 = vld [vmem:[%s5338 + $0xc0] sm:$0xff]
  %v5364 = vld [vmem:[%s5338 + $0xc8] sm:$0xff]
  %v5365 = vld [vmem:[%s5338 + $0xd0] sm:$0xff]
  %v5366 = vld [vmem:[%s5338 + $0xd8] sm:$0xff]
  %v5367 = vld [vmem:[%s5338 + $0xe0] sm:$0xff]
  %v5368 = vld [vmem:[%s5338 + $0xe8] sm:$0xff]
  %v5369 = vld [vmem:[%s5338 + $0xf0] sm:$0xff]
  %v5370 = vld [vmem:[%s5338 + $0xf8] sm:$0xff]
  %v5371 = vrot.slane %v608, 4
  %v5372 = vsel %vm172, %v5371, 0
  %5374 = vmatprep.subr.mxu0 %v5340
  %5375 = vmatpush1.msra.mxu0 %v5339
  %5376 = vmatprep.subr.mxu0 %v5344
  %5377 = vmatpush1.msra.mxu0 %v5343
  %5378 = vmatprep.subr.mxu0 %v5348
  %5379 = vmatpush1.msra.mxu0 %v5347
  %5380 = vmatprep.subr.mxu0 %v5352
  %5381 = vmatpush1.msra.mxu0 %v5351
  %5382 = vmatprep.subr.mxu0 %v5356
  %5383 = vmatpush1.msra.mxu0 %v5355
  %5384 = vmatprep.subr.mxu0 %v5360
  %5385 = vmatpush1.msra.mxu0 %v5359
  %5386 = vmatprep.subr.mxu0 %v5364
  %5387 = vmatpush1.msra.mxu0 %v5363
  %5388 = vmatprep.subr.mxu0 %v5368
  %5389 = vmatpush1.msra.mxu0 %v5367
  %5390 = vmatprep.subr.mxu0 0.0
  %5391 = vmatpush1.msra.mxu0 0.0
  %5392 = vmatprep.subr.mxu0 0.0
  %5393 = vmatpush1.msra.mxu0 0.0
  %5394 = vmatprep.subr.mxu0 0.0
  %5395 = vmatpush1.msra.mxu0 0.0
  %5396 = vmatprep.subr.mxu0 0.0
  %5397 = vmatpush1.msra.mxu0 0.0
  %5398 = vmatprep.subr.mxu0 0.0
  %5399 = vmatpush1.msra.mxu0 0.0
  %5400 = vmatprep.subr.mxu0 0.0
  %5401 = vmatpush1.msra.mxu0 0.0
  %5402 = vmatprep.subr.mxu0 0.0
  %5403 = vmatpush1.msra.mxu0 0.0
  %5404 = vmatprep.subr.mxu0 0.0
  %5405 = vmatpush1.msra.mxu0 0.0
  %5406 = vmatprep.subr.mxu0 0.0
  %5407 = vmatpush1.msra.mxu0 0.0
  %5408 = vmatprep.subr.mxu0 0.0
  %5409 = vmatpush1.msra.mxu0 0.0
  %5410 = vmatprep.subr.mxu0 0.0
  %5411 = vmatpush1.msra.mxu0 0.0
  %5412 = vmatprep.subr.mxu0 0.0
  %5413 = vmatpush1.msra.mxu0 0.0
  %5414 = vmatprep.subr.mxu0 0.0
  %5415 = vmatpush1.msra.mxu0 0.0
  %5416 = vmatprep.subr.mxu0 0.0
  %5417 = vmatpush1.msra.mxu0 0.0
  %5418 = vmatprep.subr.mxu0 0.0
  %5419 = vmatpush1.msra.mxu0 0.0
  %5420 = vmatprep.subr.mxu0 0.0
  %5421 = vmatpush1.msra.mxu0 0.0
  %5422 = vmatprep.subr.mxu0 0.0
  %5423 = vmatpush1.msra.mxu0 0.0
  %5424 = vmatprep.subr.mxu0 0.0
  %5425 = vmatpush1.msra.mxu0 0.0
  %5426 = vmatprep.subr.mxu0 0.0
  %5427 = vmatpush1.msra.mxu0 0.0
  %5428 = vmatprep.subr.mxu0 0.0
  %5429 = vmatpush1.msra.mxu0 0.0
  %5430 = vmatprep.subr.mxu0 0.0
  %5431 = vmatpush1.msra.mxu0 0.0
  %5432 = vmatprep.subr.mxu0 0.0
  %5433 = vmatpush1.msra.mxu0 0.0
  %5434 = vmatprep.subr.mxu0 0.0
  %5435 = vmatpush1.msra.mxu0 0.0
  %5436 = vmatprep.subr.mxu0 0.0
  %5437 = vmatpush1.msra.mxu0 0.0
  %5438 = vmatprep.mubr.f32.mxu0 0.0
  %5439 = vmatmul.mubr.f32.gmra.mrb[0].mxu0 %v5372
  %v5440 = vpop.f32.mrb[0].mxu0
  %v5441 = vadd.f32 0.0, %v5440
  %v5442 = vpop.f32.mrb[0].mxu0
  %v5443 = vadd.f32 0.0, %v5442
  %5444 = vdwg.mxu0
  %5445 = vmatprep.subr.mxu0 %v5342
  %5446 = vmatpush1.msra.mxu0 %v5341
  %5447 = vmatprep.subr.mxu0 %v5346
  %5448 = vmatpush1.msra.mxu0 %v5345
  %5449 = vmatprep.subr.mxu0 %v5350
  %5450 = vmatpush1.msra.mxu0 %v5349
  %5451 = vmatprep.subr.mxu0 %v5354
  %5452 = vmatpush1.msra.mxu0 %v5353
  %5453 = vmatprep.subr.mxu0 %v5358
  %5454 = vmatpush1.msra.mxu0 %v5357
  %5455 = vmatprep.subr.mxu0 %v5362
  %5456 = vmatpush1.msra.mxu0 %v5361
  %5457 = vmatprep.subr.mxu0 %v5366
  %5458 = vmatpush1.msra.mxu0 %v5365
  %5459 = vmatprep.subr.mxu0 %v5370
  %5460 = vmatpush1.msra.mxu0 %v5369
  %5461 = vmatprep.subr.mxu0 0.0
  %5462 = vmatpush1.msra.mxu0 0.0
  %5463 = vmatprep.subr.mxu0 0.0
  %5464 = vmatpush1.msra.mxu0 0.0
  %5465 = vmatprep.subr.mxu0 0.0
  %5466 = vmatpush1.msra.mxu0 0.0
  %5467 = vmatprep.subr.mxu0 0.0
  %5468 = vmatpush1.msra.mxu0 0.0
  %5469 = vmatprep.subr.mxu0 0.0
  %5470 = vmatpush1.msra.mxu0 0.0
  %5471 = vmatprep.subr.mxu0 0.0
  %5472 = vmatpush1.msra.mxu0 0.0
  %5473 = vmatprep.subr.mxu0 0.0
  %5474 = vmatpush1.msra.mxu0 0.0
  %5475 = vmatprep.subr.mxu0 0.0
  %5476 = vmatpush1.msra.mxu0 0.0
  %5477 = vmatprep.subr.mxu0 0.0
  %5478 = vmatpush1.msra.mxu0 0.0
  %5479 = vmatprep.subr.mxu0 0.0
  %5480 = vmatpush1.msra.mxu0 0.0
  %5481 = vmatprep.subr.mxu0 0.0
  %5482 = vmatpush1.msra.mxu0 0.0
  %5483 = vmatprep.subr.mxu0 0.0
  %5484 = vmatpush1.msra.mxu0 0.0
  %5485 = vmatprep.subr.mxu0 0.0
  %5486 = vmatpush1.msra.mxu0 0.0
  %5487 = vmatprep.subr.mxu0 0.0
  %5488 = vmatpush1.msra.mxu0 0.0
  %5489 = vmatprep.subr.mxu0 0.0
  %5490 = vmatpush1.msra.mxu0 0.0
  %5491 = vmatprep.subr.mxu0 0.0
  %5492 = vmatpush1.msra.mxu0 0.0
  %5493 = vmatprep.subr.mxu0 0.0
  %5494 = vmatpush1.msra.mxu0 0.0
  %5495 = vmatprep.subr.mxu0 0.0
  %5496 = vmatpush1.msra.mxu0 0.0
  %5497 = vmatprep.subr.mxu0 0.0
  %5498 = vmatpush1.msra.mxu0 0.0
  %5499 = vmatprep.subr.mxu0 0.0
  %5500 = vmatpush1.msra.mxu0 0.0
  %5501 = vmatprep.subr.mxu0 0.0
  %5502 = vmatpush1.msra.mxu0 0.0
  %5503 = vmatprep.subr.mxu0 0.0
  %5504 = vmatpush1.msra.mxu0 0.0
  %5505 = vmatprep.subr.mxu0 0.0
  %5506 = vmatpush1.msra.mxu0 0.0
  %5507 = vmatprep.subr.mxu0 0.0
  %5508 = vmatpush1.msra.mxu0 0.0
  %5509 = vmatprep.mubr.f32.mxu0 0.0
  %5510 = vmatmul.mubr.f32.gmra.mrb[0].mxu0 %v5372
  %v5511 = vpop.f32.mrb[0].mxu0
  %v5512 = vadd.f32 0.0, %v5511
  %v5513 = vpop.f32.mrb[0].mxu0
  %v5514 = vadd.f32 0.0, %v5513
  %5515 = vdwg.mxu0
  %v5516 = vadd.f32 %v5334, %v5441
  %v5517 = vadd.f32 %v5335, %v5443
  %v5518 = vadd.f32 %v5336, %v5512
  %v5519 = vadd.f32 %v5337, %v5514
  %s5520 = scalar_lea.vmem %s3, 6912
  %v5521 = vld [vmem:[%s5520] sm:$0xff]
  %v5522 = vld [vmem:[%s5520 + $0x8] sm:$0xff]
  %v5523 = vld [vmem:[%s5520 + $0x10] sm:$0xff]
  %v5524 = vld [vmem:[%s5520 + $0x18] sm:$0xff]
  %v5525 = vld [vmem:[%s5520 + $0x20] sm:$0xff]
  %v5526 = vld [vmem:[%s5520 + $0x28] sm:$0xff]
  %v5527 = vld [vmem:[%s5520 + $0x30] sm:$0xff]
  %v5528 = vld [vmem:[%s5520 + $0x38] sm:$0xff]
  %v5529 = vld [vmem:[%s5520 + $0x40] sm:$0xff]
  %v5530 = vld [vmem:[%s5520 + $0x48] sm:$0xff]
  %v5531 = vld [vmem:[%s5520 + $0x50] sm:$0xff]
  %v5532 = vld [vmem:[%s5520 + $0x58] sm:$0xff]
  %v5533 = vld [vmem:[%s5520 + $0x60] sm:$0xff]
  %v5534 = vld [vmem:[%s5520 + $0x68] sm:$0xff]
  %v5535 = vld [vmem:[%s5520 + $0x70] sm:$0xff]
  %v5536 = vld [vmem:[%s5520 + $0x78] sm:$0xff]
  %v5537 = vld [vmem:[%s5520 + $0x80] sm:$0xff]
  %v5538 = vld [vmem:[%s5520 + $0x88] sm:$0xff]
  %v5539 = vld [vmem:[%s5520 + $0x90] sm:$0xff]
  %v5540 = vld [vmem:[%s5520 + $0x98] sm:$0xff]
  %v5541 = vld [vmem:[%s5520 + $0xa0] sm:$0xff]
  %v5542 = vld [vmem:[%s5520 + $0xa8] sm:$0xff]
  %v5543 = vld [vmem:[%s5520 + $0xb0] sm:$0xff]
  %v5544 = vld [vmem:[%s5520 + $0xb8] sm:$0xff]
  %v5545 = vld [vmem:[%s5520 + $0xc0] sm:$0xff]
  %v5546 = vld [vmem:[%s5520 + $0xc8] sm:$0xff]
  %v5547 = vld [vmem:[%s5520 + $0xd0] sm:$0xff]
  %v5548 = vld [vmem:[%s5520 + $0xd8] sm:$0xff]
  %v5549 = vld [vmem:[%s5520 + $0xe0] sm:$0xff]
  %v5550 = vld [vmem:[%s5520 + $0xe8] sm:$0xff]
  %v5551 = vld [vmem:[%s5520 + $0xf0] sm:$0xff]
  %v5552 = vld [vmem:[%s5520 + $0xf8] sm:$0xff]
  %v5553 = vrot.slane %v608, 6
  %v5554 = vsel %vm172, %v5553, 0
  %5556 = vmatprep.subr.mxu0 %v5522
  %5557 = vmatpush1.msra.mxu0 %v5521
  %5558 = vmatprep.subr.mxu0 %v5526
  %5559 = vmatpush1.msra.mxu0 %v5525
  %5560 = vmatprep.subr.mxu0 %v5530
  %5561 = vmatpush1.msra.mxu0 %v5529
  %5562 = vmatprep.subr.mxu0 %v5534
  %5563 = vmatpush1.msra.mxu0 %v5533
  %5564 = vmatprep.subr.mxu0 %v5538
  %5565 = vmatpush1.msra.mxu0 %v5537
  %5566 = vmatprep.subr.mxu0 %v5542
  %5567 = vmatpush1.msra.mxu0 %v5541
  %5568 = vmatprep.subr.mxu0 %v5546
  %5569 = vmatpush1.msra.mxu0 %v5545
  %5570 = vmatprep.subr.mxu0 %v5550
  %5571 = vmatpush1.msra.mxu0 %v5549
  %5572 = vmatprep.subr.mxu0 0.0
  %5573 = vmatpush1.msra.mxu0 0.0
  %5574 = vmatprep.subr.mxu0 0.0
  %5575 = vmatpush1.msra.mxu0 0.0
  %5576 = vmatprep.subr.mxu0 0.0
  %5577 = vmatpush1.msra.mxu0 0.0
  %5578 = vmatprep.subr.mxu0 0.0
  %5579 = vmatpush1.msra.mxu0 0.0
  %5580 = vmatprep.subr.mxu0 0.0
  %5581 = vmatpush1.msra.mxu0 0.0
  %5582 = vmatprep.subr.mxu0 0.0
  %5583 = vmatpush1.msra.mxu0 0.0
  %5584 = vmatprep.subr.mxu0 0.0
  %5585 = vmatpush1.msra.mxu0 0.0
  %5586 = vmatprep.subr.mxu0 0.0
  %5587 = vmatpush1.msra.mxu0 0.0
  %5588 = vmatprep.subr.mxu0 0.0
  %5589 = vmatpush1.msra.mxu0 0.0
  %5590 = vmatprep.subr.mxu0 0.0
  %5591 = vmatpush1.msra.mxu0 0.0
  %5592 = vmatprep.subr.mxu0 0.0
  %5593 = vmatpush1.msra.mxu0 0.0
  %5594 = vmatprep.subr.mxu0 0.0
  %5595 = vmatpush1.msra.mxu0 0.0
  %5596 = vmatprep.subr.mxu0 0.0
  %5597 = vmatpush1.msra.mxu0 0.0
  %5598 = vmatprep.subr.mxu0 0.0
  %5599 = vmatpush1.msra.mxu0 0.0
  %5600 = vmatprep.subr.mxu0 0.0
  %5601 = vmatpush1.msra.mxu0 0.0
  %5602 = vmatprep.subr.mxu0 0.0
  %5603 = vmatpush1.msra.mxu0 0.0
  %5604 = vmatprep.subr.mxu0 0.0
  %5605 = vmatpush1.msra.mxu0 0.0
  %5606 = vmatprep.subr.mxu0 0.0
  %5607 = vmatpush1.msra.mxu0 0.0
  %5608 = vmatprep.subr.mxu0 0.0
  %5609 = vmatpush1.msra.mxu0 0.0
  %5610 = vmatprep.subr.mxu0 0.0
  %5611 = vmatpush1.msra.mxu0 0.0
  %5612 = vmatprep.subr.mxu0 0.0
  %5613 = vmatpush1.msra.mxu0 0.0
  %5614 = vmatprep.subr.mxu0 0.0
  %5615 = vmatpush1.msra.mxu0 0.0
  %5616 = vmatprep.subr.mxu0 0.0
  %5617 = vmatpush1.msra.mxu0 0.0
  %5618 = vmatprep.subr.mxu0 0.0
  %5619 = vmatpush1.msra.mxu0 0.0
  %5620 = vmatprep.mubr.f32.mxu0 0.0
  %5621 = vmatmul.mubr.f32.gmra.mrb[0].mxu0 %v5554
  %v5622 = vpop.f32.mrb[0].mxu0
  %v5623 = vadd.f32 0.0, %v5622
  %v5624 = vpop.f32.mrb[0].mxu0
  %v5625 = vadd.f32 0.0, %v5624
  %5626 = vdwg.mxu0
  %5627 = vmatprep.subr.mxu0 %v5524
  %5628 = vmatpush1.msra.mxu0 %v5523
  %5629 = vmatprep.subr.mxu0 %v5528
  %5630 = vmatpush1.msra.mxu0 %v5527
  %5631 = vmatprep.subr.mxu0 %v5532
  %5632 = vmatpush1.msra.mxu0 %v5531
  %5633 = vmatprep.subr.mxu0 %v5536
  %5634 = vmatpush1.msra.mxu0 %v5535
  %5635 = vmatprep.subr.mxu0 %v5540
  %5636 = vmatpush1.msra.mxu0 %v5539
  %5637 = vmatprep.subr.mxu0 %v5544
  %5638 = vmatpush1.msra.mxu0 %v5543
  %5639 = vmatprep.subr.mxu0 %v5548
  %5640 = vmatpush1.msra.mxu0 %v5547
  %5641 = vmatprep.subr.mxu0 %v5552
  %5642 = vmatpush1.msra.mxu0 %v5551
  %5643 = vmatprep.subr.mxu0 0.0
  %5644 = vmatpush1.msra.mxu0 0.0
  %5645 = vmatprep.subr.mxu0 0.0
  %5646 = vmatpush1.msra.mxu0 0.0
  %5647 = vmatprep.subr.mxu0 0.0
  %5648 = vmatpush1.msra.mxu0 0.0
  %5649 = vmatprep.subr.mxu0 0.0
  %5650 = vmatpush1.msra.mxu0 0.0
  %5651 = vmatprep.subr.mxu0 0.0
  %5652 = vmatpush1.msra.mxu0 0.0
  %5653 = vmatprep.subr.mxu0 0.0
  %5654 = vmatpush1.msra.mxu0 0.0
  %5655 = vmatprep.subr.mxu0 0.0
  %5656 = vmatpush1.msra.mxu0 0.0
  %5657 = vmatprep.subr.mxu0 0.0
  %5658 = vmatpush1.msra.mxu0 0.0
  %5659 = vmatprep.subr.mxu0 0.0
  %5660 = vmatpush1.msra.mxu0 0.0
  %5661 = vmatprep.subr.mxu0 0.0
  %5662 = vmatpush1.msra.mxu0 0.0
  %5663 = vmatprep.subr.mxu0 0.0
  %5664 = vmatpush1.msra.mxu0 0.0
  %5665 = vmatprep.subr.mxu0 0.0
  %5666 = vmatpush1.msra.mxu0 0.0
  %5667 = vmatprep.subr.mxu0 0.0
  %5668 = vmatpush1.msra.mxu0 0.0
  %5669 = vmatprep.subr.mxu0 0.0
  %5670 = vmatpush1.msra.mxu0 0.0
  %5671 = vmatprep.subr.mxu0 0.0
  %5672 = vmatpush1.msra.mxu0 0.0
  %5673 = vmatprep.subr.mxu0 0.0
  %5674 = vmatpush1.msra.mxu0 0.0
  %5675 = vmatprep.subr.mxu0 0.0
  %5676 = vmatpush1.msra.mxu0 0.0
  %5677 = vmatprep.subr.mxu0 0.0
  %5678 = vmatpush1.msra.mxu0 0.0
  %5679 = vmatprep.subr.mxu0 0.0
  %5680 = vmatpush1.msra.mxu0 0.0
  %5681 = vmatprep.subr.mxu0 0.0
  %5682 = vmatpush1.msra.mxu0 0.0
  %5683 = vmatprep.subr.mxu0 0.0
  %5684 = vmatpush1.msra.mxu0 0.0
  %5685 = vmatprep.subr.mxu0 0.0
  %5686 = vmatpush1.msra.mxu0 0.0
  %5687 = vmatprep.subr.mxu0 0.0
  %5688 = vmatpush1.msra.mxu0 0.0
  %5689 = vmatprep.subr.mxu0 0.0
  %5690 = vmatpush1.msra.mxu0 0.0
  %5691 = vmatprep.mubr.f32.mxu0 0.0
  %5692 = vmatmul.mubr.f32.gmra.mrb[0].mxu0 %v5554
  %v5693 = vpop.f32.mrb[0].mxu0
  %v5694 = vadd.f32 0.0, %v5693
  %v5695 = vpop.f32.mrb[0].mxu0
  %v5696 = vadd.f32 0.0, %v5695
  %5697 = vdwg.mxu0
  %v5698 = vadd.f32 %v5516, %v5623
  %v5699 = vadd.f32 %v5517, %v5625
  %v5700 = vadd.f32 %v5518, %v5694
  %v5701 = vadd.f32 %v5519, %v5696
  %s5702 = scalar_lea.vmem %s3, 7168
  %v5703 = vld [vmem:[%s5702] sm:$0xff]
  %v5704 = vld [vmem:[%s5702 + $0x8] sm:$0xff]
  %v5705 = vld [vmem:[%s5702 + $0x10] sm:$0xff]
  %v5706 = vld [vmem:[%s5702 + $0x18] sm:$0xff]
  %v5707 = vld [vmem:[%s5702 + $0x20] sm:$0xff]
  %v5708 = vld [vmem:[%s5702 + $0x28] sm:$0xff]
  %v5709 = vld [vmem:[%s5702 + $0x30] sm:$0xff]
  %v5710 = vld [vmem:[%s5702 + $0x38] sm:$0xff]
  %v5711 = vld [vmem:[%s5702 + $0x40] sm:$0xff]
  %v5712 = vld [vmem:[%s5702 + $0x48] sm:$0xff]
  %v5713 = vld [vmem:[%s5702 + $0x50] sm:$0xff]
  %v5714 = vld [vmem:[%s5702 + $0x58] sm:$0xff]
  %v5715 = vld [vmem:[%s5702 + $0x60] sm:$0xff]
  %v5716 = vld [vmem:[%s5702 + $0x68] sm:$0xff]
  %v5717 = vld [vmem:[%s5702 + $0x70] sm:$0xff]
  %v5718 = vld [vmem:[%s5702 + $0x78] sm:$0xff]
  %v5719 = vld [vmem:[%s5702 + $0x80] sm:$0xff]
  %v5720 = vld [vmem:[%s5702 + $0x88] sm:$0xff]
  %v5721 = vld [vmem:[%s5702 + $0x90] sm:$0xff]
  %v5722 = vld [vmem:[%s5702 + $0x98] sm:$0xff]
  %v5723 = vld [vmem:[%s5702 + $0xa0] sm:$0xff]
  %v5724 = vld [vmem:[%s5702 + $0xa8] sm:$0xff]
  %v5725 = vld [vmem:[%s5702 + $0xb0] sm:$0xff]
  %v5726 = vld [vmem:[%s5702 + $0xb8] sm:$0xff]
  %v5727 = vld [vmem:[%s5702 + $0xc0] sm:$0xff]
  %v5728 = vld [vmem:[%s5702 + $0xc8] sm:$0xff]
  %v5729 = vld [vmem:[%s5702 + $0xd0] sm:$0xff]
  %v5730 = vld [vmem:[%s5702 + $0xd8] sm:$0xff]
  %v5731 = vld [vmem:[%s5702 + $0xe0] sm:$0xff]
  %v5732 = vld [vmem:[%s5702 + $0xe8] sm:$0xff]
  %v5733 = vld [vmem:[%s5702 + $0xf0] sm:$0xff]
  %v5734 = vld [vmem:[%s5702 + $0xf8] sm:$0xff]
  %v5736 = vsel %vm172, %v609, 0
  %5738 = vmatprep.subr.mxu0 %v5704
  %5739 = vmatpush1.msra.mxu0 %v5703
  %5740 = vmatprep.subr.mxu0 %v5708
  %5741 = vmatpush1.msra.mxu0 %v5707
  %5742 = vmatprep.subr.mxu0 %v5712
  %5743 = vmatpush1.msra.mxu0 %v5711
  %5744 = vmatprep.subr.mxu0 %v5716
  %5745 = vmatpush1.msra.mxu0 %v5715
  %5746 = vmatprep.subr.mxu0 %v5720
  %5747 = vmatpush1.msra.mxu0 %v5719
  %5748 = vmatprep.subr.mxu0 %v5724
  %5749 = vmatpush1.msra.mxu0 %v5723
  %5750 = vmatprep.subr.mxu0 %v5728
  %5751 = vmatpush1.msra.mxu0 %v5727
  %5752 = vmatprep.subr.mxu0 %v5732
  %5753 = vmatpush1.msra.mxu0 %v5731
  %5754 = vmatprep.subr.mxu0 0.0
  %5755 = vmatpush1.msra.mxu0 0.0
  %5756 = vmatprep.subr.mxu0 0.0
  %5757 = vmatpush1.msra.mxu0 0.0
  %5758 = vmatprep.subr.mxu0 0.0
  %5759 = vmatpush1.msra.mxu0 0.0
  %5760 = vmatprep.subr.mxu0 0.0
  %5761 = vmatpush1.msra.mxu0 0.0
  %5762 = vmatprep.subr.mxu0 0.0
  %5763 = vmatpush1.msra.mxu0 0.0
  %5764 = vmatprep.subr.mxu0 0.0
  %5765 = vmatpush1.msra.mxu0 0.0
  %5766 = vmatprep.subr.mxu0 0.0
  %5767 = vmatpush1.msra.mxu0 0.0
  %5768 = vmatprep.subr.mxu0 0.0
  %5769 = vmatpush1.msra.mxu0 0.0
  %5770 = vmatprep.subr.mxu0 0.0
  %5771 = vmatpush1.msra.mxu0 0.0
  %5772 = vmatprep.subr.mxu0 0.0
  %5773 = vmatpush1.msra.mxu0 0.0
  %5774 = vmatprep.subr.mxu0 0.0
  %5775 = vmatpush1.msra.mxu0 0.0
  %5776 = vmatprep.subr.mxu0 0.0
  %5777 = vmatpush1.msra.mxu0 0.0
  %5778 = vmatprep.subr.mxu0 0.0
  %5779 = vmatpush1.msra.mxu0 0.0
  %5780 = vmatprep.subr.mxu0 0.0
  %5781 = vmatpush1.msra.mxu0 0.0
  %5782 = vmatprep.subr.mxu0 0.0
  %5783 = vmatpush1.msra.mxu0 0.0
  %5784 = vmatprep.subr.mxu0 0.0
  %5785 = vmatpush1.msra.mxu0 0.0
  %5786 = vmatprep.subr.mxu0 0.0
  %5787 = vmatpush1.msra.mxu0 0.0
  %5788 = vmatprep.subr.mxu0 0.0
  %5789 = vmatpush1.msra.mxu0 0.0
  %5790 = vmatprep.subr.mxu0 0.0
  %5791 = vmatpush1.msra.mxu0 0.0
  %5792 = vmatprep.subr.mxu0 0.0
  %5793 = vmatpush1.msra.mxu0 0.0
  %5794 = vmatprep.subr.mxu0 0.0
  %5795 = vmatpush1.msra.mxu0 0.0
  %5796 = vmatprep.subr.mxu0 0.0
  %5797 = vmatpush1.msra.mxu0 0.0
  %5798 = vmatprep.subr.mxu0 0.0
  %5799 = vmatpush1.msra.mxu0 0.0
  %5800 = vmatprep.subr.mxu0 0.0
  %5801 = vmatpush1.msra.mxu0 0.0
  %5802 = vmatprep.mubr.f32.mxu0 0.0
  %5803 = vmatmul.mubr.f32.gmra.mrb[0].mxu0 %v5736
  %v5804 = vpop.f32.mrb[0].mxu0
  %v5805 = vadd.f32 0.0, %v5804
  %v5806 = vpop.f32.mrb[0].mxu0
  %v5807 = vadd.f32 0.0, %v5806
  %5808 = vdwg.mxu0
  %5809 = vmatprep.subr.mxu0 %v5706
  %5810 = vmatpush1.msra.mxu0 %v5705
  %5811 = vmatprep.subr.mxu0 %v5710
  %5812 = vmatpush1.msra.mxu0 %v5709
  %5813 = vmatprep.subr.mxu0 %v5714
  %5814 = vmatpush1.msra.mxu0 %v5713
  %5815 = vmatprep.subr.mxu0 %v5718
  %5816 = vmatpush1.msra.mxu0 %v5717
  %5817 = vmatprep.subr.mxu0 %v5722
  %5818 = vmatpush1.msra.mxu0 %v5721
  %5819 = vmatprep.subr.mxu0 %v5726
  %5820 = vmatpush1.msra.mxu0 %v5725
  %5821 = vmatprep.subr.mxu0 %v5730
  %5822 = vmatpush1.msra.mxu0 %v5729
  %5823 = vmatprep.subr.mxu0 %v5734
  %5824 = vmatpush1.msra.mxu0 %v5733
  %5825 = vmatprep.subr.mxu0 0.0
  %5826 = vmatpush1.msra.mxu0 0.0
  %5827 = vmatprep.subr.mxu0 0.0
  %5828 = vmatpush1.msra.mxu0 0.0
  %5829 = vmatprep.subr.mxu0 0.0
  %5830 = vmatpush1.msra.mxu0 0.0
  %5831 = vmatprep.subr.mxu0 0.0
  %5832 = vmatpush1.msra.mxu0 0.0
  %5833 = vmatprep.subr.mxu0 0.0
  %5834 = vmatpush1.msra.mxu0 0.0
  %5835 = vmatprep.subr.mxu0 0.0
  %5836 = vmatpush1.msra.mxu0 0.0
  %5837 = vmatprep.subr.mxu0 0.0
  %5838 = vmatpush1.msra.mxu0 0.0
  %5839 = vmatprep.subr.mxu0 0.0
  %5840 = vmatpush1.msra.mxu0 0.0
  %5841 = vmatprep.subr.mxu0 0.0
  %5842 = vmatpush1.msra.mxu0 0.0
  %5843 = vmatprep.subr.mxu0 0.0
  %5844 = vmatpush1.msra.mxu0 0.0
  %5845 = vmatprep.subr.mxu0 0.0
  %5846 = vmatpush1.msra.mxu0 0.0
  %5847 = vmatprep.subr.mxu0 0.0
  %5848 = vmatpush1.msra.mxu0 0.0
  %5849 = vmatprep.subr.mxu0 0.0
  %5850 = vmatpush1.msra.mxu0 0.0
  %5851 = vmatprep.subr.mxu0 0.0
  %5852 = vmatpush1.msra.mxu0 0.0
  %5853 = vmatprep.subr.mxu0 0.0
  %5854 = vmatpush1.msra.mxu0 0.0
  %5855 = vmatprep.subr.mxu0 0.0
  %5856 = vmatpush1.msra.mxu0 0.0
  %5857 = vmatprep.subr.mxu0 0.0
  %5858 = vmatpush1.msra.mxu0 0.0
  %5859 = vmatprep.subr.mxu0 0.0
  %5860 = vmatpush1.msra.mxu0 0.0
  %5861 = vmatprep.subr.mxu0 0.0
  %5862 = vmatpush1.msra.mxu0 0.0
  %5863 = vmatprep.subr.mxu0 0.0
  %5864 = vmatpush1.msra.mxu0 0.0
  %5865 = vmatprep.subr.mxu0 0.0
  %5866 = vmatpush1.msra.mxu0 0.0
  %5867 = vmatprep.subr.mxu0 0.0
  %5868 = vmatpush1.msra.mxu0 0.0
  %5869 = vmatprep.subr.mxu0 0.0
  %5870 = vmatpush1.msra.mxu0 0.0
  %5871 = vmatprep.subr.mxu0 0.0
  %5872 = vmatpush1.msra.mxu0 0.0
  %5873 = vmatprep.mubr.f32.mxu0 0.0
  %5874 = vmatmul.mubr.f32.gmra.mrb[0].mxu0 %v5736
  %v5875 = vpop.f32.mrb[0].mxu0
  %v5876 = vadd.f32 0.0, %v5875
  %v5877 = vpop.f32.mrb[0].mxu0
  %v5878 = vadd.f32 0.0, %v5877
  %5879 = vdwg.mxu0
  %v5880 = vadd.f32 %v5698, %v5805
  %v5881 = vadd.f32 %v5699, %v5807
  %v5882 = vadd.f32 %v5700, %v5876
  %v5883 = vadd.f32 %v5701, %v5878
  %s5884 = scalar_lea.vmem %s3, 7424
  %v5885 = vld [vmem:[%s5884] sm:$0xff]
  %v5886 = vld [vmem:[%s5884 + $0x8] sm:$0xff]
  %v5887 = vld [vmem:[%s5884 + $0x10] sm:$0xff]
  %v5888 = vld [vmem:[%s5884 + $0x18] sm:$0xff]
  %v5889 = vld [vmem:[%s5884 + $0x20] sm:$0xff]
  %v5890 = vld [vmem:[%s5884 + $0x28] sm:$0xff]
  %v5891 = vld [vmem:[%s5884 + $0x30] sm:$0xff]
  %v5892 = vld [vmem:[%s5884 + $0x38] sm:$0xff]
  %v5893 = vld [vmem:[%s5884 + $0x40] sm:$0xff]
  %v5894 = vld [vmem:[%s5884 + $0x48] sm:$0xff]
  %v5895 = vld [vmem:[%s5884 + $0x50] sm:$0xff]
  %v5896 = vld [vmem:[%s5884 + $0x58] sm:$0xff]
  %v5897 = vld [vmem:[%s5884 + $0x60] sm:$0xff]
  %v5898 = vld [vmem:[%s5884 + $0x68] sm:$0xff]
  %v5899 = vld [vmem:[%s5884 + $0x70] sm:$0xff]
  %v5900 = vld [vmem:[%s5884 + $0x78] sm:$0xff]
  %v5901 = vld [vmem:[%s5884 + $0x80] sm:$0xff]
  %v5902 = vld [vmem:[%s5884 + $0x88] sm:$0xff]
  %v5903 = vld [vmem:[%s5884 + $0x90] sm:$0xff]
  %v5904 = vld [vmem:[%s5884 + $0x98] sm:$0xff]
  %v5905 = vld [vmem:[%s5884 + $0xa0] sm:$0xff]
  %v5906 = vld [vmem:[%s5884 + $0xa8] sm:$0xff]
  %v5907 = vld [vmem:[%s5884 + $0xb0] sm:$0xff]
  %v5908 = vld [vmem:[%s5884 + $0xb8] sm:$0xff]
  %v5909 = vld [vmem:[%s5884 + $0xc0] sm:$0xff]
  %v5910 = vld [vmem:[%s5884 + $0xc8] sm:$0xff]
  %v5911 = vld [vmem:[%s5884 + $0xd0] sm:$0xff]
  %v5912 = vld [vmem:[%s5884 + $0xd8] sm:$0xff]
  %v5913 = vld [vmem:[%s5884 + $0xe0] sm:$0xff]
  %v5914 = vld [vmem:[%s5884 + $0xe8] sm:$0xff]
  %v5915 = vld [vmem:[%s5884 + $0xf0] sm:$0xff]
  %v5916 = vld [vmem:[%s5884 + $0xf8] sm:$0xff]
  %v5917 = vrot.slane %v609, 2
  %v5918 = vsel %vm172, %v5917, 0
  %5920 = vmatprep.subr.mxu0 %v5886
  %5921 = vmatpush1.msra.mxu0 %v5885
  %5922 = vmatprep.subr.mxu0 %v5890
  %5923 = vmatpush1.msra.mxu0 %v5889
  %5924 = vmatprep.subr.mxu0 %v5894
  %5925 = vmatpush1.msra.mxu0 %v5893
  %5926 = vmatprep.subr.mxu0 %v5898
  %5927 = vmatpush1.msra.mxu0 %v5897
  %5928 = vmatprep.subr.mxu0 %v5902
  %5929 = vmatpush1.msra.mxu0 %v5901
  %5930 = vmatprep.subr.mxu0 %v5906
  %5931 = vmatpush1.msra.mxu0 %v5905
  %5932 = vmatprep.subr.mxu0 %v5910
  %5933 = vmatpush1.msra.mxu0 %v5909
  %5934 = vmatprep.subr.mxu0 %v5914
  %5935 = vmatpush1.msra.mxu0 %v5913
  %5936 = vmatprep.subr.mxu0 0.0
  %5937 = vmatpush1.msra.mxu0 0.0
  %5938 = vmatprep.subr.mxu0 0.0
  %5939 = vmatpush1.msra.mxu0 0.0
  %5940 = vmatprep.subr.mxu0 0.0
  %5941 = vmatpush1.msra.mxu0 0.0
  %5942 = vmatprep.subr.mxu0 0.0
  %5943 = vmatpush1.msra.mxu0 0.0
  %5944 = vmatprep.subr.mxu0 0.0
  %5945 = vmatpush1.msra.mxu0 0.0
  %5946 = vmatprep.subr.mxu0 0.0
  %5947 = vmatpush1.msra.mxu0 0.0
  %5948 = vmatprep.subr.mxu0 0.0
  %5949 = vmatpush1.msra.mxu0 0.0
  %5950 = vmatprep.subr.mxu0 0.0
  %5951 = vmatpush1.msra.mxu0 0.0
  %5952 = vmatprep.subr.mxu0 0.0
  %5953 = vmatpush1.msra.mxu0 0.0
  %5954 = vmatprep.subr.mxu0 0.0
  %5955 = vmatpush1.msra.mxu0 0.0
  %5956 = vmatprep.subr.mxu0 0.0
  %5957 = vmatpush1.msra.mxu0 0.0
  %5958 = vmatprep.subr.mxu0 0.0
  %5959 = vmatpush1.msra.mxu0 0.0
  %5960 = vmatprep.subr.mxu0 0.0
  %5961 = vmatpush1.msra.mxu0 0.0
  %5962 = vmatprep.subr.mxu0 0.0
  %5963 = vmatpush1.msra.mxu0 0.0
  %5964 = vmatprep.subr.mxu0 0.0
  %5965 = vmatpush1.msra.mxu0 0.0
  %5966 = vmatprep.subr.mxu0 0.0
  %5967 = vmatpush1.msra.mxu0 0.0
  %5968 = vmatprep.subr.mxu0 0.0
  %5969 = vmatpush1.msra.mxu0 0.0
  %5970 = vmatprep.subr.mxu0 0.0
  %5971 = vmatpush1.msra.mxu0 0.0
  %5972 = vmatprep.subr.mxu0 0.0
  %5973 = vmatpush1.msra.mxu0 0.0
  %5974 = vmatprep.subr.mxu0 0.0
  %5975 = vmatpush1.msra.mxu0 0.0
  %5976 = vmatprep.subr.mxu0 0.0
  %5977 = vmatpush1.msra.mxu0 0.0
  %5978 = vmatprep.subr.mxu0 0.0
  %5979 = vmatpush1.msra.mxu0 0.0
  %5980 = vmatprep.subr.mxu0 0.0
  %5981 = vmatpush1.msra.mxu0 0.0
  %5982 = vmatprep.subr.mxu0 0.0
  %5983 = vmatpush1.msra.mxu0 0.0
  %5984 = vmatprep.mubr.f32.mxu0 0.0
  %5985 = vmatmul.mubr.f32.gmra.mrb[0].mxu0 %v5918
  %v5986 = vpop.f32.mrb[0].mxu0
  %v5987 = vadd.f32 0.0, %v5986
  %v5988 = vpop.f32.mrb[0].mxu0
  %v5989 = vadd.f32 0.0, %v5988
  %5990 = vdwg.mxu0
  %5991 = vmatprep.subr.mxu0 %v5888
  %5992 = vmatpush1.msra.mxu0 %v5887
  %5993 = vmatprep.subr.mxu0 %v5892
  %5994 = vmatpush1.msra.mxu0 %v5891
  %5995 = vmatprep.subr.mxu0 %v5896
  %5996 = vmatpush1.msra.mxu0 %v5895
  %5997 = vmatprep.subr.mxu0 %v5900
  %5998 = vmatpush1.msra.mxu0 %v5899
  %5999 = vmatprep.subr.mxu0 %v5904
  %6000 = vmatpush1.msra.mxu0 %v5903
  %6001 = vmatprep.subr.mxu0 %v5908
  %6002 = vmatpush1.msra.mxu0 %v5907
  %6003 = vmatprep.subr.mxu0 %v5912
  %6004 = vmatpush1.msra.mxu0 %v5911
  %6005 = vmatprep.subr.mxu0 %v5916
  %6006 = vmatpush1.msra.mxu0 %v5915
  %6007 = vmatprep.subr.mxu0 0.0
  %6008 = vmatpush1.msra.mxu0 0.0
  %6009 = vmatprep.subr.mxu0 0.0
  %6010 = vmatpush1.msra.mxu0 0.0
  %6011 = vmatprep.subr.mxu0 0.0
  %6012 = vmatpush1.msra.mxu0 0.0
  %6013 = vmatprep.subr.mxu0 0.0
  %6014 = vmatpush1.msra.mxu0 0.0
  %6015 = vmatprep.subr.mxu0 0.0
  %6016 = vmatpush1.msra.mxu0 0.0
  %6017 = vmatprep.subr.mxu0 0.0
  %6018 = vmatpush1.msra.mxu0 0.0
  %6019 = vmatprep.subr.mxu0 0.0
  %6020 = vmatpush1.msra.mxu0 0.0
  %6021 = vmatprep.subr.mxu0 0.0
  %6022 = vmatpush1.msra.mxu0 0.0
  %6023 = vmatprep.subr.mxu0 0.0
  %6024 = vmatpush1.msra.mxu0 0.0
  %6025 = vmatprep.subr.mxu0 0.0
  %6026 = vmatpush1.msra.mxu0 0.0
  %6027 = vmatprep.subr.mxu0 0.0
  %6028 = vmatpush1.msra.mxu0 0.0
  %6029 = vmatprep.subr.mxu0 0.0
  %6030 = vmatpush1.msra.mxu0 0.0
  %6031 = vmatprep.subr.mxu0 0.0
  %6032 = vmatpush1.msra.mxu0 0.0
  %6033 = vmatprep.subr.mxu0 0.0
  %6034 = vmatpush1.msra.mxu0 0.0
  %6035 = vmatprep.subr.mxu0 0.0
  %6036 = vmatpush1.msra.mxu0 0.0
  %6037 = vmatprep.subr.mxu0 0.0
  %6038 = vmatpush1.msra.mxu0 0.0
  %6039 = vmatprep.subr.mxu0 0.0
  %6040 = vmatpush1.msra.mxu0 0.0
  %6041 = vmatprep.subr.mxu0 0.0
  %6042 = vmatpush1.msra.mxu0 0.0
  %6043 = vmatprep.subr.mxu0 0.0
  %6044 = vmatpush1.msra.mxu0 0.0
  %6045 = vmatprep.subr.mxu0 0.0
  %6046 = vmatpush1.msra.mxu0 0.0
  %6047 = vmatprep.subr.mxu0 0.0
  %6048 = vmatpush1.msra.mxu0 0.0
  %6049 = vmatprep.subr.mxu0 0.0
  %6050 = vmatpush1.msra.mxu0 0.0
  %6051 = vmatprep.subr.mxu0 0.0
  %6052 = vmatpush1.msra.mxu0 0.0
  %6053 = vmatprep.subr.mxu0 0.0
  %6054 = vmatpush1.msra.mxu0 0.0
  %6055 = vmatprep.mubr.f32.mxu0 0.0
  %6056 = vmatmul.mubr.f32.gmra.mrb[0].mxu0 %v5918
  %v6057 = vpop.f32.mrb[0].mxu0
  %v6058 = vadd.f32 0.0, %v6057
  %v6059 = vpop.f32.mrb[0].mxu0
  %v6060 = vadd.f32 0.0, %v6059
  %6061 = vdwg.mxu0
  %v6062 = vadd.f32 %v5880, %v5987
  %v6063 = vadd.f32 %v5881, %v5989
  %v6064 = vadd.f32 %v5882, %v6058
  %v6065 = vadd.f32 %v5883, %v6060
  %s6066 = scalar_lea.vmem %s3, 7680
  %v6067 = vld [vmem:[%s6066] sm:$0xff]
  %v6068 = vld [vmem:[%s6066 + $0x8] sm:$0xff]
  %v6069 = vld [vmem:[%s6066 + $0x10] sm:$0xff]
  %v6070 = vld [vmem:[%s6066 + $0x18] sm:$0xff]
  %v6071 = vld [vmem:[%s6066 + $0x20] sm:$0xff]
  %v6072 = vld [vmem:[%s6066 + $0x28] sm:$0xff]
  %v6073 = vld [vmem:[%s6066 + $0x30] sm:$0xff]
  %v6074 = vld [vmem:[%s6066 + $0x38] sm:$0xff]
  %v6075 = vld [vmem:[%s6066 + $0x40] sm:$0xff]
  %v6076 = vld [vmem:[%s6066 + $0x48] sm:$0xff]
  %v6077 = vld [vmem:[%s6066 + $0x50] sm:$0xff]
  %v6078 = vld [vmem:[%s6066 + $0x58] sm:$0xff]
  %v6079 = vld [vmem:[%s6066 + $0x60] sm:$0xff]
  %v6080 = vld [vmem:[%s6066 + $0x68] sm:$0xff]
  %v6081 = vld [vmem:[%s6066 + $0x70] sm:$0xff]
  %v6082 = vld [vmem:[%s6066 + $0x78] sm:$0xff]
  %v6083 = vld [vmem:[%s6066 + $0x80] sm:$0xff]
  %v6084 = vld [vmem:[%s6066 + $0x88] sm:$0xff]
  %v6085 = vld [vmem:[%s6066 + $0x90] sm:$0xff]
  %v6086 = vld [vmem:[%s6066 + $0x98] sm:$0xff]
  %v6087 = vld [vmem:[%s6066 + $0xa0] sm:$0xff]
  %v6088 = vld [vmem:[%s6066 + $0xa8] sm:$0xff]
  %v6089 = vld [vmem:[%s6066 + $0xb0] sm:$0xff]
  %v6090 = vld [vmem:[%s6066 + $0xb8] sm:$0xff]
  %v6091 = vld [vmem:[%s6066 + $0xc0] sm:$0xff]
  %v6092 = vld [vmem:[%s6066 + $0xc8] sm:$0xff]
  %v6093 = vld [vmem:[%s6066 + $0xd0] sm:$0xff]
  %v6094 = vld [vmem:[%s6066 + $0xd8] sm:$0xff]
  %v6095 = vld [vmem:[%s6066 + $0xe0] sm:$0xff]
  %v6096 = vld [vmem:[%s6066 + $0xe8] sm:$0xff]
  %v6097 = vld [vmem:[%s6066 + $0xf0] sm:$0xff]
  %v6098 = vld [vmem:[%s6066 + $0xf8] sm:$0xff]
  %v6099 = vrot.slane %v609, 4
  %v6100 = vsel %vm172, %v6099, 0
  %6102 = vmatprep.subr.mxu0 %v6068
  %6103 = vmatpush1.msra.mxu0 %v6067
  %6104 = vmatprep.subr.mxu0 %v6072
  %6105 = vmatpush1.msra.mxu0 %v6071
  %6106 = vmatprep.subr.mxu0 %v6076
  %6107 = vmatpush1.msra.mxu0 %v6075
  %6108 = vmatprep.subr.mxu0 %v6080
  %6109 = vmatpush1.msra.mxu0 %v6079
  %6110 = vmatprep.subr.mxu0 %v6084
  %6111 = vmatpush1.msra.mxu0 %v6083
  %6112 = vmatprep.subr.mxu0 %v6088
  %6113 = vmatpush1.msra.mxu0 %v6087
  %6114 = vmatprep.subr.mxu0 %v6092
  %6115 = vmatpush1.msra.mxu0 %v6091
  %6116 = vmatprep.subr.mxu0 %v6096
  %6117 = vmatpush1.msra.mxu0 %v6095
  %6118 = vmatprep.subr.mxu0 0.0
  %6119 = vmatpush1.msra.mxu0 0.0
  %6120 = vmatprep.subr.mxu0 0.0
  %6121 = vmatpush1.msra.mxu0 0.0
  %6122 = vmatprep.subr.mxu0 0.0
  %6123 = vmatpush1.msra.mxu0 0.0
  %6124 = vmatprep.subr.mxu0 0.0
  %6125 = vmatpush1.msra.mxu0 0.0
  %6126 = vmatprep.subr.mxu0 0.0
  %6127 = vmatpush1.msra.mxu0 0.0
  %6128 = vmatprep.subr.mxu0 0.0
  %6129 = vmatpush1.msra.mxu0 0.0
  %6130 = vmatprep.subr.mxu0 0.0
  %6131 = vmatpush1.msra.mxu0 0.0
  %6132 = vmatprep.subr.mxu0 0.0
  %6133 = vmatpush1.msra.mxu0 0.0
  %6134 = vmatprep.subr.mxu0 0.0
  %6135 = vmatpush1.msra.mxu0 0.0
  %6136 = vmatprep.subr.mxu0 0.0
  %6137 = vmatpush1.msra.mxu0 0.0
  %6138 = vmatprep.subr.mxu0 0.0
  %6139 = vmatpush1.msra.mxu0 0.0
  %6140 = vmatprep.subr.mxu0 0.0
  %6141 = vmatpush1.msra.mxu0 0.0
  %6142 = vmatprep.subr.mxu0 0.0
  %6143 = vmatpush1.msra.mxu0 0.0
  %6144 = vmatprep.subr.mxu0 0.0
  %6145 = vmatpush1.msra.mxu0 0.0
  %6146 = vmatprep.subr.mxu0 0.0
  %6147 = vmatpush1.msra.mxu0 0.0
  %6148 = vmatprep.subr.mxu0 0.0
  %6149 = vmatpush1.msra.mxu0 0.0
  %6150 = vmatprep.subr.mxu0 0.0
  %6151 = vmatpush1.msra.mxu0 0.0
  %6152 = vmatprep.subr.mxu0 0.0
  %6153 = vmatpush1.msra.mxu0 0.0
  %6154 = vmatprep.subr.mxu0 0.0
  %6155 = vmatpush1.msra.mxu0 0.0
  %6156 = vmatprep.subr.mxu0 0.0
  %6157 = vmatpush1.msra.mxu0 0.0
  %6158 = vmatprep.subr.mxu0 0.0
  %6159 = vmatpush1.msra.mxu0 0.0
  %6160 = vmatprep.subr.mxu0 0.0
  %6161 = vmatpush1.msra.mxu0 0.0
  %6162 = vmatprep.subr.mxu0 0.0
  %6163 = vmatpush1.msra.mxu0 0.0
  %6164 = vmatprep.subr.mxu0 0.0
  %6165 = vmatpush1.msra.mxu0 0.0
  %6166 = vmatprep.mubr.f32.mxu0 0.0
  %6167 = vmatmul.mubr.f32.gmra.mrb[0].mxu0 %v6100
  %v6168 = vpop.f32.mrb[0].mxu0
  %v6169 = vadd.f32 0.0, %v6168
  %v6170 = vpop.f32.mrb[0].mxu0
  %v6171 = vadd.f32 0.0, %v6170
  %6172 = vdwg.mxu0
  %6173 = vmatprep.subr.mxu0 %v6070
  %6174 = vmatpush1.msra.mxu0 %v6069
  %6175 = vmatprep.subr.mxu0 %v6074
  %6176 = vmatpush1.msra.mxu0 %v6073
  %6177 = vmatprep.subr.mxu0 %v6078
  %6178 = vmatpush1.msra.mxu0 %v6077
  %6179 = vmatprep.subr.mxu0 %v6082
  %6180 = vmatpush1.msra.mxu0 %v6081
  %6181 = vmatprep.subr.mxu0 %v6086
  %6182 = vmatpush1.msra.mxu0 %v6085
  %6183 = vmatprep.subr.mxu0 %v6090
  %6184 = vmatpush1.msra.mxu0 %v6089
  %6185 = vmatprep.subr.mxu0 %v6094
  %6186 = vmatpush1.msra.mxu0 %v6093
  %6187 = vmatprep.subr.mxu0 %v6098
  %6188 = vmatpush1.msra.mxu0 %v6097
  %6189 = vmatprep.subr.mxu0 0.0
  %6190 = vmatpush1.msra.mxu0 0.0
  %6191 = vmatprep.subr.mxu0 0.0
  %6192 = vmatpush1.msra.mxu0 0.0
  %6193 = vmatprep.subr.mxu0 0.0
  %6194 = vmatpush1.msra.mxu0 0.0
  %6195 = vmatprep.subr.mxu0 0.0
  %6196 = vmatpush1.msra.mxu0 0.0
  %6197 = vmatprep.subr.mxu0 0.0
  %6198 = vmatpush1.msra.mxu0 0.0
  %6199 = vmatprep.subr.mxu0 0.0
  %6200 = vmatpush1.msra.mxu0 0.0
  %6201 = vmatprep.subr.mxu0 0.0
  %6202 = vmatpush1.msra.mxu0 0.0
  %6203 = vmatprep.subr.mxu0 0.0
  %6204 = vmatpush1.msra.mxu0 0.0
  %6205 = vmatprep.subr.mxu0 0.0
  %6206 = vmatpush1.msra.mxu0 0.0
  %6207 = vmatprep.subr.mxu0 0.0
  %6208 = vmatpush1.msra.mxu0 0.0
  %6209 = vmatprep.subr.mxu0 0.0
  %6210 = vmatpush1.msra.mxu0 0.0
  %6211 = vmatprep.subr.mxu0 0.0
  %6212 = vmatpush1.msra.mxu0 0.0
  %6213 = vmatprep.subr.mxu0 0.0
  %6214 = vmatpush1.msra.mxu0 0.0
  %6215 = vmatprep.subr.mxu0 0.0
  %6216 = vmatpush1.msra.mxu0 0.0
  %6217 = vmatprep.subr.mxu0 0.0
  %6218 = vmatpush1.msra.mxu0 0.0
  %6219 = vmatprep.subr.mxu0 0.0
  %6220 = vmatpush1.msra.mxu0 0.0
  %6221 = vmatprep.subr.mxu0 0.0
  %6222 = vmatpush1.msra.mxu0 0.0
  %6223 = vmatprep.subr.mxu0 0.0
  %6224 = vmatpush1.msra.mxu0 0.0
  %6225 = vmatprep.subr.mxu0 0.0
  %6226 = vmatpush1.msra.mxu0 0.0
  %6227 = vmatprep.subr.mxu0 0.0
  %6228 = vmatpush1.msra.mxu0 0.0
  %6229 = vmatprep.subr.mxu0 0.0
  %6230 = vmatpush1.msra.mxu0 0.0
  %6231 = vmatprep.subr.mxu0 0.0
  %6232 = vmatpush1.msra.mxu0 0.0
  %6233 = vmatprep.subr.mxu0 0.0
  %6234 = vmatpush1.msra.mxu0 0.0
  %6235 = vmatprep.subr.mxu0 0.0
  %6236 = vmatpush1.msra.mxu0 0.0
  %6237 = vmatprep.mubr.f32.mxu0 0.0
  %6238 = vmatmul.mubr.f32.gmra.mrb[0].mxu0 %v6100
  %v6239 = vpop.f32.mrb[0].mxu0
  %v6240 = vadd.f32 0.0, %v6239
  %v6241 = vpop.f32.mrb[0].mxu0
  %v6242 = vadd.f32 0.0, %v6241
  %6243 = vdwg.mxu0
  %v6244 = vadd.f32 %v6062, %v6169
  %v6245 = vadd.f32 %v6063, %v6171
  %v6246 = vadd.f32 %v6064, %v6240
  %v6247 = vadd.f32 %v6065, %v6242
  %s6248 = scalar_lea.vmem %s3, 7936
  %v6249 = vld [vmem:[%s6248] sm:$0xff]
  %v6250 = vld [vmem:[%s6248 + $0x8] sm:$0xff]
  %v6251 = vld [vmem:[%s6248 + $0x10] sm:$0xff]
  %v6252 = vld [vmem:[%s6248 + $0x18] sm:$0xff]
  %v6253 = vld [vmem:[%s6248 + $0x20] sm:$0xff]
  %v6254 = vld [vmem:[%s6248 + $0x28] sm:$0xff]
  %v6255 = vld [vmem:[%s6248 + $0x30] sm:$0xff]
  %v6256 = vld [vmem:[%s6248 + $0x38] sm:$0xff]
  %v6257 = vld [vmem:[%s6248 + $0x40] sm:$0xff]
  %v6258 = vld [vmem:[%s6248 + $0x48] sm:$0xff]
  %v6259 = vld [vmem:[%s6248 + $0x50] sm:$0xff]
  %v6260 = vld [vmem:[%s6248 + $0x58] sm:$0xff]
  %v6261 = vld [vmem:[%s6248 + $0x60] sm:$0xff]
  %v6262 = vld [vmem:[%s6248 + $0x68] sm:$0xff]
  %v6263 = vld [vmem:[%s6248 + $0x70] sm:$0xff]
  %v6264 = vld [vmem:[%s6248 + $0x78] sm:$0xff]
  %v6265 = vld [vmem:[%s6248 + $0x80] sm:$0xff]
  %v6266 = vld [vmem:[%s6248 + $0x88] sm:$0xff]
  %v6267 = vld [vmem:[%s6248 + $0x90] sm:$0xff]
  %v6268 = vld [vmem:[%s6248 + $0x98] sm:$0xff]
  %v6269 = vld [vmem:[%s6248 + $0xa0] sm:$0xff]
  %v6270 = vld [vmem:[%s6248 + $0xa8] sm:$0xff]
  %v6271 = vld [vmem:[%s6248 + $0xb0] sm:$0xff]
  %v6272 = vld [vmem:[%s6248 + $0xb8] sm:$0xff]
  %v6273 = vld [vmem:[%s6248 + $0xc0] sm:$0xff]
  %v6274 = vld [vmem:[%s6248 + $0xc8] sm:$0xff]
  %v6275 = vld [vmem:[%s6248 + $0xd0] sm:$0xff]
  %v6276 = vld [vmem:[%s6248 + $0xd8] sm:$0xff]
  %v6277 = vld [vmem:[%s6248 + $0xe0] sm:$0xff]
  %v6278 = vld [vmem:[%s6248 + $0xe8] sm:$0xff]
  %v6279 = vld [vmem:[%s6248 + $0xf0] sm:$0xff]
  %v6280 = vld [vmem:[%s6248 + $0xf8] sm:$0xff]
  %v6281 = vrot.slane %v609, 6
  %v6282 = vsel %vm172, %v6281, 0
  %6284 = vmatprep.subr.mxu0 %v6250
  %6285 = vmatpush1.msra.mxu0 %v6249
  %6286 = vmatprep.subr.mxu0 %v6254
  %6287 = vmatpush1.msra.mxu0 %v6253
  %6288 = vmatprep.subr.mxu0 %v6258
  %6289 = vmatpush1.msra.mxu0 %v6257
  %6290 = vmatprep.subr.mxu0 %v6262
  %6291 = vmatpush1.msra.mxu0 %v6261
  %6292 = vmatprep.subr.mxu0 %v6266
  %6293 = vmatpush1.msra.mxu0 %v6265
  %6294 = vmatprep.subr.mxu0 %v6270
  %6295 = vmatpush1.msra.mxu0 %v6269
  %6296 = vmatprep.subr.mxu0 %v6274
  %6297 = vmatpush1.msra.mxu0 %v6273
  %6298 = vmatprep.subr.mxu0 %v6278
  %6299 = vmatpush1.msra.mxu0 %v6277
  %6300 = vmatprep.subr.mxu0 0.0
  %6301 = vmatpush1.msra.mxu0 0.0
  %6302 = vmatprep.subr.mxu0 0.0
  %6303 = vmatpush1.msra.mxu0 0.0
  %6304 = vmatprep.subr.mxu0 0.0
  %6305 = vmatpush1.msra.mxu0 0.0
  %6306 = vmatprep.subr.mxu0 0.0
  %6307 = vmatpush1.msra.mxu0 0.0
  %6308 = vmatprep.subr.mxu0 0.0
  %6309 = vmatpush1.msra.mxu0 0.0
  %6310 = vmatprep.subr.mxu0 0.0
  %6311 = vmatpush1.msra.mxu0 0.0
  %6312 = vmatprep.subr.mxu0 0.0
  %6313 = vmatpush1.msra.mxu0 0.0
  %6314 = vmatprep.subr.mxu0 0.0
  %6315 = vmatpush1.msra.mxu0 0.0
  %6316 = vmatprep.subr.mxu0 0.0
  %6317 = vmatpush1.msra.mxu0 0.0
  %6318 = vmatprep.subr.mxu0 0.0
  %6319 = vmatpush1.msra.mxu0 0.0
  %6320 = vmatprep.subr.mxu0 0.0
  %6321 = vmatpush1.msra.mxu0 0.0
  %6322 = vmatprep.subr.mxu0 0.0
  %6323 = vmatpush1.msra.mxu0 0.0
  %6324 = vmatprep.subr.mxu0 0.0
  %6325 = vmatpush1.msra.mxu0 0.0
  %6326 = vmatprep.subr.mxu0 0.0
  %6327 = vmatpush1.msra.mxu0 0.0
  %6328 = vmatprep.subr.mxu0 0.0
  %6329 = vmatpush1.msra.mxu0 0.0
  %6330 = vmatprep.subr.mxu0 0.0
  %6331 = vmatpush1.msra.mxu0 0.0
  %6332 = vmatprep.subr.mxu0 0.0
  %6333 = vmatpush1.msra.mxu0 0.0
  %6334 = vmatprep.subr.mxu0 0.0
  %6335 = vmatpush1.msra.mxu0 0.0
  %6336 = vmatprep.subr.mxu0 0.0
  %6337 = vmatpush1.msra.mxu0 0.0
  %6338 = vmatprep.subr.mxu0 0.0
  %6339 = vmatpush1.msra.mxu0 0.0
  %6340 = vmatprep.subr.mxu0 0.0
  %6341 = vmatpush1.msra.mxu0 0.0
  %6342 = vmatprep.subr.mxu0 0.0
  %6343 = vmatpush1.msra.mxu0 0.0
  %6344 = vmatprep.subr.mxu0 0.0
  %6345 = vmatpush1.msra.mxu0 0.0
  %6346 = vmatprep.subr.mxu0 0.0
  %6347 = vmatpush1.msra.mxu0 0.0
  %6348 = vmatprep.mubr.f32.mxu0 0.0
  %6349 = vmatmul.mubr.f32.gmra.mrb[0].mxu0 %v6282
  %v6350 = vpop.f32.mrb[0].mxu0
  %v6351 = vadd.f32 0.0, %v6350
  %v6352 = vpop.f32.mrb[0].mxu0
  %v6353 = vadd.f32 0.0, %v6352
  %6354 = vdwg.mxu0
  %6355 = vmatprep.subr.mxu0 %v6252
  %6356 = vmatpush1.msra.mxu0 %v6251
  %6357 = vmatprep.subr.mxu0 %v6256
  %6358 = vmatpush1.msra.mxu0 %v6255
  %6359 = vmatprep.subr.mxu0 %v6260
  %6360 = vmatpush1.msra.mxu0 %v6259
  %6361 = vmatprep.subr.mxu0 %v6264
  %6362 = vmatpush1.msra.mxu0 %v6263
  %6363 = vmatprep.subr.mxu0 %v6268
  %6364 = vmatpush1.msra.mxu0 %v6267
  %6365 = vmatprep.subr.mxu0 %v6272
  %6366 = vmatpush1.msra.mxu0 %v6271
  %6367 = vmatprep.subr.mxu0 %v6276
  %6368 = vmatpush1.msra.mxu0 %v6275
  %6369 = vmatprep.subr.mxu0 %v6280
  %6370 = vmatpush1.msra.mxu0 %v6279
  %6371 = vmatprep.subr.mxu0 0.0
  %6372 = vmatpush1.msra.mxu0 0.0
  %6373 = vmatprep.subr.mxu0 0.0
  %6374 = vmatpush1.msra.mxu0 0.0
  %6375 = vmatprep.subr.mxu0 0.0
  %6376 = vmatpush1.msra.mxu0 0.0
  %6377 = vmatprep.subr.mxu0 0.0
  %6378 = vmatpush1.msra.mxu0 0.0
  %6379 = vmatprep.subr.mxu0 0.0
  %6380 = vmatpush1.msra.mxu0 0.0
  %6381 = vmatprep.subr.mxu0 0.0
  %6382 = vmatpush1.msra.mxu0 0.0
  %6383 = vmatprep.subr.mxu0 0.0
  %6384 = vmatpush1.msra.mxu0 0.0
  %6385 = vmatprep.subr.mxu0 0.0
  %6386 = vmatpush1.msra.mxu0 0.0
  %6387 = vmatprep.subr.mxu0 0.0
  %6388 = vmatpush1.msra.mxu0 0.0
  %6389 = vmatprep.subr.mxu0 0.0
  %6390 = vmatpush1.msra.mxu0 0.0
  %6391 = vmatprep.subr.mxu0 0.0
  %6392 = vmatpush1.msra.mxu0 0.0
  %6393 = vmatprep.subr.mxu0 0.0
  %6394 = vmatpush1.msra.mxu0 0.0
  %6395 = vmatprep.subr.mxu0 0.0
  %6396 = vmatpush1.msra.mxu0 0.0
  %6397 = vmatprep.subr.mxu0 0.0
  %6398 = vmatpush1.msra.mxu0 0.0
  %6399 = vmatprep.subr.mxu0 0.0
  %6400 = vmatpush1.msra.mxu0 0.0
  %6401 = vmatprep.subr.mxu0 0.0
  %6402 = vmatpush1.msra.mxu0 0.0
  %6403 = vmatprep.subr.mxu0 0.0
  %6404 = vmatpush1.msra.mxu0 0.0
  %6405 = vmatprep.subr.mxu0 0.0
  %6406 = vmatpush1.msra.mxu0 0.0
  %6407 = vmatprep.subr.mxu0 0.0
  %6408 = vmatpush1.msra.mxu0 0.0
  %6409 = vmatprep.subr.mxu0 0.0
  %6410 = vmatpush1.msra.mxu0 0.0
  %6411 = vmatprep.subr.mxu0 0.0
  %6412 = vmatpush1.msra.mxu0 0.0
  %6413 = vmatprep.subr.mxu0 0.0
  %6414 = vmatpush1.msra.mxu0 0.0
  %6415 = vmatprep.subr.mxu0 0.0
  %6416 = vmatpush1.msra.mxu0 0.0
  %6417 = vmatprep.subr.mxu0 0.0
  %6418 = vmatpush1.msra.mxu0 0.0
  %6419 = vmatprep.mubr.f32.mxu0 0.0
  %6420 = vmatmul.mubr.f32.gmra.mrb[0].mxu0 %v6282
  %v6421 = vpop.f32.mrb[0].mxu0
  %v6422 = vadd.f32 0.0, %v6421
  %v6423 = vpop.f32.mrb[0].mxu0
  %v6424 = vadd.f32 0.0, %v6423
  %6425 = vdwg.mxu0
  %v6426 = vadd.f32 %v6244, %v6351
  %v6427 = vadd.f32 %v6245, %v6353
  %v6428 = vadd.f32 %v6246, %v6422
  %v6429 = vadd.f32 %v6247, %v6424
  %s6430 = scalar_lea.vmem %s3, 8192
  %v6431 = vld [vmem:[%s6430] sm:$0xff]
  %v6432 = vld [vmem:[%s6430 + $0x8] sm:$0xff]
  %v6433 = vld [vmem:[%s6430 + $0x10] sm:$0xff]
  %v6434 = vld [vmem:[%s6430 + $0x18] sm:$0xff]
  %v6435 = vld [vmem:[%s6430 + $0x20] sm:$0xff]
  %v6436 = vld [vmem:[%s6430 + $0x28] sm:$0xff]
  %v6437 = vld [vmem:[%s6430 + $0x30] sm:$0xff]
  %v6438 = vld [vmem:[%s6430 + $0x38] sm:$0xff]
  %v6439 = vld [vmem:[%s6430 + $0x40] sm:$0xff]
  %v6440 = vld [vmem:[%s6430 + $0x48] sm:$0xff]
  %v6441 = vld [vmem:[%s6430 + $0x50] sm:$0xff]
  %v6442 = vld [vmem:[%s6430 + $0x58] sm:$0xff]
  %v6443 = vld [vmem:[%s6430 + $0x60] sm:$0xff]
  %v6444 = vld [vmem:[%s6430 + $0x68] sm:$0xff]
  %v6445 = vld [vmem:[%s6430 + $0x70] sm:$0xff]
  %v6446 = vld [vmem:[%s6430 + $0x78] sm:$0xff]
  %v6447 = vld [vmem:[%s6430 + $0x80] sm:$0xff]
  %v6448 = vld [vmem:[%s6430 + $0x88] sm:$0xff]
  %v6449 = vld [vmem:[%s6430 + $0x90] sm:$0xff]
  %v6450 = vld [vmem:[%s6430 + $0x98] sm:$0xff]
  %v6451 = vld [vmem:[%s6430 + $0xa0] sm:$0xff]
  %v6452 = vld [vmem:[%s6430 + $0xa8] sm:$0xff]
  %v6453 = vld [vmem:[%s6430 + $0xb0] sm:$0xff]
  %v6454 = vld [vmem:[%s6430 + $0xb8] sm:$0xff]
  %v6455 = vld [vmem:[%s6430 + $0xc0] sm:$0xff]
  %v6456 = vld [vmem:[%s6430 + $0xc8] sm:$0xff]
  %v6457 = vld [vmem:[%s6430 + $0xd0] sm:$0xff]
  %v6458 = vld [vmem:[%s6430 + $0xd8] sm:$0xff]
  %v6459 = vld [vmem:[%s6430 + $0xe0] sm:$0xff]
  %v6460 = vld [vmem:[%s6430 + $0xe8] sm:$0xff]
  %v6461 = vld [vmem:[%s6430 + $0xf0] sm:$0xff]
  %v6462 = vld [vmem:[%s6430 + $0xf8] sm:$0xff]
  %v6464 = vsel %vm172, %v610, 0
  %6466 = vmatprep.subr.mxu0 %v6432
  %6467 = vmatpush1.msra.mxu0 %v6431
  %6468 = vmatprep.subr.mxu0 %v6436
  %6469 = vmatpush1.msra.mxu0 %v6435
  %6470 = vmatprep.subr.mxu0 %v6440
  %6471 = vmatpush1.msra.mxu0 %v6439
  %6472 = vmatprep.subr.mxu0 %v6444
  %6473 = vmatpush1.msra.mxu0 %v6443
  %6474 = vmatprep.subr.mxu0 %v6448
  %6475 = vmatpush1.msra.mxu0 %v6447
  %6476 = vmatprep.subr.mxu0 %v6452
  %6477 = vmatpush1.msra.mxu0 %v6451
  %6478 = vmatprep.subr.mxu0 %v6456
  %6479 = vmatpush1.msra.mxu0 %v6455
  %6480 = vmatprep.subr.mxu0 %v6460
  %6481 = vmatpush1.msra.mxu0 %v6459
  %6482 = vmatprep.subr.mxu0 0.0
  %6483 = vmatpush1.msra.mxu0 0.0
  %6484 = vmatprep.subr.mxu0 0.0
  %6485 = vmatpush1.msra.mxu0 0.0
  %6486 = vmatprep.subr.mxu0 0.0
  %6487 = vmatpush1.msra.mxu0 0.0
  %6488 = vmatprep.subr.mxu0 0.0
  %6489 = vmatpush1.msra.mxu0 0.0
  %6490 = vmatprep.subr.mxu0 0.0
  %6491 = vmatpush1.msra.mxu0 0.0
  %6492 = vmatprep.subr.mxu0 0.0
  %6493 = vmatpush1.msra.mxu0 0.0
  %6494 = vmatprep.subr.mxu0 0.0
  %6495 = vmatpush1.msra.mxu0 0.0
  %6496 = vmatprep.subr.mxu0 0.0
  %6497 = vmatpush1.msra.mxu0 0.0
  %6498 = vmatprep.subr.mxu0 0.0
  %6499 = vmatpush1.msra.mxu0 0.0
  %6500 = vmatprep.subr.mxu0 0.0
  %6501 = vmatpush1.msra.mxu0 0.0
  %6502 = vmatprep.subr.mxu0 0.0
  %6503 = vmatpush1.msra.mxu0 0.0
  %6504 = vmatprep.subr.mxu0 0.0
  %6505 = vmatpush1.msra.mxu0 0.0
  %6506 = vmatprep.subr.mxu0 0.0
  %6507 = vmatpush1.msra.mxu0 0.0
  %6508 = vmatprep.subr.mxu0 0.0
  %6509 = vmatpush1.msra.mxu0 0.0
  %6510 = vmatprep.subr.mxu0 0.0
  %6511 = vmatpush1.msra.mxu0 0.0
  %6512 = vmatprep.subr.mxu0 0.0
  %6513 = vmatpush1.msra.mxu0 0.0
  %6514 = vmatprep.subr.mxu0 0.0
  %6515 = vmatpush1.msra.mxu0 0.0
  %6516 = vmatprep.subr.mxu0 0.0
  %6517 = vmatpush1.msra.mxu0 0.0
  %6518 = vmatprep.subr.mxu0 0.0
  %6519 = vmatpush1.msra.mxu0 0.0
  %6520 = vmatprep.subr.mxu0 0.0
  %6521 = vmatpush1.msra.mxu0 0.0
  %6522 = vmatprep.subr.mxu0 0.0
  %6523 = vmatpush1.msra.mxu0 0.0
  %6524 = vmatprep.subr.mxu0 0.0
  %6525 = vmatpush1.msra.mxu0 0.0
  %6526 = vmatprep.subr.mxu0 0.0
  %6527 = vmatpush1.msra.mxu0 0.0
  %6528 = vmatprep.subr.mxu0 0.0
  %6529 = vmatpush1.msra.mxu0 0.0
  %6530 = vmatprep.mubr.f32.mxu0 0.0
  %6531 = vmatmul.mubr.f32.gmra.mrb[0].mxu0 %v6464
  %v6532 = vpop.f32.mrb[0].mxu0
  %v6533 = vadd.f32 0.0, %v6532
  %v6534 = vpop.f32.mrb[0].mxu0
  %v6535 = vadd.f32 0.0, %v6534
  %6536 = vdwg.mxu0
  %6537 = vmatprep.subr.mxu0 %v6434
  %6538 = vmatpush1.msra.mxu0 %v6433
  %6539 = vmatprep.subr.mxu0 %v6438
  %6540 = vmatpush1.msra.mxu0 %v6437
  %6541 = vmatprep.subr.mxu0 %v6442
  %6542 = vmatpush1.msra.mxu0 %v6441
  %6543 = vmatprep.subr.mxu0 %v6446
  %6544 = vmatpush1.msra.mxu0 %v6445
  %6545 = vmatprep.subr.mxu0 %v6450
  %6546 = vmatpush1.msra.mxu0 %v6449
  %6547 = vmatprep.subr.mxu0 %v6454
  %6548 = vmatpush1.msra.mxu0 %v6453
  %6549 = vmatprep.subr.mxu0 %v6458
  %6550 = vmatpush1.msra.mxu0 %v6457
  %6551 = vmatprep.subr.mxu0 %v6462
  %6552 = vmatpush1.msra.mxu0 %v6461
  %6553 = vmatprep.subr.mxu0 0.0
  %6554 = vmatpush1.msra.mxu0 0.0
  %6555 = vmatprep.subr.mxu0 0.0
  %6556 = vmatpush1.msra.mxu0 0.0
  %6557 = vmatprep.subr.mxu0 0.0
  %6558 = vmatpush1.msra.mxu0 0.0
  %6559 = vmatprep.subr.mxu0 0.0
  %6560 = vmatpush1.msra.mxu0 0.0
  %6561 = vmatprep.subr.mxu0 0.0
  %6562 = vmatpush1.msra.mxu0 0.0
  %6563 = vmatprep.subr.mxu0 0.0
  %6564 = vmatpush1.msra.mxu0 0.0
  %6565 = vmatprep.subr.mxu0 0.0
  %6566 = vmatpush1.msra.mxu0 0.0
  %6567 = vmatprep.subr.mxu0 0.0
  %6568 = vmatpush1.msra.mxu0 0.0
  %6569 = vmatprep.subr.mxu0 0.0
  %6570 = vmatpush1.msra.mxu0 0.0
  %6571 = vmatprep.subr.mxu0 0.0
  %6572 = vmatpush1.msra.mxu0 0.0
  %6573 = vmatprep.subr.mxu0 0.0
  %6574 = vmatpush1.msra.mxu0 0.0
  %6575 = vmatprep.subr.mxu0 0.0
  %6576 = vmatpush1.msra.mxu0 0.0
  %6577 = vmatprep.subr.mxu0 0.0
  %6578 = vmatpush1.msra.mxu0 0.0
  %6579 = vmatprep.subr.mxu0 0.0
  %6580 = vmatpush1.msra.mxu0 0.0
  %6581 = vmatprep.subr.mxu0 0.0
  %6582 = vmatpush1.msra.mxu0 0.0
  %6583 = vmatprep.subr.mxu0 0.0
  %6584 = vmatpush1.msra.mxu0 0.0
  %6585 = vmatprep.subr.mxu0 0.0
  %6586 = vmatpush1.msra.mxu0 0.0
  %6587 = vmatprep.subr.mxu0 0.0
  %6588 = vmatpush1.msra.mxu0 0.0
  %6589 = vmatprep.subr.mxu0 0.0
  %6590 = vmatpush1.msra.mxu0 0.0
  %6591 = vmatprep.subr.mxu0 0.0
  %6592 = vmatpush1.msra.mxu0 0.0
  %6593 = vmatprep.subr.mxu0 0.0
  %6594 = vmatpush1.msra.mxu0 0.0
  %6595 = vmatprep.subr.mxu0 0.0
  %6596 = vmatpush1.msra.mxu0 0.0
  %6597 = vmatprep.subr.mxu0 0.0
  %6598 = vmatpush1.msra.mxu0 0.0
  %6599 = vmatprep.subr.mxu0 0.0
  %6600 = vmatpush1.msra.mxu0 0.0
  %6601 = vmatprep.mubr.f32.mxu0 0.0
  %6602 = vmatmul.mubr.f32.gmra.mrb[0].mxu0 %v6464
  %v6603 = vpop.f32.mrb[0].mxu0
  %v6604 = vadd.f32 0.0, %v6603
  %v6605 = vpop.f32.mrb[0].mxu0
  %v6606 = vadd.f32 0.0, %v6605
  %6607 = vdwg.mxu0
  %v6608 = vadd.f32 %v6426, %v6533
  %v6609 = vadd.f32 %v6427, %v6535
  %v6610 = vadd.f32 %v6428, %v6604
  %v6611 = vadd.f32 %v6429, %v6606
  %s6612 = scalar_lea.vmem %s3, 8448
  %v6613 = vld [vmem:[%s6612] sm:$0xff]
  %v6614 = vld [vmem:[%s6612 + $0x8] sm:$0xff]
  %v6615 = vld [vmem:[%s6612 + $0x10] sm:$0xff]
  %v6616 = vld [vmem:[%s6612 + $0x18] sm:$0xff]
  %v6617 = vld [vmem:[%s6612 + $0x20] sm:$0xff]
  %v6618 = vld [vmem:[%s6612 + $0x28] sm:$0xff]
  %v6619 = vld [vmem:[%s6612 + $0x30] sm:$0xff]
  %v6620 = vld [vmem:[%s6612 + $0x38] sm:$0xff]
  %v6621 = vld [vmem:[%s6612 + $0x40] sm:$0xff]
  %v6622 = vld [vmem:[%s6612 + $0x48] sm:$0xff]
  %v6623 = vld [vmem:[%s6612 + $0x50] sm:$0xff]
  %v6624 = vld [vmem:[%s6612 + $0x58] sm:$0xff]
  %v6625 = vld [vmem:[%s6612 + $0x60] sm:$0xff]
  %v6626 = vld [vmem:[%s6612 + $0x68] sm:$0xff]
  %v6627 = vld [vmem:[%s6612 + $0x70] sm:$0xff]
  %v6628 = vld [vmem:[%s6612 + $0x78] sm:$0xff]
  %v6629 = vld [vmem:[%s6612 + $0x80] sm:$0xff]
  %v6630 = vld [vmem:[%s6612 + $0x88] sm:$0xff]
  %v6631 = vld [vmem:[%s6612 + $0x90] sm:$0xff]
  %v6632 = vld [vmem:[%s6612 + $0x98] sm:$0xff]
  %v6633 = vld [vmem:[%s6612 + $0xa0] sm:$0xff]
  %v6634 = vld [vmem:[%s6612 + $0xa8] sm:$0xff]
  %v6635 = vld [vmem:[%s6612 + $0xb0] sm:$0xff]
  %v6636 = vld [vmem:[%s6612 + $0xb8] sm:$0xff]
  %v6637 = vld [vmem:[%s6612 + $0xc0] sm:$0xff]
  %v6638 = vld [vmem:[%s6612 + $0xc8] sm:$0xff]
  %v6639 = vld [vmem:[%s6612 + $0xd0] sm:$0xff]
  %v6640 = vld [vmem:[%s6612 + $0xd8] sm:$0xff]
  %v6641 = vld [vmem:[%s6612 + $0xe0] sm:$0xff]
  %v6642 = vld [vmem:[%s6612 + $0xe8] sm:$0xff]
  %v6643 = vld [vmem:[%s6612 + $0xf0] sm:$0xff]
  %v6644 = vld [vmem:[%s6612 + $0xf8] sm:$0xff]
  %v6645 = vrot.slane %v610, 2
  %v6646 = vsel %vm172, %v6645, 0
  %6648 = vmatprep.subr.mxu0 %v6614
  %6649 = vmatpush1.msra.mxu0 %v6613
  %6650 = vmatprep.subr.mxu0 %v6618
  %6651 = vmatpush1.msra.mxu0 %v6617
  %6652 = vmatprep.subr.mxu0 %v6622
  %6653 = vmatpush1.msra.mxu0 %v6621
  %6654 = vmatprep.subr.mxu0 %v6626
  %6655 = vmatpush1.msra.mxu0 %v6625
  %6656 = vmatprep.subr.mxu0 %v6630
  %6657 = vmatpush1.msra.mxu0 %v6629
  %6658 = vmatprep.subr.mxu0 %v6634
  %6659 = vmatpush1.msra.mxu0 %v6633
  %6660 = vmatprep.subr.mxu0 %v6638
  %6661 = vmatpush1.msra.mxu0 %v6637
  %6662 = vmatprep.subr.mxu0 %v6642
  %6663 = vmatpush1.msra.mxu0 %v6641
  %6664 = vmatprep.subr.mxu0 0.0
  %6665 = vmatpush1.msra.mxu0 0.0
  %6666 = vmatprep.subr.mxu0 0.0
  %6667 = vmatpush1.msra.mxu0 0.0
  %6668 = vmatprep.subr.mxu0 0.0
  %6669 = vmatpush1.msra.mxu0 0.0
  %6670 = vmatprep.subr.mxu0 0.0
  %6671 = vmatpush1.msra.mxu0 0.0
  %6672 = vmatprep.subr.mxu0 0.0
  %6673 = vmatpush1.msra.mxu0 0.0
  %6674 = vmatprep.subr.mxu0 0.0
  %6675 = vmatpush1.msra.mxu0 0.0
  %6676 = vmatprep.subr.mxu0 0.0
  %6677 = vmatpush1.msra.mxu0 0.0
  %6678 = vmatprep.subr.mxu0 0.0
  %6679 = vmatpush1.msra.mxu0 0.0
  %6680 = vmatprep.subr.mxu0 0.0
  %6681 = vmatpush1.msra.mxu0 0.0
  %6682 = vmatprep.subr.mxu0 0.0
  %6683 = vmatpush1.msra.mxu0 0.0
  %6684 = vmatprep.subr.mxu0 0.0
  %6685 = vmatpush1.msra.mxu0 0.0
  %6686 = vmatprep.subr.mxu0 0.0
  %6687 = vmatpush1.msra.mxu0 0.0
  %6688 = vmatprep.subr.mxu0 0.0
  %6689 = vmatpush1.msra.mxu0 0.0
  %6690 = vmatprep.subr.mxu0 0.0
  %6691 = vmatpush1.msra.mxu0 0.0
  %6692 = vmatprep.subr.mxu0 0.0
  %6693 = vmatpush1.msra.mxu0 0.0
  %6694 = vmatprep.subr.mxu0 0.0
  %6695 = vmatpush1.msra.mxu0 0.0
  %6696 = vmatprep.subr.mxu0 0.0
  %6697 = vmatpush1.msra.mxu0 0.0
  %6698 = vmatprep.subr.mxu0 0.0
  %6699 = vmatpush1.msra.mxu0 0.0
  %6700 = vmatprep.subr.mxu0 0.0
  %6701 = vmatpush1.msra.mxu0 0.0
  %6702 = vmatprep.subr.mxu0 0.0
  %6703 = vmatpush1.msra.mxu0 0.0
  %6704 = vmatprep.subr.mxu0 0.0
  %6705 = vmatpush1.msra.mxu0 0.0
  %6706 = vmatprep.subr.mxu0 0.0
  %6707 = vmatpush1.msra.mxu0 0.0
  %6708 = vmatprep.subr.mxu0 0.0
  %6709 = vmatpush1.msra.mxu0 0.0
  %6710 = vmatprep.subr.mxu0 0.0
  %6711 = vmatpush1.msra.mxu0 0.0
  %6712 = vmatprep.mubr.f32.mxu0 0.0
  %6713 = vmatmul.mubr.f32.gmra.mrb[0].mxu0 %v6646
  %v6714 = vpop.f32.mrb[0].mxu0
  %v6715 = vadd.f32 0.0, %v6714
  %v6716 = vpop.f32.mrb[0].mxu0
  %v6717 = vadd.f32 0.0, %v6716
  %6718 = vdwg.mxu0
  %6719 = vmatprep.subr.mxu0 %v6616
  %6720 = vmatpush1.msra.mxu0 %v6615
  %6721 = vmatprep.subr.mxu0 %v6620
  %6722 = vmatpush1.msra.mxu0 %v6619
  %6723 = vmatprep.subr.mxu0 %v6624
  %6724 = vmatpush1.msra.mxu0 %v6623
  %6725 = vmatprep.subr.mxu0 %v6628
  %6726 = vmatpush1.msra.mxu0 %v6627
  %6727 = vmatprep.subr.mxu0 %v6632
  %6728 = vmatpush1.msra.mxu0 %v6631
  %6729 = vmatprep.subr.mxu0 %v6636
  %6730 = vmatpush1.msra.mxu0 %v6635
  %6731 = vmatprep.subr.mxu0 %v6640
  %6732 = vmatpush1.msra.mxu0 %v6639
  %6733 = vmatprep.subr.mxu0 %v6644
  %6734 = vmatpush1.msra.mxu0 %v6643
  %6735 = vmatprep.subr.mxu0 0.0
  %6736 = vmatpush1.msra.mxu0 0.0
  %6737 = vmatprep.subr.mxu0 0.0
  %6738 = vmatpush1.msra.mxu0 0.0
  %6739 = vmatprep.subr.mxu0 0.0
  %6740 = vmatpush1.msra.mxu0 0.0
  %6741 = vmatprep.subr.mxu0 0.0
  %6742 = vmatpush1.msra.mxu0 0.0
  %6743 = vmatprep.subr.mxu0 0.0
  %6744 = vmatpush1.msra.mxu0 0.0
  %6745 = vmatprep.subr.mxu0 0.0
  %6746 = vmatpush1.msra.mxu0 0.0
  %6747 = vmatprep.subr.mxu0 0.0
  %6748 = vmatpush1.msra.mxu0 0.0
  %6749 = vmatprep.subr.mxu0 0.0
  %6750 = vmatpush1.msra.mxu0 0.0
  %6751 = vmatprep.subr.mxu0 0.0
  %6752 = vmatpush1.msra.mxu0 0.0
  %6753 = vmatprep.subr.mxu0 0.0
  %6754 = vmatpush1.msra.mxu0 0.0
  %6755 = vmatprep.subr.mxu0 0.0
  %6756 = vmatpush1.msra.mxu0 0.0
  %6757 = vmatprep.subr.mxu0 0.0
  %6758 = vmatpush1.msra.mxu0 0.0
  %6759 = vmatprep.subr.mxu0 0.0
  %6760 = vmatpush1.msra.mxu0 0.0
  %6761 = vmatprep.subr.mxu0 0.0
  %6762 = vmatpush1.msra.mxu0 0.0
  %6763 = vmatprep.subr.mxu0 0.0
  %6764 = vmatpush1.msra.mxu0 0.0
  %6765 = vmatprep.subr.mxu0 0.0
  %6766 = vmatpush1.msra.mxu0 0.0
  %6767 = vmatprep.subr.mxu0 0.0
  %6768 = vmatpush1.msra.mxu0 0.0
  %6769 = vmatprep.subr.mxu0 0.0
  %6770 = vmatpush1.msra.mxu0 0.0
  %6771 = vmatprep.subr.mxu0 0.0
  %6772 = vmatpush1.msra.mxu0 0.0
  %6773 = vmatprep.subr.mxu0 0.0
  %6774 = vmatpush1.msra.mxu0 0.0
  %6775 = vmatprep.subr.mxu0 0.0
  %6776 = vmatpush1.msra.mxu0 0.0
  %6777 = vmatprep.subr.mxu0 0.0
  %6778 = vmatpush1.msra.mxu0 0.0
  %6779 = vmatprep.subr.mxu0 0.0
  %6780 = vmatpush1.msra.mxu0 0.0
  %6781 = vmatprep.subr.mxu0 0.0
  %6782 = vmatpush1.msra.mxu0 0.0
  %6783 = vmatprep.mubr.f32.mxu0 0.0
  %6784 = vmatmul.mubr.f32.gmra.mrb[0].mxu0 %v6646
  %v6785 = vpop.f32.mrb[0].mxu0
  %v6786 = vadd.f32 0.0, %v6785
  %v6787 = vpop.f32.mrb[0].mxu0
  %v6788 = vadd.f32 0.0, %v6787
  %6789 = vdwg.mxu0
  %v6790 = vadd.f32 %v6608, %v6715
  %v6791 = vadd.f32 %v6609, %v6717
  %v6792 = vadd.f32 %v6610, %v6786
  %v6793 = vadd.f32 %v6611, %v6788
  %s6794 = scalar_lea.vmem %s3, 8704
  %v6795 = vld [vmem:[%s6794] sm:$0xff]
  %v6796 = vld [vmem:[%s6794 + $0x8] sm:$0xff]
  %v6797 = vld [vmem:[%s6794 + $0x10] sm:$0xff]
  %v6798 = vld [vmem:[%s6794 + $0x18] sm:$0xff]
  %v6799 = vld [vmem:[%s6794 + $0x20] sm:$0xff]
  %v6800 = vld [vmem:[%s6794 + $0x28] sm:$0xff]
  %v6801 = vld [vmem:[%s6794 + $0x30] sm:$0xff]
  %v6802 = vld [vmem:[%s6794 + $0x38] sm:$0xff]
  %v6803 = vld [vmem:[%s6794 + $0x40] sm:$0xff]
  %v6804 = vld [vmem:[%s6794 + $0x48] sm:$0xff]
  %v6805 = vld [vmem:[%s6794 + $0x50] sm:$0xff]
  %v6806 = vld [vmem:[%s6794 + $0x58] sm:$0xff]
  %v6807 = vld [vmem:[%s6794 + $0x60] sm:$0xff]
  %v6808 = vld [vmem:[%s6794 + $0x68] sm:$0xff]
  %v6809 = vld [vmem:[%s6794 + $0x70] sm:$0xff]
  %v6810 = vld [vmem:[%s6794 + $0x78] sm:$0xff]
  %v6811 = vld [vmem:[%s6794 + $0x80] sm:$0xff]
  %v6812 = vld [vmem:[%s6794 + $0x88] sm:$0xff]
  %v6813 = vld [vmem:[%s6794 + $0x90] sm:$0xff]
  %v6814 = vld [vmem:[%s6794 + $0x98] sm:$0xff]
  %v6815 = vld [vmem:[%s6794 + $0xa0] sm:$0xff]
  %v6816 = vld [vmem:[%s6794 + $0xa8] sm:$0xff]
  %v6817 = vld [vmem:[%s6794 + $0xb0] sm:$0xff]
  %v6818 = vld [vmem:[%s6794 + $0xb8] sm:$0xff]
  %v6819 = vld [vmem:[%s6794 + $0xc0] sm:$0xff]
  %v6820 = vld [vmem:[%s6794 + $0xc8] sm:$0xff]
  %v6821 = vld [vmem:[%s6794 + $0xd0] sm:$0xff]
  %v6822 = vld [vmem:[%s6794 + $0xd8] sm:$0xff]
  %v6823 = vld [vmem:[%s6794 + $0xe0] sm:$0xff]
  %v6824 = vld [vmem:[%s6794 + $0xe8] sm:$0xff]
  %v6825 = vld [vmem:[%s6794 + $0xf0] sm:$0xff]
  %v6826 = vld [vmem:[%s6794 + $0xf8] sm:$0xff]
  %v6827 = vrot.slane %v610, 4
  %v6828 = vsel %vm172, %v6827, 0
  %6830 = vmatprep.subr.mxu0 %v6796
  %6831 = vmatpush1.msra.mxu0 %v6795
  %6832 = vmatprep.subr.mxu0 %v6800
  %6833 = vmatpush1.msra.mxu0 %v6799
  %6834 = vmatprep.subr.mxu0 %v6804
  %6835 = vmatpush1.msra.mxu0 %v6803
  %6836 = vmatprep.subr.mxu0 %v6808
  %6837 = vmatpush1.msra.mxu0 %v6807
  %6838 = vmatprep.subr.mxu0 %v6812
  %6839 = vmatpush1.msra.mxu0 %v6811
  %6840 = vmatprep.subr.mxu0 %v6816
  %6841 = vmatpush1.msra.mxu0 %v6815
  %6842 = vmatprep.subr.mxu0 %v6820
  %6843 = vmatpush1.msra.mxu0 %v6819
  %6844 = vmatprep.subr.mxu0 %v6824
  %6845 = vmatpush1.msra.mxu0 %v6823
  %6846 = vmatprep.subr.mxu0 0.0
  %6847 = vmatpush1.msra.mxu0 0.0
  %6848 = vmatprep.subr.mxu0 0.0
  %6849 = vmatpush1.msra.mxu0 0.0
  %6850 = vmatprep.subr.mxu0 0.0
  %6851 = vmatpush1.msra.mxu0 0.0
  %6852 = vmatprep.subr.mxu0 0.0
  %6853 = vmatpush1.msra.mxu0 0.0
  %6854 = vmatprep.subr.mxu0 0.0
  %6855 = vmatpush1.msra.mxu0 0.0
  %6856 = vmatprep.subr.mxu0 0.0
  %6857 = vmatpush1.msra.mxu0 0.0
  %6858 = vmatprep.subr.mxu0 0.0
  %6859 = vmatpush1.msra.mxu0 0.0
  %6860 = vmatprep.subr.mxu0 0.0
  %6861 = vmatpush1.msra.mxu0 0.0
  %6862 = vmatprep.subr.mxu0 0.0
  %6863 = vmatpush1.msra.mxu0 0.0
  %6864 = vmatprep.subr.mxu0 0.0
  %6865 = vmatpush1.msra.mxu0 0.0
  %6866 = vmatprep.subr.mxu0 0.0
  %6867 = vmatpush1.msra.mxu0 0.0
  %6868 = vmatprep.subr.mxu0 0.0
  %6869 = vmatpush1.msra.mxu0 0.0
  %6870 = vmatprep.subr.mxu0 0.0
  %6871 = vmatpush1.msra.mxu0 0.0
  %6872 = vmatprep.subr.mxu0 0.0
  %6873 = vmatpush1.msra.mxu0 0.0
  %6874 = vmatprep.subr.mxu0 0.0
  %6875 = vmatpush1.msra.mxu0 0.0
  %6876 = vmatprep.subr.mxu0 0.0
  %6877 = vmatpush1.msra.mxu0 0.0
  %6878 = vmatprep.subr.mxu0 0.0
  %6879 = vmatpush1.msra.mxu0 0.0
  %6880 = vmatprep.subr.mxu0 0.0
  %6881 = vmatpush1.msra.mxu0 0.0
  %6882 = vmatprep.subr.mxu0 0.0
  %6883 = vmatpush1.msra.mxu0 0.0
  %6884 = vmatprep.subr.mxu0 0.0
  %6885 = vmatpush1.msra.mxu0 0.0
  %6886 = vmatprep.subr.mxu0 0.0
  %6887 = vmatpush1.msra.mxu0 0.0
  %6888 = vmatprep.subr.mxu0 0.0
  %6889 = vmatpush1.msra.mxu0 0.0
  %6890 = vmatprep.subr.mxu0 0.0
  %6891 = vmatpush1.msra.mxu0 0.0
  %6892 = vmatprep.subr.mxu0 0.0
  %6893 = vmatpush1.msra.mxu0 0.0
  %6894 = vmatprep.mubr.f32.mxu0 0.0
  %6895 = vmatmul.mubr.f32.gmra.mrb[0].mxu0 %v6828
  %v6896 = vpop.f32.mrb[0].mxu0
  %v6897 = vadd.f32 0.0, %v6896
  %v6898 = vpop.f32.mrb[0].mxu0
  %v6899 = vadd.f32 0.0, %v6898
  %6900 = vdwg.mxu0
  %6901 = vmatprep.subr.mxu0 %v6798
  %6902 = vmatpush1.msra.mxu0 %v6797
  %6903 = vmatprep.subr.mxu0 %v6802
  %6904 = vmatpush1.msra.mxu0 %v6801
  %6905 = vmatprep.subr.mxu0 %v6806
  %6906 = vmatpush1.msra.mxu0 %v6805
  %6907 = vmatprep.subr.mxu0 %v6810
  %6908 = vmatpush1.msra.mxu0 %v6809
  %6909 = vmatprep.subr.mxu0 %v6814
  %6910 = vmatpush1.msra.mxu0 %v6813
  %6911 = vmatprep.subr.mxu0 %v6818
  %6912 = vmatpush1.msra.mxu0 %v6817
  %6913 = vmatprep.subr.mxu0 %v6822
  %6914 = vmatpush1.msra.mxu0 %v6821
  %6915 = vmatprep.subr.mxu0 %v6826
  %6916 = vmatpush1.msra.mxu0 %v6825
  %6917 = vmatprep.subr.mxu0 0.0
  %6918 = vmatpush1.msra.mxu0 0.0
  %6919 = vmatprep.subr.mxu0 0.0
  %6920 = vmatpush1.msra.mxu0 0.0
  %6921 = vmatprep.subr.mxu0 0.0
  %6922 = vmatpush1.msra.mxu0 0.0
  %6923 = vmatprep.subr.mxu0 0.0
  %6924 = vmatpush1.msra.mxu0 0.0
  %6925 = vmatprep.subr.mxu0 0.0
  %6926 = vmatpush1.msra.mxu0 0.0
  %6927 = vmatprep.subr.mxu0 0.0
  %6928 = vmatpush1.msra.mxu0 0.0
  %6929 = vmatprep.subr.mxu0 0.0
  %6930 = vmatpush1.msra.mxu0 0.0
  %6931 = vmatprep.subr.mxu0 0.0
  %6932 = vmatpush1.msra.mxu0 0.0
  %6933 = vmatprep.subr.mxu0 0.0
  %6934 = vmatpush1.msra.mxu0 0.0
  %6935 = vmatprep.subr.mxu0 0.0
  %6936 = vmatpush1.msra.mxu0 0.0
  %6937 = vmatprep.subr.mxu0 0.0
  %6938 = vmatpush1.msra.mxu0 0.0
  %6939 = vmatprep.subr.mxu0 0.0
  %6940 = vmatpush1.msra.mxu0 0.0
  %6941 = vmatprep.subr.mxu0 0.0
  %6942 = vmatpush1.msra.mxu0 0.0
  %6943 = vmatprep.subr.mxu0 0.0
  %6944 = vmatpush1.msra.mxu0 0.0
  %6945 = vmatprep.subr.mxu0 0.0
  %6946 = vmatpush1.msra.mxu0 0.0
  %6947 = vmatprep.subr.mxu0 0.0
  %6948 = vmatpush1.msra.mxu0 0.0
  %6949 = vmatprep.subr.mxu0 0.0
  %6950 = vmatpush1.msra.mxu0 0.0
  %6951 = vmatprep.subr.mxu0 0.0
  %6952 = vmatpush1.msra.mxu0 0.0
  %6953 = vmatprep.subr.mxu0 0.0
  %6954 = vmatpush1.msra.mxu0 0.0
  %6955 = vmatprep.subr.mxu0 0.0
  %6956 = vmatpush1.msra.mxu0 0.0
  %6957 = vmatprep.subr.mxu0 0.0
  %6958 = vmatpush1.msra.mxu0 0.0
  %6959 = vmatprep.subr.mxu0 0.0
  %6960 = vmatpush1.msra.mxu0 0.0
  %6961 = vmatprep.subr.mxu0 0.0
  %6962 = vmatpush1.msra.mxu0 0.0
  %6963 = vmatprep.subr.mxu0 0.0
  %6964 = vmatpush1.msra.mxu0 0.0
  %6965 = vmatprep.mubr.f32.mxu0 0.0
  %6966 = vmatmul.mubr.f32.gmra.mrb[0].mxu0 %v6828
  %v6967 = vpop.f32.mrb[0].mxu0
  %v6968 = vadd.f32 0.0, %v6967
  %v6969 = vpop.f32.mrb[0].mxu0
  %v6970 = vadd.f32 0.0, %v6969
  %6971 = vdwg.mxu0
  %v6972 = vadd.f32 %v6790, %v6897
  %v6973 = vadd.f32 %v6791, %v6899
  %v6974 = vadd.f32 %v6792, %v6968
  %v6975 = vadd.f32 %v6793, %v6970
  %s6976 = scalar_lea.vmem %s3, 8960
  %v6977 = vld [vmem:[%s6976] sm:$0xff]
  %v6978 = vld [vmem:[%s6976 + $0x8] sm:$0xff]
  %v6979 = vld [vmem:[%s6976 + $0x10] sm:$0xff]
  %v6980 = vld [vmem:[%s6976 + $0x18] sm:$0xff]
  %v6981 = vld [vmem:[%s6976 + $0x20] sm:$0xff]
  %v6982 = vld [vmem:[%s6976 + $0x28] sm:$0xff]
  %v6983 = vld [vmem:[%s6976 + $0x30] sm:$0xff]
  %v6984 = vld [vmem:[%s6976 + $0x38] sm:$0xff]
  %v6985 = vld [vmem:[%s6976 + $0x40] sm:$0xff]
  %v6986 = vld [vmem:[%s6976 + $0x48] sm:$0xff]
  %v6987 = vld [vmem:[%s6976 + $0x50] sm:$0xff]
  %v6988 = vld [vmem:[%s6976 + $0x58] sm:$0xff]
  %v6989 = vld [vmem:[%s6976 + $0x60] sm:$0xff]
  %v6990 = vld [vmem:[%s6976 + $0x68] sm:$0xff]
  %v6991 = vld [vmem:[%s6976 + $0x70] sm:$0xff]
  %v6992 = vld [vmem:[%s6976 + $0x78] sm:$0xff]
  %v6993 = vld [vmem:[%s6976 + $0x80] sm:$0xff]
  %v6994 = vld [vmem:[%s6976 + $0x88] sm:$0xff]
  %v6995 = vld [vmem:[%s6976 + $0x90] sm:$0xff]
  %v6996 = vld [vmem:[%s6976 + $0x98] sm:$0xff]
  %v6997 = vld [vmem:[%s6976 + $0xa0] sm:$0xff]
  %v6998 = vld [vmem:[%s6976 + $0xa8] sm:$0xff]
  %v6999 = vld [vmem:[%s6976 + $0xb0] sm:$0xff]
  %v7000 = vld [vmem:[%s6976 + $0xb8] sm:$0xff]
  %v7001 = vld [vmem:[%s6976 + $0xc0] sm:$0xff]
  %v7002 = vld [vmem:[%s6976 + $0xc8] sm:$0xff]
  %v7003 = vld [vmem:[%s6976 + $0xd0] sm:$0xff]
  %v7004 = vld [vmem:[%s6976 + $0xd8] sm:$0xff]
  %v7005 = vld [vmem:[%s6976 + $0xe0] sm:$0xff]
  %v7006 = vld [vmem:[%s6976 + $0xe8] sm:$0xff]
  %v7007 = vld [vmem:[%s6976 + $0xf0] sm:$0xff]
  %v7008 = vld [vmem:[%s6976 + $0xf8] sm:$0xff]
  %v7009 = vrot.slane %v610, 6
  %v7010 = vsel %vm172, %v7009, 0
  %7012 = vmatprep.subr.mxu0 %v6978
  %7013 = vmatpush1.msra.mxu0 %v6977
  %7014 = vmatprep.subr.mxu0 %v6982
  %7015 = vmatpush1.msra.mxu0 %v6981
  %7016 = vmatprep.subr.mxu0 %v6986
  %7017 = vmatpush1.msra.mxu0 %v6985
  %7018 = vmatprep.subr.mxu0 %v6990
  %7019 = vmatpush1.msra.mxu0 %v6989
  %7020 = vmatprep.subr.mxu0 %v6994
  %7021 = vmatpush1.msra.mxu0 %v6993
  %7022 = vmatprep.subr.mxu0 %v6998
  %7023 = vmatpush1.msra.mxu0 %v6997
  %7024 = vmatprep.subr.mxu0 %v7002
  %7025 = vmatpush1.msra.mxu0 %v7001
  %7026 = vmatprep.subr.mxu0 %v7006
  %7027 = vmatpush1.msra.mxu0 %v7005
  %7028 = vmatprep.subr.mxu0 0.0
  %7029 = vmatpush1.msra.mxu0 0.0
  %7030 = vmatprep.subr.mxu0 0.0
  %7031 = vmatpush1.msra.mxu0 0.0
  %7032 = vmatprep.subr.mxu0 0.0
  %7033 = vmatpush1.msra.mxu0 0.0
  %7034 = vmatprep.subr.mxu0 0.0
  %7035 = vmatpush1.msra.mxu0 0.0
  %7036 = vmatprep.subr.mxu0 0.0
  %7037 = vmatpush1.msra.mxu0 0.0
  %7038 = vmatprep.subr.mxu0 0.0
  %7039 = vmatpush1.msra.mxu0 0.0
  %7040 = vmatprep.subr.mxu0 0.0
  %7041 = vmatpush1.msra.mxu0 0.0
  %7042 = vmatprep.subr.mxu0 0.0
  %7043 = vmatpush1.msra.mxu0 0.0
  %7044 = vmatprep.subr.mxu0 0.0
  %7045 = vmatpush1.msra.mxu0 0.0
  %7046 = vmatprep.subr.mxu0 0.0
  %7047 = vmatpush1.msra.mxu0 0.0
  %7048 = vmatprep.subr.mxu0 0.0
  %7049 = vmatpush1.msra.mxu0 0.0
  %7050 = vmatprep.subr.mxu0 0.0
  %7051 = vmatpush1.msra.mxu0 0.0
  %7052 = vmatprep.subr.mxu0 0.0
  %7053 = vmatpush1.msra.mxu0 0.0
  %7054 = vmatprep.subr.mxu0 0.0
  %7055 = vmatpush1.msra.mxu0 0.0
  %7056 = vmatprep.subr.mxu0 0.0
  %7057 = vmatpush1.msra.mxu0 0.0
  %7058 = vmatprep.subr.mxu0 0.0
  %7059 = vmatpush1.msra.mxu0 0.0
  %7060 = vmatprep.subr.mxu0 0.0
  %7061 = vmatpush1.msra.mxu0 0.0
  %7062 = vmatprep.subr.mxu0 0.0
  %7063 = vmatpush1.msra.mxu0 0.0
  %7064 = vmatprep.subr.mxu0 0.0
  %7065 = vmatpush1.msra.mxu0 0.0
  %7066 = vmatprep.subr.mxu0 0.0
  %7067 = vmatpush1.msra.mxu0 0.0
  %7068 = vmatprep.subr.mxu0 0.0
  %7069 = vmatpush1.msra.mxu0 0.0
  %7070 = vmatprep.subr.mxu0 0.0
  %7071 = vmatpush1.msra.mxu0 0.0
  %7072 = vmatprep.subr.mxu0 0.0
  %7073 = vmatpush1.msra.mxu0 0.0
  %7074 = vmatprep.subr.mxu0 0.0
  %7075 = vmatpush1.msra.mxu0 0.0
  %7076 = vmatprep.mubr.f32.mxu0 0.0
  %7077 = vmatmul.mubr.f32.gmra.mrb[0].mxu0 %v7010
  %v7078 = vpop.f32.mrb[0].mxu0
  %v7079 = vadd.f32 0.0, %v7078
  %v7080 = vpop.f32.mrb[0].mxu0
  %v7081 = vadd.f32 0.0, %v7080
  %7082 = vdwg.mxu0
  %7083 = vmatprep.subr.mxu0 %v6980
  %7084 = vmatpush1.msra.mxu0 %v6979
  %7085 = vmatprep.subr.mxu0 %v6984
  %7086 = vmatpush1.msra.mxu0 %v6983
  %7087 = vmatprep.subr.mxu0 %v6988
  %7088 = vmatpush1.msra.mxu0 %v6987
  %7089 = vmatprep.subr.mxu0 %v6992
  %7090 = vmatpush1.msra.mxu0 %v6991
  %7091 = vmatprep.subr.mxu0 %v6996
  %7092 = vmatpush1.msra.mxu0 %v6995
  %7093 = vmatprep.subr.mxu0 %v7000
  %7094 = vmatpush1.msra.mxu0 %v6999
  %7095 = vmatprep.subr.mxu0 %v7004
  %7096 = vmatpush1.msra.mxu0 %v7003
  %7097 = vmatprep.subr.mxu0 %v7008
  %7098 = vmatpush1.msra.mxu0 %v7007
  %7099 = vmatprep.subr.mxu0 0.0
  %7100 = vmatpush1.msra.mxu0 0.0
  %7101 = vmatprep.subr.mxu0 0.0
  %7102 = vmatpush1.msra.mxu0 0.0
  %7103 = vmatprep.subr.mxu0 0.0
  %7104 = vmatpush1.msra.mxu0 0.0
  %7105 = vmatprep.subr.mxu0 0.0
  %7106 = vmatpush1.msra.mxu0 0.0
  %7107 = vmatprep.subr.mxu0 0.0
  %7108 = vmatpush1.msra.mxu0 0.0
  %7109 = vmatprep.subr.mxu0 0.0
  %7110 = vmatpush1.msra.mxu0 0.0
  %7111 = vmatprep.subr.mxu0 0.0
  %7112 = vmatpush1.msra.mxu0 0.0
  %7113 = vmatprep.subr.mxu0 0.0
  %7114 = vmatpush1.msra.mxu0 0.0
  %7115 = vmatprep.subr.mxu0 0.0
  %7116 = vmatpush1.msra.mxu0 0.0
  %7117 = vmatprep.subr.mxu0 0.0
  %7118 = vmatpush1.msra.mxu0 0.0
  %7119 = vmatprep.subr.mxu0 0.0
  %7120 = vmatpush1.msra.mxu0 0.0
  %7121 = vmatprep.subr.mxu0 0.0
  %7122 = vmatpush1.msra.mxu0 0.0
  %7123 = vmatprep.subr.mxu0 0.0
  %7124 = vmatpush1.msra.mxu0 0.0
  %7125 = vmatprep.subr.mxu0 0.0
  %7126 = vmatpush1.msra.mxu0 0.0
  %7127 = vmatprep.subr.mxu0 0.0
  %7128 = vmatpush1.msra.mxu0 0.0
  %7129 = vmatprep.subr.mxu0 0.0
  %7130 = vmatpush1.msra.mxu0 0.0
  %7131 = vmatprep.subr.mxu0 0.0
  %7132 = vmatpush1.msra.mxu0 0.0
  %7133 = vmatprep.subr.mxu0 0.0
  %7134 = vmatpush1.msra.mxu0 0.0
  %7135 = vmatprep.subr.mxu0 0.0
  %7136 = vmatpush1.msra.mxu0 0.0
  %7137 = vmatprep.subr.mxu0 0.0
  %7138 = vmatpush1.msra.mxu0 0.0
  %7139 = vmatprep.subr.mxu0 0.0
  %7140 = vmatpush1.msra.mxu0 0.0
  %7141 = vmatprep.subr.mxu0 0.0
  %7142 = vmatpush1.msra.mxu0 0.0
  %7143 = vmatprep.subr.mxu0 0.0
  %7144 = vmatpush1.msra.mxu0 0.0
  %7145 = vmatprep.subr.mxu0 0.0
  %7146 = vmatpush1.msra.mxu0 0.0
  %7147 = vmatprep.mubr.f32.mxu0 0.0
  %7148 = vmatmul.mubr.f32.gmra.mrb[0].mxu0 %v7010
  %v7149 = vpop.f32.mrb[0].mxu0
  %v7150 = vadd.f32 0.0, %v7149
  %v7151 = vpop.f32.mrb[0].mxu0
  %v7152 = vadd.f32 0.0, %v7151
  %7153 = vdwg.mxu0
  %v7154 = vadd.f32 %v6972, %v7079
  %v7155 = vadd.f32 %v6973, %v7081
  %v7156 = vadd.f32 %v6974, %v7150
  %v7157 = vadd.f32 %v6975, %v7152
  %s7158 = scalar_lea.vmem %s3, 9216
  %v7159 = vld [vmem:[%s7158] sm:$0xff]
  %v7160 = vld [vmem:[%s7158 + $0x8] sm:$0xff]
  %v7161 = vld [vmem:[%s7158 + $0x10] sm:$0xff]
  %v7162 = vld [vmem:[%s7158 + $0x18] sm:$0xff]
  %v7163 = vld [vmem:[%s7158 + $0x20] sm:$0xff]
  %v7164 = vld [vmem:[%s7158 + $0x28] sm:$0xff]
  %v7165 = vld [vmem:[%s7158 + $0x30] sm:$0xff]
  %v7166 = vld [vmem:[%s7158 + $0x38] sm:$0xff]
  %v7167 = vld [vmem:[%s7158 + $0x40] sm:$0xff]
  %v7168 = vld [vmem:[%s7158 + $0x48] sm:$0xff]
  %v7169 = vld [vmem:[%s7158 + $0x50] sm:$0xff]
  %v7170 = vld [vmem:[%s7158 + $0x58] sm:$0xff]
  %v7171 = vld [vmem:[%s7158 + $0x60] sm:$0xff]
  %v7172 = vld [vmem:[%s7158 + $0x68] sm:$0xff]
  %v7173 = vld [vmem:[%s7158 + $0x70] sm:$0xff]
  %v7174 = vld [vmem:[%s7158 + $0x78] sm:$0xff]
  %v7175 = vld [vmem:[%s7158 + $0x80] sm:$0xff]
  %v7176 = vld [vmem:[%s7158 + $0x88] sm:$0xff]
  %v7177 = vld [vmem:[%s7158 + $0x90] sm:$0xff]
  %v7178 = vld [vmem:[%s7158 + $0x98] sm:$0xff]
  %v7179 = vld [vmem:[%s7158 + $0xa0] sm:$0xff]
  %v7180 = vld [vmem:[%s7158 + $0xa8] sm:$0xff]
  %v7181 = vld [vmem:[%s7158 + $0xb0] sm:$0xff]
  %v7182 = vld [vmem:[%s7158 + $0xb8] sm:$0xff]
  %v7183 = vld [vmem:[%s7158 + $0xc0] sm:$0xff]
  %v7184 = vld [vmem:[%s7158 + $0xc8] sm:$0xff]
  %v7185 = vld [vmem:[%s7158 + $0xd0] sm:$0xff]
  %v7186 = vld [vmem:[%s7158 + $0xd8] sm:$0xff]
  %v7187 = vld [vmem:[%s7158 + $0xe0] sm:$0xff]
  %v7188 = vld [vmem:[%s7158 + $0xe8] sm:$0xff]
  %v7189 = vld [vmem:[%s7158 + $0xf0] sm:$0xff]
  %v7190 = vld [vmem:[%s7158 + $0xf8] sm:$0xff]
  %v7192 = vsel %vm172, %v611, 0
  %7194 = vmatprep.subr.mxu0 %v7160
  %7195 = vmatpush1.msra.mxu0 %v7159
  %7196 = vmatprep.subr.mxu0 %v7164
  %7197 = vmatpush1.msra.mxu0 %v7163
  %7198 = vmatprep.subr.mxu0 %v7168
  %7199 = vmatpush1.msra.mxu0 %v7167
  %7200 = vmatprep.subr.mxu0 %v7172
  %7201 = vmatpush1.msra.mxu0 %v7171
  %7202 = vmatprep.subr.mxu0 %v7176
  %7203 = vmatpush1.msra.mxu0 %v7175
  %7204 = vmatprep.subr.mxu0 %v7180
  %7205 = vmatpush1.msra.mxu0 %v7179
  %7206 = vmatprep.subr.mxu0 %v7184
  %7207 = vmatpush1.msra.mxu0 %v7183
  %7208 = vmatprep.subr.mxu0 %v7188
  %7209 = vmatpush1.msra.mxu0 %v7187
  %7210 = vmatprep.subr.mxu0 0.0
  %7211 = vmatpush1.msra.mxu0 0.0
  %7212 = vmatprep.subr.mxu0 0.0
  %7213 = vmatpush1.msra.mxu0 0.0
  %7214 = vmatprep.subr.mxu0 0.0
  %7215 = vmatpush1.msra.mxu0 0.0
  %7216 = vmatprep.subr.mxu0 0.0
  %7217 = vmatpush1.msra.mxu0 0.0
  %7218 = vmatprep.subr.mxu0 0.0
  %7219 = vmatpush1.msra.mxu0 0.0
  %7220 = vmatprep.subr.mxu0 0.0
  %7221 = vmatpush1.msra.mxu0 0.0
  %7222 = vmatprep.subr.mxu0 0.0
  %7223 = vmatpush1.msra.mxu0 0.0
  %7224 = vmatprep.subr.mxu0 0.0
  %7225 = vmatpush1.msra.mxu0 0.0
  %7226 = vmatprep.subr.mxu0 0.0
  %7227 = vmatpush1.msra.mxu0 0.0
  %7228 = vmatprep.subr.mxu0 0.0
  %7229 = vmatpush1.msra.mxu0 0.0
  %7230 = vmatprep.subr.mxu0 0.0
  %7231 = vmatpush1.msra.mxu0 0.0
  %7232 = vmatprep.subr.mxu0 0.0
  %7233 = vmatpush1.msra.mxu0 0.0
  %7234 = vmatprep.subr.mxu0 0.0
  %7235 = vmatpush1.msra.mxu0 0.0
  %7236 = vmatprep.subr.mxu0 0.0
  %7237 = vmatpush1.msra.mxu0 0.0
  %7238 = vmatprep.subr.mxu0 0.0
  %7239 = vmatpush1.msra.mxu0 0.0
  %7240 = vmatprep.subr.mxu0 0.0
  %7241 = vmatpush1.msra.mxu0 0.0
  %7242 = vmatprep.subr.mxu0 0.0
  %7243 = vmatpush1.msra.mxu0 0.0
  %7244 = vmatprep.subr.mxu0 0.0
  %7245 = vmatpush1.msra.mxu0 0.0
  %7246 = vmatprep.subr.mxu0 0.0
  %7247 = vmatpush1.msra.mxu0 0.0
  %7248 = vmatprep.subr.mxu0 0.0
  %7249 = vmatpush1.msra.mxu0 0.0
  %7250 = vmatprep.subr.mxu0 0.0
  %7251 = vmatpush1.msra.mxu0 0.0
  %7252 = vmatprep.subr.mxu0 0.0
  %7253 = vmatpush1.msra.mxu0 0.0
  %7254 = vmatprep.subr.mxu0 0.0
  %7255 = vmatpush1.msra.mxu0 0.0
  %7256 = vmatprep.subr.mxu0 0.0
  %7257 = vmatpush1.msra.mxu0 0.0
  %7258 = vmatprep.mubr.f32.mxu0 0.0
  %7259 = vmatmul.mubr.f32.gmra.mrb[0].mxu0 %v7192
  %v7260 = vpop.f32.mrb[0].mxu0
  %v7261 = vadd.f32 0.0, %v7260
  %v7262 = vpop.f32.mrb[0].mxu0
  %v7263 = vadd.f32 0.0, %v7262
  %7264 = vdwg.mxu0
  %7265 = vmatprep.subr.mxu0 %v7162
  %7266 = vmatpush1.msra.mxu0 %v7161
  %7267 = vmatprep.subr.mxu0 %v7166
  %7268 = vmatpush1.msra.mxu0 %v7165
  %7269 = vmatprep.subr.mxu0 %v7170
  %7270 = vmatpush1.msra.mxu0 %v7169
  %7271 = vmatprep.subr.mxu0 %v7174
  %7272 = vmatpush1.msra.mxu0 %v7173
  %7273 = vmatprep.subr.mxu0 %v7178
  %7274 = vmatpush1.msra.mxu0 %v7177
  %7275 = vmatprep.subr.mxu0 %v7182
  %7276 = vmatpush1.msra.mxu0 %v7181
  %7277 = vmatprep.subr.mxu0 %v7186
  %7278 = vmatpush1.msra.mxu0 %v7185
  %7279 = vmatprep.subr.mxu0 %v7190
  %7280 = vmatpush1.msra.mxu0 %v7189
  %7281 = vmatprep.subr.mxu0 0.0
  %7282 = vmatpush1.msra.mxu0 0.0
  %7283 = vmatprep.subr.mxu0 0.0
  %7284 = vmatpush1.msra.mxu0 0.0
  %7285 = vmatprep.subr.mxu0 0.0
  %7286 = vmatpush1.msra.mxu0 0.0
  %7287 = vmatprep.subr.mxu0 0.0
  %7288 = vmatpush1.msra.mxu0 0.0
  %7289 = vmatprep.subr.mxu0 0.0
  %7290 = vmatpush1.msra.mxu0 0.0
  %7291 = vmatprep.subr.mxu0 0.0
  %7292 = vmatpush1.msra.mxu0 0.0
  %7293 = vmatprep.subr.mxu0 0.0
  %7294 = vmatpush1.msra.mxu0 0.0
  %7295 = vmatprep.subr.mxu0 0.0
  %7296 = vmatpush1.msra.mxu0 0.0
  %7297 = vmatprep.subr.mxu0 0.0
  %7298 = vmatpush1.msra.mxu0 0.0
  %7299 = vmatprep.subr.mxu0 0.0
  %7300 = vmatpush1.msra.mxu0 0.0
  %7301 = vmatprep.subr.mxu0 0.0
  %7302 = vmatpush1.msra.mxu0 0.0
  %7303 = vmatprep.subr.mxu0 0.0
  %7304 = vmatpush1.msra.mxu0 0.0
  %7305 = vmatprep.subr.mxu0 0.0
  %7306 = vmatpush1.msra.mxu0 0.0
  %7307 = vmatprep.subr.mxu0 0.0
  %7308 = vmatpush1.msra.mxu0 0.0
  %7309 = vmatprep.subr.mxu0 0.0
  %7310 = vmatpush1.msra.mxu0 0.0
  %7311 = vmatprep.subr.mxu0 0.0
  %7312 = vmatpush1.msra.mxu0 0.0
  %7313 = vmatprep.subr.mxu0 0.0
  %7314 = vmatpush1.msra.mxu0 0.0
  %7315 = vmatprep.subr.mxu0 0.0
  %7316 = vmatpush1.msra.mxu0 0.0
  %7317 = vmatprep.subr.mxu0 0.0
  %7318 = vmatpush1.msra.mxu0 0.0
  %7319 = vmatprep.subr.mxu0 0.0
  %7320 = vmatpush1.msra.mxu0 0.0
  %7321 = vmatprep.subr.mxu0 0.0
  %7322 = vmatpush1.msra.mxu0 0.0
  %7323 = vmatprep.subr.mxu0 0.0
  %7324 = vmatpush1.msra.mxu0 0.0
  %7325 = vmatprep.subr.mxu0 0.0
  %7326 = vmatpush1.msra.mxu0 0.0
  %7327 = vmatprep.subr.mxu0 0.0
  %7328 = vmatpush1.msra.mxu0 0.0
  %7329 = vmatprep.mubr.f32.mxu0 0.0
  %7330 = vmatmul.mubr.f32.gmra.mrb[0].mxu0 %v7192
  %v7331 = vpop.f32.mrb[0].mxu0
  %v7332 = vadd.f32 0.0, %v7331
  %v7333 = vpop.f32.mrb[0].mxu0
  %v7334 = vadd.f32 0.0, %v7333
  %7335 = vdwg.mxu0
  %v7336 = vadd.f32 %v7154, %v7261
  %v7337 = vadd.f32 %v7155, %v7263
  %v7338 = vadd.f32 %v7156, %v7332
  %v7339 = vadd.f32 %v7157, %v7334
  %s7340 = scalar_lea.vmem %s3, 9472
  %v7341 = vld [vmem:[%s7340] sm:$0xff]
  %v7342 = vld [vmem:[%s7340 + $0x8] sm:$0xff]
  %v7343 = vld [vmem:[%s7340 + $0x10] sm:$0xff]
  %v7344 = vld [vmem:[%s7340 + $0x18] sm:$0xff]
  %v7345 = vld [vmem:[%s7340 + $0x20] sm:$0xff]
  %v7346 = vld [vmem:[%s7340 + $0x28] sm:$0xff]
  %v7347 = vld [vmem:[%s7340 + $0x30] sm:$0xff]
  %v7348 = vld [vmem:[%s7340 + $0x38] sm:$0xff]
  %v7349 = vld [vmem:[%s7340 + $0x40] sm:$0xff]
  %v7350 = vld [vmem:[%s7340 + $0x48] sm:$0xff]
  %v7351 = vld [vmem:[%s7340 + $0x50] sm:$0xff]
  %v7352 = vld [vmem:[%s7340 + $0x58] sm:$0xff]
  %v7353 = vld [vmem:[%s7340 + $0x60] sm:$0xff]
  %v7354 = vld [vmem:[%s7340 + $0x68] sm:$0xff]
  %v7355 = vld [vmem:[%s7340 + $0x70] sm:$0xff]
  %v7356 = vld [vmem:[%s7340 + $0x78] sm:$0xff]
  %v7357 = vld [vmem:[%s7340 + $0x80] sm:$0xff]
  %v7358 = vld [vmem:[%s7340 + $0x88] sm:$0xff]
  %v7359 = vld [vmem:[%s7340 + $0x90] sm:$0xff]
  %v7360 = vld [vmem:[%s7340 + $0x98] sm:$0xff]
  %v7361 = vld [vmem:[%s7340 + $0xa0] sm:$0xff]
  %v7362 = vld [vmem:[%s7340 + $0xa8] sm:$0xff]
  %v7363 = vld [vmem:[%s7340 + $0xb0] sm:$0xff]
  %v7364 = vld [vmem:[%s7340 + $0xb8] sm:$0xff]
  %v7365 = vld [vmem:[%s7340 + $0xc0] sm:$0xff]
  %v7366 = vld [vmem:[%s7340 + $0xc8] sm:$0xff]
  %v7367 = vld [vmem:[%s7340 + $0xd0] sm:$0xff]
  %v7368 = vld [vmem:[%s7340 + $0xd8] sm:$0xff]
  %v7369 = vld [vmem:[%s7340 + $0xe0] sm:$0xff]
  %v7370 = vld [vmem:[%s7340 + $0xe8] sm:$0xff]
  %v7371 = vld [vmem:[%s7340 + $0xf0] sm:$0xff]
  %v7372 = vld [vmem:[%s7340 + $0xf8] sm:$0xff]
  %v7373 = vrot.slane %v611, 2
  %v7374 = vsel %vm172, %v7373, 0
  %7376 = vmatprep.subr.mxu0 %v7342
  %7377 = vmatpush1.msra.mxu0 %v7341
  %7378 = vmatprep.subr.mxu0 %v7346
  %7379 = vmatpush1.msra.mxu0 %v7345
  %7380 = vmatprep.subr.mxu0 %v7350
  %7381 = vmatpush1.msra.mxu0 %v7349
  %7382 = vmatprep.subr.mxu0 %v7354
  %7383 = vmatpush1.msra.mxu0 %v7353
  %7384 = vmatprep.subr.mxu0 %v7358
  %7385 = vmatpush1.msra.mxu0 %v7357
  %7386 = vmatprep.subr.mxu0 %v7362
  %7387 = vmatpush1.msra.mxu0 %v7361
  %7388 = vmatprep.subr.mxu0 %v7366
  %7389 = vmatpush1.msra.mxu0 %v7365
  %7390 = vmatprep.subr.mxu0 %v7370
  %7391 = vmatpush1.msra.mxu0 %v7369
  %7392 = vmatprep.subr.mxu0 0.0
  %7393 = vmatpush1.msra.mxu0 0.0
  %7394 = vmatprep.subr.mxu0 0.0
  %7395 = vmatpush1.msra.mxu0 0.0
  %7396 = vmatprep.subr.mxu0 0.0
  %7397 = vmatpush1.msra.mxu0 0.0
  %7398 = vmatprep.subr.mxu0 0.0
  %7399 = vmatpush1.msra.mxu0 0.0
  %7400 = vmatprep.subr.mxu0 0.0
  %7401 = vmatpush1.msra.mxu0 0.0
  %7402 = vmatprep.subr.mxu0 0.0
  %7403 = vmatpush1.msra.mxu0 0.0
  %7404 = vmatprep.subr.mxu0 0.0
  %7405 = vmatpush1.msra.mxu0 0.0
  %7406 = vmatprep.subr.mxu0 0.0
  %7407 = vmatpush1.msra.mxu0 0.0
  %7408 = vmatprep.subr.mxu0 0.0
  %7409 = vmatpush1.msra.mxu0 0.0
  %7410 = vmatprep.subr.mxu0 0.0
  %7411 = vmatpush1.msra.mxu0 0.0
  %7412 = vmatprep.subr.mxu0 0.0
  %7413 = vmatpush1.msra.mxu0 0.0
  %7414 = vmatprep.subr.mxu0 0.0
  %7415 = vmatpush1.msra.mxu0 0.0
  %7416 = vmatprep.subr.mxu0 0.0
  %7417 = vmatpush1.msra.mxu0 0.0
  %7418 = vmatprep.subr.mxu0 0.0
  %7419 = vmatpush1.msra.mxu0 0.0
  %7420 = vmatprep.subr.mxu0 0.0
  %7421 = vmatpush1.msra.mxu0 0.0
  %7422 = vmatprep.subr.mxu0 0.0
  %7423 = vmatpush1.msra.mxu0 0.0
  %7424 = vmatprep.subr.mxu0 0.0
  %7425 = vmatpush1.msra.mxu0 0.0
  %7426 = vmatprep.subr.mxu0 0.0
  %7427 = vmatpush1.msra.mxu0 0.0
  %7428 = vmatprep.subr.mxu0 0.0
  %7429 = vmatpush1.msra.mxu0 0.0
  %7430 = vmatprep.subr.mxu0 0.0
  %7431 = vmatpush1.msra.mxu0 0.0
  %7432 = vmatprep.subr.mxu0 0.0
  %7433 = vmatpush1.msra.mxu0 0.0
  %7434 = vmatprep.subr.mxu0 0.0
  %7435 = vmatpush1.msra.mxu0 0.0
  %7436 = vmatprep.subr.mxu0 0.0
  %7437 = vmatpush1.msra.mxu0 0.0
  %7438 = vmatprep.subr.mxu0 0.0
  %7439 = vmatpush1.msra.mxu0 0.0
  %7440 = vmatprep.mubr.f32.mxu0 0.0
  %7441 = vmatmul.mubr.f32.gmra.mrb[0].mxu0 %v7374
  %v7442 = vpop.f32.mrb[0].mxu0
  %v7443 = vadd.f32 0.0, %v7442
  %v7444 = vpop.f32.mrb[0].mxu0
  %v7445 = vadd.f32 0.0, %v7444
  %7446 = vdwg.mxu0
  %7447 = vmatprep.subr.mxu0 %v7344
  %7448 = vmatpush1.msra.mxu0 %v7343
  %7449 = vmatprep.subr.mxu0 %v7348
  %7450 = vmatpush1.msra.mxu0 %v7347
  %7451 = vmatprep.subr.mxu0 %v7352
  %7452 = vmatpush1.msra.mxu0 %v7351
  %7453 = vmatprep.subr.mxu0 %v7356
  %7454 = vmatpush1.msra.mxu0 %v7355
  %7455 = vmatprep.subr.mxu0 %v7360
  %7456 = vmatpush1.msra.mxu0 %v7359
  %7457 = vmatprep.subr.mxu0 %v7364
  %7458 = vmatpush1.msra.mxu0 %v7363
  %7459 = vmatprep.subr.mxu0 %v7368
  %7460 = vmatpush1.msra.mxu0 %v7367
  %7461 = vmatprep.subr.mxu0 %v7372
  %7462 = vmatpush1.msra.mxu0 %v7371
  %7463 = vmatprep.subr.mxu0 0.0
  %7464 = vmatpush1.msra.mxu0 0.0
  %7465 = vmatprep.subr.mxu0 0.0
  %7466 = vmatpush1.msra.mxu0 0.0
  %7467 = vmatprep.subr.mxu0 0.0
  %7468 = vmatpush1.msra.mxu0 0.0
  %7469 = vmatprep.subr.mxu0 0.0
  %7470 = vmatpush1.msra.mxu0 0.0
  %7471 = vmatprep.subr.mxu0 0.0
  %7472 = vmatpush1.msra.mxu0 0.0
  %7473 = vmatprep.subr.mxu0 0.0
  %7474 = vmatpush1.msra.mxu0 0.0
  %7475 = vmatprep.subr.mxu0 0.0
  %7476 = vmatpush1.msra.mxu0 0.0
  %7477 = vmatprep.subr.mxu0 0.0
  %7478 = vmatpush1.msra.mxu0 0.0
  %7479 = vmatprep.subr.mxu0 0.0
  %7480 = vmatpush1.msra.mxu0 0.0
  %7481 = vmatprep.subr.mxu0 0.0
  %7482 = vmatpush1.msra.mxu0 0.0
  %7483 = vmatprep.subr.mxu0 0.0
  %7484 = vmatpush1.msra.mxu0 0.0
  %7485 = vmatprep.subr.mxu0 0.0
  %7486 = vmatpush1.msra.mxu0 0.0
  %7487 = vmatprep.subr.mxu0 0.0
  %7488 = vmatpush1.msra.mxu0 0.0
  %7489 = vmatprep.subr.mxu0 0.0
  %7490 = vmatpush1.msra.mxu0 0.0
  %7491 = vmatprep.subr.mxu0 0.0
  %7492 = vmatpush1.msra.mxu0 0.0
  %7493 = vmatprep.subr.mxu0 0.0
  %7494 = vmatpush1.msra.mxu0 0.0
  %7495 = vmatprep.subr.mxu0 0.0
  %7496 = vmatpush1.msra.mxu0 0.0
  %7497 = vmatprep.subr.mxu0 0.0
  %7498 = vmatpush1.msra.mxu0 0.0
  %7499 = vmatprep.subr.mxu0 0.0
  %7500 = vmatpush1.msra.mxu0 0.0
  %7501 = vmatprep.subr.mxu0 0.0
  %7502 = vmatpush1.msra.mxu0 0.0
  %7503 = vmatprep.subr.mxu0 0.0
  %7504 = vmatpush1.msra.mxu0 0.0
  %7505 = vmatprep.subr.mxu0 0.0
  %7506 = vmatpush1.msra.mxu0 0.0
  %7507 = vmatprep.subr.mxu0 0.0
  %7508 = vmatpush1.msra.mxu0 0.0
  %7509 = vmatprep.subr.mxu0 0.0
  %7510 = vmatpush1.msra.mxu0 0.0
  %7511 = vmatprep.mubr.f32.mxu0 0.0
  %7512 = vmatmul.mubr.f32.gmra.mrb[0].mxu0 %v7374
  %v7513 = vpop.f32.mrb[0].mxu0
  %v7514 = vadd.f32 0.0, %v7513
  %v7515 = vpop.f32.mrb[0].mxu0
  %v7516 = vadd.f32 0.0, %v7515
  %7517 = vdwg.mxu0
  %v7518 = vadd.f32 %v7336, %v7443
  %v7519 = vadd.f32 %v7337, %v7445
  %v7520 = vadd.f32 %v7338, %v7514
  %v7521 = vadd.f32 %v7339, %v7516
  %s7522 = scalar_lea.vmem %s3, 9728
  %v7523 = vld [vmem:[%s7522] sm:$0xff]
  %v7524 = vld [vmem:[%s7522 + $0x8] sm:$0xff]
  %v7525 = vld [vmem:[%s7522 + $0x10] sm:$0xff]
  %v7526 = vld [vmem:[%s7522 + $0x18] sm:$0xff]
  %v7527 = vld [vmem:[%s7522 + $0x20] sm:$0xff]
  %v7528 = vld [vmem:[%s7522 + $0x28] sm:$0xff]
  %v7529 = vld [vmem:[%s7522 + $0x30] sm:$0xff]
  %v7530 = vld [vmem:[%s7522 + $0x38] sm:$0xff]
  %v7531 = vld [vmem:[%s7522 + $0x40] sm:$0xff]
  %v7532 = vld [vmem:[%s7522 + $0x48] sm:$0xff]
  %v7533 = vld [vmem:[%s7522 + $0x50] sm:$0xff]
  %v7534 = vld [vmem:[%s7522 + $0x58] sm:$0xff]
  %v7535 = vld [vmem:[%s7522 + $0x60] sm:$0xff]
  %v7536 = vld [vmem:[%s7522 + $0x68] sm:$0xff]
  %v7537 = vld [vmem:[%s7522 + $0x70] sm:$0xff]
  %v7538 = vld [vmem:[%s7522 + $0x78] sm:$0xff]
  %v7539 = vld [vmem:[%s7522 + $0x80] sm:$0xff]
  %v7540 = vld [vmem:[%s7522 + $0x88] sm:$0xff]
  %v7541 = vld [vmem:[%s7522 + $0x90] sm:$0xff]
  %v7542 = vld [vmem:[%s7522 + $0x98] sm:$0xff]
  %v7543 = vld [vmem:[%s7522 + $0xa0] sm:$0xff]
  %v7544 = vld [vmem:[%s7522 + $0xa8] sm:$0xff]
  %v7545 = vld [vmem:[%s7522 + $0xb0] sm:$0xff]
  %v7546 = vld [vmem:[%s7522 + $0xb8] sm:$0xff]
  %v7547 = vld [vmem:[%s7522 + $0xc0] sm:$0xff]
  %v7548 = vld [vmem:[%s7522 + $0xc8] sm:$0xff]
  %v7549 = vld [vmem:[%s7522 + $0xd0] sm:$0xff]
  %v7550 = vld [vmem:[%s7522 + $0xd8] sm:$0xff]
  %v7551 = vld [vmem:[%s7522 + $0xe0] sm:$0xff]
  %v7552 = vld [vmem:[%s7522 + $0xe8] sm:$0xff]
  %v7553 = vld [vmem:[%s7522 + $0xf0] sm:$0xff]
  %v7554 = vld [vmem:[%s7522 + $0xf8] sm:$0xff]
  %v7555 = vrot.slane %v611, 4
  %v7556 = vsel %vm172, %v7555, 0
  %7558 = vmatprep.subr.mxu0 %v7524
  %7559 = vmatpush1.msra.mxu0 %v7523
  %7560 = vmatprep.subr.mxu0 %v7528
  %7561 = vmatpush1.msra.mxu0 %v7527
  %7562 = vmatprep.subr.mxu0 %v7532
  %7563 = vmatpush1.msra.mxu0 %v7531
  %7564 = vmatprep.subr.mxu0 %v7536
  %7565 = vmatpush1.msra.mxu0 %v7535
  %7566 = vmatprep.subr.mxu0 %v7540
  %7567 = vmatpush1.msra.mxu0 %v7539
  %7568 = vmatprep.subr.mxu0 %v7544
  %7569 = vmatpush1.msra.mxu0 %v7543
  %7570 = vmatprep.subr.mxu0 %v7548
  %7571 = vmatpush1.msra.mxu0 %v7547
  %7572 = vmatprep.subr.mxu0 %v7552
  %7573 = vmatpush1.msra.mxu0 %v7551
  %7574 = vmatprep.subr.mxu0 0.0
  %7575 = vmatpush1.msra.mxu0 0.0
  %7576 = vmatprep.subr.mxu0 0.0
  %7577 = vmatpush1.msra.mxu0 0.0
  %7578 = vmatprep.subr.mxu0 0.0
  %7579 = vmatpush1.msra.mxu0 0.0
  %7580 = vmatprep.subr.mxu0 0.0
  %7581 = vmatpush1.msra.mxu0 0.0
  %7582 = vmatprep.subr.mxu0 0.0
  %7583 = vmatpush1.msra.mxu0 0.0
  %7584 = vmatprep.subr.mxu0 0.0
  %7585 = vmatpush1.msra.mxu0 0.0
  %7586 = vmatprep.subr.mxu0 0.0
  %7587 = vmatpush1.msra.mxu0 0.0
  %7588 = vmatprep.subr.mxu0 0.0
  %7589 = vmatpush1.msra.mxu0 0.0
  %7590 = vmatprep.subr.mxu0 0.0
  %7591 = vmatpush1.msra.mxu0 0.0
  %7592 = vmatprep.subr.mxu0 0.0
  %7593 = vmatpush1.msra.mxu0 0.0
  %7594 = vmatprep.subr.mxu0 0.0
  %7595 = vmatpush1.msra.mxu0 0.0
  %7596 = vmatprep.subr.mxu0 0.0
  %7597 = vmatpush1.msra.mxu0 0.0
  %7598 = vmatprep.subr.mxu0 0.0
  %7599 = vmatpush1.msra.mxu0 0.0
  %7600 = vmatprep.subr.mxu0 0.0
  %7601 = vmatpush1.msra.mxu0 0.0
  %7602 = vmatprep.subr.mxu0 0.0
  %7603 = vmatpush1.msra.mxu0 0.0
  %7604 = vmatprep.subr.mxu0 0.0
  %7605 = vmatpush1.msra.mxu0 0.0
  %7606 = vmatprep.subr.mxu0 0.0
  %7607 = vmatpush1.msra.mxu0 0.0
  %7608 = vmatprep.subr.mxu0 0.0
  %7609 = vmatpush1.msra.mxu0 0.0
  %7610 = vmatprep.subr.mxu0 0.0
  %7611 = vmatpush1.msra.mxu0 0.0
  %7612 = vmatprep.subr.mxu0 0.0
  %7613 = vmatpush1.msra.mxu0 0.0
  %7614 = vmatprep.subr.mxu0 0.0
  %7615 = vmatpush1.msra.mxu0 0.0
  %7616 = vmatprep.subr.mxu0 0.0
  %7617 = vmatpush1.msra.mxu0 0.0
  %7618 = vmatprep.subr.mxu0 0.0
  %7619 = vmatpush1.msra.mxu0 0.0
  %7620 = vmatprep.subr.mxu0 0.0
  %7621 = vmatpush1.msra.mxu0 0.0
  %7622 = vmatprep.mubr.f32.mxu0 0.0
  %7623 = vmatmul.mubr.f32.gmra.mrb[0].mxu0 %v7556
  %v7624 = vpop.f32.mrb[0].mxu0
  %v7625 = vadd.f32 0.0, %v7624
  %v7626 = vpop.f32.mrb[0].mxu0
  %v7627 = vadd.f32 0.0, %v7626
  %7628 = vdwg.mxu0
  %7629 = vmatprep.subr.mxu0 %v7526
  %7630 = vmatpush1.msra.mxu0 %v7525
  %7631 = vmatprep.subr.mxu0 %v7530
  %7632 = vmatpush1.msra.mxu0 %v7529
  %7633 = vmatprep.subr.mxu0 %v7534
  %7634 = vmatpush1.msra.mxu0 %v7533
  %7635 = vmatprep.subr.mxu0 %v7538
  %7636 = vmatpush1.msra.mxu0 %v7537
  %7637 = vmatprep.subr.mxu0 %v7542
  %7638 = vmatpush1.msra.mxu0 %v7541
  %7639 = vmatprep.subr.mxu0 %v7546
  %7640 = vmatpush1.msra.mxu0 %v7545
  %7641 = vmatprep.subr.mxu0 %v7550
  %7642 = vmatpush1.msra.mxu0 %v7549
  %7643 = vmatprep.subr.mxu0 %v7554
  %7644 = vmatpush1.msra.mxu0 %v7553
  %7645 = vmatprep.subr.mxu0 0.0
  %7646 = vmatpush1.msra.mxu0 0.0
  %7647 = vmatprep.subr.mxu0 0.0
  %7648 = vmatpush1.msra.mxu0 0.0
  %7649 = vmatprep.subr.mxu0 0.0
  %7650 = vmatpush1.msra.mxu0 0.0
  %7651 = vmatprep.subr.mxu0 0.0
  %7652 = vmatpush1.msra.mxu0 0.0
  %7653 = vmatprep.subr.mxu0 0.0
  %7654 = vmatpush1.msra.mxu0 0.0
  %7655 = vmatprep.subr.mxu0 0.0
  %7656 = vmatpush1.msra.mxu0 0.0
  %7657 = vmatprep.subr.mxu0 0.0
  %7658 = vmatpush1.msra.mxu0 0.0
  %7659 = vmatprep.subr.mxu0 0.0
  %7660 = vmatpush1.msra.mxu0 0.0
  %7661 = vmatprep.subr.mxu0 0.0
  %7662 = vmatpush1.msra.mxu0 0.0
  %7663 = vmatprep.subr.mxu0 0.0
  %7664 = vmatpush1.msra.mxu0 0.0
  %7665 = vmatprep.subr.mxu0 0.0
  %7666 = vmatpush1.msra.mxu0 0.0
  %7667 = vmatprep.subr.mxu0 0.0
  %7668 = vmatpush1.msra.mxu0 0.0
  %7669 = vmatprep.subr.mxu0 0.0
  %7670 = vmatpush1.msra.mxu0 0.0
  %7671 = vmatprep.subr.mxu0 0.0
  %7672 = vmatpush1.msra.mxu0 0.0
  %7673 = vmatprep.subr.mxu0 0.0
  %7674 = vmatpush1.msra.mxu0 0.0
  %7675 = vmatprep.subr.mxu0 0.0
  %7676 = vmatpush1.msra.mxu0 0.0
  %7677 = vmatprep.subr.mxu0 0.0
  %7678 = vmatpush1.msra.mxu0 0.0
  %7679 = vmatprep.subr.mxu0 0.0
  %7680 = vmatpush1.msra.mxu0 0.0
  %7681 = vmatprep.subr.mxu0 0.0
  %7682 = vmatpush1.msra.mxu0 0.0
  %7683 = vmatprep.subr.mxu0 0.0
  %7684 = vmatpush1.msra.mxu0 0.0
  %7685 = vmatprep.subr.mxu0 0.0
  %7686 = vmatpush1.msra.mxu0 0.0
  %7687 = vmatprep.subr.mxu0 0.0
  %7688 = vmatpush1.msra.mxu0 0.0
  %7689 = vmatprep.subr.mxu0 0.0
  %7690 = vmatpush1.msra.mxu0 0.0
  %7691 = vmatprep.subr.mxu0 0.0
  %7692 = vmatpush1.msra.mxu0 0.0
  %7693 = vmatprep.mubr.f32.mxu0 0.0
  %7694 = vmatmul.mubr.f32.gmra.mrb[0].mxu0 %v7556
  %v7695 = vpop.f32.mrb[0].mxu0
  %v7696 = vadd.f32 0.0, %v7695
  %v7697 = vpop.f32.mrb[0].mxu0
  %v7698 = vadd.f32 0.0, %v7697
  %7699 = vdwg.mxu0
  %v7700 = vadd.f32 %v7518, %v7625
  %v7701 = vadd.f32 %v7519, %v7627
  %v7702 = vadd.f32 %v7520, %v7696
  %v7703 = vadd.f32 %v7521, %v7698
  %s7704 = scalar_lea.vmem %s3, 9984
  %v7705 = vld [vmem:[%s7704] sm:$0xff]
  %v7706 = vld [vmem:[%s7704 + $0x8] sm:$0xff]
  %v7707 = vld [vmem:[%s7704 + $0x10] sm:$0xff]
  %v7708 = vld [vmem:[%s7704 + $0x18] sm:$0xff]
  %v7709 = vld [vmem:[%s7704 + $0x20] sm:$0xff]
  %v7710 = vld [vmem:[%s7704 + $0x28] sm:$0xff]
  %v7711 = vld [vmem:[%s7704 + $0x30] sm:$0xff]
  %v7712 = vld [vmem:[%s7704 + $0x38] sm:$0xff]
  %v7713 = vld [vmem:[%s7704 + $0x40] sm:$0xff]
  %v7714 = vld [vmem:[%s7704 + $0x48] sm:$0xff]
  %v7715 = vld [vmem:[%s7704 + $0x50] sm:$0xff]
  %v7716 = vld [vmem:[%s7704 + $0x58] sm:$0xff]
  %v7717 = vld [vmem:[%s7704 + $0x60] sm:$0xff]
  %v7718 = vld [vmem:[%s7704 + $0x68] sm:$0xff]
  %v7719 = vld [vmem:[%s7704 + $0x70] sm:$0xff]
  %v7720 = vld [vmem:[%s7704 + $0x78] sm:$0xff]
  %v7721 = vld [vmem:[%s7704 + $0x80] sm:$0xff]
  %v7722 = vld [vmem:[%s7704 + $0x88] sm:$0xff]
  %v7723 = vld [vmem:[%s7704 + $0x90] sm:$0xff]
  %v7724 = vld [vmem:[%s7704 + $0x98] sm:$0xff]
  %v7725 = vld [vmem:[%s7704 + $0xa0] sm:$0xff]
  %v7726 = vld [vmem:[%s7704 + $0xa8] sm:$0xff]
  %v7727 = vld [vmem:[%s7704 + $0xb0] sm:$0xff]
  %v7728 = vld [vmem:[%s7704 + $0xb8] sm:$0xff]
  %v7729 = vld [vmem:[%s7704 + $0xc0] sm:$0xff]
  %v7730 = vld [vmem:[%s7704 + $0xc8] sm:$0xff]
  %v7731 = vld [vmem:[%s7704 + $0xd0] sm:$0xff]
  %v7732 = vld [vmem:[%s7704 + $0xd8] sm:$0xff]
  %v7733 = vld [vmem:[%s7704 + $0xe0] sm:$0xff]
  %v7734 = vld [vmem:[%s7704 + $0xe8] sm:$0xff]
  %v7735 = vld [vmem:[%s7704 + $0xf0] sm:$0xff]
  %v7736 = vld [vmem:[%s7704 + $0xf8] sm:$0xff]
  %v7737 = vrot.slane %v611, 6
  %v7738 = vsel %vm172, %v7737, 0
  %7740 = vmatprep.subr.mxu0 %v7706
  %7741 = vmatpush1.msra.mxu0 %v7705
  %7742 = vmatprep.subr.mxu0 %v7710
  %7743 = vmatpush1.msra.mxu0 %v7709
  %7744 = vmatprep.subr.mxu0 %v7714
  %7745 = vmatpush1.msra.mxu0 %v7713
  %7746 = vmatprep.subr.mxu0 %v7718
  %7747 = vmatpush1.msra.mxu0 %v7717
  %7748 = vmatprep.subr.mxu0 %v7722
  %7749 = vmatpush1.msra.mxu0 %v7721
  %7750 = vmatprep.subr.mxu0 %v7726
  %7751 = vmatpush1.msra.mxu0 %v7725
  %7752 = vmatprep.subr.mxu0 %v7730
  %7753 = vmatpush1.msra.mxu0 %v7729
  %7754 = vmatprep.subr.mxu0 %v7734
  %7755 = vmatpush1.msra.mxu0 %v7733
  %7756 = vmatprep.subr.mxu0 0.0
  %7757 = vmatpush1.msra.mxu0 0.0
  %7758 = vmatprep.subr.mxu0 0.0
  %7759 = vmatpush1.msra.mxu0 0.0
  %7760 = vmatprep.subr.mxu0 0.0
  %7761 = vmatpush1.msra.mxu0 0.0
  %7762 = vmatprep.subr.mxu0 0.0
  %7763 = vmatpush1.msra.mxu0 0.0
  %7764 = vmatprep.subr.mxu0 0.0
  %7765 = vmatpush1.msra.mxu0 0.0
  %7766 = vmatprep.subr.mxu0 0.0
  %7767 = vmatpush1.msra.mxu0 0.0
  %7768 = vmatprep.subr.mxu0 0.0
  %7769 = vmatpush1.msra.mxu0 0.0
  %7770 = vmatprep.subr.mxu0 0.0
  %7771 = vmatpush1.msra.mxu0 0.0
  %7772 = vmatprep.subr.mxu0 0.0
  %7773 = vmatpush1.msra.mxu0 0.0
  %7774 = vmatprep.subr.mxu0 0.0
  %7775 = vmatpush1.msra.mxu0 0.0
  %7776 = vmatprep.subr.mxu0 0.0
  %7777 = vmatpush1.msra.mxu0 0.0
  %7778 = vmatprep.subr.mxu0 0.0
  %7779 = vmatpush1.msra.mxu0 0.0
  %7780 = vmatprep.subr.mxu0 0.0
  %7781 = vmatpush1.msra.mxu0 0.0
  %7782 = vmatprep.subr.mxu0 0.0
  %7783 = vmatpush1.msra.mxu0 0.0
  %7784 = vmatprep.subr.mxu0 0.0
  %7785 = vmatpush1.msra.mxu0 0.0
  %7786 = vmatprep.subr.mxu0 0.0
  %7787 = vmatpush1.msra.mxu0 0.0
  %7788 = vmatprep.subr.mxu0 0.0
  %7789 = vmatpush1.msra.mxu0 0.0
  %7790 = vmatprep.subr.mxu0 0.0
  %7791 = vmatpush1.msra.mxu0 0.0
  %7792 = vmatprep.subr.mxu0 0.0
  %7793 = vmatpush1.msra.mxu0 0.0
  %7794 = vmatprep.subr.mxu0 0.0
  %7795 = vmatpush1.msra.mxu0 0.0
  %7796 = vmatprep.subr.mxu0 0.0
  %7797 = vmatpush1.msra.mxu0 0.0
  %7798 = vmatprep.subr.mxu0 0.0
  %7799 = vmatpush1.msra.mxu0 0.0
  %7800 = vmatprep.subr.mxu0 0.0
  %7801 = vmatpush1.msra.mxu0 0.0
  %7802 = vmatprep.subr.mxu0 0.0
  %7803 = vmatpush1.msra.mxu0 0.0
  %7804 = vmatprep.mubr.f32.mxu0 0.0
  %7805 = vmatmul.mubr.f32.gmra.mrb[0].mxu0 %v7738
  %v7806 = vpop.f32.mrb[0].mxu0
  %v7807 = vadd.f32 0.0, %v7806
  %v7808 = vpop.f32.mrb[0].mxu0
  %v7809 = vadd.f32 0.0, %v7808
  %7810 = vdwg.mxu0
  %7811 = vmatprep.subr.mxu0 %v7708
  %7812 = vmatpush1.msra.mxu0 %v7707
  %7813 = vmatprep.subr.mxu0 %v7712
  %7814 = vmatpush1.msra.mxu0 %v7711
  %7815 = vmatprep.subr.mxu0 %v7716
  %7816 = vmatpush1.msra.mxu0 %v7715
  %7817 = vmatprep.subr.mxu0 %v7720
  %7818 = vmatpush1.msra.mxu0 %v7719
  %7819 = vmatprep.subr.mxu0 %v7724
  %7820 = vmatpush1.msra.mxu0 %v7723
  %7821 = vmatprep.subr.mxu0 %v7728
  %7822 = vmatpush1.msra.mxu0 %v7727
  %7823 = vmatprep.subr.mxu0 %v7732
  %7824 = vmatpush1.msra.mxu0 %v7731
  %7825 = vmatprep.subr.mxu0 %v7736
  %7826 = vmatpush1.msra.mxu0 %v7735
  %7827 = vmatprep.subr.mxu0 0.0
  %7828 = vmatpush1.msra.mxu0 0.0
  %7829 = vmatprep.subr.mxu0 0.0
  %7830 = vmatpush1.msra.mxu0 0.0
  %7831 = vmatprep.subr.mxu0 0.0
  %7832 = vmatpush1.msra.mxu0 0.0
  %7833 = vmatprep.subr.mxu0 0.0
  %7834 = vmatpush1.msra.mxu0 0.0
  %7835 = vmatprep.subr.mxu0 0.0
  %7836 = vmatpush1.msra.mxu0 0.0
  %7837 = vmatprep.subr.mxu0 0.0
  %7838 = vmatpush1.msra.mxu0 0.0
  %7839 = vmatprep.subr.mxu0 0.0
  %7840 = vmatpush1.msra.mxu0 0.0
  %7841 = vmatprep.subr.mxu0 0.0
  %7842 = vmatpush1.msra.mxu0 0.0
  %7843 = vmatprep.subr.mxu0 0.0
  %7844 = vmatpush1.msra.mxu0 0.0
  %7845 = vmatprep.subr.mxu0 0.0
  %7846 = vmatpush1.msra.mxu0 0.0
  %7847 = vmatprep.subr.mxu0 0.0
  %7848 = vmatpush1.msra.mxu0 0.0
  %7849 = vmatprep.subr.mxu0 0.0
  %7850 = vmatpush1.msra.mxu0 0.0
  %7851 = vmatprep.subr.mxu0 0.0
  %7852 = vmatpush1.msra.mxu0 0.0
  %7853 = vmatprep.subr.mxu0 0.0
  %7854 = vmatpush1.msra.mxu0 0.0
  %7855 = vmatprep.subr.mxu0 0.0
  %7856 = vmatpush1.msra.mxu0 0.0
  %7857 = vmatprep.subr.mxu0 0.0
  %7858 = vmatpush1.msra.mxu0 0.0
  %7859 = vmatprep.subr.mxu0 0.0
  %7860 = vmatpush1.msra.mxu0 0.0
  %7861 = vmatprep.subr.mxu0 0.0
  %7862 = vmatpush1.msra.mxu0 0.0
  %7863 = vmatprep.subr.mxu0 0.0
  %7864 = vmatpush1.msra.mxu0 0.0
  %7865 = vmatprep.subr.mxu0 0.0
  %7866 = vmatpush1.msra.mxu0 0.0
  %7867 = vmatprep.subr.mxu0 0.0
  %7868 = vmatpush1.msra.mxu0 0.0
  %7869 = vmatprep.subr.mxu0 0.0
  %7870 = vmatpush1.msra.mxu0 0.0
  %7871 = vmatprep.subr.mxu0 0.0
  %7872 = vmatpush1.msra.mxu0 0.0
  %7873 = vmatprep.subr.mxu0 0.0
  %7874 = vmatpush1.msra.mxu0 0.0
  %7875 = vmatprep.mubr.f32.mxu0 0.0
  %7876 = vmatmul.mubr.f32.gmra.mrb[0].mxu0 %v7738
  %v7877 = vpop.f32.mrb[0].mxu0
  %v7878 = vadd.f32 0.0, %v7877
  %v7879 = vpop.f32.mrb[0].mxu0
  %v7880 = vadd.f32 0.0, %v7879
  %7881 = vdwg.mxu0
  %v7882 = vadd.f32 %v7700, %v7807
  %v7883 = vadd.f32 %v7701, %v7809
  %v7884 = vadd.f32 %v7702, %v7878
  %v7885 = vadd.f32 %v7703, %v7880
  %s7886 = scalar_lea.vmem %s3, 10240
  %v7887 = vld [vmem:[%s7886] sm:$0xff]
  %v7888 = vld [vmem:[%s7886 + $0x8] sm:$0xff]
  %v7889 = vld [vmem:[%s7886 + $0x10] sm:$0xff]
  %v7890 = vld [vmem:[%s7886 + $0x18] sm:$0xff]
  %v7891 = vld [vmem:[%s7886 + $0x20] sm:$0xff]
  %v7892 = vld [vmem:[%s7886 + $0x28] sm:$0xff]
  %v7893 = vld [vmem:[%s7886 + $0x30] sm:$0xff]
  %v7894 = vld [vmem:[%s7886 + $0x38] sm:$0xff]
  %v7895 = vld [vmem:[%s7886 + $0x40] sm:$0xff]
  %v7896 = vld [vmem:[%s7886 + $0x48] sm:$0xff]
  %v7897 = vld [vmem:[%s7886 + $0x50] sm:$0xff]
  %v7898 = vld [vmem:[%s7886 + $0x58] sm:$0xff]
  %v7899 = vld [vmem:[%s7886 + $0x60] sm:$0xff]
  %v7900 = vld [vmem:[%s7886 + $0x68] sm:$0xff]
  %v7901 = vld [vmem:[%s7886 + $0x70] sm:$0xff]
  %v7902 = vld [vmem:[%s7886 + $0x78] sm:$0xff]
  %v7903 = vld [vmem:[%s7886 + $0x80] sm:$0xff]
  %v7904 = vld [vmem:[%s7886 + $0x88] sm:$0xff]
  %v7905 = vld [vmem:[%s7886 + $0x90] sm:$0xff]
  %v7906 = vld [vmem:[%s7886 + $0x98] sm:$0xff]
  %v7907 = vld [vmem:[%s7886 + $0xa0] sm:$0xff]
  %v7908 = vld [vmem:[%s7886 + $0xa8] sm:$0xff]
  %v7909 = vld [vmem:[%s7886 + $0xb0] sm:$0xff]
  %v7910 = vld [vmem:[%s7886 + $0xb8] sm:$0xff]
  %v7911 = vld [vmem:[%s7886 + $0xc0] sm:$0xff]
  %v7912 = vld [vmem:[%s7886 + $0xc8] sm:$0xff]
  %v7913 = vld [vmem:[%s7886 + $0xd0] sm:$0xff]
  %v7914 = vld [vmem:[%s7886 + $0xd8] sm:$0xff]
  %v7915 = vld [vmem:[%s7886 + $0xe0] sm:$0xff]
  %v7916 = vld [vmem:[%s7886 + $0xe8] sm:$0xff]
  %v7917 = vld [vmem:[%s7886 + $0xf0] sm:$0xff]
  %v7918 = vld [vmem:[%s7886 + $0xf8] sm:$0xff]
  %v7920 = vsel %vm172, %v612, 0
  %7922 = vmatprep.subr.mxu0 %v7888
  %7923 = vmatpush1.msra.mxu0 %v7887
  %7924 = vmatprep.subr.mxu0 %v7892
  %7925 = vmatpush1.msra.mxu0 %v7891
  %7926 = vmatprep.subr.mxu0 %v7896
  %7927 = vmatpush1.msra.mxu0 %v7895
  %7928 = vmatprep.subr.mxu0 %v7900
  %7929 = vmatpush1.msra.mxu0 %v7899
  %7930 = vmatprep.subr.mxu0 %v7904
  %7931 = vmatpush1.msra.mxu0 %v7903
  %7932 = vmatprep.subr.mxu0 %v7908
  %7933 = vmatpush1.msra.mxu0 %v7907
  %7934 = vmatprep.subr.mxu0 %v7912
  %7935 = vmatpush1.msra.mxu0 %v7911
  %7936 = vmatprep.subr.mxu0 %v7916
  %7937 = vmatpush1.msra.mxu0 %v7915
  %7938 = vmatprep.subr.mxu0 0.0
  %7939 = vmatpush1.msra.mxu0 0.0
  %7940 = vmatprep.subr.mxu0 0.0
  %7941 = vmatpush1.msra.mxu0 0.0
  %7942 = vmatprep.subr.mxu0 0.0
  %7943 = vmatpush1.msra.mxu0 0.0
  %7944 = vmatprep.subr.mxu0 0.0
  %7945 = vmatpush1.msra.mxu0 0.0
  %7946 = vmatprep.subr.mxu0 0.0
  %7947 = vmatpush1.msra.mxu0 0.0
  %7948 = vmatprep.subr.mxu0 0.0
  %7949 = vmatpush1.msra.mxu0 0.0
  %7950 = vmatprep.subr.mxu0 0.0
  %7951 = vmatpush1.msra.mxu0 0.0
  %7952 = vmatprep.subr.mxu0 0.0
  %7953 = vmatpush1.msra.mxu0 0.0
  %7954 = vmatprep.subr.mxu0 0.0
  %7955 = vmatpush1.msra.mxu0 0.0
  %7956 = vmatprep.subr.mxu0 0.0
  %7957 = vmatpush1.msra.mxu0 0.0
  %7958 = vmatprep.subr.mxu0 0.0
  %7959 = vmatpush1.msra.mxu0 0.0
  %7960 = vmatprep.subr.mxu0 0.0
  %7961 = vmatpush1.msra.mxu0 0.0
  %7962 = vmatprep.subr.mxu0 0.0
  %7963 = vmatpush1.msra.mxu0 0.0
  %7964 = vmatprep.subr.mxu0 0.0
  %7965 = vmatpush1.msra.mxu0 0.0
  %7966 = vmatprep.subr.mxu0 0.0
  %7967 = vmatpush1.msra.mxu0 0.0
  %7968 = vmatprep.subr.mxu0 0.0
  %7969 = vmatpush1.msra.mxu0 0.0
  %7970 = vmatprep.subr.mxu0 0.0
  %7971 = vmatpush1.msra.mxu0 0.0
  %7972 = vmatprep.subr.mxu0 0.0
  %7973 = vmatpush1.msra.mxu0 0.0
  %7974 = vmatprep.subr.mxu0 0.0
  %7975 = vmatpush1.msra.mxu0 0.0
  %7976 = vmatprep.subr.mxu0 0.0
  %7977 = vmatpush1.msra.mxu0 0.0
  %7978 = vmatprep.subr.mxu0 0.0
  %7979 = vmatpush1.msra.mxu0 0.0
  %7980 = vmatprep.subr.mxu0 0.0
  %7981 = vmatpush1.msra.mxu0 0.0
  %7982 = vmatprep.subr.mxu0 0.0
  %7983 = vmatpush1.msra.mxu0 0.0
  %7984 = vmatprep.subr.mxu0 0.0
  %7985 = vmatpush1.msra.mxu0 0.0
  %7986 = vmatprep.mubr.f32.mxu0 0.0
  %7987 = vmatmul.mubr.f32.gmra.mrb[0].mxu0 %v7920
  %v7988 = vpop.f32.mrb[0].mxu0
  %v7989 = vadd.f32 0.0, %v7988
  %v7990 = vpop.f32.mrb[0].mxu0
  %v7991 = vadd.f32 0.0, %v7990
  %7992 = vdwg.mxu0
  %7993 = vmatprep.subr.mxu0 %v7890
  %7994 = vmatpush1.msra.mxu0 %v7889
  %7995 = vmatprep.subr.mxu0 %v7894
  %7996 = vmatpush1.msra.mxu0 %v7893
  %7997 = vmatprep.subr.mxu0 %v7898
  %7998 = vmatpush1.msra.mxu0 %v7897
  %7999 = vmatprep.subr.mxu0 %v7902
  %8000 = vmatpush1.msra.mxu0 %v7901
  %8001 = vmatprep.subr.mxu0 %v7906
  %8002 = vmatpush1.msra.mxu0 %v7905
  %8003 = vmatprep.subr.mxu0 %v7910
  %8004 = vmatpush1.msra.mxu0 %v7909
  %8005 = vmatprep.subr.mxu0 %v7914
  %8006 = vmatpush1.msra.mxu0 %v7913
  %8007 = vmatprep.subr.mxu0 %v7918
  %8008 = vmatpush1.msra.mxu0 %v7917
  %8009 = vmatprep.subr.mxu0 0.0
  %8010 = vmatpush1.msra.mxu0 0.0
  %8011 = vmatprep.subr.mxu0 0.0
  %8012 = vmatpush1.msra.mxu0 0.0
  %8013 = vmatprep.subr.mxu0 0.0
  %8014 = vmatpush1.msra.mxu0 0.0
  %8015 = vmatprep.subr.mxu0 0.0
  %8016 = vmatpush1.msra.mxu0 0.0
  %8017 = vmatprep.subr.mxu0 0.0
  %8018 = vmatpush1.msra.mxu0 0.0
  %8019 = vmatprep.subr.mxu0 0.0
  %8020 = vmatpush1.msra.mxu0 0.0
  %8021 = vmatprep.subr.mxu0 0.0
  %8022 = vmatpush1.msra.mxu0 0.0
  %8023 = vmatprep.subr.mxu0 0.0
  %8024 = vmatpush1.msra.mxu0 0.0
  %8025 = vmatprep.subr.mxu0 0.0
  %8026 = vmatpush1.msra.mxu0 0.0
  %8027 = vmatprep.subr.mxu0 0.0
  %8028 = vmatpush1.msra.mxu0 0.0
  %8029 = vmatprep.subr.mxu0 0.0
  %8030 = vmatpush1.msra.mxu0 0.0
  %8031 = vmatprep.subr.mxu0 0.0
  %8032 = vmatpush1.msra.mxu0 0.0
  %8033 = vmatprep.subr.mxu0 0.0
  %8034 = vmatpush1.msra.mxu0 0.0
  %8035 = vmatprep.subr.mxu0 0.0
  %8036 = vmatpush1.msra.mxu0 0.0
  %8037 = vmatprep.subr.mxu0 0.0
  %8038 = vmatpush1.msra.mxu0 0.0
  %8039 = vmatprep.subr.mxu0 0.0
  %8040 = vmatpush1.msra.mxu0 0.0
  %8041 = vmatprep.subr.mxu0 0.0
  %8042 = vmatpush1.msra.mxu0 0.0
  %8043 = vmatprep.subr.mxu0 0.0
  %8044 = vmatpush1.msra.mxu0 0.0
  %8045 = vmatprep.subr.mxu0 0.0
  %8046 = vmatpush1.msra.mxu0 0.0
  %8047 = vmatprep.subr.mxu0 0.0
  %8048 = vmatpush1.msra.mxu0 0.0
  %8049 = vmatprep.subr.mxu0 0.0
  %8050 = vmatpush1.msra.mxu0 0.0
  %8051 = vmatprep.subr.mxu0 0.0
  %8052 = vmatpush1.msra.mxu0 0.0
  %8053 = vmatprep.subr.mxu0 0.0
  %8054 = vmatpush1.msra.mxu0 0.0
  %8055 = vmatprep.subr.mxu0 0.0
  %8056 = vmatpush1.msra.mxu0 0.0
  %8057 = vmatprep.mubr.f32.mxu0 0.0
  %8058 = vmatmul.mubr.f32.gmra.mrb[0].mxu0 %v7920
  %v8059 = vpop.f32.mrb[0].mxu0
  %v8060 = vadd.f32 0.0, %v8059
  %v8061 = vpop.f32.mrb[0].mxu0
  %v8062 = vadd.f32 0.0, %v8061
  %8063 = vdwg.mxu0
  %v8064 = vadd.f32 %v7882, %v7989
  %v8065 = vadd.f32 %v7883, %v7991
  %v8066 = vadd.f32 %v7884, %v8060
  %v8067 = vadd.f32 %v7885, %v8062
  %s8068 = scalar_lea.vmem %s3, 10496
  %v8069 = vld [vmem:[%s8068] sm:$0xff]
  %v8070 = vld [vmem:[%s8068 + $0x8] sm:$0xff]
  %v8071 = vld [vmem:[%s8068 + $0x10] sm:$0xff]
  %v8072 = vld [vmem:[%s8068 + $0x18] sm:$0xff]
  %v8073 = vld [vmem:[%s8068 + $0x20] sm:$0xff]
  %v8074 = vld [vmem:[%s8068 + $0x28] sm:$0xff]
  %v8075 = vld [vmem:[%s8068 + $0x30] sm:$0xff]
  %v8076 = vld [vmem:[%s8068 + $0x38] sm:$0xff]
  %v8077 = vld [vmem:[%s8068 + $0x40] sm:$0xff]
  %v8078 = vld [vmem:[%s8068 + $0x48] sm:$0xff]
  %v8079 = vld [vmem:[%s8068 + $0x50] sm:$0xff]
  %v8080 = vld [vmem:[%s8068 + $0x58] sm:$0xff]
  %v8081 = vld [vmem:[%s8068 + $0x60] sm:$0xff]
  %v8082 = vld [vmem:[%s8068 + $0x68] sm:$0xff]
  %v8083 = vld [vmem:[%s8068 + $0x70] sm:$0xff]
  %v8084 = vld [vmem:[%s8068 + $0x78] sm:$0xff]
  %v8085 = vld [vmem:[%s8068 + $0x80] sm:$0xff]
  %v8086 = vld [vmem:[%s8068 + $0x88] sm:$0xff]
  %v8087 = vld [vmem:[%s8068 + $0x90] sm:$0xff]
  %v8088 = vld [vmem:[%s8068 + $0x98] sm:$0xff]
  %v8089 = vld [vmem:[%s8068 + $0xa0] sm:$0xff]
  %v8090 = vld [vmem:[%s8068 + $0xa8] sm:$0xff]
  %v8091 = vld [vmem:[%s8068 + $0xb0] sm:$0xff]
  %v8092 = vld [vmem:[%s8068 + $0xb8] sm:$0xff]
  %v8093 = vld [vmem:[%s8068 + $0xc0] sm:$0xff]
  %v8094 = vld [vmem:[%s8068 + $0xc8] sm:$0xff]
  %v8095 = vld [vmem:[%s8068 + $0xd0] sm:$0xff]
  %v8096 = vld [vmem:[%s8068 + $0xd8] sm:$0xff]
  %v8097 = vld [vmem:[%s8068 + $0xe0] sm:$0xff]
  %v8098 = vld [vmem:[%s8068 + $0xe8] sm:$0xff]
  %v8099 = vld [vmem:[%s8068 + $0xf0] sm:$0xff]
  %v8100 = vld [vmem:[%s8068 + $0xf8] sm:$0xff]
  %v8101 = vrot.slane %v612, 2
  %v8102 = vsel %vm172, %v8101, 0
  %8104 = vmatprep.subr.mxu0 %v8070
  %8105 = vmatpush1.msra.mxu0 %v8069
  %8106 = vmatprep.subr.mxu0 %v8074
  %8107 = vmatpush1.msra.mxu0 %v8073
  %8108 = vmatprep.subr.mxu0 %v8078
  %8109 = vmatpush1.msra.mxu0 %v8077
  %8110 = vmatprep.subr.mxu0 %v8082
  %8111 = vmatpush1.msra.mxu0 %v8081
  %8112 = vmatprep.subr.mxu0 %v8086
  %8113 = vmatpush1.msra.mxu0 %v8085
  %8114 = vmatprep.subr.mxu0 %v8090
  %8115 = vmatpush1.msra.mxu0 %v8089
  %8116 = vmatprep.subr.mxu0 %v8094
  %8117 = vmatpush1.msra.mxu0 %v8093
  %8118 = vmatprep.subr.mxu0 %v8098
  %8119 = vmatpush1.msra.mxu0 %v8097
  %8120 = vmatprep.subr.mxu0 0.0
  %8121 = vmatpush1.msra.mxu0 0.0
  %8122 = vmatprep.subr.mxu0 0.0
  %8123 = vmatpush1.msra.mxu0 0.0
  %8124 = vmatprep.subr.mxu0 0.0
  %8125 = vmatpush1.msra.mxu0 0.0
  %8126 = vmatprep.subr.mxu0 0.0
  %8127 = vmatpush1.msra.mxu0 0.0
  %8128 = vmatprep.subr.mxu0 0.0
  %8129 = vmatpush1.msra.mxu0 0.0
  %8130 = vmatprep.subr.mxu0 0.0
  %8131 = vmatpush1.msra.mxu0 0.0
  %8132 = vmatprep.subr.mxu0 0.0
  %8133 = vmatpush1.msra.mxu0 0.0
  %8134 = vmatprep.subr.mxu0 0.0
  %8135 = vmatpush1.msra.mxu0 0.0
  %8136 = vmatprep.subr.mxu0 0.0
  %8137 = vmatpush1.msra.mxu0 0.0
  %8138 = vmatprep.subr.mxu0 0.0
  %8139 = vmatpush1.msra.mxu0 0.0
  %8140 = vmatprep.subr.mxu0 0.0
  %8141 = vmatpush1.msra.mxu0 0.0
  %8142 = vmatprep.subr.mxu0 0.0
  %8143 = vmatpush1.msra.mxu0 0.0
  %8144 = vmatprep.subr.mxu0 0.0
  %8145 = vmatpush1.msra.mxu0 0.0
  %8146 = vmatprep.subr.mxu0 0.0
  %8147 = vmatpush1.msra.mxu0 0.0
  %8148 = vmatprep.subr.mxu0 0.0
  %8149 = vmatpush1.msra.mxu0 0.0
  %8150 = vmatprep.subr.mxu0 0.0
  %8151 = vmatpush1.msra.mxu0 0.0
  %8152 = vmatprep.subr.mxu0 0.0
  %8153 = vmatpush1.msra.mxu0 0.0
  %8154 = vmatprep.subr.mxu0 0.0
  %8155 = vmatpush1.msra.mxu0 0.0
  %8156 = vmatprep.subr.mxu0 0.0
  %8157 = vmatpush1.msra.mxu0 0.0
  %8158 = vmatprep.subr.mxu0 0.0
  %8159 = vmatpush1.msra.mxu0 0.0
  %8160 = vmatprep.subr.mxu0 0.0
  %8161 = vmatpush1.msra.mxu0 0.0
  %8162 = vmatprep.subr.mxu0 0.0
  %8163 = vmatpush1.msra.mxu0 0.0
  %8164 = vmatprep.subr.mxu0 0.0
  %8165 = vmatpush1.msra.mxu0 0.0
  %8166 = vmatprep.subr.mxu0 0.0
  %8167 = vmatpush1.msra.mxu0 0.0
  %8168 = vmatprep.mubr.f32.mxu0 0.0
  %8169 = vmatmul.mubr.f32.gmra.mrb[0].mxu0 %v8102
  %v8170 = vpop.f32.mrb[0].mxu0
  %v8171 = vadd.f32 0.0, %v8170
  %v8172 = vpop.f32.mrb[0].mxu0
  %v8173 = vadd.f32 0.0, %v8172
  %8174 = vdwg.mxu0
  %8175 = vmatprep.subr.mxu0 %v8072
  %8176 = vmatpush1.msra.mxu0 %v8071
  %8177 = vmatprep.subr.mxu0 %v8076
  %8178 = vmatpush1.msra.mxu0 %v8075
  %8179 = vmatprep.subr.mxu0 %v8080
  %8180 = vmatpush1.msra.mxu0 %v8079
  %8181 = vmatprep.subr.mxu0 %v8084
  %8182 = vmatpush1.msra.mxu0 %v8083
  %8183 = vmatprep.subr.mxu0 %v8088
  %8184 = vmatpush1.msra.mxu0 %v8087
  %8185 = vmatprep.subr.mxu0 %v8092
  %8186 = vmatpush1.msra.mxu0 %v8091
  %8187 = vmatprep.subr.mxu0 %v8096
  %8188 = vmatpush1.msra.mxu0 %v8095
  %8189 = vmatprep.subr.mxu0 %v8100
  %8190 = vmatpush1.msra.mxu0 %v8099
  %8191 = vmatprep.subr.mxu0 0.0
  %8192 = vmatpush1.msra.mxu0 0.0
  %8193 = vmatprep.subr.mxu0 0.0
  %8194 = vmatpush1.msra.mxu0 0.0
  %8195 = vmatprep.subr.mxu0 0.0
  %8196 = vmatpush1.msra.mxu0 0.0
  %8197 = vmatprep.subr.mxu0 0.0
  %8198 = vmatpush1.msra.mxu0 0.0
  %8199 = vmatprep.subr.mxu0 0.0
  %8200 = vmatpush1.msra.mxu0 0.0
  %8201 = vmatprep.subr.mxu0 0.0
  %8202 = vmatpush1.msra.mxu0 0.0
  %8203 = vmatprep.subr.mxu0 0.0
  %8204 = vmatpush1.msra.mxu0 0.0
  %8205 = vmatprep.subr.mxu0 0.0
  %8206 = vmatpush1.msra.mxu0 0.0
  %8207 = vmatprep.subr.mxu0 0.0
  %8208 = vmatpush1.msra.mxu0 0.0
  %8209 = vmatprep.subr.mxu0 0.0
  %8210 = vmatpush1.msra.mxu0 0.0
  %8211 = vmatprep.subr.mxu0 0.0
  %8212 = vmatpush1.msra.mxu0 0.0
  %8213 = vmatprep.subr.mxu0 0.0
  %8214 = vmatpush1.msra.mxu0 0.0
  %8215 = vmatprep.subr.mxu0 0.0
  %8216 = vmatpush1.msra.mxu0 0.0
  %8217 = vmatprep.subr.mxu0 0.0
  %8218 = vmatpush1.msra.mxu0 0.0
  %8219 = vmatprep.subr.mxu0 0.0
  %8220 = vmatpush1.msra.mxu0 0.0
  %8221 = vmatprep.subr.mxu0 0.0
  %8222 = vmatpush1.msra.mxu0 0.0
  %8223 = vmatprep.subr.mxu0 0.0
  %8224 = vmatpush1.msra.mxu0 0.0
  %8225 = vmatprep.subr.mxu0 0.0
  %8226 = vmatpush1.msra.mxu0 0.0
  %8227 = vmatprep.subr.mxu0 0.0
  %8228 = vmatpush1.msra.mxu0 0.0
  %8229 = vmatprep.subr.mxu0 0.0
  %8230 = vmatpush1.msra.mxu0 0.0
  %8231 = vmatprep.subr.mxu0 0.0
  %8232 = vmatpush1.msra.mxu0 0.0
  %8233 = vmatprep.subr.mxu0 0.0
  %8234 = vmatpush1.msra.mxu0 0.0
  %8235 = vmatprep.subr.mxu0 0.0
  %8236 = vmatpush1.msra.mxu0 0.0
  %8237 = vmatprep.subr.mxu0 0.0
  %8238 = vmatpush1.msra.mxu0 0.0
  %8239 = vmatprep.mubr.f32.mxu0 0.0
  %8240 = vmatmul.mubr.f32.gmra.mrb[0].mxu0 %v8102
  %v8241 = vpop.f32.mrb[0].mxu0
  %v8242 = vadd.f32 0.0, %v8241
  %v8243 = vpop.f32.mrb[0].mxu0
  %v8244 = vadd.f32 0.0, %v8243
  %8245 = vdwg.mxu0
  %v8246 = vadd.f32 %v8064, %v8171
  %v8247 = vadd.f32 %v8065, %v8173
  %v8248 = vadd.f32 %v8066, %v8242
  %v8249 = vadd.f32 %v8067, %v8244
  %s8250 = scalar_lea.vmem %s3, 10752
  %v8251 = vld [vmem:[%s8250] sm:$0xff]
  %v8252 = vld [vmem:[%s8250 + $0x8] sm:$0xff]
  %v8253 = vld [vmem:[%s8250 + $0x10] sm:$0xff]
  %v8254 = vld [vmem:[%s8250 + $0x18] sm:$0xff]
  %v8255 = vld [vmem:[%s8250 + $0x20] sm:$0xff]
  %v8256 = vld [vmem:[%s8250 + $0x28] sm:$0xff]
  %v8257 = vld [vmem:[%s8250 + $0x30] sm:$0xff]
  %v8258 = vld [vmem:[%s8250 + $0x38] sm:$0xff]
  %v8259 = vld [vmem:[%s8250 + $0x40] sm:$0xff]
  %v8260 = vld [vmem:[%s8250 + $0x48] sm:$0xff]
  %v8261 = vld [vmem:[%s8250 + $0x50] sm:$0xff]
  %v8262 = vld [vmem:[%s8250 + $0x58] sm:$0xff]
  %v8263 = vld [vmem:[%s8250 + $0x60] sm:$0xff]
  %v8264 = vld [vmem:[%s8250 + $0x68] sm:$0xff]
  %v8265 = vld [vmem:[%s8250 + $0x70] sm:$0xff]
  %v8266 = vld [vmem:[%s8250 + $0x78] sm:$0xff]
  %v8267 = vld [vmem:[%s8250 + $0x80] sm:$0xff]
  %v8268 = vld [vmem:[%s8250 + $0x88] sm:$0xff]
  %v8269 = vld [vmem:[%s8250 + $0x90] sm:$0xff]
  %v8270 = vld [vmem:[%s8250 + $0x98] sm:$0xff]
  %v8271 = vld [vmem:[%s8250 + $0xa0] sm:$0xff]
  %v8272 = vld [vmem:[%s8250 + $0xa8] sm:$0xff]
  %v8273 = vld [vmem:[%s8250 + $0xb0] sm:$0xff]
  %v8274 = vld [vmem:[%s8250 + $0xb8] sm:$0xff]
  %v8275 = vld [vmem:[%s8250 + $0xc0] sm:$0xff]
  %v8276 = vld [vmem:[%s8250 + $0xc8] sm:$0xff]
  %v8277 = vld [vmem:[%s8250 + $0xd0] sm:$0xff]
  %v8278 = vld [vmem:[%s8250 + $0xd8] sm:$0xff]
  %v8279 = vld [vmem:[%s8250 + $0xe0] sm:$0xff]
  %v8280 = vld [vmem:[%s8250 + $0xe8] sm:$0xff]
  %v8281 = vld [vmem:[%s8250 + $0xf0] sm:$0xff]
  %v8282 = vld [vmem:[%s8250 + $0xf8] sm:$0xff]
  %v8283 = vrot.slane %v612, 4
  %v8284 = vsel %vm172, %v8283, 0
  %8286 = vmatprep.subr.mxu0 %v8252
  %8287 = vmatpush1.msra.mxu0 %v8251
  %8288 = vmatprep.subr.mxu0 %v8256
  %8289 = vmatpush1.msra.mxu0 %v8255
  %8290 = vmatprep.subr.mxu0 %v8260
  %8291 = vmatpush1.msra.mxu0 %v8259
  %8292 = vmatprep.subr.mxu0 %v8264
  %8293 = vmatpush1.msra.mxu0 %v8263
  %8294 = vmatprep.subr.mxu0 %v8268
  %8295 = vmatpush1.msra.mxu0 %v8267
  %8296 = vmatprep.subr.mxu0 %v8272
  %8297 = vmatpush1.msra.mxu0 %v8271
  %8298 = vmatprep.subr.mxu0 %v8276
  %8299 = vmatpush1.msra.mxu0 %v8275
  %8300 = vmatprep.subr.mxu0 %v8280
  %8301 = vmatpush1.msra.mxu0 %v8279
  %8302 = vmatprep.subr.mxu0 0.0
  %8303 = vmatpush1.msra.mxu0 0.0
  %8304 = vmatprep.subr.mxu0 0.0
  %8305 = vmatpush1.msra.mxu0 0.0
  %8306 = vmatprep.subr.mxu0 0.0
  %8307 = vmatpush1.msra.mxu0 0.0
  %8308 = vmatprep.subr.mxu0 0.0
  %8309 = vmatpush1.msra.mxu0 0.0
  %8310 = vmatprep.subr.mxu0 0.0
  %8311 = vmatpush1.msra.mxu0 0.0
  %8312 = vmatprep.subr.mxu0 0.0
  %8313 = vmatpush1.msra.mxu0 0.0
  %8314 = vmatprep.subr.mxu0 0.0
  %8315 = vmatpush1.msra.mxu0 0.0
  %8316 = vmatprep.subr.mxu0 0.0
  %8317 = vmatpush1.msra.mxu0 0.0
  %8318 = vmatprep.subr.mxu0 0.0
  %8319 = vmatpush1.msra.mxu0 0.0
  %8320 = vmatprep.subr.mxu0 0.0
  %8321 = vmatpush1.msra.mxu0 0.0
  %8322 = vmatprep.subr.mxu0 0.0
  %8323 = vmatpush1.msra.mxu0 0.0
  %8324 = vmatprep.subr.mxu0 0.0
  %8325 = vmatpush1.msra.mxu0 0.0
  %8326 = vmatprep.subr.mxu0 0.0
  %8327 = vmatpush1.msra.mxu0 0.0
  %8328 = vmatprep.subr.mxu0 0.0
  %8329 = vmatpush1.msra.mxu0 0.0
  %8330 = vmatprep.subr.mxu0 0.0
  %8331 = vmatpush1.msra.mxu0 0.0
  %8332 = vmatprep.subr.mxu0 0.0
  %8333 = vmatpush1.msra.mxu0 0.0
  %8334 = vmatprep.subr.mxu0 0.0
  %8335 = vmatpush1.msra.mxu0 0.0
  %8336 = vmatprep.subr.mxu0 0.0
  %8337 = vmatpush1.msra.mxu0 0.0
  %8338 = vmatprep.subr.mxu0 0.0
  %8339 = vmatpush1.msra.mxu0 0.0
  %8340 = vmatprep.subr.mxu0 0.0
  %8341 = vmatpush1.msra.mxu0 0.0
  %8342 = vmatprep.subr.mxu0 0.0
  %8343 = vmatpush1.msra.mxu0 0.0
  %8344 = vmatprep.subr.mxu0 0.0
  %8345 = vmatpush1.msra.mxu0 0.0
  %8346 = vmatprep.subr.mxu0 0.0
  %8347 = vmatpush1.msra.mxu0 0.0
  %8348 = vmatprep.subr.mxu0 0.0
  %8349 = vmatpush1.msra.mxu0 0.0
  %8350 = vmatprep.mubr.f32.mxu0 0.0
  %8351 = vmatmul.mubr.f32.gmra.mrb[0].mxu0 %v8284
  %v8352 = vpop.f32.mrb[0].mxu0
  %v8353 = vadd.f32 0.0, %v8352
  %v8354 = vpop.f32.mrb[0].mxu0
  %v8355 = vadd.f32 0.0, %v8354
  %8356 = vdwg.mxu0
  %8357 = vmatprep.subr.mxu0 %v8254
  %8358 = vmatpush1.msra.mxu0 %v8253
  %8359 = vmatprep.subr.mxu0 %v8258
  %8360 = vmatpush1.msra.mxu0 %v8257
  %8361 = vmatprep.subr.mxu0 %v8262
  %8362 = vmatpush1.msra.mxu0 %v8261
  %8363 = vmatprep.subr.mxu0 %v8266
  %8364 = vmatpush1.msra.mxu0 %v8265
  %8365 = vmatprep.subr.mxu0 %v8270
  %8366 = vmatpush1.msra.mxu0 %v8269
  %8367 = vmatprep.subr.mxu0 %v8274
  %8368 = vmatpush1.msra.mxu0 %v8273
  %8369 = vmatprep.subr.mxu0 %v8278
  %8370 = vmatpush1.msra.mxu0 %v8277
  %8371 = vmatprep.subr.mxu0 %v8282
  %8372 = vmatpush1.msra.mxu0 %v8281
  %8373 = vmatprep.subr.mxu0 0.0
  %8374 = vmatpush1.msra.mxu0 0.0
  %8375 = vmatprep.subr.mxu0 0.0
  %8376 = vmatpush1.msra.mxu0 0.0
  %8377 = vmatprep.subr.mxu0 0.0
  %8378 = vmatpush1.msra.mxu0 0.0
  %8379 = vmatprep.subr.mxu0 0.0
  %8380 = vmatpush1.msra.mxu0 0.0
  %8381 = vmatprep.subr.mxu0 0.0
  %8382 = vmatpush1.msra.mxu0 0.0
  %8383 = vmatprep.subr.mxu0 0.0
  %8384 = vmatpush1.msra.mxu0 0.0
  %8385 = vmatprep.subr.mxu0 0.0
  %8386 = vmatpush1.msra.mxu0 0.0
  %8387 = vmatprep.subr.mxu0 0.0
  %8388 = vmatpush1.msra.mxu0 0.0
  %8389 = vmatprep.subr.mxu0 0.0
  %8390 = vmatpush1.msra.mxu0 0.0
  %8391 = vmatprep.subr.mxu0 0.0
  %8392 = vmatpush1.msra.mxu0 0.0
  %8393 = vmatprep.subr.mxu0 0.0
  %8394 = vmatpush1.msra.mxu0 0.0
  %8395 = vmatprep.subr.mxu0 0.0
  %8396 = vmatpush1.msra.mxu0 0.0
  %8397 = vmatprep.subr.mxu0 0.0
  %8398 = vmatpush1.msra.mxu0 0.0
  %8399 = vmatprep.subr.mxu0 0.0
  %8400 = vmatpush1.msra.mxu0 0.0
  %8401 = vmatprep.subr.mxu0 0.0
  %8402 = vmatpush1.msra.mxu0 0.0
  %8403 = vmatprep.subr.mxu0 0.0
  %8404 = vmatpush1.msra.mxu0 0.0
  %8405 = vmatprep.subr.mxu0 0.0
  %8406 = vmatpush1.msra.mxu0 0.0
  %8407 = vmatprep.subr.mxu0 0.0
  %8408 = vmatpush1.msra.mxu0 0.0
  %8409 = vmatprep.subr.mxu0 0.0
  %8410 = vmatpush1.msra.mxu0 0.0
  %8411 = vmatprep.subr.mxu0 0.0
  %8412 = vmatpush1.msra.mxu0 0.0
  %8413 = vmatprep.subr.mxu0 0.0
  %8414 = vmatpush1.msra.mxu0 0.0
  %8415 = vmatprep.subr.mxu0 0.0
  %8416 = vmatpush1.msra.mxu0 0.0
  %8417 = vmatprep.subr.mxu0 0.0
  %8418 = vmatpush1.msra.mxu0 0.0
  %8419 = vmatprep.subr.mxu0 0.0
  %8420 = vmatpush1.msra.mxu0 0.0
  %8421 = vmatprep.mubr.f32.mxu0 0.0
  %8422 = vmatmul.mubr.f32.gmra.mrb[0].mxu0 %v8284
  %v8423 = vpop.f32.mrb[0].mxu0
  %v8424 = vadd.f32 0.0, %v8423
  %v8425 = vpop.f32.mrb[0].mxu0
  %v8426 = vadd.f32 0.0, %v8425
  %8427 = vdwg.mxu0
  %v8428 = vadd.f32 %v8246, %v8353
  %v8429 = vadd.f32 %v8247, %v8355
  %v8430 = vadd.f32 %v8248, %v8424
  %v8431 = vadd.f32 %v8249, %v8426
  %s8432 = scalar_lea.vmem %s3, 11008
  %v8433 = vld [vmem:[%s8432] sm:$0xff]
  %v8434 = vld [vmem:[%s8432 + $0x8] sm:$0xff]
  %v8435 = vld [vmem:[%s8432 + $0x10] sm:$0xff]
  %v8436 = vld [vmem:[%s8432 + $0x18] sm:$0xff]
  %v8437 = vld [vmem:[%s8432 + $0x20] sm:$0xff]
  %v8438 = vld [vmem:[%s8432 + $0x28] sm:$0xff]
  %v8439 = vld [vmem:[%s8432 + $0x30] sm:$0xff]
  %v8440 = vld [vmem:[%s8432 + $0x38] sm:$0xff]
  %v8441 = vld [vmem:[%s8432 + $0x40] sm:$0xff]
  %v8442 = vld [vmem:[%s8432 + $0x48] sm:$0xff]
  %v8443 = vld [vmem:[%s8432 + $0x50] sm:$0xff]
  %v8444 = vld [vmem:[%s8432 + $0x58] sm:$0xff]
  %v8445 = vld [vmem:[%s8432 + $0x60] sm:$0xff]
  %v8446 = vld [vmem:[%s8432 + $0x68] sm:$0xff]
  %v8447 = vld [vmem:[%s8432 + $0x70] sm:$0xff]
  %v8448 = vld [vmem:[%s8432 + $0x78] sm:$0xff]
  %v8449 = vld [vmem:[%s8432 + $0x80] sm:$0xff]
  %v8450 = vld [vmem:[%s8432 + $0x88] sm:$0xff]
  %v8451 = vld [vmem:[%s8432 + $0x90] sm:$0xff]
  %v8452 = vld [vmem:[%s8432 + $0x98] sm:$0xff]
  %v8453 = vld [vmem:[%s8432 + $0xa0] sm:$0xff]
  %v8454 = vld [vmem:[%s8432 + $0xa8] sm:$0xff]
  %v8455 = vld [vmem:[%s8432 + $0xb0] sm:$0xff]
  %v8456 = vld [vmem:[%s8432 + $0xb8] sm:$0xff]
  %v8457 = vld [vmem:[%s8432 + $0xc0] sm:$0xff]
  %v8458 = vld [vmem:[%s8432 + $0xc8] sm:$0xff]
  %v8459 = vld [vmem:[%s8432 + $0xd0] sm:$0xff]
  %v8460 = vld [vmem:[%s8432 + $0xd8] sm:$0xff]
  %v8461 = vld [vmem:[%s8432 + $0xe0] sm:$0xff]
  %v8462 = vld [vmem:[%s8432 + $0xe8] sm:$0xff]
  %v8463 = vld [vmem:[%s8432 + $0xf0] sm:$0xff]
  %v8464 = vld [vmem:[%s8432 + $0xf8] sm:$0xff]
  %v8465 = vrot.slane %v612, 6
  %v8466 = vsel %vm172, %v8465, 0
  %8468 = vmatprep.subr.mxu0 %v8434
  %8469 = vmatpush1.msra.mxu0 %v8433
  %8470 = vmatprep.subr.mxu0 %v8438
  %8471 = vmatpush1.msra.mxu0 %v8437
  %8472 = vmatprep.subr.mxu0 %v8442
  %8473 = vmatpush1.msra.mxu0 %v8441
  %8474 = vmatprep.subr.mxu0 %v8446
  %8475 = vmatpush1.msra.mxu0 %v8445
  %8476 = vmatprep.subr.mxu0 %v8450
  %8477 = vmatpush1.msra.mxu0 %v8449
  %8478 = vmatprep.subr.mxu0 %v8454
  %8479 = vmatpush1.msra.mxu0 %v8453
  %8480 = vmatprep.subr.mxu0 %v8458
  %8481 = vmatpush1.msra.mxu0 %v8457
  %8482 = vmatprep.subr.mxu0 %v8462
  %8483 = vmatpush1.msra.mxu0 %v8461
  %8484 = vmatprep.subr.mxu0 0.0
  %8485 = vmatpush1.msra.mxu0 0.0
  %8486 = vmatprep.subr.mxu0 0.0
  %8487 = vmatpush1.msra.mxu0 0.0
  %8488 = vmatprep.subr.mxu0 0.0
  %8489 = vmatpush1.msra.mxu0 0.0
  %8490 = vmatprep.subr.mxu0 0.0
  %8491 = vmatpush1.msra.mxu0 0.0
  %8492 = vmatprep.subr.mxu0 0.0
  %8493 = vmatpush1.msra.mxu0 0.0
  %8494 = vmatprep.subr.mxu0 0.0
  %8495 = vmatpush1.msra.mxu0 0.0
  %8496 = vmatprep.subr.mxu0 0.0
  %8497 = vmatpush1.msra.mxu0 0.0
  %8498 = vmatprep.subr.mxu0 0.0
  %8499 = vmatpush1.msra.mxu0 0.0
  %8500 = vmatprep.subr.mxu0 0.0
  %8501 = vmatpush1.msra.mxu0 0.0
  %8502 = vmatprep.subr.mxu0 0.0
  %8503 = vmatpush1.msra.mxu0 0.0
  %8504 = vmatprep.subr.mxu0 0.0
  %8505 = vmatpush1.msra.mxu0 0.0
  %8506 = vmatprep.subr.mxu0 0.0
  %8507 = vmatpush1.msra.mxu0 0.0
  %8508 = vmatprep.subr.mxu0 0.0
  %8509 = vmatpush1.msra.mxu0 0.0
  %8510 = vmatprep.subr.mxu0 0.0
  %8511 = vmatpush1.msra.mxu0 0.0
  %8512 = vmatprep.subr.mxu0 0.0
  %8513 = vmatpush1.msra.mxu0 0.0
  %8514 = vmatprep.subr.mxu0 0.0
  %8515 = vmatpush1.msra.mxu0 0.0
  %8516 = vmatprep.subr.mxu0 0.0
  %8517 = vmatpush1.msra.mxu0 0.0
  %8518 = vmatprep.subr.mxu0 0.0
  %8519 = vmatpush1.msra.mxu0 0.0
  %8520 = vmatprep.subr.mxu0 0.0
  %8521 = vmatpush1.msra.mxu0 0.0
  %8522 = vmatprep.subr.mxu0 0.0
  %8523 = vmatpush1.msra.mxu0 0.0
  %8524 = vmatprep.subr.mxu0 0.0
  %8525 = vmatpush1.msra.mxu0 0.0
  %8526 = vmatprep.subr.mxu0 0.0
  %8527 = vmatpush1.msra.mxu0 0.0
  %8528 = vmatprep.subr.mxu0 0.0
  %8529 = vmatpush1.msra.mxu0 0.0
  %8530 = vmatprep.subr.mxu0 0.0
  %8531 = vmatpush1.msra.mxu0 0.0
  %8532 = vmatprep.mubr.f32.mxu0 0.0
  %8533 = vmatmul.mubr.f32.gmra.mrb[0].mxu0 %v8466
  %v8534 = vpop.f32.mrb[0].mxu0
  %v8535 = vadd.f32 0.0, %v8534
  %v8536 = vpop.f32.mrb[0].mxu0
  %v8537 = vadd.f32 0.0, %v8536
  %8538 = vdwg.mxu0
  %8539 = vmatprep.subr.mxu0 %v8436
  %8540 = vmatpush1.msra.mxu0 %v8435
  %8541 = vmatprep.subr.mxu0 %v8440
  %8542 = vmatpush1.msra.mxu0 %v8439
  %8543 = vmatprep.subr.mxu0 %v8444
  %8544 = vmatpush1.msra.mxu0 %v8443
  %8545 = vmatprep.subr.mxu0 %v8448
  %8546 = vmatpush1.msra.mxu0 %v8447
  %8547 = vmatprep.subr.mxu0 %v8452
  %8548 = vmatpush1.msra.mxu0 %v8451
  %8549 = vmatprep.subr.mxu0 %v8456
  %8550 = vmatpush1.msra.mxu0 %v8455
  %8551 = vmatprep.subr.mxu0 %v8460
  %8552 = vmatpush1.msra.mxu0 %v8459
  %8553 = vmatprep.subr.mxu0 %v8464
  %8554 = vmatpush1.msra.mxu0 %v8463
  %8555 = vmatprep.subr.mxu0 0.0
  %8556 = vmatpush1.msra.mxu0 0.0
  %8557 = vmatprep.subr.mxu0 0.0
  %8558 = vmatpush1.msra.mxu0 0.0
  %8559 = vmatprep.subr.mxu0 0.0
  %8560 = vmatpush1.msra.mxu0 0.0
  %8561 = vmatprep.subr.mxu0 0.0
  %8562 = vmatpush1.msra.mxu0 0.0
  %8563 = vmatprep.subr.mxu0 0.0
  %8564 = vmatpush1.msra.mxu0 0.0
  %8565 = vmatprep.subr.mxu0 0.0
  %8566 = vmatpush1.msra.mxu0 0.0
  %8567 = vmatprep.subr.mxu0 0.0
  %8568 = vmatpush1.msra.mxu0 0.0
  %8569 = vmatprep.subr.mxu0 0.0
  %8570 = vmatpush1.msra.mxu0 0.0
  %8571 = vmatprep.subr.mxu0 0.0
  %8572 = vmatpush1.msra.mxu0 0.0
  %8573 = vmatprep.subr.mxu0 0.0
  %8574 = vmatpush1.msra.mxu0 0.0
  %8575 = vmatprep.subr.mxu0 0.0
  %8576 = vmatpush1.msra.mxu0 0.0
  %8577 = vmatprep.subr.mxu0 0.0
  %8578 = vmatpush1.msra.mxu0 0.0
  %8579 = vmatprep.subr.mxu0 0.0
  %8580 = vmatpush1.msra.mxu0 0.0
  %8581 = vmatprep.subr.mxu0 0.0
  %8582 = vmatpush1.msra.mxu0 0.0
  %8583 = vmatprep.subr.mxu0 0.0
  %8584 = vmatpush1.msra.mxu0 0.0
  %8585 = vmatprep.subr.mxu0 0.0
  %8586 = vmatpush1.msra.mxu0 0.0
  %8587 = vmatprep.subr.mxu0 0.0
  %8588 = vmatpush1.msra.mxu0 0.0
  %8589 = vmatprep.subr.mxu0 0.0
  %8590 = vmatpush1.msra.mxu0 0.0
  %8591 = vmatprep.subr.mxu0 0.0
  %8592 = vmatpush1.msra.mxu0 0.0
  %8593 = vmatprep.subr.mxu0 0.0
  %8594 = vmatpush1.msra.mxu0 0.0
  %8595 = vmatprep.subr.mxu0 0.0
  %8596 = vmatpush1.msra.mxu0 0.0
  %8597 = vmatprep.subr.mxu0 0.0
  %8598 = vmatpush1.msra.mxu0 0.0
  %8599 = vmatprep.subr.mxu0 0.0
  %8600 = vmatpush1.msra.mxu0 0.0
  %8601 = vmatprep.subr.mxu0 0.0
  %8602 = vmatpush1.msra.mxu0 0.0
  %8603 = vmatprep.mubr.f32.mxu0 0.0
  %8604 = vmatmul.mubr.f32.gmra.mrb[0].mxu0 %v8466
  %v8605 = vpop.f32.mrb[0].mxu0
  %v8606 = vadd.f32 0.0, %v8605
  %v8607 = vpop.f32.mrb[0].mxu0
  %v8608 = vadd.f32 0.0, %v8607
  %8609 = vdwg.mxu0
  %v8610 = vadd.f32 %v8428, %v8535
  %v8611 = vadd.f32 %v8429, %v8537
  %v8612 = vadd.f32 %v8430, %v8606
  %v8613 = vadd.f32 %v8431, %v8608
  %s8614 = scalar_lea.vmem %s3, 11264
  %v8615 = vld [vmem:[%s8614] sm:$0xff]
  %v8616 = vld [vmem:[%s8614 + $0x8] sm:$0xff]
  %v8617 = vld [vmem:[%s8614 + $0x10] sm:$0xff]
  %v8618 = vld [vmem:[%s8614 + $0x18] sm:$0xff]
  %v8619 = vld [vmem:[%s8614 + $0x20] sm:$0xff]
  %v8620 = vld [vmem:[%s8614 + $0x28] sm:$0xff]
  %v8621 = vld [vmem:[%s8614 + $0x30] sm:$0xff]
  %v8622 = vld [vmem:[%s8614 + $0x38] sm:$0xff]
  %v8623 = vld [vmem:[%s8614 + $0x40] sm:$0xff]
  %v8624 = vld [vmem:[%s8614 + $0x48] sm:$0xff]
  %v8625 = vld [vmem:[%s8614 + $0x50] sm:$0xff]
  %v8626 = vld [vmem:[%s8614 + $0x58] sm:$0xff]
  %v8627 = vld [vmem:[%s8614 + $0x60] sm:$0xff]
  %v8628 = vld [vmem:[%s8614 + $0x68] sm:$0xff]
  %v8629 = vld [vmem:[%s8614 + $0x70] sm:$0xff]
  %v8630 = vld [vmem:[%s8614 + $0x78] sm:$0xff]
  %v8631 = vld [vmem:[%s8614 + $0x80] sm:$0xff]
  %v8632 = vld [vmem:[%s8614 + $0x88] sm:$0xff]
  %v8633 = vld [vmem:[%s8614 + $0x90] sm:$0xff]
  %v8634 = vld [vmem:[%s8614 + $0x98] sm:$0xff]
  %v8635 = vld [vmem:[%s8614 + $0xa0] sm:$0xff]
  %v8636 = vld [vmem:[%s8614 + $0xa8] sm:$0xff]
  %v8637 = vld [vmem:[%s8614 + $0xb0] sm:$0xff]
  %v8638 = vld [vmem:[%s8614 + $0xb8] sm:$0xff]
  %v8639 = vld [vmem:[%s8614 + $0xc0] sm:$0xff]
  %v8640 = vld [vmem:[%s8614 + $0xc8] sm:$0xff]
  %v8641 = vld [vmem:[%s8614 + $0xd0] sm:$0xff]
  %v8642 = vld [vmem:[%s8614 + $0xd8] sm:$0xff]
  %v8643 = vld [vmem:[%s8614 + $0xe0] sm:$0xff]
  %v8644 = vld [vmem:[%s8614 + $0xe8] sm:$0xff]
  %v8645 = vld [vmem:[%s8614 + $0xf0] sm:$0xff]
  %v8646 = vld [vmem:[%s8614 + $0xf8] sm:$0xff]
  %v8648 = vsel %vm172, %v613, 0
  %8650 = vmatprep.subr.mxu0 %v8616
  %8651 = vmatpush1.msra.mxu0 %v8615
  %8652 = vmatprep.subr.mxu0 %v8620
  %8653 = vmatpush1.msra.mxu0 %v8619
  %8654 = vmatprep.subr.mxu0 %v8624
  %8655 = vmatpush1.msra.mxu0 %v8623
  %8656 = vmatprep.subr.mxu0 %v8628
  %8657 = vmatpush1.msra.mxu0 %v8627
  %8658 = vmatprep.subr.mxu0 %v8632
  %8659 = vmatpush1.msra.mxu0 %v8631
  %8660 = vmatprep.subr.mxu0 %v8636
  %8661 = vmatpush1.msra.mxu0 %v8635
  %8662 = vmatprep.subr.mxu0 %v8640
  %8663 = vmatpush1.msra.mxu0 %v8639
  %8664 = vmatprep.subr.mxu0 %v8644
  %8665 = vmatpush1.msra.mxu0 %v8643
  %8666 = vmatprep.subr.mxu0 0.0
  %8667 = vmatpush1.msra.mxu0 0.0
  %8668 = vmatprep.subr.mxu0 0.0
  %8669 = vmatpush1.msra.mxu0 0.0
  %8670 = vmatprep.subr.mxu0 0.0
  %8671 = vmatpush1.msra.mxu0 0.0
  %8672 = vmatprep.subr.mxu0 0.0
  %8673 = vmatpush1.msra.mxu0 0.0
  %8674 = vmatprep.subr.mxu0 0.0
  %8675 = vmatpush1.msra.mxu0 0.0
  %8676 = vmatprep.subr.mxu0 0.0
  %8677 = vmatpush1.msra.mxu0 0.0
  %8678 = vmatprep.subr.mxu0 0.0
  %8679 = vmatpush1.msra.mxu0 0.0
  %8680 = vmatprep.subr.mxu0 0.0
  %8681 = vmatpush1.msra.mxu0 0.0
  %8682 = vmatprep.subr.mxu0 0.0
  %8683 = vmatpush1.msra.mxu0 0.0
  %8684 = vmatprep.subr.mxu0 0.0
  %8685 = vmatpush1.msra.mxu0 0.0
  %8686 = vmatprep.subr.mxu0 0.0
  %8687 = vmatpush1.msra.mxu0 0.0
  %8688 = vmatprep.subr.mxu0 0.0
  %8689 = vmatpush1.msra.mxu0 0.0
  %8690 = vmatprep.subr.mxu0 0.0
  %8691 = vmatpush1.msra.mxu0 0.0
  %8692 = vmatprep.subr.mxu0 0.0
  %8693 = vmatpush1.msra.mxu0 0.0
  %8694 = vmatprep.subr.mxu0 0.0
  %8695 = vmatpush1.msra.mxu0 0.0
  %8696 = vmatprep.subr.mxu0 0.0
  %8697 = vmatpush1.msra.mxu0 0.0
  %8698 = vmatprep.subr.mxu0 0.0
  %8699 = vmatpush1.msra.mxu0 0.0
  %8700 = vmatprep.subr.mxu0 0.0
  %8701 = vmatpush1.msra.mxu0 0.0
  %8702 = vmatprep.subr.mxu0 0.0
  %8703 = vmatpush1.msra.mxu0 0.0
  %8704 = vmatprep.subr.mxu0 0.0
  %8705 = vmatpush1.msra.mxu0 0.0
  %8706 = vmatprep.subr.mxu0 0.0
  %8707 = vmatpush1.msra.mxu0 0.0
  %8708 = vmatprep.subr.mxu0 0.0
  %8709 = vmatpush1.msra.mxu0 0.0
  %8710 = vmatprep.subr.mxu0 0.0
  %8711 = vmatpush1.msra.mxu0 0.0
  %8712 = vmatprep.subr.mxu0 0.0
  %8713 = vmatpush1.msra.mxu0 0.0
  %8714 = vmatprep.mubr.f32.mxu0 0.0
  %8715 = vmatmul.mubr.f32.gmra.mrb[0].mxu0 %v8648
  %v8716 = vpop.f32.mrb[0].mxu0
  %v8717 = vadd.f32 0.0, %v8716
  %v8718 = vpop.f32.mrb[0].mxu0
  %v8719 = vadd.f32 0.0, %v8718
  %8720 = vdwg.mxu0
  %8721 = vmatprep.subr.mxu0 %v8618
  %8722 = vmatpush1.msra.mxu0 %v8617
  %8723 = vmatprep.subr.mxu0 %v8622
  %8724 = vmatpush1.msra.mxu0 %v8621
  %8725 = vmatprep.subr.mxu0 %v8626
  %8726 = vmatpush1.msra.mxu0 %v8625
  %8727 = vmatprep.subr.mxu0 %v8630
  %8728 = vmatpush1.msra.mxu0 %v8629
  %8729 = vmatprep.subr.mxu0 %v8634
  %8730 = vmatpush1.msra.mxu0 %v8633
  %8731 = vmatprep.subr.mxu0 %v8638
  %8732 = vmatpush1.msra.mxu0 %v8637
  %8733 = vmatprep.subr.mxu0 %v8642
  %8734 = vmatpush1.msra.mxu0 %v8641
  %8735 = vmatprep.subr.mxu0 %v8646
  %8736 = vmatpush1.msra.mxu0 %v8645
  %8737 = vmatprep.subr.mxu0 0.0
  %8738 = vmatpush1.msra.mxu0 0.0
  %8739 = vmatprep.subr.mxu0 0.0
  %8740 = vmatpush1.msra.mxu0 0.0
  %8741 = vmatprep.subr.mxu0 0.0
  %8742 = vmatpush1.msra.mxu0 0.0
  %8743 = vmatprep.subr.mxu0 0.0
  %8744 = vmatpush1.msra.mxu0 0.0
  %8745 = vmatprep.subr.mxu0 0.0
  %8746 = vmatpush1.msra.mxu0 0.0
  %8747 = vmatprep.subr.mxu0 0.0
  %8748 = vmatpush1.msra.mxu0 0.0
  %8749 = vmatprep.subr.mxu0 0.0
  %8750 = vmatpush1.msra.mxu0 0.0
  %8751 = vmatprep.subr.mxu0 0.0
  %8752 = vmatpush1.msra.mxu0 0.0
  %8753 = vmatprep.subr.mxu0 0.0
  %8754 = vmatpush1.msra.mxu0 0.0
  %8755 = vmatprep.subr.mxu0 0.0
  %8756 = vmatpush1.msra.mxu0 0.0
  %8757 = vmatprep.subr.mxu0 0.0
  %8758 = vmatpush1.msra.mxu0 0.0
  %8759 = vmatprep.subr.mxu0 0.0
  %8760 = vmatpush1.msra.mxu0 0.0
  %8761 = vmatprep.subr.mxu0 0.0
  %8762 = vmatpush1.msra.mxu0 0.0
  %8763 = vmatprep.subr.mxu0 0.0
  %8764 = vmatpush1.msra.mxu0 0.0
  %8765 = vmatprep.subr.mxu0 0.0
  %8766 = vmatpush1.msra.mxu0 0.0
  %8767 = vmatprep.subr.mxu0 0.0
  %8768 = vmatpush1.msra.mxu0 0.0
  %8769 = vmatprep.subr.mxu0 0.0
  %8770 = vmatpush1.msra.mxu0 0.0
  %8771 = vmatprep.subr.mxu0 0.0
  %8772 = vmatpush1.msra.mxu0 0.0
  %8773 = vmatprep.subr.mxu0 0.0
  %8774 = vmatpush1.msra.mxu0 0.0
  %8775 = vmatprep.subr.mxu0 0.0
  %8776 = vmatpush1.msra.mxu0 0.0
  %8777 = vmatprep.subr.mxu0 0.0
  %8778 = vmatpush1.msra.mxu0 0.0
  %8779 = vmatprep.subr.mxu0 0.0
  %8780 = vmatpush1.msra.mxu0 0.0
  %8781 = vmatprep.subr.mxu0 0.0
  %8782 = vmatpush1.msra.mxu0 0.0
  %8783 = vmatprep.subr.mxu0 0.0
  %8784 = vmatpush1.msra.mxu0 0.0
  %8785 = vmatprep.mubr.f32.mxu0 0.0
  %8786 = vmatmul.mubr.f32.gmra.mrb[0].mxu0 %v8648
  %v8787 = vpop.f32.mrb[0].mxu0
  %v8788 = vadd.f32 0.0, %v8787
  %v8789 = vpop.f32.mrb[0].mxu0
  %v8790 = vadd.f32 0.0, %v8789
  %8791 = vdwg.mxu0
  %v8792 = vadd.f32 %v8610, %v8717
  %v8793 = vadd.f32 %v8611, %v8719
  %v8794 = vadd.f32 %v8612, %v8788
  %v8795 = vadd.f32 %v8613, %v8790
  %s8796 = scalar_lea.vmem %s3, 11520
  %v8797 = vld [vmem:[%s8796] sm:$0xff]
  %v8798 = vld [vmem:[%s8796 + $0x8] sm:$0xff]
  %v8799 = vld [vmem:[%s8796 + $0x10] sm:$0xff]
  %v8800 = vld [vmem:[%s8796 + $0x18] sm:$0xff]
  %v8801 = vld [vmem:[%s8796 + $0x20] sm:$0xff]
  %v8802 = vld [vmem:[%s8796 + $0x28] sm:$0xff]
  %v8803 = vld [vmem:[%s8796 + $0x30] sm:$0xff]
  %v8804 = vld [vmem:[%s8796 + $0x38] sm:$0xff]
  %v8805 = vld [vmem:[%s8796 + $0x40] sm:$0xff]
  %v8806 = vld [vmem:[%s8796 + $0x48] sm:$0xff]
  %v8807 = vld [vmem:[%s8796 + $0x50] sm:$0xff]
  %v8808 = vld [vmem:[%s8796 + $0x58] sm:$0xff]
  %v8809 = vld [vmem:[%s8796 + $0x60] sm:$0xff]
  %v8810 = vld [vmem:[%s8796 + $0x68] sm:$0xff]
  %v8811 = vld [vmem:[%s8796 + $0x70] sm:$0xff]
  %v8812 = vld [vmem:[%s8796 + $0x78] sm:$0xff]
  %v8813 = vld [vmem:[%s8796 + $0x80] sm:$0xff]
  %v8814 = vld [vmem:[%s8796 + $0x88] sm:$0xff]
  %v8815 = vld [vmem:[%s8796 + $0x90] sm:$0xff]
  %v8816 = vld [vmem:[%s8796 + $0x98] sm:$0xff]
  %v8817 = vld [vmem:[%s8796 + $0xa0] sm:$0xff]
  %v8818 = vld [vmem:[%s8796 + $0xa8] sm:$0xff]
  %v8819 = vld [vmem:[%s8796 + $0xb0] sm:$0xff]
  %v8820 = vld [vmem:[%s8796 + $0xb8] sm:$0xff]
  %v8821 = vld [vmem:[%s8796 + $0xc0] sm:$0xff]
  %v8822 = vld [vmem:[%s8796 + $0xc8] sm:$0xff]
  %v8823 = vld [vmem:[%s8796 + $0xd0] sm:$0xff]
  %v8824 = vld [vmem:[%s8796 + $0xd8] sm:$0xff]
  %v8825 = vld [vmem:[%s8796 + $0xe0] sm:$0xff]
  %v8826 = vld [vmem:[%s8796 + $0xe8] sm:$0xff]
  %v8827 = vld [vmem:[%s8796 + $0xf0] sm:$0xff]
  %v8828 = vld [vmem:[%s8796 + $0xf8] sm:$0xff]
  %v8829 = vrot.slane %v613, 2
  %v8830 = vsel %vm172, %v8829, 0
  %8832 = vmatprep.subr.mxu0 %v8798
  %8833 = vmatpush1.msra.mxu0 %v8797
  %8834 = vmatprep.subr.mxu0 %v8802
  %8835 = vmatpush1.msra.mxu0 %v8801
  %8836 = vmatprep.subr.mxu0 %v8806
  %8837 = vmatpush1.msra.mxu0 %v8805
  %8838 = vmatprep.subr.mxu0 %v8810
  %8839 = vmatpush1.msra.mxu0 %v8809
  %8840 = vmatprep.subr.mxu0 %v8814
  %8841 = vmatpush1.msra.mxu0 %v8813
  %8842 = vmatprep.subr.mxu0 %v8818
  %8843 = vmatpush1.msra.mxu0 %v8817
  %8844 = vmatprep.subr.mxu0 %v8822
  %8845 = vmatpush1.msra.mxu0 %v8821
  %8846 = vmatprep.subr.mxu0 %v8826
  %8847 = vmatpush1.msra.mxu0 %v8825
  %8848 = vmatprep.subr.mxu0 0.0
  %8849 = vmatpush1.msra.mxu0 0.0
  %8850 = vmatprep.subr.mxu0 0.0
  %8851 = vmatpush1.msra.mxu0 0.0
  %8852 = vmatprep.subr.mxu0 0.0
  %8853 = vmatpush1.msra.mxu0 0.0
  %8854 = vmatprep.subr.mxu0 0.0
  %8855 = vmatpush1.msra.mxu0 0.0
  %8856 = vmatprep.subr.mxu0 0.0
  %8857 = vmatpush1.msra.mxu0 0.0
  %8858 = vmatprep.subr.mxu0 0.0
  %8859 = vmatpush1.msra.mxu0 0.0
  %8860 = vmatprep.subr.mxu0 0.0
  %8861 = vmatpush1.msra.mxu0 0.0
  %8862 = vmatprep.subr.mxu0 0.0
  %8863 = vmatpush1.msra.mxu0 0.0
  %8864 = vmatprep.subr.mxu0 0.0
  %8865 = vmatpush1.msra.mxu0 0.0
  %8866 = vmatprep.subr.mxu0 0.0
  %8867 = vmatpush1.msra.mxu0 0.0
  %8868 = vmatprep.subr.mxu0 0.0
  %8869 = vmatpush1.msra.mxu0 0.0
  %8870 = vmatprep.subr.mxu0 0.0
  %8871 = vmatpush1.msra.mxu0 0.0
  %8872 = vmatprep.subr.mxu0 0.0
  %8873 = vmatpush1.msra.mxu0 0.0
  %8874 = vmatprep.subr.mxu0 0.0
  %8875 = vmatpush1.msra.mxu0 0.0
  %8876 = vmatprep.subr.mxu0 0.0
  %8877 = vmatpush1.msra.mxu0 0.0
  %8878 = vmatprep.subr.mxu0 0.0
  %8879 = vmatpush1.msra.mxu0 0.0
  %8880 = vmatprep.subr.mxu0 0.0
  %8881 = vmatpush1.msra.mxu0 0.0
  %8882 = vmatprep.subr.mxu0 0.0
  %8883 = vmatpush1.msra.mxu0 0.0
  %8884 = vmatprep.subr.mxu0 0.0
  %8885 = vmatpush1.msra.mxu0 0.0
  %8886 = vmatprep.subr.mxu0 0.0
  %8887 = vmatpush1.msra.mxu0 0.0
  %8888 = vmatprep.subr.mxu0 0.0
  %8889 = vmatpush1.msra.mxu0 0.0
  %8890 = vmatprep.subr.mxu0 0.0
  %8891 = vmatpush1.msra.mxu0 0.0
  %8892 = vmatprep.subr.mxu0 0.0
  %8893 = vmatpush1.msra.mxu0 0.0
  %8894 = vmatprep.subr.mxu0 0.0
  %8895 = vmatpush1.msra.mxu0 0.0
  %8896 = vmatprep.mubr.f32.mxu0 0.0
  %8897 = vmatmul.mubr.f32.gmra.mrb[0].mxu0 %v8830
  %v8898 = vpop.f32.mrb[0].mxu0
  %v8899 = vadd.f32 0.0, %v8898
  %v8900 = vpop.f32.mrb[0].mxu0
  %v8901 = vadd.f32 0.0, %v8900
  %8902 = vdwg.mxu0
  %8903 = vmatprep.subr.mxu0 %v8800
  %8904 = vmatpush1.msra.mxu0 %v8799
  %8905 = vmatprep.subr.mxu0 %v8804
  %8906 = vmatpush1.msra.mxu0 %v8803
  %8907 = vmatprep.subr.mxu0 %v8808
  %8908 = vmatpush1.msra.mxu0 %v8807
  %8909 = vmatprep.subr.mxu0 %v8812
  %8910 = vmatpush1.msra.mxu0 %v8811
  %8911 = vmatprep.subr.mxu0 %v8816
  %8912 = vmatpush1.msra.mxu0 %v8815
  %8913 = vmatprep.subr.mxu0 %v8820
  %8914 = vmatpush1.msra.mxu0 %v8819
  %8915 = vmatprep.subr.mxu0 %v8824
  %8916 = vmatpush1.msra.mxu0 %v8823
  %8917 = vmatprep.subr.mxu0 %v8828
  %8918 = vmatpush1.msra.mxu0 %v8827
  %8919 = vmatprep.subr.mxu0 0.0
  %8920 = vmatpush1.msra.mxu0 0.0
  %8921 = vmatprep.subr.mxu0 0.0
  %8922 = vmatpush1.msra.mxu0 0.0
  %8923 = vmatprep.subr.mxu0 0.0
  %8924 = vmatpush1.msra.mxu0 0.0
  %8925 = vmatprep.subr.mxu0 0.0
  %8926 = vmatpush1.msra.mxu0 0.0
  %8927 = vmatprep.subr.mxu0 0.0
  %8928 = vmatpush1.msra.mxu0 0.0
  %8929 = vmatprep.subr.mxu0 0.0
  %8930 = vmatpush1.msra.mxu0 0.0
  %8931 = vmatprep.subr.mxu0 0.0
  %8932 = vmatpush1.msra.mxu0 0.0
  %8933 = vmatprep.subr.mxu0 0.0
  %8934 = vmatpush1.msra.mxu0 0.0
  %8935 = vmatprep.subr.mxu0 0.0
  %8936 = vmatpush1.msra.mxu0 0.0
  %8937 = vmatprep.subr.mxu0 0.0
  %8938 = vmatpush1.msra.mxu0 0.0
  %8939 = vmatprep.subr.mxu0 0.0
  %8940 = vmatpush1.msra.mxu0 0.0
  %8941 = vmatprep.subr.mxu0 0.0
  %8942 = vmatpush1.msra.mxu0 0.0
  %8943 = vmatprep.subr.mxu0 0.0
  %8944 = vmatpush1.msra.mxu0 0.0
  %8945 = vmatprep.subr.mxu0 0.0
  %8946 = vmatpush1.msra.mxu0 0.0
  %8947 = vmatprep.subr.mxu0 0.0
  %8948 = vmatpush1.msra.mxu0 0.0
  %8949 = vmatprep.subr.mxu0 0.0
  %8950 = vmatpush1.msra.mxu0 0.0
  %8951 = vmatprep.subr.mxu0 0.0
  %8952 = vmatpush1.msra.mxu0 0.0
  %8953 = vmatprep.subr.mxu0 0.0
  %8954 = vmatpush1.msra.mxu0 0.0
  %8955 = vmatprep.subr.mxu0 0.0
  %8956 = vmatpush1.msra.mxu0 0.0
  %8957 = vmatprep.subr.mxu0 0.0
  %8958 = vmatpush1.msra.mxu0 0.0
  %8959 = vmatprep.subr.mxu0 0.0
  %8960 = vmatpush1.msra.mxu0 0.0
  %8961 = vmatprep.subr.mxu0 0.0
  %8962 = vmatpush1.msra.mxu0 0.0
  %8963 = vmatprep.subr.mxu0 0.0
  %8964 = vmatpush1.msra.mxu0 0.0
  %8965 = vmatprep.subr.mxu0 0.0
  %8966 = vmatpush1.msra.mxu0 0.0
  %8967 = vmatprep.mubr.f32.mxu0 0.0
  %8968 = vmatmul.mubr.f32.gmra.mrb[0].mxu0 %v8830
  %v8969 = vpop.f32.mrb[0].mxu0
  %v8970 = vadd.f32 0.0, %v8969
  %v8971 = vpop.f32.mrb[0].mxu0
  %v8972 = vadd.f32 0.0, %v8971
  %8973 = vdwg.mxu0
  %v8974 = vadd.f32 %v8792, %v8899
  %v8975 = vadd.f32 %v8793, %v8901
  %v8976 = vadd.f32 %v8794, %v8970
  %v8977 = vadd.f32 %v8795, %v8972
  %s8978 = scalar_lea.vmem %s3, 11776
  %v8979 = vld [vmem:[%s8978] sm:$0xff]
  %v8980 = vld [vmem:[%s8978 + $0x8] sm:$0xff]
  %v8981 = vld [vmem:[%s8978 + $0x10] sm:$0xff]
  %v8982 = vld [vmem:[%s8978 + $0x18] sm:$0xff]
  %v8983 = vld [vmem:[%s8978 + $0x20] sm:$0xff]
  %v8984 = vld [vmem:[%s8978 + $0x28] sm:$0xff]
  %v8985 = vld [vmem:[%s8978 + $0x30] sm:$0xff]
  %v8986 = vld [vmem:[%s8978 + $0x38] sm:$0xff]
  %v8987 = vld [vmem:[%s8978 + $0x40] sm:$0xff]
  %v8988 = vld [vmem:[%s8978 + $0x48] sm:$0xff]
  %v8989 = vld [vmem:[%s8978 + $0x50] sm:$0xff]
  %v8990 = vld [vmem:[%s8978 + $0x58] sm:$0xff]
  %v8991 = vld [vmem:[%s8978 + $0x60] sm:$0xff]
  %v8992 = vld [vmem:[%s8978 + $0x68] sm:$0xff]
  %v8993 = vld [vmem:[%s8978 + $0x70] sm:$0xff]
  %v8994 = vld [vmem:[%s8978 + $0x78] sm:$0xff]
  %v8995 = vld [vmem:[%s8978 + $0x80] sm:$0xff]
  %v8996 = vld [vmem:[%s8978 + $0x88] sm:$0xff]
  %v8997 = vld [vmem:[%s8978 + $0x90] sm:$0xff]
  %v8998 = vld [vmem:[%s8978 + $0x98] sm:$0xff]
  %v8999 = vld [vmem:[%s8978 + $0xa0] sm:$0xff]
  %v9000 = vld [vmem:[%s8978 + $0xa8] sm:$0xff]
  %v9001 = vld [vmem:[%s8978 + $0xb0] sm:$0xff]
  %v9002 = vld [vmem:[%s8978 + $0xb8] sm:$0xff]
  %v9003 = vld [vmem:[%s8978 + $0xc0] sm:$0xff]
  %v9004 = vld [vmem:[%s8978 + $0xc8] sm:$0xff]
  %v9005 = vld [vmem:[%s8978 + $0xd0] sm:$0xff]
  %v9006 = vld [vmem:[%s8978 + $0xd8] sm:$0xff]
  %v9007 = vld [vmem:[%s8978 + $0xe0] sm:$0xff]
  %v9008 = vld [vmem:[%s8978 + $0xe8] sm:$0xff]
  %v9009 = vld [vmem:[%s8978 + $0xf0] sm:$0xff]
  %v9010 = vld [vmem:[%s8978 + $0xf8] sm:$0xff]
  %v9011 = vrot.slane %v613, 4
  %v9012 = vsel %vm172, %v9011, 0
  %9014 = vmatprep.subr.mxu0 %v8980
  %9015 = vmatpush1.msra.mxu0 %v8979
  %9016 = vmatprep.subr.mxu0 %v8984
  %9017 = vmatpush1.msra.mxu0 %v8983
  %9018 = vmatprep.subr.mxu0 %v8988
  %9019 = vmatpush1.msra.mxu0 %v8987
  %9020 = vmatprep.subr.mxu0 %v8992
  %9021 = vmatpush1.msra.mxu0 %v8991
  %9022 = vmatprep.subr.mxu0 %v8996
  %9023 = vmatpush1.msra.mxu0 %v8995
  %9024 = vmatprep.subr.mxu0 %v9000
  %9025 = vmatpush1.msra.mxu0 %v8999
  %9026 = vmatprep.subr.mxu0 %v9004
  %9027 = vmatpush1.msra.mxu0 %v9003
  %9028 = vmatprep.subr.mxu0 %v9008
  %9029 = vmatpush1.msra.mxu0 %v9007
  %9030 = vmatprep.subr.mxu0 0.0
  %9031 = vmatpush1.msra.mxu0 0.0
  %9032 = vmatprep.subr.mxu0 0.0
  %9033 = vmatpush1.msra.mxu0 0.0
  %9034 = vmatprep.subr.mxu0 0.0
  %9035 = vmatpush1.msra.mxu0 0.0
  %9036 = vmatprep.subr.mxu0 0.0
  %9037 = vmatpush1.msra.mxu0 0.0
  %9038 = vmatprep.subr.mxu0 0.0
  %9039 = vmatpush1.msra.mxu0 0.0
  %9040 = vmatprep.subr.mxu0 0.0
  %9041 = vmatpush1.msra.mxu0 0.0
  %9042 = vmatprep.subr.mxu0 0.0
  %9043 = vmatpush1.msra.mxu0 0.0
  %9044 = vmatprep.subr.mxu0 0.0
  %9045 = vmatpush1.msra.mxu0 0.0
  %9046 = vmatprep.subr.mxu0 0.0
  %9047 = vmatpush1.msra.mxu0 0.0
  %9048 = vmatprep.subr.mxu0 0.0
  %9049 = vmatpush1.msra.mxu0 0.0
  %9050 = vmatprep.subr.mxu0 0.0
  %9051 = vmatpush1.msra.mxu0 0.0
  %9052 = vmatprep.subr.mxu0 0.0
  %9053 = vmatpush1.msra.mxu0 0.0
  %9054 = vmatprep.subr.mxu0 0.0
  %9055 = vmatpush1.msra.mxu0 0.0
  %9056 = vmatprep.subr.mxu0 0.0
  %9057 = vmatpush1.msra.mxu0 0.0
  %9058 = vmatprep.subr.mxu0 0.0
  %9059 = vmatpush1.msra.mxu0 0.0
  %9060 = vmatprep.subr.mxu0 0.0
  %9061 = vmatpush1.msra.mxu0 0.0
  %9062 = vmatprep.subr.mxu0 0.0
  %9063 = vmatpush1.msra.mxu0 0.0
  %9064 = vmatprep.subr.mxu0 0.0
  %9065 = vmatpush1.msra.mxu0 0.0
  %9066 = vmatprep.subr.mxu0 0.0
  %9067 = vmatpush1.msra.mxu0 0.0
  %9068 = vmatprep.subr.mxu0 0.0
  %9069 = vmatpush1.msra.mxu0 0.0
  %9070 = vmatprep.subr.mxu0 0.0
  %9071 = vmatpush1.msra.mxu0 0.0
  %9072 = vmatprep.subr.mxu0 0.0
  %9073 = vmatpush1.msra.mxu0 0.0
  %9074 = vmatprep.subr.mxu0 0.0
  %9075 = vmatpush1.msra.mxu0 0.0
  %9076 = vmatprep.subr.mxu0 0.0
  %9077 = vmatpush1.msra.mxu0 0.0
  %9078 = vmatprep.mubr.f32.mxu0 0.0
  %9079 = vmatmul.mubr.f32.gmra.mrb[0].mxu0 %v9012
  %v9080 = vpop.f32.mrb[0].mxu0
  %v9081 = vadd.f32 0.0, %v9080
  %v9082 = vpop.f32.mrb[0].mxu0
  %v9083 = vadd.f32 0.0, %v9082
  %9084 = vdwg.mxu0
  %9085 = vmatprep.subr.mxu0 %v8982
  %9086 = vmatpush1.msra.mxu0 %v8981
  %9087 = vmatprep.subr.mxu0 %v8986
  %9088 = vmatpush1.msra.mxu0 %v8985
  %9089 = vmatprep.subr.mxu0 %v8990
  %9090 = vmatpush1.msra.mxu0 %v8989
  %9091 = vmatprep.subr.mxu0 %v8994
  %9092 = vmatpush1.msra.mxu0 %v8993
  %9093 = vmatprep.subr.mxu0 %v8998
  %9094 = vmatpush1.msra.mxu0 %v8997
  %9095 = vmatprep.subr.mxu0 %v9002
  %9096 = vmatpush1.msra.mxu0 %v9001
  %9097 = vmatprep.subr.mxu0 %v9006
  %9098 = vmatpush1.msra.mxu0 %v9005
  %9099 = vmatprep.subr.mxu0 %v9010
  %9100 = vmatpush1.msra.mxu0 %v9009
  %9101 = vmatprep.subr.mxu0 0.0
  %9102 = vmatpush1.msra.mxu0 0.0
  %9103 = vmatprep.subr.mxu0 0.0
  %9104 = vmatpush1.msra.mxu0 0.0
  %9105 = vmatprep.subr.mxu0 0.0
  %9106 = vmatpush1.msra.mxu0 0.0
  %9107 = vmatprep.subr.mxu0 0.0
  %9108 = vmatpush1.msra.mxu0 0.0
  %9109 = vmatprep.subr.mxu0 0.0
  %9110 = vmatpush1.msra.mxu0 0.0
  %9111 = vmatprep.subr.mxu0 0.0
  %9112 = vmatpush1.msra.mxu0 0.0
  %9113 = vmatprep.subr.mxu0 0.0
  %9114 = vmatpush1.msra.mxu0 0.0
  %9115 = vmatprep.subr.mxu0 0.0
  %9116 = vmatpush1.msra.mxu0 0.0
  %9117 = vmatprep.subr.mxu0 0.0
  %9118 = vmatpush1.msra.mxu0 0.0
  %9119 = vmatprep.subr.mxu0 0.0
  %9120 = vmatpush1.msra.mxu0 0.0
  %9121 = vmatprep.subr.mxu0 0.0
  %9122 = vmatpush1.msra.mxu0 0.0
  %9123 = vmatprep.subr.mxu0 0.0
  %9124 = vmatpush1.msra.mxu0 0.0
  %9125 = vmatprep.subr.mxu0 0.0
  %9126 = vmatpush1.msra.mxu0 0.0
  %9127 = vmatprep.subr.mxu0 0.0
  %9128 = vmatpush1.msra.mxu0 0.0
  %9129 = vmatprep.subr.mxu0 0.0
  %9130 = vmatpush1.msra.mxu0 0.0
  %9131 = vmatprep.subr.mxu0 0.0
  %9132 = vmatpush1.msra.mxu0 0.0
  %9133 = vmatprep.subr.mxu0 0.0
  %9134 = vmatpush1.msra.mxu0 0.0
  %9135 = vmatprep.subr.mxu0 0.0
  %9136 = vmatpush1.msra.mxu0 0.0
  %9137 = vmatprep.subr.mxu0 0.0
  %9138 = vmatpush1.msra.mxu0 0.0
  %9139 = vmatprep.subr.mxu0 0.0
  %9140 = vmatpush1.msra.mxu0 0.0
  %9141 = vmatprep.subr.mxu0 0.0
  %9142 = vmatpush1.msra.mxu0 0.0
  %9143 = vmatprep.subr.mxu0 0.0
  %9144 = vmatpush1.msra.mxu0 0.0
  %9145 = vmatprep.subr.mxu0 0.0
  %9146 = vmatpush1.msra.mxu0 0.0
  %9147 = vmatprep.subr.mxu0 0.0
  %9148 = vmatpush1.msra.mxu0 0.0
  %9149 = vmatprep.mubr.f32.mxu0 0.0
  %9150 = vmatmul.mubr.f32.gmra.mrb[0].mxu0 %v9012
  %v9151 = vpop.f32.mrb[0].mxu0
  %v9152 = vadd.f32 0.0, %v9151
  %v9153 = vpop.f32.mrb[0].mxu0
  %v9154 = vadd.f32 0.0, %v9153
  %9155 = vdwg.mxu0
  %v9156 = vadd.f32 %v8974, %v9081
  %v9157 = vadd.f32 %v8975, %v9083
  %v9158 = vadd.f32 %v8976, %v9152
  %v9159 = vadd.f32 %v8977, %v9154
  %s9160 = scalar_lea.vmem %s3, 12032
  %v9161 = vld [vmem:[%s9160] sm:$0xff]
  %v9162 = vld [vmem:[%s9160 + $0x8] sm:$0xff]
  %v9163 = vld [vmem:[%s9160 + $0x10] sm:$0xff]
  %v9164 = vld [vmem:[%s9160 + $0x18] sm:$0xff]
  %v9165 = vld [vmem:[%s9160 + $0x20] sm:$0xff]
  %v9166 = vld [vmem:[%s9160 + $0x28] sm:$0xff]
  %v9167 = vld [vmem:[%s9160 + $0x30] sm:$0xff]
  %v9168 = vld [vmem:[%s9160 + $0x38] sm:$0xff]
  %v9169 = vld [vmem:[%s9160 + $0x40] sm:$0xff]
  %v9170 = vld [vmem:[%s9160 + $0x48] sm:$0xff]
  %v9171 = vld [vmem:[%s9160 + $0x50] sm:$0xff]
  %v9172 = vld [vmem:[%s9160 + $0x58] sm:$0xff]
  %v9173 = vld [vmem:[%s9160 + $0x60] sm:$0xff]
  %v9174 = vld [vmem:[%s9160 + $0x68] sm:$0xff]
  %v9175 = vld [vmem:[%s9160 + $0x70] sm:$0xff]
  %v9176 = vld [vmem:[%s9160 + $0x78] sm:$0xff]
  %v9177 = vld [vmem:[%s9160 + $0x80] sm:$0xff]
  %v9178 = vld [vmem:[%s9160 + $0x88] sm:$0xff]
  %v9179 = vld [vmem:[%s9160 + $0x90] sm:$0xff]
  %v9180 = vld [vmem:[%s9160 + $0x98] sm:$0xff]
  %v9181 = vld [vmem:[%s9160 + $0xa0] sm:$0xff]
  %v9182 = vld [vmem:[%s9160 + $0xa8] sm:$0xff]
  %v9183 = vld [vmem:[%s9160 + $0xb0] sm:$0xff]
  %v9184 = vld [vmem:[%s9160 + $0xb8] sm:$0xff]
  %v9185 = vld [vmem:[%s9160 + $0xc0] sm:$0xff]
  %v9186 = vld [vmem:[%s9160 + $0xc8] sm:$0xff]
  %v9187 = vld [vmem:[%s9160 + $0xd0] sm:$0xff]
  %v9188 = vld [vmem:[%s9160 + $0xd8] sm:$0xff]
  %v9189 = vld [vmem:[%s9160 + $0xe0] sm:$0xff]
  %v9190 = vld [vmem:[%s9160 + $0xe8] sm:$0xff]
  %v9191 = vld [vmem:[%s9160 + $0xf0] sm:$0xff]
  %v9192 = vld [vmem:[%s9160 + $0xf8] sm:$0xff]
  %v9193 = vrot.slane %v613, 6
  %v9194 = vsel %vm172, %v9193, 0
  %9196 = vmatprep.subr.mxu0 %v9162
  %9197 = vmatpush1.msra.mxu0 %v9161
  %9198 = vmatprep.subr.mxu0 %v9166
  %9199 = vmatpush1.msra.mxu0 %v9165
  %9200 = vmatprep.subr.mxu0 %v9170
  %9201 = vmatpush1.msra.mxu0 %v9169
  %9202 = vmatprep.subr.mxu0 %v9174
  %9203 = vmatpush1.msra.mxu0 %v9173
  %9204 = vmatprep.subr.mxu0 %v9178
  %9205 = vmatpush1.msra.mxu0 %v9177
  %9206 = vmatprep.subr.mxu0 %v9182
  %9207 = vmatpush1.msra.mxu0 %v9181
  %9208 = vmatprep.subr.mxu0 %v9186
  %9209 = vmatpush1.msra.mxu0 %v9185
  %9210 = vmatprep.subr.mxu0 %v9190
  %9211 = vmatpush1.msra.mxu0 %v9189
  %9212 = vmatprep.subr.mxu0 0.0
  %9213 = vmatpush1.msra.mxu0 0.0
  %9214 = vmatprep.subr.mxu0 0.0
  %9215 = vmatpush1.msra.mxu0 0.0
  %9216 = vmatprep.subr.mxu0 0.0
  %9217 = vmatpush1.msra.mxu0 0.0
  %9218 = vmatprep.subr.mxu0 0.0
  %9219 = vmatpush1.msra.mxu0 0.0
  %9220 = vmatprep.subr.mxu0 0.0
  %9221 = vmatpush1.msra.mxu0 0.0
  %9222 = vmatprep.subr.mxu0 0.0
  %9223 = vmatpush1.msra.mxu0 0.0
  %9224 = vmatprep.subr.mxu0 0.0
  %9225 = vmatpush1.msra.mxu0 0.0
  %9226 = vmatprep.subr.mxu0 0.0
  %9227 = vmatpush1.msra.mxu0 0.0
  %9228 = vmatprep.subr.mxu0 0.0
  %9229 = vmatpush1.msra.mxu0 0.0
  %9230 = vmatprep.subr.mxu0 0.0
  %9231 = vmatpush1.msra.mxu0 0.0
  %9232 = vmatprep.subr.mxu0 0.0
  %9233 = vmatpush1.msra.mxu0 0.0
  %9234 = vmatprep.subr.mxu0 0.0
  %9235 = vmatpush1.msra.mxu0 0.0
  %9236 = vmatprep.subr.mxu0 0.0
  %9237 = vmatpush1.msra.mxu0 0.0
  %9238 = vmatprep.subr.mxu0 0.0
  %9239 = vmatpush1.msra.mxu0 0.0
  %9240 = vmatprep.subr.mxu0 0.0
  %9241 = vmatpush1.msra.mxu0 0.0
  %9242 = vmatprep.subr.mxu0 0.0
  %9243 = vmatpush1.msra.mxu0 0.0
  %9244 = vmatprep.subr.mxu0 0.0
  %9245 = vmatpush1.msra.mxu0 0.0
  %9246 = vmatprep.subr.mxu0 0.0
  %9247 = vmatpush1.msra.mxu0 0.0
  %9248 = vmatprep.subr.mxu0 0.0
  %9249 = vmatpush1.msra.mxu0 0.0
  %9250 = vmatprep.subr.mxu0 0.0
  %9251 = vmatpush1.msra.mxu0 0.0
  %9252 = vmatprep.subr.mxu0 0.0
  %9253 = vmatpush1.msra.mxu0 0.0
  %9254 = vmatprep.subr.mxu0 0.0
  %9255 = vmatpush1.msra.mxu0 0.0
  %9256 = vmatprep.subr.mxu0 0.0
  %9257 = vmatpush1.msra.mxu0 0.0
  %9258 = vmatprep.subr.mxu0 0.0
  %9259 = vmatpush1.msra.mxu0 0.0
  %9260 = vmatprep.mubr.f32.mxu0 0.0
  %9261 = vmatmul.mubr.f32.gmra.mrb[0].mxu0 %v9194
  %v9262 = vpop.f32.mrb[0].mxu0
  %v9263 = vadd.f32 0.0, %v9262
  %v9264 = vpop.f32.mrb[0].mxu0
  %v9265 = vadd.f32 0.0, %v9264
  %9266 = vdwg.mxu0
  %9267 = vmatprep.subr.mxu0 %v9164
  %9268 = vmatpush1.msra.mxu0 %v9163
  %9269 = vmatprep.subr.mxu0 %v9168
  %9270 = vmatpush1.msra.mxu0 %v9167
  %9271 = vmatprep.subr.mxu0 %v9172
  %9272 = vmatpush1.msra.mxu0 %v9171
  %9273 = vmatprep.subr.mxu0 %v9176
  %9274 = vmatpush1.msra.mxu0 %v9175
  %9275 = vmatprep.subr.mxu0 %v9180
  %9276 = vmatpush1.msra.mxu0 %v9179
  %9277 = vmatprep.subr.mxu0 %v9184
  %9278 = vmatpush1.msra.mxu0 %v9183
  %9279 = vmatprep.subr.mxu0 %v9188
  %9280 = vmatpush1.msra.mxu0 %v9187
  %9281 = vmatprep.subr.mxu0 %v9192
  %9282 = vmatpush1.msra.mxu0 %v9191
  %9283 = vmatprep.subr.mxu0 0.0
  %9284 = vmatpush1.msra.mxu0 0.0
  %9285 = vmatprep.subr.mxu0 0.0
  %9286 = vmatpush1.msra.mxu0 0.0
  %9287 = vmatprep.subr.mxu0 0.0
  %9288 = vmatpush1.msra.mxu0 0.0
  %9289 = vmatprep.subr.mxu0 0.0
  %9290 = vmatpush1.msra.mxu0 0.0
  %9291 = vmatprep.subr.mxu0 0.0
  %9292 = vmatpush1.msra.mxu0 0.0
  %9293 = vmatprep.subr.mxu0 0.0
  %9294 = vmatpush1.msra.mxu0 0.0
  %9295 = vmatprep.subr.mxu0 0.0
  %9296 = vmatpush1.msra.mxu0 0.0
  %9297 = vmatprep.subr.mxu0 0.0
  %9298 = vmatpush1.msra.mxu0 0.0
  %9299 = vmatprep.subr.mxu0 0.0
  %9300 = vmatpush1.msra.mxu0 0.0
  %9301 = vmatprep.subr.mxu0 0.0
  %9302 = vmatpush1.msra.mxu0 0.0
  %9303 = vmatprep.subr.mxu0 0.0
  %9304 = vmatpush1.msra.mxu0 0.0
  %9305 = vmatprep.subr.mxu0 0.0
  %9306 = vmatpush1.msra.mxu0 0.0
  %9307 = vmatprep.subr.mxu0 0.0
  %9308 = vmatpush1.msra.mxu0 0.0
  %9309 = vmatprep.subr.mxu0 0.0
  %9310 = vmatpush1.msra.mxu0 0.0
  %9311 = vmatprep.subr.mxu0 0.0
  %9312 = vmatpush1.msra.mxu0 0.0
  %9313 = vmatprep.subr.mxu0 0.0
  %9314 = vmatpush1.msra.mxu0 0.0
  %9315 = vmatprep.subr.mxu0 0.0
  %9316 = vmatpush1.msra.mxu0 0.0
  %9317 = vmatprep.subr.mxu0 0.0
  %9318 = vmatpush1.msra.mxu0 0.0
  %9319 = vmatprep.subr.mxu0 0.0
  %9320 = vmatpush1.msra.mxu0 0.0
  %9321 = vmatprep.subr.mxu0 0.0
  %9322 = vmatpush1.msra.mxu0 0.0
  %9323 = vmatprep.subr.mxu0 0.0
  %9324 = vmatpush1.msra.mxu0 0.0
  %9325 = vmatprep.subr.mxu0 0.0
  %9326 = vmatpush1.msra.mxu0 0.0
  %9327 = vmatprep.subr.mxu0 0.0
  %9328 = vmatpush1.msra.mxu0 0.0
  %9329 = vmatprep.subr.mxu0 0.0
  %9330 = vmatpush1.msra.mxu0 0.0
  %9331 = vmatprep.mubr.f32.mxu0 0.0
  %9332 = vmatmul.mubr.f32.gmra.mrb[0].mxu0 %v9194
  %v9333 = vpop.f32.mrb[0].mxu0
  %v9334 = vadd.f32 0.0, %v9333
  %v9335 = vpop.f32.mrb[0].mxu0
  %v9336 = vadd.f32 0.0, %v9335
  %9337 = vdwg.mxu0
  %v9338 = vadd.f32 %v9156, %v9263
  %v9339 = vadd.f32 %v9157, %v9265
  %v9340 = vadd.f32 %v9158, %v9334
  %v9341 = vadd.f32 %v9159, %v9336
  %s9342 = scalar_lea.vmem %s3, 12288
  %v9343 = vld [vmem:[%s9342] sm:$0xff]
  %v9344 = vld [vmem:[%s9342 + $0x8] sm:$0xff]
  %v9345 = vld [vmem:[%s9342 + $0x10] sm:$0xff]
  %v9346 = vld [vmem:[%s9342 + $0x18] sm:$0xff]
  %v9347 = vld [vmem:[%s9342 + $0x20] sm:$0xff]
  %v9348 = vld [vmem:[%s9342 + $0x28] sm:$0xff]
  %v9349 = vld [vmem:[%s9342 + $0x30] sm:$0xff]
  %v9350 = vld [vmem:[%s9342 + $0x38] sm:$0xff]
  %v9351 = vld [vmem:[%s9342 + $0x40] sm:$0xff]
  %v9352 = vld [vmem:[%s9342 + $0x48] sm:$0xff]
  %v9353 = vld [vmem:[%s9342 + $0x50] sm:$0xff]
  %v9354 = vld [vmem:[%s9342 + $0x58] sm:$0xff]
  %v9355 = vld [vmem:[%s9342 + $0x60] sm:$0xff]
  %v9356 = vld [vmem:[%s9342 + $0x68] sm:$0xff]
  %v9357 = vld [vmem:[%s9342 + $0x70] sm:$0xff]
  %v9358 = vld [vmem:[%s9342 + $0x78] sm:$0xff]
  %v9359 = vld [vmem:[%s9342 + $0x80] sm:$0xff]
  %v9360 = vld [vmem:[%s9342 + $0x88] sm:$0xff]
  %v9361 = vld [vmem:[%s9342 + $0x90] sm:$0xff]
  %v9362 = vld [vmem:[%s9342 + $0x98] sm:$0xff]
  %v9363 = vld [vmem:[%s9342 + $0xa0] sm:$0xff]
  %v9364 = vld [vmem:[%s9342 + $0xa8] sm:$0xff]
  %v9365 = vld [vmem:[%s9342 + $0xb0] sm:$0xff]
  %v9366 = vld [vmem:[%s9342 + $0xb8] sm:$0xff]
  %v9367 = vld [vmem:[%s9342 + $0xc0] sm:$0xff]
  %v9368 = vld [vmem:[%s9342 + $0xc8] sm:$0xff]
  %v9369 = vld [vmem:[%s9342 + $0xd0] sm:$0xff]
  %v9370 = vld [vmem:[%s9342 + $0xd8] sm:$0xff]
  %v9371 = vld [vmem:[%s9342 + $0xe0] sm:$0xff]
  %v9372 = vld [vmem:[%s9342 + $0xe8] sm:$0xff]
  %v9373 = vld [vmem:[%s9342 + $0xf0] sm:$0xff]
  %v9374 = vld [vmem:[%s9342 + $0xf8] sm:$0xff]
  %v9376 = vsel %vm172, %v614, 0
  %9378 = vmatprep.subr.mxu0 %v9344
  %9379 = vmatpush1.msra.mxu0 %v9343
  %9380 = vmatprep.subr.mxu0 %v9348
  %9381 = vmatpush1.msra.mxu0 %v9347
  %9382 = vmatprep.subr.mxu0 %v9352
  %9383 = vmatpush1.msra.mxu0 %v9351
  %9384 = vmatprep.subr.mxu0 %v9356
  %9385 = vmatpush1.msra.mxu0 %v9355
  %9386 = vmatprep.subr.mxu0 %v9360
  %9387 = vmatpush1.msra.mxu0 %v9359
  %9388 = vmatprep.subr.mxu0 %v9364
  %9389 = vmatpush1.msra.mxu0 %v9363
  %9390 = vmatprep.subr.mxu0 %v9368
  %9391 = vmatpush1.msra.mxu0 %v9367
  %9392 = vmatprep.subr.mxu0 %v9372
  %9393 = vmatpush1.msra.mxu0 %v9371
  %9394 = vmatprep.subr.mxu0 0.0
  %9395 = vmatpush1.msra.mxu0 0.0
  %9396 = vmatprep.subr.mxu0 0.0
  %9397 = vmatpush1.msra.mxu0 0.0
  %9398 = vmatprep.subr.mxu0 0.0
  %9399 = vmatpush1.msra.mxu0 0.0
  %9400 = vmatprep.subr.mxu0 0.0
  %9401 = vmatpush1.msra.mxu0 0.0
  %9402 = vmatprep.subr.mxu0 0.0
  %9403 = vmatpush1.msra.mxu0 0.0
  %9404 = vmatprep.subr.mxu0 0.0
  %9405 = vmatpush1.msra.mxu0 0.0
  %9406 = vmatprep.subr.mxu0 0.0
  %9407 = vmatpush1.msra.mxu0 0.0
  %9408 = vmatprep.subr.mxu0 0.0
  %9409 = vmatpush1.msra.mxu0 0.0
  %9410 = vmatprep.subr.mxu0 0.0
  %9411 = vmatpush1.msra.mxu0 0.0
  %9412 = vmatprep.subr.mxu0 0.0
  %9413 = vmatpush1.msra.mxu0 0.0
  %9414 = vmatprep.subr.mxu0 0.0
  %9415 = vmatpush1.msra.mxu0 0.0
  %9416 = vmatprep.subr.mxu0 0.0
  %9417 = vmatpush1.msra.mxu0 0.0
  %9418 = vmatprep.subr.mxu0 0.0
  %9419 = vmatpush1.msra.mxu0 0.0
  %9420 = vmatprep.subr.mxu0 0.0
  %9421 = vmatpush1.msra.mxu0 0.0
  %9422 = vmatprep.subr.mxu0 0.0
  %9423 = vmatpush1.msra.mxu0 0.0
  %9424 = vmatprep.subr.mxu0 0.0
  %9425 = vmatpush1.msra.mxu0 0.0
  %9426 = vmatprep.subr.mxu0 0.0
  %9427 = vmatpush1.msra.mxu0 0.0
  %9428 = vmatprep.subr.mxu0 0.0
  %9429 = vmatpush1.msra.mxu0 0.0
  %9430 = vmatprep.subr.mxu0 0.0
  %9431 = vmatpush1.msra.mxu0 0.0
  %9432 = vmatprep.subr.mxu0 0.0
  %9433 = vmatpush1.msra.mxu0 0.0
  %9434 = vmatprep.subr.mxu0 0.0
  %9435 = vmatpush1.msra.mxu0 0.0
  %9436 = vmatprep.subr.mxu0 0.0
  %9437 = vmatpush1.msra.mxu0 0.0
  %9438 = vmatprep.subr.mxu0 0.0
  %9439 = vmatpush1.msra.mxu0 0.0
  %9440 = vmatprep.subr.mxu0 0.0
  %9441 = vmatpush1.msra.mxu0 0.0
  %9442 = vmatprep.mubr.f32.mxu0 0.0
  %9443 = vmatmul.mubr.f32.gmra.mrb[0].mxu0 %v9376
  %v9444 = vpop.f32.mrb[0].mxu0
  %v9445 = vadd.f32 0.0, %v9444
  %v9446 = vpop.f32.mrb[0].mxu0
  %v9447 = vadd.f32 0.0, %v9446
  %9448 = vdwg.mxu0
  %9449 = vmatprep.subr.mxu0 %v9346
  %9450 = vmatpush1.msra.mxu0 %v9345
  %9451 = vmatprep.subr.mxu0 %v9350
  %9452 = vmatpush1.msra.mxu0 %v9349
  %9453 = vmatprep.subr.mxu0 %v9354
  %9454 = vmatpush1.msra.mxu0 %v9353
  %9455 = vmatprep.subr.mxu0 %v9358
  %9456 = vmatpush1.msra.mxu0 %v9357
  %9457 = vmatprep.subr.mxu0 %v9362
  %9458 = vmatpush1.msra.mxu0 %v9361
  %9459 = vmatprep.subr.mxu0 %v9366
  %9460 = vmatpush1.msra.mxu0 %v9365
  %9461 = vmatprep.subr.mxu0 %v9370
  %9462 = vmatpush1.msra.mxu0 %v9369
  %9463 = vmatprep.subr.mxu0 %v9374
  %9464 = vmatpush1.msra.mxu0 %v9373
  %9465 = vmatprep.subr.mxu0 0.0
  %9466 = vmatpush1.msra.mxu0 0.0
  %9467 = vmatprep.subr.mxu0 0.0
  %9468 = vmatpush1.msra.mxu0 0.0
  %9469 = vmatprep.subr.mxu0 0.0
  %9470 = vmatpush1.msra.mxu0 0.0
  %9471 = vmatprep.subr.mxu0 0.0
  %9472 = vmatpush1.msra.mxu0 0.0
  %9473 = vmatprep.subr.mxu0 0.0
  %9474 = vmatpush1.msra.mxu0 0.0
  %9475 = vmatprep.subr.mxu0 0.0
  %9476 = vmatpush1.msra.mxu0 0.0
  %9477 = vmatprep.subr.mxu0 0.0
  %9478 = vmatpush1.msra.mxu0 0.0
  %9479 = vmatprep.subr.mxu0 0.0
  %9480 = vmatpush1.msra.mxu0 0.0
  %9481 = vmatprep.subr.mxu0 0.0
  %9482 = vmatpush1.msra.mxu0 0.0
  %9483 = vmatprep.subr.mxu0 0.0
  %9484 = vmatpush1.msra.mxu0 0.0
  %9485 = vmatprep.subr.mxu0 0.0
  %9486 = vmatpush1.msra.mxu0 0.0
  %9487 = vmatprep.subr.mxu0 0.0
  %9488 = vmatpush1.msra.mxu0 0.0
  %9489 = vmatprep.subr.mxu0 0.0
  %9490 = vmatpush1.msra.mxu0 0.0
  %9491 = vmatprep.subr.mxu0 0.0
  %9492 = vmatpush1.msra.mxu0 0.0
  %9493 = vmatprep.subr.mxu0 0.0
  %9494 = vmatpush1.msra.mxu0 0.0
  %9495 = vmatprep.subr.mxu0 0.0
  %9496 = vmatpush1.msra.mxu0 0.0
  %9497 = vmatprep.subr.mxu0 0.0
  %9498 = vmatpush1.msra.mxu0 0.0
  %9499 = vmatprep.subr.mxu0 0.0
  %9500 = vmatpush1.msra.mxu0 0.0
  %9501 = vmatprep.subr.mxu0 0.0
  %9502 = vmatpush1.msra.mxu0 0.0
  %9503 = vmatprep.subr.mxu0 0.0
  %9504 = vmatpush1.msra.mxu0 0.0
  %9505 = vmatprep.subr.mxu0 0.0
  %9506 = vmatpush1.msra.mxu0 0.0
  %9507 = vmatprep.subr.mxu0 0.0
  %9508 = vmatpush1.msra.mxu0 0.0
  %9509 = vmatprep.subr.mxu0 0.0
  %9510 = vmatpush1.msra.mxu0 0.0
  %9511 = vmatprep.subr.mxu0 0.0
  %9512 = vmatpush1.msra.mxu0 0.0
  %9513 = vmatprep.mubr.f32.mxu0 0.0
  %9514 = vmatmul.mubr.f32.gmra.mrb[0].mxu0 %v9376
  %v9515 = vpop.f32.mrb[0].mxu0
  %v9516 = vadd.f32 0.0, %v9515
  %v9517 = vpop.f32.mrb[0].mxu0
  %v9518 = vadd.f32 0.0, %v9517
  %9519 = vdwg.mxu0
  %v9520 = vadd.f32 %v9338, %v9445
  %v9521 = vadd.f32 %v9339, %v9447
  %v9522 = vadd.f32 %v9340, %v9516
  %v9523 = vadd.f32 %v9341, %v9518
  %v9524 = vld [vmem:[%s4] sm:$0xf]
  %v9526 = vlaneseq
  %v9527 = vshrl.u32 %v9526, 7
  %v9528 = vsub.s32 0, %v9527
  %v9529 = vrot.slane %v9524, %v9528
  %v9530 = vlaneseq
  %v9531 = vshrl.u32 %v9530, 7
  %v9532 = vsub.s32 1, %v9531
  %v9533 = vrot.slane %v9524, %v9532
  %v9534 = vlaneseq
  %v9535 = vshrl.u32 %v9534, 7
  %v9536 = vsub.s32 2, %v9535
  %v9537 = vrot.slane %v9524, %v9536
  %v9538 = vlaneseq
  %v9539 = vshrl.u32 %v9538, 7
  %v9540 = vsub.s32 3, %v9539
  %v9541 = vrot.slane %v9524, %v9540
  %v9546 = vadd.f32 %v9520, %v9529
  %v9547 = vadd.f32 %v9521, %v9533
  %v9548 = vadd.f32 %v9522, %v9537
  %v9549 = vadd.f32 %v9523, %v9541
  %v9550 = vmax.f32 %v9546, 0.0
  %v9551 = vmax.f32 %v9547, 0.0
  %v9552 = vmax.f32 %v9548, 0.0
  %v9553 = vmax.f32 %v9549, 0.0
  %v9554 = vld [vmem:[%s5] sm:$0xf]
  %v9556 = vlaneseq
  %v9557 = vshrl.u32 %v9556, 7
  %v9558 = vsub.s32 0, %v9557
  %v9559 = vrot.slane %v9554, %v9558
  %v9560 = vlaneseq
  %v9561 = vshrl.u32 %v9560, 7
  %v9562 = vsub.s32 1, %v9561
  %v9563 = vrot.slane %v9554, %v9562
  %v9564 = vlaneseq
  %v9565 = vshrl.u32 %v9564, 7
  %v9566 = vsub.s32 2, %v9565
  %v9567 = vrot.slane %v9554, %v9566
  %v9568 = vlaneseq
  %v9569 = vshrl.u32 %v9568, 7
  %v9570 = vsub.s32 3, %v9569
  %v9571 = vrot.slane %v9554, %v9570
  %v9576 = vmul.f32 %v9550, %v9559
  %v9577 = vmul.f32 %v9551, %v9563
  %v9578 = vmul.f32 %v9552, %v9567
  %v9579 = vmul.f32 %v9553, %v9571
  %vm9580 = vcmask 1041408
  %v9581 = vsel %vm9580, %v9576, 0.0
  %v9582 = vsel %vm9580, %v9577, 0.0
  %v9583 = vadd.f32 %v9581, %v9582
  %v9584 = vsel %vm9580, %v9578, 0.0
  %v9585 = vadd.f32 %v9583, %v9584
  %v9586 = vsel %vm9580, %v9579, 0.0
  %v9587 = vadd.f32 %v9585, %v9586
  %9588 = vadd.xlane.f32.xlu0 %v9587
  %v9589 = vpop.xlane.xlu0 %9588
  %v9590 = vld [vmem:[#allocation2] sm:$0x1]
  %v9592 = vlaneseq
  %v9593 = vshrl.u32 %v9592, 7
  %v9594 = vsub.s32 0, %v9593
  %v9595 = vrot.slane %v9590, %v9594
  %v9597 = vadd.f32 %v9589, %v9595
  %vm9598 = vcmask 1024
  %9599 = vst.msk [vmem:[%s7] sm:$0x3] %vm9598, %v9597
  // Predicated region
  $region30: #{value_network_forward.5} parent=0 // pred_check
    _
  $region31: #{value_network_forward.5} parent=0 // pred_check_branch
    %9601 = sbr.rel (0) target = $region33
  $region32: #{value_network_forward.5} parent=0 // pred_region
    _
  $region33: #{value_network_forward.5} parent=0 // pred_fallthru
    _
  // Predicated region
  $region34: #{value_network_forward.5} parent=0 // pred_check
    _
  $region35: #{value_network_forward.5} parent=0 // pred_check_branch
    %9603 = sbr.rel (0) target = $region37
  $region36: #{value_network_forward.5} parent=0 // pred_region
    _
  $region37: #{value_network_forward.5} parent=0 // pred_fallthru
    _

</llo_original>
